<compile_context>
chip_gen: v7x
topology: tpu7x:2x2x1
jax: 0.10.0
libtpu: 0.0.40
codegen_flags: <defaults>
</compile_context>

<pallas_src>
import functools

import jax
import jax.numpy as jnp
from jax.experimental import pallas as pl
from jax.experimental.pallas import tpu as pltpu

NEG_SLOPE = 0.2      # DGL GATConv default negative_slope for leaky_relu
MASK_VAL = -1e30


def _gat_project_kernel(x_ref, w_ref, z_ref, el_ref, er_ref, *, hf, num_heads):
    """Fused all-head projection + attention logits for one tile of nodes.

    z_all = x @ [W_all | W_all@A_l | W_all@A_r]   (T, H*F + 2H)  single MXU pass
    """
    x = x_ref[...]                                                    # (T, Din)
    z_all = jnp.dot(x, w_ref[...], preferred_element_type=jnp.float32)
    z_ref[...] = z_all[:, :hf].astype(z_ref.dtype)                    # bf16 out
    el_ref[...] = z_all[:, hf:hf + num_heads]                         # (T, H)
    er_ref[...] = z_all[:, hf + num_heads:hf + 2 * num_heads]         # (T, H)


def _gat_attn_kernel(z_ref, elt_ref, er_ref, bias_ref, adj_ref, o_ref,
                     m_ref, l_ref, acc_ref, *, num_heads, feat, activation):
    """Online edge-softmax + aggregation for one (dst-tile, src-tile) block."""
    j = pl.program_id(1)
    nj = pl.num_programs(1)

    @pl.when(j == 0)
    def _init():
        m_ref[...] = jnp.full_like(m_ref, MASK_VAL)
        l_ref[...] = jnp.zeros_like(l_ref)
        acc_ref[...] = jnp.zeros_like(acc_ref)

    mask = adj_ref[...] != 0          # (Td, Ts) int8 mask -> bool
    er = er_ref[...]                  # (Td, H) destination-side logits

    for h in range(num_heads):
        # e[i, j] = leaky_relu(er[dst=i, h] + el[src=j, h])
        e = er[:, h:h + 1] + elt_ref[h:h + 1, :]                      # (Td, Ts)
        e = jnp.maximum(e, NEG_SLOPE * e)                             # leaky_relu
        e = jnp.where(mask, e, MASK_VAL)

        m_prev = m_ref[:, h:h + 1]                                    # (Td, 1)
        m_new = jnp.maximum(m_prev, jnp.max(e, axis=1, keepdims=True))
        alpha = jnp.exp(m_prev - m_new)                               # rescale old
        p = jnp.exp(e - m_new)                                        # (Td, Ts)

        l_ref[:, h:h + 1] = (alpha * l_ref[:, h:h + 1]
                             + jnp.sum(p, axis=1, keepdims=True))

        z_h = z_ref[:, h * feat:(h + 1) * feat]                       # (Ts, F) bf16
        agg = jnp.dot(p.astype(z_ref.dtype), z_h,
                      preferred_element_type=jnp.float32)             # (Td, F)
        acc_ref[:, h * feat:(h + 1) * feat] = (
            alpha * acc_ref[:, h * feat:(h + 1) * feat] + agg)
        m_ref[:, h:h + 1] = m_new

    @pl.when(j == nj - 1)
    def _finalize():
        for h in range(num_heads):
            inv = pl.reciprocal(l_ref[:, h:h + 1], approx=True)       # EUP, ~free
            acc_ref[:, h * feat:(h + 1) * feat] = (
                acc_ref[:, h * feat:(h + 1) * feat] * inv)
        out = acc_ref[...] + bias_ref[...]                            # (Td, H*F)
        if activation == "elu":
            out = jnp.where(out > 0, out, jnp.exp(jnp.minimum(out, 0.0)) - 1.0)
        o_ref[...] = out.astype(o_ref.dtype)


def gat_conv(x, adj, w_all, attn_l, attn_r, bias, *, activation,
             tile_dst=128, tile_src=512, tile_proj=256):
    """One GATConv layer, all heads fused. Returns head-flattened (N, H*F)."""
    n, din = x.shape
    hf = w_all.shape[1]
    num_heads, feat = attn_l.shape
    assert hf == num_heads * feat

    tile_dst = min(tile_dst, n)
    tile_src = min(tile_src, n)
    tile_proj = min(tile_proj, n)
    assert n % tile_dst == 0 and n % tile_src == 0 and n % tile_proj == 0, \
        "N must be divisible by the tile sizes"
    assert tile_dst == n or tile_dst % 32 == 0   # int8 adjacency (32,128) tiling

    # Fold el/er into the projection: Wl/Wr embed the per-head attention
    # vectors block-diagonally so one wide matmul produces Z, el, er.
    eye = jnp.eye(num_heads, dtype=attn_l.dtype)
    a_l = (attn_l[:, :, None] * eye[:, None, :]).reshape(hf, num_heads)
    a_r = (attn_r[:, :, None] * eye[:, None, :]).reshape(hf, num_heads)
    w_cat = jnp.concatenate([w_all, w_all @ a_l, w_all @ a_r], axis=1)
    wc = hf + 2 * num_heads

    # Kernel 1: projection + attention logits, computed once (not per dst tile).
    proj_kernel = functools.partial(_gat_project_kernel, hf=hf,
                                    num_heads=num_heads)
    z, el, er = pl.pallas_call(
        proj_kernel,
        grid=(n // tile_proj,),
        in_specs=[
            pl.BlockSpec((tile_proj, din), lambda i: (i, 0)),     # x rows
            pl.BlockSpec((din, wc), lambda i: (0, 0)),            # W_cat (shared)
        ],
        out_specs=[
            pl.BlockSpec((tile_proj, hf), lambda i: (i, 0)),
            pl.BlockSpec((tile_proj, num_heads), lambda i: (i, 0)),
            pl.BlockSpec((tile_proj, num_heads), lambda i: (i, 0)),
        ],
        out_shape=(
            jax.ShapeDtypeStruct((n, hf), jnp.bfloat16),          # Z in bf16
            jax.ShapeDtypeStruct((n, num_heads), jnp.float32),
            jax.ShapeDtypeStruct((n, num_heads), jnp.float32),
        ),
        compiler_params=pltpu.CompilerParams(
            dimension_semantics=("parallel",)),
        cost_estimate=pl.CostEstimate(
            flops=2 * n * din * wc,
            transcendentals=0,
            bytes_accessed=4 * (n * din + din * wc + 2 * n * num_heads)
            + 2 * n * hf),
    )(x, w_cat)

    # Tiny (N, H) transpose in plain JAX (N*H*4 bytes) so each head's source
    # logits are a lane-major row inside the attention kernel.
    elt = el.T

    # Kernel 2: online edge softmax + aggregation over (dst tiles, src tiles).
    attn_kernel = functools.partial(_gat_attn_kernel, num_heads=num_heads,
                                    feat=feat, activation=activation)
    n_dst, n_src = n // tile_dst, n // tile_src

    vmem_bytes = (2 * (tile_src * hf * 2                 # Z bf16 (dbl-buffered)
                       + num_heads * tile_src * 4        # elt
                       + tile_dst * num_heads * 4        # er
                       + hf * 4                          # bias
                       + tile_dst * tile_src             # adj int8
                       + tile_dst * hf * 4)              # out
                  + tile_dst * (2 * num_heads + hf) * 4)  # scratch
    vmem_limit = int(min(100 * 2**20, max(32 * 2**20, 2 * vmem_bytes)))

    out = pl.pallas_call(
        attn_kernel,
        grid=(n_dst, n_src),
        in_specs=[
            pl.BlockSpec((tile_src, hf), lambda i, j: (j, 0)),          # Z src tile
            pl.BlockSpec((num_heads, tile_src), lambda i, j: (0, j)),   # el^T
            pl.BlockSpec((tile_dst, num_heads), lambda i, j: (i, 0)),   # er dst tile
            pl.BlockSpec((1, hf), lambda i, j: (0, 0)),                 # bias
            pl.BlockSpec((tile_dst, tile_src), lambda i, j: (i, j)),    # adj int8
        ],
        out_specs=pl.BlockSpec((tile_dst, hf), lambda i, j: (i, 0)),    # lane-dense
        out_shape=jax.ShapeDtypeStruct((n, hf), jnp.float32),
        scratch_shapes=[
            pltpu.VMEM((tile_dst, num_heads), jnp.float32),   # running max
            pltpu.VMEM((tile_dst, num_heads), jnp.float32),   # running denom
            pltpu.VMEM((tile_dst, hf), jnp.float32),          # running weighted sum
        ],
        compiler_params=pltpu.CompilerParams(
            dimension_semantics=("parallel", "arbitrary"),
            vmem_limit_bytes=vmem_limit),
        cost_estimate=pl.CostEstimate(
            flops=2 * n * n * hf + 8 * n * n * num_heads,
            transcendentals=n * n * num_heads + n * hf,
            bytes_accessed=n * n
            + n_dst * n * (hf * 2 + num_heads * 4)
            + n * hf * 4),
    )(z, elt, er, bias, adj)
    return out


def gat_forward(x, adj, params, *, tile_dst=128, tile_src=512):
    # Layer 0: GATConv(in_size, hid, heads[0]), ELU; output already == flatten(1).
    h = gat_conv(x, adj, params["w0"], params["al0"], params["ar0"],
                 params["b0"], activation="elu",
                 tile_dst=tile_dst, tile_src=tile_src)            # (N, H0*hid)
    # Layer 1: GATConv(hid*heads[0], out, heads[1]), no activation.
    h = gat_conv(h, adj, params["w1"], params["al1"], params["ar1"],
                 params["b1"], activation=None,
                 tile_dst=tile_dst, tile_src=tile_src)            # (N, H1*out)
    n = h.shape[0]
    h1 = params["al1"].shape[0]
    return h.reshape(n, h1, -1).mean(axis=1)                      # mean over heads


def init_params(key, in_size, hid_size, out_size, heads):
    h0, h1 = heads
    ks = jax.random.split(key, 6)

    def xavier(k, shape, fan_in, fan_out):
        scale = jnp.sqrt(2.0 / (fan_in + fan_out))
        return (scale * jax.random.normal(k, shape)).astype(jnp.float32)

    d1 = hid_size * h0
    return {
        "w0": xavier(ks[0], (in_size, h0 * hid_size), in_size, h0 * hid_size),
        "al0": xavier(ks[1], (h0, hid_size), hid_size, 1),
        "ar0": xavier(ks[2], (h0, hid_size), hid_size, 1),
        "b0": jnp.zeros((1, h0 * hid_size), jnp.float32),
        "w1": xavier(ks[3], (d1, h1 * out_size), d1, h1 * out_size),
        "al1": xavier(ks[4], (h1, out_size), out_size, 1),
        "ar1": xavier(ks[5], (h1, out_size), out_size, 1),
        "b1": jnp.zeros((1, h1 * out_size), jnp.float32),
    }


if __name__ == "__main__":
    # Small synthetic graph: N nodes, dense adjacency mask with self-loops.
    N = 256
    in_size, hid_size, out_size = 32, 16, 8
    heads = [4, 1]

    key = jax.random.PRNGKey(0)
    k_x, k_adj, k_p = jax.random.split(key, 3)

    x = jax.random.normal(k_x, (N, in_size), dtype=jnp.float32)
    rand_adj = (jax.random.uniform(k_adj, (N, N)) < 0.05).astype(jnp.float32)
    # Self-loops guarantee every destination row has >= 1 edge (softmax denom > 0).
    adj = jnp.maximum(rand_adj, jnp.eye(N, dtype=jnp.float32))
    # Mask-only operand (never on the MXU): int8 quarters the N^2 HBM traffic.
    adj = adj.astype(jnp.int8)

    params = init_params(k_p, in_size, hid_size, out_size, heads)

    # Small tiles here so the demo exercises both grid axes (2 dst x 2 src
    # steps) and the online-softmax accumulation path; use larger tiles
    # (tile_dst=256-512, tile_src=512+) for real graph sizes.
    fwd = jax.jit(functools.partial(gat_forward, tile_dst=128, tile_src=128))
    out = fwd(x, adj, params)
    out = jax.block_until_ready(out)
    assert out.shape == (N, out_size)
    assert bool(jnp.all(jnp.isfinite(out)))
    print("KERNEL_OK")
</pallas_src>

<mosaic_0001>
module attributes {stable_mosaic.version = 11 : i64} {
  func.func @_gat_attn_kernel(%arg0: i32, %arg1: i32, %arg2: memref<128x64xbf16, #tpu.memory_space<vmem>>, %arg3: memref<4x128xf32, #tpu.memory_space<vmem>>, %arg4: memref<128x4xf32, #tpu.memory_space<vmem>>, %arg5: memref<1x64xf32, #tpu.memory_space<vmem>>, %arg6: memref<128x128xi8, #tpu.memory_space<vmem>>, %arg7: memref<128x64xf32, #tpu.memory_space<vmem>>, %arg8: memref<128x4xf32, #tpu.memory_space<vmem>>, %arg9: memref<128x4xf32, #tpu.memory_space<vmem>>, %arg10: memref<128x64xf32, #tpu.memory_space<vmem>>) attributes {dimension_semantics = [#tpu.dimension_semantics<parallel>, #tpu.dimension_semantics<arbitrary>], iteration_bounds = array<i64: 2, 2>, scalar_prefetch = 0 : i64, scratch_operands = 3 : i64, tpu.core_type = #tpu.core_type<tc>, window_params = [{transform_indices = @transform_0, window_bounds = array<i64: 128, 64>}, {transform_indices = @transform_1, window_bounds = array<i64: 4, 128>}, {transform_indices = @transform_2, window_bounds = array<i64: 128, 4>}, {pipeline_mode = #tpu.pipeline_mode<synchronous>, transform_indices = @transform_3, window_bounds = array<i64: 1, 64>}, {transform_indices = @transform_4, window_bounds = array<i64: 128, 128>}, {transform_indices = @transform_5, window_bounds = array<i64: 128, 64>}]} {
    %c0_i32 = arith.constant 0 : i32
    %0 = arith.cmpi eq, %arg1, %c0_i32 : i32
    %1 = arith.extui %0 : i1 to i32
    %c0_i32_0 = arith.constant 0 : i32
    %2 = arith.cmpi ne, %1, %c0_i32_0 : i32
    scf.if %2 {
      %cst_82 = arith.constant -1.000000e+30 : f32
      %146 = vector.broadcast %cst_82 : f32 to vector<128x4xf32>
      %c0_83 = arith.constant 0 : index
      %c0_84 = arith.constant 0 : index
      %147 = vector.load %arg8[%c0_83, %c0_84] : memref<128x4xf32, #tpu.memory_space<vmem>>, vector<128x4xf32>
      tpu.vector_store %arg8[%c0_83, %c0_84], %146 {strides = array<i32>} : memref<128x4xf32, #tpu.memory_space<vmem>>, vector<128x4xf32>,
      %cst_85 = arith.constant 0.000000e+00 : f32
      %148 = vector.broadcast %cst_85 : f32 to vector<128x4xf32>
      %c0_86 = arith.constant 0 : index
      %c0_87 = arith.constant 0 : index
      %149 = vector.load %arg9[%c0_86, %c0_87] : memref<128x4xf32, #tpu.memory_space<vmem>>, vector<128x4xf32>
      tpu.vector_store %arg9[%c0_86, %c0_87], %148 {strides = array<i32>} : memref<128x4xf32, #tpu.memory_space<vmem>>, vector<128x4xf32>,
      %cst_88 = arith.constant 0.000000e+00 : f32
      %150 = vector.broadcast %cst_88 : f32 to vector<128x64xf32>
      %c0_89 = arith.constant 0 : index
      %c0_90 = arith.constant 0 : index
      %151 = vector.load %arg10[%c0_89, %c0_90] : memref<128x64xf32, #tpu.memory_space<vmem>>, vector<128x64xf32>
      tpu.vector_store %arg10[%c0_89, %c0_90], %150 {strides = array<i32>} : memref<128x64xf32, #tpu.memory_space<vmem>>, vector<128x64xf32>,
    } else {
    }
    %c0 = arith.constant 0 : index
    %c0_1 = arith.constant 0 : index
    %3 = vector.load %arg6[%c0, %c0_1] : memref<128x128xi8, #tpu.memory_space<vmem>>, vector<128x128xi8>
    %c0_i8 = arith.constant 0 : i8
    %4 = vector.broadcast %c0_i8 : i8 to vector<128x128xi8>
    %5 = arith.cmpi ne, %3, %4 : vector<128x128xi8>
    %c0_2 = arith.constant 0 : index
    %c0_3 = arith.constant 0 : index
    %6 = vector.load %arg4[%c0_2, %c0_3] : memref<128x4xf32, #tpu.memory_space<vmem>>, vector<128x4xf32>
    %7 = vector.extract_strided_slice %6 {offsets = [0, 0], sizes = [128, 1], strides = [1, 1]} : vector<128x4xf32> to vector<128x1xf32>
    %c0_4 = arith.constant 0 : index
    %c0_5 = arith.constant 0 : index
    %8 = vector.load %arg3[%c0_4, %c0_5] : memref<4x128xf32, #tpu.memory_space<vmem>>, vector<1x128xf32>
    %9 = vector.broadcast %7 : vector<128x1xf32> to vector<128x128xf32>
    %10 = vector.broadcast %8 : vector<1x128xf32> to vector<128x128xf32>
    %11 = arith.addf %9, %10 : vector<128x128xf32>
    %cst = arith.constant 2.000000e-01 : f32
    %12 = vector.broadcast %cst : f32 to vector<128x128xf32>
    %13 = arith.mulf %12, %11 : vector<128x128xf32>
    %14 = arith.maximumf %11, %13 : vector<128x128xf32>
    %cst_6 = arith.constant -1.000000e+30 : f32
    %15 = vector.broadcast %cst_6 : f32 to vector<128x128xf32>
    %16 = arith.select %5, %14, %15 : vector<128x128xi1>, vector<128x128xf32>
    %c0_7 = arith.constant 0 : index
    %c0_8 = arith.constant 0 : index
    %17 = vector.load %arg8[%c0_7, %c0_8] : memref<128x4xf32, #tpu.memory_space<vmem>>, vector<128x1xf32>
    %cst_9 = arith.constant dense<0xFF800000> : vector<128xf32>
    %18 = vector.multi_reduction <maximumf>, %16, %cst_9 [1] : vector<128x128xf32> to vector<128xf32>
    %19 = vector.shape_cast %18 : vector<128xf32> to vector<128x1xf32>
    %20 = arith.maximumf %17, %19 : vector<128x1xf32>
    %21 = arith.subf %17, %20 : vector<128x1xf32>
    %22 = math.exp %21 : vector<128x1xf32>
    %23 = vector.broadcast %20 : vector<128x1xf32> to vector<128x128xf32>
    %24 = arith.subf %16, %23 : vector<128x128xf32>
    %25 = math.exp %24 : vector<128x128xf32>
    %c0_10 = arith.constant 0 : index
    %c0_11 = arith.constant 0 : index
    %26 = vector.load %arg9[%c0_10, %c0_11] : memref<128x4xf32, #tpu.memory_space<vmem>>, vector<128x1xf32>
    %27 = arith.mulf %22, %26 : vector<128x1xf32>
    %cst_12 = arith.constant dense<0.000000e+00> : vector<128xf32>
    %28 = vector.multi_reduction <add>, %25, %cst_12 [1] : vector<128x128xf32> to vector<128xf32>
    %29 = vector.shape_cast %28 : vector<128xf32> to vector<128x1xf32>
    %30 = arith.addf %27, %29 : vector<128x1xf32>
    %c0_13 = arith.constant 0 : index
    %c0_14 = arith.constant 0 : index
    %31 = vector.load %arg9[%c0_13, %c0_14] : memref<128x4xf32, #tpu.memory_space<vmem>>, vector<128x1xf32>
    tpu.vector_store %arg9[%c0_13, %c0_14], %30 {strides = array<i32>} : memref<128x4xf32, #tpu.memory_space<vmem>>, vector<128x1xf32>,
    %c0_15 = arith.constant 0 : index
    %c0_16 = arith.constant 0 : index
    %32 = vector.load %arg2[%c0_15, %c0_16] : memref<128x64xbf16, #tpu.memory_space<vmem>>, vector<128x16xbf16>
    %33 = arith.truncf %25 : vector<128x128xf32> to vector<128x128xbf16>
    %cst_17 = arith.constant dense<0.000000e+00> : vector<128x16xf32>
    %34 = tpu.matmul %33, %32, %cst_17 {dimension_numbers = #tpu.dot_dimension_numbers<[1], [0], [0], [1], [0, 0, 1, 1], [], []>} : vector<128x128xbf16>, vector<128x16xbf16>, vector<128x16xf32> -> vector<128x16xf32>
    %c0_18 = arith.constant 0 : index
    %c0_19 = arith.constant 0 : index
    %35 = vector.load %arg10[%c0_18, %c0_19] : memref<128x64xf32, #tpu.memory_space<vmem>>, vector<128x16xf32>
    %36 = vector.broadcast %22 : vector<128x1xf32> to vector<128x16xf32>
    %37 = arith.mulf %36, %35 : vector<128x16xf32>
    %38 = arith.addf %37, %34 : vector<128x16xf32>
    %c0_20 = arith.constant 0 : index
    %c0_21 = arith.constant 0 : index
    %39 = vector.load %arg10[%c0_20, %c0_21] : memref<128x64xf32, #tpu.memory_space<vmem>>, vector<128x16xf32>
    tpu.vector_store %arg10[%c0_20, %c0_21], %38 {strides = array<i32>} : memref<128x64xf32, #tpu.memory_space<vmem>>, vector<128x16xf32>,
    %c0_22 = arith.constant 0 : index
    %c0_23 = arith.constant 0 : index
    %40 = vector.load %arg8[%c0_22, %c0_23] : memref<128x4xf32, #tpu.memory_space<vmem>>, vector<128x1xf32>
    tpu.vector_store %arg8[%c0_22, %c0_23], %20 {strides = array<i32>} : memref<128x4xf32, #tpu.memory_space<vmem>>, vector<128x1xf32>,
    %41 = vector.extract_strided_slice %6 {offsets = [0, 1], sizes = [128, 1], strides = [1, 1]} : vector<128x4xf32> to vector<128x1xf32>
    %c1 = arith.constant 1 : index
    %c0_24 = arith.constant 0 : index
    %42 = vector.load %arg3[%c1, %c0_24] : memref<4x128xf32, #tpu.memory_space<vmem>>, vector<1x128xf32>
    %43 = vector.broadcast %41 : vector<128x1xf32> to vector<128x128xf32>
    %44 = vector.broadcast %42 : vector<1x128xf32> to vector<128x128xf32>
    %45 = arith.addf %43, %44 : vector<128x128xf32>
    %cst_25 = arith.constant 2.000000e-01 : f32
    %46 = vector.broadcast %cst_25 : f32 to vector<128x128xf32>
    %47 = arith.mulf %46, %45 : vector<128x128xf32>
    %48 = arith.maximumf %45, %47 : vector<128x128xf32>
    %cst_26 = arith.constant -1.000000e+30 : f32
    %49 = vector.broadcast %cst_26 : f32 to vector<128x128xf32>
    %50 = arith.select %5, %48, %49 : vector<128x128xi1>, vector<128x128xf32>
    %c0_27 = arith.constant 0 : index
    %c1_28 = arith.constant 1 : index
    %51 = vector.load %arg8[%c0_27, %c1_28] : memref<128x4xf32, #tpu.memory_space<vmem>>, vector<128x1xf32>
    %cst_29 = arith.constant dense<0xFF800000> : vector<128xf32>
    %52 = vector.multi_reduction <maximumf>, %50, %cst_29 [1] : vector<128x128xf32> to vector<128xf32>
    %53 = vector.shape_cast %52 : vector<128xf32> to vector<128x1xf32>
    %54 = arith.maximumf %51, %53 : vector<128x1xf32>
    %55 = arith.subf %51, %54 : vector<128x1xf32>
    %56 = math.exp %55 : vector<128x1xf32>
    %57 = vector.broadcast %54 : vector<128x1xf32> to vector<128x128xf32>
    %58 = arith.subf %50, %57 : vector<128x128xf32>
    %59 = math.exp %58 : vector<128x128xf32>
    %c0_30 = arith.constant 0 : index
    %c1_31 = arith.constant 1 : index
    %60 = vector.load %arg9[%c0_30, %c1_31] : memref<128x4xf32, #tpu.memory_space<vmem>>, vector<128x1xf32>
    %61 = arith.mulf %56, %60 : vector<128x1xf32>
    %cst_32 = arith.constant dense<0.000000e+00> : vector<128xf32>
    %62 = vector.multi_reduction <add>, %59, %cst_32 [1] : vector<128x128xf32> to vector<128xf32>
    %63 = vector.shape_cast %62 : vector<128xf32> to vector<128x1xf32>
    %64 = arith.addf %61, %63 : vector<128x1xf32>
    %c0_33 = arith.constant 0 : index
    %c1_34 = arith.constant 1 : index
    %65 = vector.load %arg9[%c0_33, %c1_34] : memref<128x4xf32, #tpu.memory_space<vmem>>, vector<128x1xf32>
    tpu.vector_store %arg9[%c0_33, %c1_34], %64 {strides = array<i32>} : memref<128x4xf32, #tpu.memory_space<vmem>>, vector<128x1xf32>,
    %c0_35 = arith.constant 0 : index
    %c16 = arith.constant 16 : index
    %66 = vector.load %arg2[%c0_35, %c16] : memref<128x64xbf16, #tpu.memory_space<vmem>>, vector<128x16xbf16>
    %67 = arith.truncf %59 : vector<128x128xf32> to vector<128x128xbf16>
    %cst_36 = arith.constant dense<0.000000e+00> : vector<128x16xf32>
    %68 = tpu.matmul %67, %66, %cst_36 {dimension_numbers = #tpu.dot_dimension_numbers<[1], [0], [0], [1], [0, 0, 1, 1], [], []>} : vector<128x128xbf16>, vector<128x16xbf16>, vector<128x16xf32> -> vector<128x16xf32>
    %c0_37 = arith.constant 0 : index
    %c16_38 = arith.constant 16 : index
    %69 = vector.load %arg10[%c0_37, %c16_38] : memref<128x64xf32, #tpu.memory_space<vmem>>, vector<128x16xf32>
    %70 = vector.broadcast %56 : vector<128x1xf32> to vector<128x16xf32>
    %71 = arith.mulf %70, %69 : vector<128x16xf32>
    %72 = arith.addf %71, %68 : vector<128x16xf32>
    %c0_39 = arith.constant 0 : index
    %c16_40 = arith.constant 16 : index
    %73 = vector.load %arg10[%c0_39, %c16_40] : memref<128x64xf32, #tpu.memory_space<vmem>>, vector<128x16xf32>
    tpu.vector_store %arg10[%c0_39, %c16_40], %72 {strides = array<i32>} : memref<128x64xf32, #tpu.memory_space<vmem>>, vector<128x16xf32>,
    %c0_41 = arith.constant 0 : index
    %c1_42 = arith.constant 1 : index
    %74 = vector.load %arg8[%c0_41, %c1_42] : memref<128x4xf32, #tpu.memory_space<vmem>>, vector<128x1xf32>
    tpu.vector_store %arg8[%c0_41, %c1_42], %54 {strides = array<i32>} : memref<128x4xf32, #tpu.memory_space<vmem>>, vector<128x1xf32>,
    %75 = vector.extract_strided_slice %6 {offsets = [0, 2], sizes = [128, 1], strides = [1, 1]} : vector<128x4xf32> to vector<128x1xf32>
    %c2 = arith.constant 2 : index
    %c0_43 = arith.constant 0 : index
    %76 = vector.load %arg3[%c2, %c0_43] : memref<4x128xf32, #tpu.memory_space<vmem>>, vector<1x128xf32>
    %77 = vector.broadcast %75 : vector<128x1xf32> to vector<128x128xf32>
    %78 = vector.broadcast %76 : vector<1x128xf32> to vector<128x128xf32>
    %79 = arith.addf %77, %78 : vector<128x128xf32>
    %cst_44 = arith.constant 2.000000e-01 : f32
    %80 = vector.broadcast %cst_44 : f32 to vector<128x128xf32>
    %81 = arith.mulf %80, %79 : vector<128x128xf32>
    %82 = arith.maximumf %79, %81 : vector<128x128xf32>
    %cst_45 = arith.constant -1.000000e+30 : f32
    %83 = vector.broadcast %cst_45 : f32 to vector<128x128xf32>
    %84 = arith.select %5, %82, %83 : vector<128x128xi1>, vector<128x128xf32>
    %c0_46 = arith.constant 0 : index
    %c2_47 = arith.constant 2 : index
    %85 = vector.load %arg8[%c0_46, %c2_47] : memref<128x4xf32, #tpu.memory_space<vmem>>, vector<128x1xf32>
    %cst_48 = arith.constant dense<0xFF800000> : vector<128xf32>
    %86 = vector.multi_reduction <maximumf>, %84, %cst_48 [1] : vector<128x128xf32> to vector<128xf32>
    %87 = vector.shape_cast %86 : vector<128xf32> to vector<128x1xf32>
    %88 = arith.maximumf %85, %87 : vector<128x1xf32>
    %89 = arith.subf %85, %88 : vector<128x1xf32>
    %90 = math.exp %89 : vector<128x1xf32>
    %91 = vector.broadcast %88 : vector<128x1xf32> to vector<128x128xf32>
    %92 = arith.subf %84, %91 : vector<128x128xf32>
    %93 = math.exp %92 : vector<128x128xf32>
    %c0_49 = arith.constant 0 : index
    %c2_50 = arith.constant 2 : index
    %94 = vector.load %arg9[%c0_49, %c2_50] : memref<128x4xf32, #tpu.memory_space<vmem>>, vector<128x1xf32>
    %95 = arith.mulf %90, %94 : vector<128x1xf32>
    %cst_51 = arith.constant dense<0.000000e+00> : vector<128xf32>
    %96 = vector.multi_reduction <add>, %93, %cst_51 [1] : vector<128x128xf32> to vector<128xf32>
    %97 = vector.shape_cast %96 : vector<128xf32> to vector<128x1xf32>
    %98 = arith.addf %95, %97 : vector<128x1xf32>
    %c0_52 = arith.constant 0 : index
    %c2_53 = arith.constant 2 : index
    %99 = vector.load %arg9[%c0_52, %c2_53] : memref<128x4xf32, #tpu.memory_space<vmem>>, vector<128x1xf32>
    tpu.vector_store %arg9[%c0_52, %c2_53], %98 {strides = array<i32>} : memref<128x4xf32, #tpu.memory_space<vmem>>, vector<128x1xf32>,
    %c0_54 = arith.constant 0 : index
    %c32 = arith.constant 32 : index
    %100 = vector.load %arg2[%c0_54, %c32] : memref<128x64xbf16, #tpu.memory_space<vmem>>, vector<128x16xbf16>
    %101 = arith.truncf %93 : vector<128x128xf32> to vector<128x128xbf16>
    %cst_55 = arith.constant dense<0.000000e+00> : vector<128x16xf32>
    %102 = tpu.matmul %101, %100, %cst_55 {dimension_numbers = #tpu.dot_dimension_numbers<[1], [0], [0], [1], [0, 0, 1, 1], [], []>} : vector<128x128xbf16>, vector<128x16xbf16>, vector<128x16xf32> -> vector<128x16xf32>
    %c0_56 = arith.constant 0 : index
    %c32_57 = arith.constant 32 : index
    %103 = vector.load %arg10[%c0_56, %c32_57] : memref<128x64xf32, #tpu.memory_space<vmem>>, vector<128x16xf32>
    %104 = vector.broadcast %90 : vector<128x1xf32> to vector<128x16xf32>
    %105 = arith.mulf %104, %103 : vector<128x16xf32>
    %106 = arith.addf %105, %102 : vector<128x16xf32>
    %c0_58 = arith.constant 0 : index
    %c32_59 = arith.constant 32 : index
    %107 = vector.load %arg10[%c0_58, %c32_59] : memref<128x64xf32, #tpu.memory_space<vmem>>, vector<128x16xf32>
    tpu.vector_store %arg10[%c0_58, %c32_59], %106 {strides = array<i32>} : memref<128x64xf32, #tpu.memory_space<vmem>>, vector<128x16xf32>,
    %c0_60 = arith.constant 0 : index
    %c2_61 = arith.constant 2 : index
    %108 = vector.load %arg8[%c0_60, %c2_61] : memref<128x4xf32, #tpu.memory_space<vmem>>, vector<128x1xf32>
    tpu.vector_store %arg8[%c0_60, %c2_61], %88 {strides = array<i32>} : memref<128x4xf32, #tpu.memory_space<vmem>>, vector<128x1xf32>,
    %109 = vector.extract_strided_slice %6 {offsets = [0, 3], sizes = [128, 1], strides = [1, 1]} : vector<128x4xf32> to vector<128x1xf32>
    %c3 = arith.constant 3 : index
    %c0_62 = arith.constant 0 : index
    %110 = vector.load %arg3[%c3, %c0_62] : memref<4x128xf32, #tpu.memory_space<vmem>>, vector<1x128xf32>
    %111 = vector.broadcast %109 : vector<128x1xf32> to vector<128x128xf32>
    %112 = vector.broadcast %110 : vector<1x128xf32> to vector<128x128xf32>
    %113 = arith.addf %111, %112 : vector<128x128xf32>
    %cst_63 = arith.constant 2.000000e-01 : f32
    %114 = vector.broadcast %cst_63 : f32 to vector<128x128xf32>
    %115 = arith.mulf %114, %113 : vector<128x128xf32>
    %116 = arith.maximumf %113, %115 : vector<128x128xf32>
    %cst_64 = arith.constant -1.000000e+30 : f32
    %117 = vector.broadcast %cst_64 : f32 to vector<128x128xf32>
    %118 = arith.select %5, %116, %117 : vector<128x128xi1>, vector<128x128xf32>
    %c0_65 = arith.constant 0 : index
    %c3_66 = arith.constant 3 : index
    %119 = vector.load %arg8[%c0_65, %c3_66] : memref<128x4xf32, #tpu.memory_space<vmem>>, vector<128x1xf32>
    %cst_67 = arith.constant dense<0xFF800000> : vector<128xf32>
    %120 = vector.multi_reduction <maximumf>, %118, %cst_67 [1] : vector<128x128xf32> to vector<128xf32>
    %121 = vector.shape_cast %120 : vector<128xf32> to vector<128x1xf32>
    %122 = arith.maximumf %119, %121 : vector<128x1xf32>
    %123 = arith.subf %119, %122 : vector<128x1xf32>
    %124 = math.exp %123 : vector<128x1xf32>
    %125 = vector.broadcast %122 : vector<128x1xf32> to vector<128x128xf32>
    %126 = arith.subf %118, %125 : vector<128x128xf32>
    %127 = math.exp %126 : vector<128x128xf32>
    %c0_68 = arith.constant 0 : index
    %c3_69 = arith.constant 3 : index
    %128 = vector.load %arg9[%c0_68, %c3_69] : memref<128x4xf32, #tpu.memory_space<vmem>>, vector<128x1xf32>
    %129 = arith.mulf %124, %128 : vector<128x1xf32>
    %cst_70 = arith.constant dense<0.000000e+00> : vector<128xf32>
    %130 = vector.multi_reduction <add>, %127, %cst_70 [1] : vector<128x128xf32> to vector<128xf32>
    %131 = vector.shape_cast %130 : vector<128xf32> to vector<128x1xf32>
    %132 = arith.addf %129, %131 : vector<128x1xf32>
    %c0_71 = arith.constant 0 : index
    %c3_72 = arith.constant 3 : index
    %133 = vector.load %arg9[%c0_71, %c3_72] : memref<128x4xf32, #tpu.memory_space<vmem>>, vector<128x1xf32>
    tpu.vector_store %arg9[%c0_71, %c3_72], %132 {strides = array<i32>} : memref<128x4xf32, #tpu.memory_space<vmem>>, vector<128x1xf32>,
    %c0_73 = arith.constant 0 : index
    %c48 = arith.constant 48 : index
    %134 = vector.load %arg2[%c0_73, %c48] : memref<128x64xbf16, #tpu.memory_space<vmem>>, vector<128x16xbf16>
    %135 = arith.truncf %127 : vector<128x128xf32> to vector<128x128xbf16>
    %cst_74 = arith.constant dense<0.000000e+00> : vector<128x16xf32>
    %136 = tpu.matmul %135, %134, %cst_74 {dimension_numbers = #tpu.dot_dimension_numbers<[1], [0], [0], [1], [0, 0, 1, 1], [], []>} : vector<128x128xbf16>, vector<128x16xbf16>, vector<128x16xf32> -> vector<128x16xf32>
    %c0_75 = arith.constant 0 : index
    %c48_76 = arith.constant 48 : index
    %137 = vector.load %arg10[%c0_75, %c48_76] : memref<128x64xf32, #tpu.memory_space<vmem>>, vector<128x16xf32>
    %138 = vector.broadcast %124 : vector<128x1xf32> to vector<128x16xf32>
    %139 = arith.mulf %138, %137 : vector<128x16xf32>
    %140 = arith.addf %139, %136 : vector<128x16xf32>
    %c0_77 = arith.constant 0 : index
    %c48_78 = arith.constant 48 : index
    %141 = vector.load %arg10[%c0_77, %c48_78] : memref<128x64xf32, #tpu.memory_space<vmem>>, vector<128x16xf32>
    tpu.vector_store %arg10[%c0_77, %c48_78], %140 {strides = array<i32>} : memref<128x64xf32, #tpu.memory_space<vmem>>, vector<128x16xf32>,
    %c0_79 = arith.constant 0 : index
    %c3_80 = arith.constant 3 : index
    %142 = vector.load %arg8[%c0_79, %c3_80] : memref<128x4xf32, #tpu.memory_space<vmem>>, vector<128x1xf32>
    tpu.vector_store %arg8[%c0_79, %c3_80], %122 {strides = array<i32>} : memref<128x4xf32, #tpu.memory_space<vmem>>, vector<128x1xf32>,
    %c1_i32 = arith.constant 1 : i32
    %143 = arith.cmpi eq, %arg1, %c1_i32 : i32
    %144 = arith.extui %143 : i1 to i32
    %c0_i32_81 = arith.constant 0 : i32
    %145 = arith.cmpi ne, %144, %c0_i32_81 : i32
    scf.if %145 {
      %c0_82 = arith.constant 0 : index
      %c0_83 = arith.constant 0 : index
      %146 = vector.load %arg9[%c0_82, %c0_83] : memref<128x4xf32, #tpu.memory_space<vmem>>, vector<128x1xf32>
      %147 = tpu.reciprocal %146 {approx = true} : vector<128x1xf32> -> vector<128x1xf32>
      %c0_84 = arith.constant 0 : index
      %c0_85 = arith.constant 0 : index
      %148 = vector.load %arg10[%c0_84, %c0_85] : memref<128x64xf32, #tpu.memory_space<vmem>>, vector<128x16xf32>
      %149 = vector.broadcast %147 : vector<128x1xf32> to vector<128x16xf32>
      %150 = arith.mulf %148, %149 : vector<128x16xf32>
      %c0_86 = arith.constant 0 : index
      %c0_87 = arith.constant 0 : index
      %151 = vector.load %arg10[%c0_86, %c0_87] : memref<128x64xf32, #tpu.memory_space<vmem>>, vector<128x16xf32>
      tpu.vector_store %arg10[%c0_86, %c0_87], %150 {strides = array<i32>} : memref<128x64xf32, #tpu.memory_space<vmem>>, vector<128x16xf32>,
      %c0_88 = arith.constant 0 : index
      %c1_89 = arith.constant 1 : index
      %152 = vector.load %arg9[%c0_88, %c1_89] : memref<128x4xf32, #tpu.memory_space<vmem>>, vector<128x1xf32>
      %153 = tpu.reciprocal %152 {approx = true} : vector<128x1xf32> -> vector<128x1xf32>
      %c0_90 = arith.constant 0 : index
      %c16_91 = arith.constant 16 : index
      %154 = vector.load %arg10[%c0_90, %c16_91] : memref<128x64xf32, #tpu.memory_space<vmem>>, vector<128x16xf32>
      %155 = vector.broadcast %153 : vector<128x1xf32> to vector<128x16xf32>
      %156 = arith.mulf %154, %155 : vector<128x16xf32>
      %c0_92 = arith.constant 0 : index
      %c16_93 = arith.constant 16 : index
      %157 = vector.load %arg10[%c0_92, %c16_93] : memref<128x64xf32, #tpu.memory_space<vmem>>, vector<128x16xf32>
      tpu.vector_store %arg10[%c0_92, %c16_93], %156 {strides = array<i32>} : memref<128x64xf32, #tpu.memory_space<vmem>>, vector<128x16xf32>,
      %c0_94 = arith.constant 0 : index
      %c2_95 = arith.constant 2 : index
      %158 = vector.load %arg9[%c0_94, %c2_95] : memref<128x4xf32, #tpu.memory_space<vmem>>, vector<128x1xf32>
      %159 = tpu.reciprocal %158 {approx = true} : vector<128x1xf32> -> vector<128x1xf32>
      %c0_96 = arith.constant 0 : index
      %c32_97 = arith.constant 32 : index
      %160 = vector.load %arg10[%c0_96, %c32_97] : memref<128x64xf32, #tpu.memory_space<vmem>>, vector<128x16xf32>
      %161 = vector.broadcast %159 : vector<128x1xf32> to vector<128x16xf32>
      %162 = arith.mulf %160, %161 : vector<128x16xf32>
      %c0_98 = arith.constant 0 : index
      %c32_99 = arith.constant 32 : index
      %163 = vector.load %arg10[%c0_98, %c32_99] : memref<128x64xf32, #tpu.memory_space<vmem>>, vector<128x16xf32>
      tpu.vector_store %arg10[%c0_98, %c32_99], %162 {strides = array<i32>} : memref<128x64xf32, #tpu.memory_space<vmem>>, vector<128x16xf32>,
      %c0_100 = arith.constant 0 : index
      %c3_101 = arith.constant 3 : index
      %164 = vector.load %arg9[%c0_100, %c3_101] : memref<128x4xf32, #tpu.memory_space<vmem>>, vector<128x1xf32>
      %165 = tpu.reciprocal %164 {approx = true} : vector<128x1xf32> -> vector<128x1xf32>
      %c0_102 = arith.constant 0 : index
      %c48_103 = arith.constant 48 : index
      %166 = vector.load %arg10[%c0_102, %c48_103] : memref<128x64xf32, #tpu.memory_space<vmem>>, vector<128x16xf32>
      %167 = vector.broadcast %165 : vector<128x1xf32> to vector<128x16xf32>
      %168 = arith.mulf %166, %167 : vector<128x16xf32>
      %c0_104 = arith.constant 0 : index
      %c48_105 = arith.constant 48 : index
      %169 = vector.load %arg10[%c0_104, %c48_105] : memref<128x64xf32, #tpu.memory_space<vmem>>, vector<128x16xf32>
      tpu.vector_store %arg10[%c0_104, %c48_105], %168 {strides = array<i32>} : memref<128x64xf32, #tpu.memory_space<vmem>>, vector<128x16xf32>,
      %c0_106 = arith.constant 0 : index
      %c0_107 = arith.constant 0 : index
      %170 = vector.load %arg10[%c0_106, %c0_107] : memref<128x64xf32, #tpu.memory_space<vmem>>, vector<128x64xf32>
      %c0_108 = arith.constant 0 : index
      %c0_109 = arith.constant 0 : index
      %171 = vector.load %arg5[%c0_108, %c0_109] : memref<1x64xf32, #tpu.memory_space<vmem>>, vector<1x64xf32>
      %172 = vector.broadcast %171 : vector<1x64xf32> to vector<128x64xf32>
      %173 = arith.addf %170, %172 : vector<128x64xf32>
      %cst_110 = arith.constant 0.000000e+00 : f32
      %174 = vector.broadcast %cst_110 : f32 to vector<128x64xf32>
      %175 = arith.cmpf ogt, %173, %174 : vector<128x64xf32>
      %cst_111 = arith.constant 0.000000e+00 : f32
      %176 = vector.broadcast %cst_111 : f32 to vector<128x64xf32>
      %177 = arith.minimumf %173, %176 : vector<128x64xf32>
      %178 = math.exp %177 : vector<128x64xf32>
      %cst_112 = arith.constant 1.000000e+00 : f32
      %179 = vector.broadcast %cst_112 : f32 to vector<128x64xf32>
      %180 = arith.subf %178, %179 : vector<128x64xf32>
      %181 = arith.select %175, %173, %180 : vector<128x64xi1>, vector<128x64xf32>
      %c0_113 = arith.constant 0 : index
      %c0_114 = arith.constant 0 : index
      %182 = vector.load %arg7[%c0_113, %c0_114] : memref<128x64xf32, #tpu.memory_space<vmem>>, vector<128x64xf32>
      tpu.vector_store %arg7[%c0_113, %c0_114], %181 {strides = array<i32>} : memref<128x64xf32, #tpu.memory_space<vmem>>, vector<128x64xf32>,
    } else {
    }
    return
  }
  func.func @transform_0(%arg0: i32, %arg1: i32) -> (i32, i32) {
    %c0_i32 = arith.constant 0 : i32
    %c0_i32_0 = arith.constant 0 : i32
    return %arg1, %c0_i32 : i32, i32
  }
  func.func @transform_1(%arg0: i32, %arg1: i32) -> (i32, i32) {
    %c0_i32 = arith.constant 0 : i32
    %c0_i32_0 = arith.constant 0 : i32
    return %c0_i32, %arg1 : i32, i32
  }
  func.func @transform_2(%arg0: i32, %arg1: i32) -> (i32, i32) {
    %c0_i32 = arith.constant 0 : i32
    %c0_i32_0 = arith.constant 0 : i32
    return %arg0, %c0_i32 : i32, i32
  }
  func.func @transform_3(%arg0: i32, %arg1: i32) -> (i32, i32) {
    %c0_i32 = arith.constant 0 : i32
    %c0_i32_0 = arith.constant 0 : i32
    %c0_i32_1 = arith.constant 0 : i32
    return %c0_i32, %c0_i32_0 : i32, i32
  }
  func.func @transform_4(%arg0: i32, %arg1: i32) -> (i32, i32) {
    %c0_i32 = arith.constant 0 : i32
    return %arg0, %arg1 : i32, i32
  }
  func.func @transform_5(%arg0: i32, %arg1: i32) -> (i32, i32) {
    %c0_i32 = arith.constant 0 : i32
    %c0_i32_0 = arith.constant 0 : i32
    return %arg0, %c0_i32 : i32, i32
  }
}

module attributes {stable_mosaic.version = 11 : i64} {
  func.func @_gat_project_kernel(%arg0: i32, %arg1: memref<256x32xf32, #tpu.memory_space<vmem>>, %arg2: memref<32x72xf32, #tpu.memory_space<vmem>>, %arg3: memref<256x64xbf16, #tpu.memory_space<vmem>>, %arg4: memref<256x4xf32, #tpu.memory_space<vmem>>, %arg5: memref<256x4xf32, #tpu.memory_space<vmem>>) attributes {dimension_semantics = [#tpu.dimension_semantics<parallel>], iteration_bounds = array<i64: 1>, scalar_prefetch = 0 : i64, scratch_operands = 0 : i64, tpu.core_type = #tpu.core_type<tc>, window_params = [{transform_indices = @transform_0, window_bounds = array<i64: 256, 32>}, {pipeline_mode = #tpu.pipeline_mode<synchronous>, transform_indices = @transform_1, window_bounds = array<i64: 32, 72>}, {transform_indices = @transform_2, window_bounds = array<i64: 256, 64>}, {transform_indices = @transform_3, window_bounds = array<i64: 256, 4>}, {transform_indices = @transform_4, window_bounds = array<i64: 256, 4>}]} {
    %c0 = arith.constant 0 : index
    %c0_0 = arith.constant 0 : index
    %0 = vector.load %arg1[%c0, %c0_0] : memref<256x32xf32, #tpu.memory_space<vmem>>, vector<256x32xf32>
    %c0_1 = arith.constant 0 : index
    %c0_2 = arith.constant 0 : index
    %1 = vector.load %arg2[%c0_1, %c0_2] : memref<32x72xf32, #tpu.memory_space<vmem>>, vector<32x72xf32>
    %cst = arith.constant dense<0.000000e+00> : vector<256x72xf32>
    %2 = tpu.matmul %0, %1, %cst {dimension_numbers = #tpu.dot_dimension_numbers<[1], [0], [0], [1], [0, 0, 1, 1], [], []>} : vector<256x32xf32>, vector<32x72xf32>, vector<256x72xf32> -> vector<256x72xf32>
    %3 = vector.extract_strided_slice %2 {offsets = [0, 0], sizes = [256, 64], strides = [1, 1]} : vector<256x72xf32> to vector<256x64xf32>
    %4 = arith.truncf %3 : vector<256x64xf32> to vector<256x64xbf16>
    %c0_3 = arith.constant 0 : index
    %c0_4 = arith.constant 0 : index
    %5 = vector.load %arg3[%c0_3, %c0_4] : memref<256x64xbf16, #tpu.memory_space<vmem>>, vector<256x64xbf16>
    tpu.vector_store %arg3[%c0_3, %c0_4], %4 {strides = array<i32>} : memref<256x64xbf16, #tpu.memory_space<vmem>>, vector<256x64xbf16>,
    %6 = vector.extract_strided_slice %2 {offsets = [0, 64], sizes = [256, 4], strides = [1, 1]} : vector<256x72xf32> to vector<256x4xf32>
    %c0_5 = arith.constant 0 : index
    %c0_6 = arith.constant 0 : index
    %7 = vector.load %arg4[%c0_5, %c0_6] : memref<256x4xf32, #tpu.memory_space<vmem>>, vector<256x4xf32>
    tpu.vector_store %arg4[%c0_5, %c0_6], %6 {strides = array<i32>} : memref<256x4xf32, #tpu.memory_space<vmem>>, vector<256x4xf32>,
    %8 = vector.extract_strided_slice %2 {offsets = [0, 68], sizes = [256, 4], strides = [1, 1]} : vector<256x72xf32> to vector<256x4xf32>
    %c0_7 = arith.constant 0 : index
    %c0_8 = arith.constant 0 : index
    %9 = vector.load %arg5[%c0_7, %c0_8] : memref<256x4xf32, #tpu.memory_space<vmem>>, vector<256x4xf32>
    tpu.vector_store %arg5[%c0_7, %c0_8], %8 {strides = array<i32>} : memref<256x4xf32, #tpu.memory_space<vmem>>, vector<256x4xf32>,
    return
  }
  func.func @transform_0(%arg0: i32) -> (i32, i32) {
    %c0_i32 = arith.constant 0 : i32
    %c0_i32_0 = arith.constant 0 : i32
    return %arg0, %c0_i32 : i32, i32
  }
  func.func @transform_1(%arg0: i32) -> (i32, i32) {
    %c0_i32 = arith.constant 0 : i32
    %c0_i32_0 = arith.constant 0 : i32
    %c0_i32_1 = arith.constant 0 : i32
    return %c0_i32, %c0_i32_0 : i32, i32
  }
  func.func @transform_2(%arg0: i32) -> (i32, i32) {
    %c0_i32 = arith.constant 0 : i32
    %c0_i32_0 = arith.constant 0 : i32
    return %arg0, %c0_i32 : i32, i32
  }
  func.func @transform_3(%arg0: i32) -> (i32, i32) {
    %c0_i32 = arith.constant 0 : i32
    %c0_i32_0 = arith.constant 0 : i32
    return %arg0, %c0_i32 : i32, i32
  }
  func.func @transform_4(%arg0: i32) -> (i32, i32) {
    %c0_i32 = arith.constant 0 : i32
    %c0_i32_0 = arith.constant 0 : i32
    return %arg0, %c0_i32 : i32, i32
  }
}

module attributes {stable_mosaic.version = 11 : i64} {
  func.func @_gat_project_kernel(%arg0: i32, %arg1: memref<256x64xf32, #tpu.memory_space<vmem>>, %arg2: memref<64x10xf32, #tpu.memory_space<vmem>>, %arg3: memref<256x8xbf16, #tpu.memory_space<vmem>>, %arg4: memref<256x1xf32, #tpu.memory_space<vmem>>, %arg5: memref<256x1xf32, #tpu.memory_space<vmem>>) attributes {dimension_semantics = [#tpu.dimension_semantics<parallel>], iteration_bounds = array<i64: 1>, scalar_prefetch = 0 : i64, scratch_operands = 0 : i64, tpu.core_type = #tpu.core_type<tc>, window_params = [{transform_indices = @transform_0, window_bounds = array<i64: 256, 64>}, {pipeline_mode = #tpu.pipeline_mode<synchronous>, transform_indices = @transform_1, window_bounds = array<i64: 64, 10>}, {transform_indices = @transform_2, window_bounds = array<i64: 256, 8>}, {transform_indices = @transform_3, window_bounds = array<i64: 256, 1>}, {transform_indices = @transform_4, window_bounds = array<i64: 256, 1>}]} {
    %c0 = arith.constant 0 : index
    %c0_0 = arith.constant 0 : index
    %0 = vector.load %arg1[%c0, %c0_0] : memref<256x64xf32, #tpu.memory_space<vmem>>, vector<256x64xf32>
    %c0_1 = arith.constant 0 : index
    %c0_2 = arith.constant 0 : index
    %1 = vector.load %arg2[%c0_1, %c0_2] : memref<64x10xf32, #tpu.memory_space<vmem>>, vector<64x10xf32>
    %cst = arith.constant dense<0.000000e+00> : vector<256x10xf32>
    %2 = tpu.matmul %0, %1, %cst {dimension_numbers = #tpu.dot_dimension_numbers<[1], [0], [0], [1], [0, 0, 1, 1], [], []>} : vector<256x64xf32>, vector<64x10xf32>, vector<256x10xf32> -> vector<256x10xf32>
    %3 = vector.extract_strided_slice %2 {offsets = [0, 0], sizes = [256, 8], strides = [1, 1]} : vector<256x10xf32> to vector<256x8xf32>
    %4 = arith.truncf %3 : vector<256x8xf32> to vector<256x8xbf16>
    %c0_3 = arith.constant 0 : index
    %c0_4 = arith.constant 0 : index
    %5 = vector.load %arg3[%c0_3, %c0_4] : memref<256x8xbf16, #tpu.memory_space<vmem>>, vector<256x8xbf16>
    tpu.vector_store %arg3[%c0_3, %c0_4], %4 {strides = array<i32>} : memref<256x8xbf16, #tpu.memory_space<vmem>>, vector<256x8xbf16>,
    %6 = vector.extract_strided_slice %2 {offsets = [0, 8], sizes = [256, 1], strides = [1, 1]} : vector<256x10xf32> to vector<256x1xf32>
    %c0_5 = arith.constant 0 : index
    %c0_6 = arith.constant 0 : index
    %7 = vector.load %arg4[%c0_5, %c0_6] : memref<256x1xf32, #tpu.memory_space<vmem>>, vector<256x1xf32>
    tpu.vector_store %arg4[%c0_5, %c0_6], %6 {strides = array<i32>} : memref<256x1xf32, #tpu.memory_space<vmem>>, vector<256x1xf32>,
    %8 = vector.extract_strided_slice %2 {offsets = [0, 9], sizes = [256, 1], strides = [1, 1]} : vector<256x10xf32> to vector<256x1xf32>
    %c0_7 = arith.constant 0 : index
    %c0_8 = arith.constant 0 : index
    %9 = vector.load %arg5[%c0_7, %c0_8] : memref<256x1xf32, #tpu.memory_space<vmem>>, vector<256x1xf32>
    tpu.vector_store %arg5[%c0_7, %c0_8], %8 {strides = array<i32>} : memref<256x1xf32, #tpu.memory_space<vmem>>, vector<256x1xf32>,
    return
  }
  func.func @transform_0(%arg0: i32) -> (i32, i32) {
    %c0_i32 = arith.constant 0 : i32
    %c0_i32_0 = arith.constant 0 : i32
    return %arg0, %c0_i32 : i32, i32
  }
  func.func @transform_1(%arg0: i32) -> (i32, i32) {
    %c0_i32 = arith.constant 0 : i32
    %c0_i32_0 = arith.constant 0 : i32
    %c0_i32_1 = arith.constant 0 : i32
    return %c0_i32, %c0_i32_0 : i32, i32
  }
  func.func @transform_2(%arg0: i32) -> (i32, i32) {
    %c0_i32 = arith.constant 0 : i32
    %c0_i32_0 = arith.constant 0 : i32
    return %arg0, %c0_i32 : i32, i32
  }
  func.func @transform_3(%arg0: i32) -> (i32, i32) {
    %c0_i32 = arith.constant 0 : i32
    %c0_i32_0 = arith.constant 0 : i32
    return %arg0, %c0_i32 : i32, i32
  }
  func.func @transform_4(%arg0: i32) -> (i32, i32) {
    %c0_i32 = arith.constant 0 : i32
    %c0_i32_0 = arith.constant 0 : i32
    return %arg0, %c0_i32 : i32, i32
  }
}

module attributes {stable_mosaic.version = 11 : i64} {
  func.func @_gat_attn_kernel(%arg0: i32, %arg1: i32, %arg2: memref<128x8xbf16, #tpu.memory_space<vmem>>, %arg3: memref<1x128xf32, #tpu.memory_space<vmem>>, %arg4: memref<128x1xf32, #tpu.memory_space<vmem>>, %arg5: memref<1x8xf32, #tpu.memory_space<vmem>>, %arg6: memref<128x128xi8, #tpu.memory_space<vmem>>, %arg7: memref<128x8xf32, #tpu.memory_space<vmem>>, %arg8: memref<128x1xf32, #tpu.memory_space<vmem>>, %arg9: memref<128x1xf32, #tpu.memory_space<vmem>>, %arg10: memref<128x8xf32, #tpu.memory_space<vmem>>) attributes {dimension_semantics = [#tpu.dimension_semantics<parallel>, #tpu.dimension_semantics<arbitrary>], iteration_bounds = array<i64: 2, 2>, scalar_prefetch = 0 : i64, scratch_operands = 3 : i64, tpu.core_type = #tpu.core_type<tc>, window_params = [{transform_indices = @transform_0, window_bounds = array<i64: 128, 8>}, {transform_indices = @transform_1, window_bounds = array<i64: 1, 128>}, {transform_indices = @transform_2, window_bounds = array<i64: 128, 1>}, {pipeline_mode = #tpu.pipeline_mode<synchronous>, transform_indices = @transform_3, window_bounds = array<i64: 1, 8>}, {transform_indices = @transform_4, window_bounds = array<i64: 128, 128>}, {transform_indices = @transform_5, window_bounds = array<i64: 128, 8>}]} {
    %c0_i32 = arith.constant 0 : i32
    %0 = arith.cmpi eq, %arg1, %c0_i32 : i32
    %1 = arith.extui %0 : i1 to i32
    %c0_i32_0 = arith.constant 0 : i32
    %2 = arith.cmpi ne, %1, %c0_i32_0 : i32
    scf.if %2 {
      %cst_25 = arith.constant -1.000000e+30 : f32
      %43 = vector.broadcast %cst_25 : f32 to vector<128x1xf32>
      %c0_26 = arith.constant 0 : index
      %c0_27 = arith.constant 0 : index
      %44 = vector.load %arg8[%c0_26, %c0_27] : memref<128x1xf32, #tpu.memory_space<vmem>>, vector<128x1xf32>
      tpu.vector_store %arg8[%c0_26, %c0_27], %43 {strides = array<i32>} : memref<128x1xf32, #tpu.memory_space<vmem>>, vector<128x1xf32>,
      %cst_28 = arith.constant 0.000000e+00 : f32
      %45 = vector.broadcast %cst_28 : f32 to vector<128x1xf32>
      %c0_29 = arith.constant 0 : index
      %c0_30 = arith.constant 0 : index
      %46 = vector.load %arg9[%c0_29, %c0_30] : memref<128x1xf32, #tpu.memory_space<vmem>>, vector<128x1xf32>
      tpu.vector_store %arg9[%c0_29, %c0_30], %45 {strides = array<i32>} : memref<128x1xf32, #tpu.memory_space<vmem>>, vector<128x1xf32>,
      %cst_31 = arith.constant 0.000000e+00 : f32
      %47 = vector.broadcast %cst_31 : f32 to vector<128x8xf32>
      %c0_32 = arith.constant 0 : index
      %c0_33 = arith.constant 0 : index
      %48 = vector.load %arg10[%c0_32, %c0_33] : memref<128x8xf32, #tpu.memory_space<vmem>>, vector<128x8xf32>
      tpu.vector_store %arg10[%c0_32, %c0_33], %47 {strides = array<i32>} : memref<128x8xf32, #tpu.memory_space<vmem>>, vector<128x8xf32>,
    } else {
    }
    %c0 = arith.constant 0 : index
    %c0_1 = arith.constant 0 : index
    %3 = vector.load %arg6[%c0, %c0_1] : memref<128x128xi8, #tpu.memory_space<vmem>>, vector<128x128xi8>
    %c0_i8 = arith.constant 0 : i8
    %4 = vector.broadcast %c0_i8 : i8 to vector<128x128xi8>
    %5 = arith.cmpi ne, %3, %4 : vector<128x128xi8>
    %c0_2 = arith.constant 0 : index
    %c0_3 = arith.constant 0 : index
    %6 = vector.load %arg4[%c0_2, %c0_3] : memref<128x1xf32, #tpu.memory_space<vmem>>, vector<128x1xf32>
    %c0_4 = arith.constant 0 : index
    %c0_5 = arith.constant 0 : index
    %7 = vector.load %arg3[%c0_4, %c0_5] : memref<1x128xf32, #tpu.memory_space<vmem>>, vector<1x128xf32>
    %8 = vector.broadcast %6 : vector<128x1xf32> to vector<128x128xf32>
    %9 = vector.broadcast %7 : vector<1x128xf32> to vector<128x128xf32>
    %10 = arith.addf %8, %9 : vector<128x128xf32>
    %cst = arith.constant 2.000000e-01 : f32
    %11 = vector.broadcast %cst : f32 to vector<128x128xf32>
    %12 = arith.mulf %11, %10 : vector<128x128xf32>
    %13 = arith.maximumf %10, %12 : vector<128x128xf32>
    %cst_6 = arith.constant -1.000000e+30 : f32
    %14 = vector.broadcast %cst_6 : f32 to vector<128x128xf32>
    %15 = arith.select %5, %13, %14 : vector<128x128xi1>, vector<128x128xf32>
    %c0_7 = arith.constant 0 : index
    %c0_8 = arith.constant 0 : index
    %16 = vector.load %arg8[%c0_7, %c0_8] : memref<128x1xf32, #tpu.memory_space<vmem>>, vector<128x1xf32>
    %cst_9 = arith.constant dense<0xFF800000> : vector<128xf32>
    %17 = vector.multi_reduction <maximumf>, %15, %cst_9 [1] : vector<128x128xf32> to vector<128xf32>
    %18 = vector.shape_cast %17 : vector<128xf32> to vector<128x1xf32>
    %19 = arith.maximumf %16, %18 : vector<128x1xf32>
    %20 = arith.subf %16, %19 : vector<128x1xf32>
    %21 = math.exp %20 : vector<128x1xf32>
    %22 = vector.broadcast %19 : vector<128x1xf32> to vector<128x128xf32>
    %23 = arith.subf %15, %22 : vector<128x128xf32>
    %24 = math.exp %23 : vector<128x128xf32>
    %c0_10 = arith.constant 0 : index
    %c0_11 = arith.constant 0 : index
    %25 = vector.load %arg9[%c0_10, %c0_11] : memref<128x1xf32, #tpu.memory_space<vmem>>, vector<128x1xf32>
    %26 = arith.mulf %21, %25 : vector<128x1xf32>
    %cst_12 = arith.constant dense<0.000000e+00> : vector<128xf32>
    %27 = vector.multi_reduction <add>, %24, %cst_12 [1] : vector<128x128xf32> to vector<128xf32>
    %28 = vector.shape_cast %27 : vector<128xf32> to vector<128x1xf32>
    %29 = arith.addf %26, %28 : vector<128x1xf32>
    %c0_13 = arith.constant 0 : index
    %c0_14 = arith.constant 0 : index
    %30 = vector.load %arg9[%c0_13, %c0_14] : memref<128x1xf32, #tpu.memory_space<vmem>>, vector<128x1xf32>
    tpu.vector_store %arg9[%c0_13, %c0_14], %29 {strides = array<i32>} : memref<128x1xf32, #tpu.memory_space<vmem>>, vector<128x1xf32>,
    %c0_15 = arith.constant 0 : index
    %c0_16 = arith.constant 0 : index
    %31 = vector.load %arg2[%c0_15, %c0_16] : memref<128x8xbf16, #tpu.memory_space<vmem>>, vector<128x8xbf16>
    %32 = arith.truncf %24 : vector<128x128xf32> to vector<128x128xbf16>
    %cst_17 = arith.constant dense<0.000000e+00> : vector<128x8xf32>
    %33 = tpu.matmul %32, %31, %cst_17 {dimension_numbers = #tpu.dot_dimension_numbers<[1], [0], [0], [1], [0, 0, 1, 1], [], []>} : vector<128x128xbf16>, vector<128x8xbf16>, vector<128x8xf32> -> vector<128x8xf32>
    %c0_18 = arith.constant 0 : index
    %c0_19 = arith.constant 0 : index
    %34 = vector.load %arg10[%c0_18, %c0_19] : memref<128x8xf32, #tpu.memory_space<vmem>>, vector<128x8xf32>
    %35 = vector.broadcast %21 : vector<128x1xf32> to vector<128x8xf32>
    %36 = arith.mulf %35, %34 : vector<128x8xf32>
    %37 = arith.addf %36, %33 : vector<128x8xf32>
    %c0_20 = arith.constant 0 : index
    %c0_21 = arith.constant 0 : index
    %38 = vector.load %arg10[%c0_20, %c0_21] : memref<128x8xf32, #tpu.memory_space<vmem>>, vector<128x8xf32>
    tpu.vector_store %arg10[%c0_20, %c0_21], %37 {strides = array<i32>} : memref<128x8xf32, #tpu.memory_space<vmem>>, vector<128x8xf32>,
    %c0_22 = arith.constant 0 : index
    %c0_23 = arith.constant 0 : index
    %39 = vector.load %arg8[%c0_22, %c0_23] : memref<128x1xf32, #tpu.memory_space<vmem>>, vector<128x1xf32>
    tpu.vector_store %arg8[%c0_22, %c0_23], %19 {strides = array<i32>} : memref<128x1xf32, #tpu.memory_space<vmem>>, vector<128x1xf32>,
    %c1_i32 = arith.constant 1 : i32
    %40 = arith.cmpi eq, %arg1, %c1_i32 : i32
    %41 = arith.extui %40 : i1 to i32
    %c0_i32_24 = arith.constant 0 : i32
    %42 = arith.cmpi ne, %41, %c0_i32_24 : i32
    scf.if %42 {
      %c0_25 = arith.constant 0 : index
      %c0_26 = arith.constant 0 : index
      %43 = vector.load %arg9[%c0_25, %c0_26] : memref<128x1xf32, #tpu.memory_space<vmem>>, vector<128x1xf32>
      %44 = tpu.reciprocal %43 {approx = true} : vector<128x1xf32> -> vector<128x1xf32>
      %c0_27 = arith.constant 0 : index
      %c0_28 = arith.constant 0 : index
      %45 = vector.load %arg10[%c0_27, %c0_28] : memref<128x8xf32, #tpu.memory_space<vmem>>, vector<128x8xf32>
      %46 = vector.broadcast %44 : vector<128x1xf32> to vector<128x8xf32>
      %47 = arith.mulf %45, %46 : vector<128x8xf32>
      %c0_29 = arith.constant 0 : index
      %c0_30 = arith.constant 0 : index
      %48 = vector.load %arg10[%c0_29, %c0_30] : memref<128x8xf32, #tpu.memory_space<vmem>>, vector<128x8xf32>
      tpu.vector_store %arg10[%c0_29, %c0_30], %47 {strides = array<i32>} : memref<128x8xf32, #tpu.memory_space<vmem>>, vector<128x8xf32>,
      %c0_31 = arith.constant 0 : index
      %c0_32 = arith.constant 0 : index
      %49 = vector.load %arg10[%c0_31, %c0_32] : memref<128x8xf32, #tpu.memory_space<vmem>>, vector<128x8xf32>
      %c0_33 = arith.constant 0 : index
      %c0_34 = arith.constant 0 : index
      %50 = vector.load %arg5[%c0_33, %c0_34] : memref<1x8xf32, #tpu.memory_space<vmem>>, vector<1x8xf32>
      %51 = vector.broadcast %50 : vector<1x8xf32> to vector<128x8xf32>
      %52 = arith.addf %49, %51 : vector<128x8xf32>
      %c0_35 = arith.constant 0 : index
      %c0_36 = arith.constant 0 : index
      %53 = vector.load %arg7[%c0_35, %c0_36] : memref<128x8xf32, #tpu.memory_space<vmem>>, vector<128x8xf32>
      tpu.vector_store %arg7[%c0_35, %c0_36], %52 {strides = array<i32>} : memref<128x8xf32, #tpu.memory_space<vmem>>, vector<128x8xf32>,
    } else {
    }
    return
  }
  func.func @transform_0(%arg0: i32, %arg1: i32) -> (i32, i32) {
    %c0_i32 = arith.constant 0 : i32
    %c0_i32_0 = arith.constant 0 : i32
    return %arg1, %c0_i32 : i32, i32
  }
  func.func @transform_1(%arg0: i32, %arg1: i32) -> (i32, i32) {
    %c0_i32 = arith.constant 0 : i32
    %c0_i32_0 = arith.constant 0 : i32
    return %c0_i32, %arg1 : i32, i32
  }
  func.func @transform_2(%arg0: i32, %arg1: i32) -> (i32, i32) {
    %c0_i32 = arith.constant 0 : i32
    %c0_i32_0 = arith.constant 0 : i32
    return %arg0, %c0_i32 : i32, i32
  }
  func.func @transform_3(%arg0: i32, %arg1: i32) -> (i32, i32) {
    %c0_i32 = arith.constant 0 : i32
    %c0_i32_0 = arith.constant 0 : i32
    %c0_i32_1 = arith.constant 0 : i32
    return %c0_i32, %c0_i32_0 : i32, i32
  }
  func.func @transform_4(%arg0: i32, %arg1: i32) -> (i32, i32) {
    %c0_i32 = arith.constant 0 : i32
    return %arg0, %arg1 : i32, i32
  }
  func.func @transform_5(%arg0: i32, %arg1: i32) -> (i32, i32) {
    %c0_i32 = arith.constant 0 : i32
    %c0_i32_0 = arith.constant 0 : i32
    return %arg0, %c0_i32 : i32, i32
  }
}

</mosaic_0001>

<llo_original>
// kernel: gat_forward.4
$region0: #{gat_forward.4}
  #allocation0 [shape = 'u32[]', space=smem, size = 0x4, offset = 0x4, fixed_abs, tag = 'smem constant byte address 0x4 - core index']
  #allocation1 [shape = 'u32[144,128]{1,0:T(1,128)}', space=vmem, size = 0x12000, scoped, tag = 'internal scratch']
  %s0 = inlined_call_operand.vmem [shape: f32[256,32], index: 0, kind: input, shape index: {}]
  %s1 = inlined_call_operand.vmem [shape: f32[32,72], index: 1, kind: input, shape index: {}]
  %s2 = inlined_call_operand.vmem [shape: bf16[256,64], index: 2, kind: output, shape index: {0}]
  %s3 = inlined_call_operand.vmem [shape: f32[256,4], index: 3, kind: output, shape index: {1}]
  %s4 = inlined_call_operand.vmem [shape: f32[256,4], index: 4, kind: output, shape index: {2}]
  %5 = xla_tuple %s2, %s3, %s4
  %s6 = sld [smem:[#allocation0]]
  $region34: #{gat_forward.4} parent=0
    _
  %s8 = ssub.s32 1, %s6
  %s9 = scalar_select 0, %s8, %s6
  // Predicated region
  $region2: #{gat_forward.4} parent=0 // pred_check
    _
  $region3: #{gat_forward.4} parent=0 // pred_check_branch
    %11 = sbr.rel (0) target = $region5
  $region4: #{gat_forward.4} parent=0 // pred_region
    _
  $region5: #{gat_forward.4} parent=0 // pred_fallthru
    _
  // Predicated region
  $region6: #{gat_forward.4} parent=0 // pred_check
    _
  $region7: #{gat_forward.4} parent=0 // pred_check_branch
    %13 = sbr.rel (0) target = $region9
  $region8: #{gat_forward.4} parent=0 // pred_region
    _
  $region9: #{gat_forward.4} parent=0 // pred_fallthru
    _
  %v14 = vld [vmem:[%s0] sm:$0xff]
  %v15 = vld [vmem:[%s0 + $0x8] sm:$0xff]
  %v16 = vld [vmem:[%s0 + $0x10] sm:$0xff]
  %v17 = vld [vmem:[%s0 + $0x18] sm:$0xff]
  %v18 = vld [vmem:[%s0 + $0x20] sm:$0xff]
  %v19 = vld [vmem:[%s0 + $0x28] sm:$0xff]
  %v20 = vld [vmem:[%s0 + $0x30] sm:$0xff]
  %v21 = vld [vmem:[%s0 + $0x38] sm:$0xff]
  %v22 = vld [vmem:[%s0 + $0x40] sm:$0xff]
  %v23 = vld [vmem:[%s0 + $0x48] sm:$0xff]
  %v24 = vld [vmem:[%s0 + $0x50] sm:$0xff]
  %v25 = vld [vmem:[%s0 + $0x58] sm:$0xff]
  %v26 = vld [vmem:[%s0 + $0x60] sm:$0xff]
  %v27 = vld [vmem:[%s0 + $0x68] sm:$0xff]
  %v28 = vld [vmem:[%s0 + $0x70] sm:$0xff]
  %v29 = vld [vmem:[%s0 + $0x78] sm:$0xff]
  %v30 = vld [vmem:[%s0 + $0x80] sm:$0xff]
  %v31 = vld [vmem:[%s0 + $0x88] sm:$0xff]
  %v32 = vld [vmem:[%s0 + $0x90] sm:$0xff]
  %v33 = vld [vmem:[%s0 + $0x98] sm:$0xff]
  %v34 = vld [vmem:[%s0 + $0xa0] sm:$0xff]
  %v35 = vld [vmem:[%s0 + $0xa8] sm:$0xff]
  %v36 = vld [vmem:[%s0 + $0xb0] sm:$0xff]
  %v37 = vld [vmem:[%s0 + $0xb8] sm:$0xff]
  %v38 = vld [vmem:[%s0 + $0xc0] sm:$0xff]
  %v39 = vld [vmem:[%s0 + $0xc8] sm:$0xff]
  %v40 = vld [vmem:[%s0 + $0xd0] sm:$0xff]
  %v41 = vld [vmem:[%s0 + $0xd8] sm:$0xff]
  %v42 = vld [vmem:[%s0 + $0xe0] sm:$0xff]
  %v43 = vld [vmem:[%s0 + $0xe8] sm:$0xff]
  %v44 = vld [vmem:[%s0 + $0xf0] sm:$0xff]
  %v45 = vld [vmem:[%s0 + $0xf8] sm:$0xff]
  %v46 = vld [vmem:[%s1] sm:$0xff]
  %v47 = vld [vmem:[%s1 + $0x8] sm:$0xff]
  %v48 = vld [vmem:[%s1 + $0x10] sm:$0xff]
  %v49 = vld [vmem:[%s1 + $0x18] sm:$0xff]
  %vm50 = vcmask 261120
  %v52 = vsel %vm50, %v14, 0
  %v55 = vsel %vm50, %v15, 0
  %v58 = vsel %vm50, %v16, 0
  %v61 = vsel %vm50, %v17, 0
  %v64 = vsel %vm50, %v18, 0
  %v67 = vsel %vm50, %v19, 0
  %v70 = vsel %vm50, %v20, 0
  %v73 = vsel %vm50, %v21, 0
  %v76 = vsel %vm50, %v22, 0
  %v79 = vsel %vm50, %v23, 0
  %v82 = vsel %vm50, %v24, 0
  %v85 = vsel %vm50, %v25, 0
  %v88 = vsel %vm50, %v26, 0
  %v91 = vsel %vm50, %v27, 0
  %v94 = vsel %vm50, %v28, 0
  %v97 = vsel %vm50, %v29, 0
  %v100 = vsel %vm50, %v30, 0
  %v103 = vsel %vm50, %v31, 0
  %v106 = vsel %vm50, %v32, 0
  %v109 = vsel %vm50, %v33, 0
  %v112 = vsel %vm50, %v34, 0
  %v115 = vsel %vm50, %v35, 0
  %v118 = vsel %vm50, %v36, 0
  %v121 = vsel %vm50, %v37, 0
  %v124 = vsel %vm50, %v38, 0
  %v127 = vsel %vm50, %v39, 0
  %v130 = vsel %vm50, %v40, 0
  %v133 = vsel %vm50, %v41, 0
  %v136 = vsel %vm50, %v42, 0
  %v139 = vsel %vm50, %v43, 0
  %v142 = vsel %vm50, %v44, 0
  %v145 = vsel %vm50, %v45, 0
  %147 = vmatprep.subr.mxu0 0.0
  %148 = vmatpush1.msra.mxu0 %v46
  %149 = vmatprep.subr.mxu0 0.0
  %150 = vmatpush1.msra.mxu0 %v47
  %151 = vmatprep.subr.mxu0 0.0
  %152 = vmatpush1.msra.mxu0 %v48
  %153 = vmatprep.subr.mxu0 0.0
  %154 = vmatpush1.msra.mxu0 %v49
  %155 = vmatprep.subr.mxu0 0.0
  %156 = vmatpush1.msra.mxu0 0.0
  %157 = vmatprep.subr.mxu0 0.0
  %158 = vmatpush1.msra.mxu0 0.0
  %159 = vmatprep.subr.mxu0 0.0
  %160 = vmatpush1.msra.mxu0 0.0
  %161 = vmatprep.subr.mxu0 0.0
  %162 = vmatpush1.msra.mxu0 0.0
  %163 = vmatprep.subr.mxu0 0.0
  %164 = vmatpush1.msra.mxu0 0.0
  %165 = vmatprep.subr.mxu0 0.0
  %166 = vmatpush1.msra.mxu0 0.0
  %167 = vmatprep.subr.mxu0 0.0
  %168 = vmatpush1.msra.mxu0 0.0
  %169 = vmatprep.subr.mxu0 0.0
  %170 = vmatpush1.msra.mxu0 0.0
  %171 = vmatprep.subr.mxu0 0.0
  %172 = vmatpush1.msra.mxu0 0.0
  %173 = vmatprep.subr.mxu0 0.0
  %174 = vmatpush1.msra.mxu0 0.0
  %175 = vmatprep.subr.mxu0 0.0
  %176 = vmatpush1.msra.mxu0 0.0
  %177 = vmatprep.subr.mxu0 0.0
  %178 = vmatpush1.msra.mxu0 0.0
  %179 = vmatprep.subr.mxu0 0.0
  %180 = vmatpush1.msra.mxu0 0.0
  %181 = vmatprep.subr.mxu0 0.0
  %182 = vmatpush1.msra.mxu0 0.0
  %183 = vmatprep.subr.mxu0 0.0
  %184 = vmatpush1.msra.mxu0 0.0
  %185 = vmatprep.subr.mxu0 0.0
  %186 = vmatpush1.msra.mxu0 0.0
  %187 = vmatprep.subr.mxu0 0.0
  %188 = vmatpush1.msra.mxu0 0.0
  %189 = vmatprep.subr.mxu0 0.0
  %190 = vmatpush1.msra.mxu0 0.0
  %191 = vmatprep.subr.mxu0 0.0
  %192 = vmatpush1.msra.mxu0 0.0
  %193 = vmatprep.subr.mxu0 0.0
  %194 = vmatpush1.msra.mxu0 0.0
  %195 = vmatprep.subr.mxu0 0.0
  %196 = vmatpush1.msra.mxu0 0.0
  %197 = vmatprep.subr.mxu0 0.0
  %198 = vmatpush1.msra.mxu0 0.0
  %199 = vmatprep.subr.mxu0 0.0
  %200 = vmatpush1.msra.mxu0 0.0
  %201 = vmatprep.subr.mxu0 0.0
  %202 = vmatpush1.msra.mxu0 0.0
  %203 = vmatprep.subr.mxu0 0.0
  %204 = vmatpush1.msra.mxu0 0.0
  %205 = vmatprep.subr.mxu0 0.0
  %206 = vmatpush1.msra.mxu0 0.0
  %207 = vmatprep.subr.mxu0 0.0
  %208 = vmatpush1.msra.mxu0 0.0
  %209 = vmatprep.subr.mxu0 0.0
  %210 = vmatpush1.msra.mxu0 0.0
  %211 = vmatprep.mubr.f32.mxu0 0.0
  %212 = vmatmul.mubr.f32.gmra.mrb[0].mxu0 %v52
  %v213 = vpop.f32.mrb[0].mxu0
  %v214 = vadd.f32 0.0, %v213
  %v215 = vpop.f32.mrb[0].mxu0
  %216 = vmatprep.mubr.f32.mxu0 0.0
  %217 = vmatmul.mubr.f32.gmra.mrb[0].mxu0 %v55
  %v218 = vpop.f32.mrb[0].mxu0
  %v219 = vadd.f32 0.0, %v218
  %v220 = vpop.f32.mrb[0].mxu0
  %221 = vmatprep.mubr.f32.mxu0 0.0
  %222 = vmatmul.mubr.f32.gmra.mrb[0].mxu0 %v58
  %v223 = vpop.f32.mrb[0].mxu0
  %v224 = vadd.f32 0.0, %v223
  %v225 = vpop.f32.mrb[0].mxu0
  %226 = vmatprep.mubr.f32.mxu0 0.0
  %227 = vmatmul.mubr.f32.gmra.mrb[0].mxu0 %v61
  %v228 = vpop.f32.mrb[0].mxu0
  %v229 = vadd.f32 0.0, %v228
  %v230 = vpop.f32.mrb[0].mxu0
  %231 = vmatprep.mubr.f32.mxu0 0.0
  %232 = vmatmul.mubr.f32.gmra.mrb[0].mxu0 %v64
  %v233 = vpop.f32.mrb[0].mxu0
  %v234 = vadd.f32 0.0, %v233
  %v235 = vpop.f32.mrb[0].mxu0
  %236 = vmatprep.mubr.f32.mxu0 0.0
  %237 = vmatmul.mubr.f32.gmra.mrb[0].mxu0 %v67
  %v238 = vpop.f32.mrb[0].mxu0
  %v239 = vadd.f32 0.0, %v238
  %v240 = vpop.f32.mrb[0].mxu0
  %241 = vmatprep.mubr.f32.mxu0 0.0
  %242 = vmatmul.mubr.f32.gmra.mrb[0].mxu0 %v70
  %v243 = vpop.f32.mrb[0].mxu0
  %v244 = vadd.f32 0.0, %v243
  %v245 = vpop.f32.mrb[0].mxu0
  %246 = vmatprep.mubr.f32.mxu0 0.0
  %247 = vmatmul.mubr.f32.gmra.mrb[0].mxu0 %v73
  %v248 = vpop.f32.mrb[0].mxu0
  %v249 = vadd.f32 0.0, %v248
  %v250 = vpop.f32.mrb[0].mxu0
  %251 = vmatprep.mubr.f32.mxu0 0.0
  %252 = vmatmul.mubr.f32.gmra.mrb[0].mxu0 %v76
  %v253 = vpop.f32.mrb[0].mxu0
  %v254 = vadd.f32 0.0, %v253
  %v255 = vpop.f32.mrb[0].mxu0
  %256 = vmatprep.mubr.f32.mxu0 0.0
  %257 = vmatmul.mubr.f32.gmra.mrb[0].mxu0 %v79
  %v258 = vpop.f32.mrb[0].mxu0
  %v259 = vadd.f32 0.0, %v258
  %v260 = vpop.f32.mrb[0].mxu0
  %261 = vmatprep.mubr.f32.mxu0 0.0
  %262 = vmatmul.mubr.f32.gmra.mrb[0].mxu0 %v82
  %v263 = vpop.f32.mrb[0].mxu0
  %v264 = vadd.f32 0.0, %v263
  %v265 = vpop.f32.mrb[0].mxu0
  %266 = vmatprep.mubr.f32.mxu0 0.0
  %267 = vmatmul.mubr.f32.gmra.mrb[0].mxu0 %v85
  %v268 = vpop.f32.mrb[0].mxu0
  %v269 = vadd.f32 0.0, %v268
  %v270 = vpop.f32.mrb[0].mxu0
  %271 = vmatprep.mubr.f32.mxu0 0.0
  %272 = vmatmul.mubr.f32.gmra.mrb[0].mxu0 %v88
  %v273 = vpop.f32.mrb[0].mxu0
  %v274 = vadd.f32 0.0, %v273
  %v275 = vpop.f32.mrb[0].mxu0
  %276 = vmatprep.mubr.f32.mxu0 0.0
  %277 = vmatmul.mubr.f32.gmra.mrb[0].mxu0 %v91
  %v278 = vpop.f32.mrb[0].mxu0
  %v279 = vadd.f32 0.0, %v278
  %v280 = vpop.f32.mrb[0].mxu0
  %281 = vmatprep.mubr.f32.mxu0 0.0
  %282 = vmatmul.mubr.f32.gmra.mrb[0].mxu0 %v94
  %v283 = vpop.f32.mrb[0].mxu0
  %v284 = vadd.f32 0.0, %v283
  %v285 = vpop.f32.mrb[0].mxu0
  %286 = vmatprep.mubr.f32.mxu0 0.0
  %287 = vmatmul.mubr.f32.gmra.mrb[0].mxu0 %v97
  %v288 = vpop.f32.mrb[0].mxu0
  %v289 = vadd.f32 0.0, %v288
  %v290 = vpop.f32.mrb[0].mxu0
  %291 = vmatprep.mubr.f32.mxu0 0.0
  %292 = vmatmul.mubr.f32.gmra.mrb[0].mxu0 %v100
  %v293 = vpop.f32.mrb[0].mxu0
  %v294 = vadd.f32 0.0, %v293
  %v295 = vpop.f32.mrb[0].mxu0
  %296 = vmatprep.mubr.f32.mxu0 0.0
  %297 = vmatmul.mubr.f32.gmra.mrb[0].mxu0 %v103
  %v298 = vpop.f32.mrb[0].mxu0
  %v299 = vadd.f32 0.0, %v298
  %v300 = vpop.f32.mrb[0].mxu0
  %301 = vmatprep.mubr.f32.mxu0 0.0
  %302 = vmatmul.mubr.f32.gmra.mrb[0].mxu0 %v106
  %v303 = vpop.f32.mrb[0].mxu0
  %v304 = vadd.f32 0.0, %v303
  %v305 = vpop.f32.mrb[0].mxu0
  %306 = vmatprep.mubr.f32.mxu0 0.0
  %307 = vmatmul.mubr.f32.gmra.mrb[0].mxu0 %v109
  %v308 = vpop.f32.mrb[0].mxu0
  %v309 = vadd.f32 0.0, %v308
  %v310 = vpop.f32.mrb[0].mxu0
  %311 = vmatprep.mubr.f32.mxu0 0.0
  %312 = vmatmul.mubr.f32.gmra.mrb[0].mxu0 %v112
  %v313 = vpop.f32.mrb[0].mxu0
  %v314 = vadd.f32 0.0, %v313
  %v315 = vpop.f32.mrb[0].mxu0
  %316 = vmatprep.mubr.f32.mxu0 0.0
  %317 = vmatmul.mubr.f32.gmra.mrb[0].mxu0 %v115
  %v318 = vpop.f32.mrb[0].mxu0
  %v319 = vadd.f32 0.0, %v318
  %v320 = vpop.f32.mrb[0].mxu0
  %321 = vmatprep.mubr.f32.mxu0 0.0
  %322 = vmatmul.mubr.f32.gmra.mrb[0].mxu0 %v118
  %v323 = vpop.f32.mrb[0].mxu0
  %v324 = vadd.f32 0.0, %v323
  %v325 = vpop.f32.mrb[0].mxu0
  %326 = vmatprep.mubr.f32.mxu0 0.0
  %327 = vmatmul.mubr.f32.gmra.mrb[0].mxu0 %v121
  %v328 = vpop.f32.mrb[0].mxu0
  %v329 = vadd.f32 0.0, %v328
  %v330 = vpop.f32.mrb[0].mxu0
  %331 = vmatprep.mubr.f32.mxu0 0.0
  %332 = vmatmul.mubr.f32.gmra.mrb[0].mxu0 %v124
  %v333 = vpop.f32.mrb[0].mxu0
  %v334 = vadd.f32 0.0, %v333
  %v335 = vpop.f32.mrb[0].mxu0
  %336 = vmatprep.mubr.f32.mxu0 0.0
  %337 = vmatmul.mubr.f32.gmra.mrb[0].mxu0 %v127
  %v338 = vpop.f32.mrb[0].mxu0
  %v339 = vadd.f32 0.0, %v338
  %v340 = vpop.f32.mrb[0].mxu0
  %341 = vmatprep.mubr.f32.mxu0 0.0
  %342 = vmatmul.mubr.f32.gmra.mrb[0].mxu0 %v130
  %v343 = vpop.f32.mrb[0].mxu0
  %v344 = vadd.f32 0.0, %v343
  %v345 = vpop.f32.mrb[0].mxu0
  %346 = vmatprep.mubr.f32.mxu0 0.0
  %347 = vmatmul.mubr.f32.gmra.mrb[0].mxu0 %v133
  %v348 = vpop.f32.mrb[0].mxu0
  %v349 = vadd.f32 0.0, %v348
  %v350 = vpop.f32.mrb[0].mxu0
  %351 = vmatprep.mubr.f32.mxu0 0.0
  %352 = vmatmul.mubr.f32.gmra.mrb[0].mxu0 %v136
  %v353 = vpop.f32.mrb[0].mxu0
  %v354 = vadd.f32 0.0, %v353
  %v355 = vpop.f32.mrb[0].mxu0
  %356 = vmatprep.mubr.f32.mxu0 0.0
  %357 = vmatmul.mubr.f32.gmra.mrb[0].mxu0 %v139
  %v358 = vpop.f32.mrb[0].mxu0
  %v359 = vadd.f32 0.0, %v358
  %v360 = vpop.f32.mrb[0].mxu0
  %361 = vmatprep.mubr.f32.mxu0 0.0
  %362 = vmatmul.mubr.f32.gmra.mrb[0].mxu0 %v142
  %v363 = vpop.f32.mrb[0].mxu0
  %v364 = vadd.f32 0.0, %v363
  %v365 = vpop.f32.mrb[0].mxu0
  %366 = vmatprep.mubr.f32.mxu0 0.0
  %367 = vmatmul.mubr.f32.gmra.mrb[0].mxu0 %v145
  %v368 = vpop.f32.mrb[0].mxu0
  %v369 = vadd.f32 0.0, %v368
  %v370 = vpop.f32.mrb[0].mxu0
  %371 = vdwg.mxu0
  %v372 = vpack.c.bf16 %v219, %v214
  %v373 = vpack.c.bf16 %v229, %v224
  %v374 = vpack.c.bf16 %v239, %v234
  %v375 = vpack.c.bf16 %v249, %v244
  %v376 = vpack.c.bf16 %v259, %v254
  %v377 = vpack.c.bf16 %v269, %v264
  %v378 = vpack.c.bf16 %v279, %v274
  %v379 = vpack.c.bf16 %v289, %v284
  %v380 = vpack.c.bf16 %v299, %v294
  %v381 = vpack.c.bf16 %v309, %v304
  %v382 = vpack.c.bf16 %v319, %v314
  %v383 = vpack.c.bf16 %v329, %v324
  %v384 = vpack.c.bf16 %v339, %v334
  %v385 = vpack.c.bf16 %v349, %v344
  %v386 = vpack.c.bf16 %v359, %v354
  %v387 = vpack.c.bf16 %v369, %v364
  %v404 = vunpack.c.l.b16 %v372
  %v405 = vunpack.c.h.b16 %v372
  %v406 = vunpack.c.l.b16 %v373
  %v407 = vunpack.c.h.b16 %v373
  %v408 = vunpack.c.l.b16 %v374
  %v409 = vunpack.c.h.b16 %v374
  %v410 = vunpack.c.l.b16 %v375
  %v411 = vunpack.c.h.b16 %v375
  %v412 = vunpack.c.l.b16 %v376
  %v413 = vunpack.c.h.b16 %v376
  %v414 = vunpack.c.l.b16 %v377
  %v415 = vunpack.c.h.b16 %v377
  %v416 = vunpack.c.l.b16 %v378
  %v417 = vunpack.c.h.b16 %v378
  %v418 = vunpack.c.l.b16 %v379
  %v419 = vunpack.c.h.b16 %v379
  %v420 = vunpack.c.l.b16 %v380
  %v421 = vunpack.c.h.b16 %v380
  %v422 = vunpack.c.l.b16 %v381
  %v423 = vunpack.c.h.b16 %v381
  %v424 = vunpack.c.l.b16 %v382
  %v425 = vunpack.c.h.b16 %v382
  %v426 = vunpack.c.l.b16 %v383
  %v427 = vunpack.c.h.b16 %v383
  %v428 = vunpack.c.l.b16 %v384
  %v429 = vunpack.c.h.b16 %v384
  %v430 = vunpack.c.l.b16 %v385
  %v431 = vunpack.c.h.b16 %v385
  %v432 = vunpack.c.l.b16 %v386
  %v433 = vunpack.c.h.b16 %v386
  %v434 = vunpack.c.l.b16 %v387
  %v435 = vunpack.c.h.b16 %v387
  %v436 = vpack.c.b16 %v404, %v404
  %v437 = vpack.c.b16 %v405, %v405
  %v438 = vpack.c.b16 %v406, %v406
  %v439 = vpack.c.b16 %v407, %v407
  %v440 = vpack.c.b16 %v408, %v408
  %v441 = vpack.c.b16 %v409, %v409
  %v442 = vpack.c.b16 %v410, %v410
  %v443 = vpack.c.b16 %v411, %v411
  %v444 = vpack.c.b16 %v412, %v412
  %v445 = vpack.c.b16 %v413, %v413
  %v446 = vpack.c.b16 %v414, %v414
  %v447 = vpack.c.b16 %v415, %v415
  %v448 = vpack.c.b16 %v416, %v416
  %v449 = vpack.c.b16 %v417, %v417
  %v450 = vpack.c.b16 %v418, %v418
  %v451 = vpack.c.b16 %v419, %v419
  %v452 = vpack.c.b16 %v420, %v420
  %v453 = vpack.c.b16 %v421, %v421
  %v454 = vpack.c.b16 %v422, %v422
  %v455 = vpack.c.b16 %v423, %v423
  %v456 = vpack.c.b16 %v424, %v424
  %v457 = vpack.c.b16 %v425, %v425
  %v458 = vpack.c.b16 %v426, %v426
  %v459 = vpack.c.b16 %v427, %v427
  %v460 = vpack.c.b16 %v428, %v428
  %v461 = vpack.c.b16 %v429, %v429
  %v462 = vpack.c.b16 %v430, %v430
  %v463 = vpack.c.b16 %v431, %v431
  %v464 = vpack.c.b16 %v432, %v432
  %v465 = vpack.c.b16 %v433, %v433
  %v466 = vpack.c.b16 %v434, %v434
  %v467 = vpack.c.b16 %v435, %v435
  %vm500 = vcmask 519168
  %501 = vst.msk [vmem:[%s2] sm:$0xf] %vm500, %v436
  %502 = vst.msk [vmem:[%s2 + $0x4] sm:$0xf] %vm500, %v437
  %503 = vst.msk [vmem:[%s2 + $0x8] sm:$0xf] %vm500, %v438
  %504 = vst.msk [vmem:[%s2 + $0xc] sm:$0xf] %vm500, %v439
  %505 = vst.msk [vmem:[%s2 + $0x10] sm:$0xf] %vm500, %v440
  %506 = vst.msk [vmem:[%s2 + $0x14] sm:$0xf] %vm500, %v441
  %507 = vst.msk [vmem:[%s2 + $0x18] sm:$0xf] %vm500, %v442
  %508 = vst.msk [vmem:[%s2 + $0x1c] sm:$0xf] %vm500, %v443
  %509 = vst.msk [vmem:[%s2 + $0x20] sm:$0xf] %vm500, %v444
  %510 = vst.msk [vmem:[%s2 + $0x24] sm:$0xf] %vm500, %v445
  %511 = vst.msk [vmem:[%s2 + $0x28] sm:$0xf] %vm500, %v446
  %512 = vst.msk [vmem:[%s2 + $0x2c] sm:$0xf] %vm500, %v447
  %513 = vst.msk [vmem:[%s2 + $0x30] sm:$0xf] %vm500, %v448
  %514 = vst.msk [vmem:[%s2 + $0x34] sm:$0xf] %vm500, %v449
  %515 = vst.msk [vmem:[%s2 + $0x38] sm:$0xf] %vm500, %v450
  %516 = vst.msk [vmem:[%s2 + $0x3c] sm:$0xf] %vm500, %v451
  %517 = vst.msk [vmem:[%s2 + $0x40] sm:$0xf] %vm500, %v452
  %518 = vst.msk [vmem:[%s2 + $0x44] sm:$0xf] %vm500, %v453
  %519 = vst.msk [vmem:[%s2 + $0x48] sm:$0xf] %vm500, %v454
  %520 = vst.msk [vmem:[%s2 + $0x4c] sm:$0xf] %vm500, %v455
  %521 = vst.msk [vmem:[%s2 + $0x50] sm:$0xf] %vm500, %v456
  %522 = vst.msk [vmem:[%s2 + $0x54] sm:$0xf] %vm500, %v457
  %523 = vst.msk [vmem:[%s2 + $0x58] sm:$0xf] %vm500, %v458
  %524 = vst.msk [vmem:[%s2 + $0x5c] sm:$0xf] %vm500, %v459
  %525 = vst.msk [vmem:[%s2 + $0x60] sm:$0xf] %vm500, %v460
  %526 = vst.msk [vmem:[%s2 + $0x64] sm:$0xf] %vm500, %v461
  %527 = vst.msk [vmem:[%s2 + $0x68] sm:$0xf] %vm500, %v462
  %528 = vst.msk [vmem:[%s2 + $0x6c] sm:$0xf] %vm500, %v463
  %529 = vst.msk [vmem:[%s2 + $0x70] sm:$0xf] %vm500, %v464
  %530 = vst.msk [vmem:[%s2 + $0x74] sm:$0xf] %vm500, %v465
  %531 = vst.msk [vmem:[%s2 + $0x78] sm:$0xf] %vm500, %v466
  %532 = vst.msk [vmem:[%s2 + $0x7c] sm:$0xf] %vm500, %v467
  %565 = vrot.lane.b32.xlu0 %v214, 64
  %v566 = vpop.permute.xlu0 %565
  %567 = vrot.lane.b32.xlu0 %v219, 64
  %v568 = vpop.permute.xlu0 %567
  %569 = vrot.lane.b32.xlu0 %v224, 64
  %v570 = vpop.permute.xlu0 %569
  %571 = vrot.lane.b32.xlu0 %v229, 64
  %v572 = vpop.permute.xlu0 %571
  %573 = vrot.lane.b32.xlu0 %v234, 64
  %v574 = vpop.permute.xlu0 %573
  %575 = vrot.lane.b32.xlu0 %v239, 64
  %v576 = vpop.permute.xlu0 %575
  %577 = vrot.lane.b32.xlu0 %v244, 64
  %v578 = vpop.permute.xlu0 %577
  %579 = vrot.lane.b32.xlu0 %v249, 64
  %v580 = vpop.permute.xlu0 %579
  %581 = vrot.lane.b32.xlu0 %v254, 64
  %v582 = vpop.permute.xlu0 %581
  %583 = vrot.lane.b32.xlu0 %v259, 64
  %v584 = vpop.permute.xlu0 %583
  %585 = vrot.lane.b32.xlu0 %v264, 64
  %v586 = vpop.permute.xlu0 %585
  %587 = vrot.lane.b32.xlu0 %v269, 64
  %v588 = vpop.permute.xlu0 %587
  %589 = vrot.lane.b32.xlu0 %v274, 64
  %v590 = vpop.permute.xlu0 %589
  %591 = vrot.lane.b32.xlu0 %v279, 64
  %v592 = vpop.permute.xlu0 %591
  %593 = vrot.lane.b32.xlu0 %v284, 64
  %v594 = vpop.permute.xlu0 %593
  %595 = vrot.lane.b32.xlu0 %v289, 64
  %v596 = vpop.permute.xlu0 %595
  %597 = vrot.lane.b32.xlu0 %v294, 64
  %v598 = vpop.permute.xlu0 %597
  %599 = vrot.lane.b32.xlu0 %v299, 64
  %v600 = vpop.permute.xlu0 %599
  %601 = vrot.lane.b32.xlu0 %v304, 64
  %v602 = vpop.permute.xlu0 %601
  %603 = vrot.lane.b32.xlu0 %v309, 64
  %v604 = vpop.permute.xlu0 %603
  %605 = vrot.lane.b32.xlu0 %v314, 64
  %v606 = vpop.permute.xlu0 %605
  %607 = vrot.lane.b32.xlu0 %v319, 64
  %v608 = vpop.permute.xlu0 %607
  %609 = vrot.lane.b32.xlu0 %v324, 64
  %v610 = vpop.permute.xlu0 %609
  %611 = vrot.lane.b32.xlu0 %v329, 64
  %v612 = vpop.permute.xlu0 %611
  %613 = vrot.lane.b32.xlu0 %v334, 64
  %v614 = vpop.permute.xlu0 %613
  %615 = vrot.lane.b32.xlu0 %v339, 64
  %v616 = vpop.permute.xlu0 %615
  %617 = vrot.lane.b32.xlu0 %v344, 64
  %v618 = vpop.permute.xlu0 %617
  %619 = vrot.lane.b32.xlu0 %v349, 64
  %v620 = vpop.permute.xlu0 %619
  %621 = vrot.lane.b32.xlu0 %v354, 64
  %v622 = vpop.permute.xlu0 %621
  %623 = vrot.lane.b32.xlu0 %v359, 64
  %v624 = vpop.permute.xlu0 %623
  %625 = vrot.lane.b32.xlu0 %v364, 64
  %v626 = vpop.permute.xlu0 %625
  %627 = vrot.lane.b32.xlu0 %v369, 64
  %v628 = vpop.permute.xlu0 %627
  %vm661 = vcmask 31744
  %662 = vst.msk [vmem:[%s3] sm:$0xff] %vm661, %v566
  %663 = vst.msk [vmem:[%s3 + $0x8] sm:$0xff] %vm661, %v568
  %664 = vst.msk [vmem:[%s3 + $0x10] sm:$0xff] %vm661, %v570
  %665 = vst.msk [vmem:[%s3 + $0x18] sm:$0xff] %vm661, %v572
  %666 = vst.msk [vmem:[%s3 + $0x20] sm:$0xff] %vm661, %v574
  %667 = vst.msk [vmem:[%s3 + $0x28] sm:$0xff] %vm661, %v576
  %668 = vst.msk [vmem:[%s3 + $0x30] sm:$0xff] %vm661, %v578
  %669 = vst.msk [vmem:[%s3 + $0x38] sm:$0xff] %vm661, %v580
  %670 = vst.msk [vmem:[%s3 + $0x40] sm:$0xff] %vm661, %v582
  %671 = vst.msk [vmem:[%s3 + $0x48] sm:$0xff] %vm661, %v584
  %672 = vst.msk [vmem:[%s3 + $0x50] sm:$0xff] %vm661, %v586
  %673 = vst.msk [vmem:[%s3 + $0x58] sm:$0xff] %vm661, %v588
  %674 = vst.msk [vmem:[%s3 + $0x60] sm:$0xff] %vm661, %v590
  %675 = vst.msk [vmem:[%s3 + $0x68] sm:$0xff] %vm661, %v592
  %676 = vst.msk [vmem:[%s3 + $0x70] sm:$0xff] %vm661, %v594
  %677 = vst.msk [vmem:[%s3 + $0x78] sm:$0xff] %vm661, %v596
  %678 = vst.msk [vmem:[%s3 + $0x80] sm:$0xff] %vm661, %v598
  %679 = vst.msk [vmem:[%s3 + $0x88] sm:$0xff] %vm661, %v600
  %680 = vst.msk [vmem:[%s3 + $0x90] sm:$0xff] %vm661, %v602
  %681 = vst.msk [vmem:[%s3 + $0x98] sm:$0xff] %vm661, %v604
  %682 = vst.msk [vmem:[%s3 + $0xa0] sm:$0xff] %vm661, %v606
  %683 = vst.msk [vmem:[%s3 + $0xa8] sm:$0xff] %vm661, %v608
  %684 = vst.msk [vmem:[%s3 + $0xb0] sm:$0xff] %vm661, %v610
  %685 = vst.msk [vmem:[%s3 + $0xb8] sm:$0xff] %vm661, %v612
  %686 = vst.msk [vmem:[%s3 + $0xc0] sm:$0xff] %vm661, %v614
  %687 = vst.msk [vmem:[%s3 + $0xc8] sm:$0xff] %vm661, %v616
  %688 = vst.msk [vmem:[%s3 + $0xd0] sm:$0xff] %vm661, %v618
  %689 = vst.msk [vmem:[%s3 + $0xd8] sm:$0xff] %vm661, %v620
  %690 = vst.msk [vmem:[%s3 + $0xe0] sm:$0xff] %vm661, %v622
  %691 = vst.msk [vmem:[%s3 + $0xe8] sm:$0xff] %vm661, %v624
  %692 = vst.msk [vmem:[%s3 + $0xf0] sm:$0xff] %vm661, %v626
  %693 = vst.msk [vmem:[%s3 + $0xf8] sm:$0xff] %vm661, %v628
  %694 = vrot.lane.b32.xlu0 %v214, 60
  %v695 = vpop.permute.xlu0 %694
  %696 = vrot.lane.b32.xlu0 %v219, 60
  %v697 = vpop.permute.xlu0 %696
  %698 = vrot.lane.b32.xlu0 %v224, 60
  %v699 = vpop.permute.xlu0 %698
  %700 = vrot.lane.b32.xlu0 %v229, 60
  %v701 = vpop.permute.xlu0 %700
  %702 = vrot.lane.b32.xlu0 %v234, 60
  %v703 = vpop.permute.xlu0 %702
  %704 = vrot.lane.b32.xlu0 %v239, 60
  %v705 = vpop.permute.xlu0 %704
  %706 = vrot.lane.b32.xlu0 %v244, 60
  %v707 = vpop.permute.xlu0 %706
  %708 = vrot.lane.b32.xlu0 %v249, 60
  %v709 = vpop.permute.xlu0 %708
  %710 = vrot.lane.b32.xlu0 %v254, 60
  %v711 = vpop.permute.xlu0 %710
  %712 = vrot.lane.b32.xlu0 %v259, 60
  %v713 = vpop.permute.xlu0 %712
  %714 = vrot.lane.b32.xlu0 %v264, 60
  %v715 = vpop.permute.xlu0 %714
  %716 = vrot.lane.b32.xlu0 %v269, 60
  %v717 = vpop.permute.xlu0 %716
  %718 = vrot.lane.b32.xlu0 %v274, 60
  %v719 = vpop.permute.xlu0 %718
  %720 = vrot.lane.b32.xlu0 %v279, 60
  %v721 = vpop.permute.xlu0 %720
  %722 = vrot.lane.b32.xlu0 %v284, 60
  %v723 = vpop.permute.xlu0 %722
  %724 = vrot.lane.b32.xlu0 %v289, 60
  %v725 = vpop.permute.xlu0 %724
  %726 = vrot.lane.b32.xlu0 %v294, 60
  %v727 = vpop.permute.xlu0 %726
  %728 = vrot.lane.b32.xlu0 %v299, 60
  %v729 = vpop.permute.xlu0 %728
  %730 = vrot.lane.b32.xlu0 %v304, 60
  %v731 = vpop.permute.xlu0 %730
  %732 = vrot.lane.b32.xlu0 %v309, 60
  %v733 = vpop.permute.xlu0 %732
  %734 = vrot.lane.b32.xlu0 %v314, 60
  %v735 = vpop.permute.xlu0 %734
  %736 = vrot.lane.b32.xlu0 %v319, 60
  %v737 = vpop.permute.xlu0 %736
  %738 = vrot.lane.b32.xlu0 %v324, 60
  %v739 = vpop.permute.xlu0 %738
  %740 = vrot.lane.b32.xlu0 %v329, 60
  %v741 = vpop.permute.xlu0 %740
  %742 = vrot.lane.b32.xlu0 %v334, 60
  %v743 = vpop.permute.xlu0 %742
  %744 = vrot.lane.b32.xlu0 %v339, 60
  %v745 = vpop.permute.xlu0 %744
  %746 = vrot.lane.b32.xlu0 %v344, 60
  %v747 = vpop.permute.xlu0 %746
  %748 = vrot.lane.b32.xlu0 %v349, 60
  %v749 = vpop.permute.xlu0 %748
  %750 = vrot.lane.b32.xlu0 %v354, 60
  %v751 = vpop.permute.xlu0 %750
  %752 = vrot.lane.b32.xlu0 %v359, 60
  %v753 = vpop.permute.xlu0 %752
  %754 = vrot.lane.b32.xlu0 %v364, 60
  %v755 = vpop.permute.xlu0 %754
  %756 = vrot.lane.b32.xlu0 %v369, 60
  %v757 = vpop.permute.xlu0 %756
  %790 = vst.msk [vmem:[%s4] sm:$0xff] %vm661, %v695
  %791 = vst.msk [vmem:[%s4 + $0x8] sm:$0xff] %vm661, %v697
  %792 = vst.msk [vmem:[%s4 + $0x10] sm:$0xff] %vm661, %v699
  %793 = vst.msk [vmem:[%s4 + $0x18] sm:$0xff] %vm661, %v701
  %794 = vst.msk [vmem:[%s4 + $0x20] sm:$0xff] %vm661, %v703
  %795 = vst.msk [vmem:[%s4 + $0x28] sm:$0xff] %vm661, %v705
  %796 = vst.msk [vmem:[%s4 + $0x30] sm:$0xff] %vm661, %v707
  %797 = vst.msk [vmem:[%s4 + $0x38] sm:$0xff] %vm661, %v709
  %798 = vst.msk [vmem:[%s4 + $0x40] sm:$0xff] %vm661, %v711
  %799 = vst.msk [vmem:[%s4 + $0x48] sm:$0xff] %vm661, %v713
  %800 = vst.msk [vmem:[%s4 + $0x50] sm:$0xff] %vm661, %v715
  %801 = vst.msk [vmem:[%s4 + $0x58] sm:$0xff] %vm661, %v717
  %802 = vst.msk [vmem:[%s4 + $0x60] sm:$0xff] %vm661, %v719
  %803 = vst.msk [vmem:[%s4 + $0x68] sm:$0xff] %vm661, %v721
  %804 = vst.msk [vmem:[%s4 + $0x70] sm:$0xff] %vm661, %v723
  %805 = vst.msk [vmem:[%s4 + $0x78] sm:$0xff] %vm661, %v725
  %806 = vst.msk [vmem:[%s4 + $0x80] sm:$0xff] %vm661, %v727
  %807 = vst.msk [vmem:[%s4 + $0x88] sm:$0xff] %vm661, %v729
  %808 = vst.msk [vmem:[%s4 + $0x90] sm:$0xff] %vm661, %v731
  %809 = vst.msk [vmem:[%s4 + $0x98] sm:$0xff] %vm661, %v733
  %810 = vst.msk [vmem:[%s4 + $0xa0] sm:$0xff] %vm661, %v735
  %811 = vst.msk [vmem:[%s4 + $0xa8] sm:$0xff] %vm661, %v737
  %812 = vst.msk [vmem:[%s4 + $0xb0] sm:$0xff] %vm661, %v739
  %813 = vst.msk [vmem:[%s4 + $0xb8] sm:$0xff] %vm661, %v741
  %814 = vst.msk [vmem:[%s4 + $0xc0] sm:$0xff] %vm661, %v743
  %815 = vst.msk [vmem:[%s4 + $0xc8] sm:$0xff] %vm661, %v745
  %816 = vst.msk [vmem:[%s4 + $0xd0] sm:$0xff] %vm661, %v747
  %817 = vst.msk [vmem:[%s4 + $0xd8] sm:$0xff] %vm661, %v749
  %818 = vst.msk [vmem:[%s4 + $0xe0] sm:$0xff] %vm661, %v751
  %819 = vst.msk [vmem:[%s4 + $0xe8] sm:$0xff] %vm661, %v753
  %820 = vst.msk [vmem:[%s4 + $0xf0] sm:$0xff] %vm661, %v755
  %821 = vst.msk [vmem:[%s4 + $0xf8] sm:$0xff] %vm661, %v757
  // Predicated region
  $region10: #{gat_forward.4} parent=0 // pred_check
    _
  $region11: #{gat_forward.4} parent=0 // pred_check_branch
    %823 = sbr.rel (0) target = $region13
  $region12: #{gat_forward.4} parent=0 // pred_region
    _
  $region13: #{gat_forward.4} parent=0 // pred_fallthru
    _
  // Predicated region
  $region14: #{gat_forward.4} parent=0 // pred_check
    _
  $region15: #{gat_forward.4} parent=0 // pred_check_branch
    %825 = sbr.rel (0) target = $region17
  $region16: #{gat_forward.4} parent=0 // pred_region
    _
  $region17: #{gat_forward.4} parent=0 // pred_fallthru
    _
  // Predicated region
  $region18: #{gat_forward.4} parent=0 // pred_check
    _
  $region19: #{gat_forward.4} parent=0 // pred_check_branch
    %827 = sbr.rel (0) target = $region21
  $region20: #{gat_forward.4} parent=0 // pred_region
    _
  $region21: #{gat_forward.4} parent=0 // pred_fallthru
    _
  // Predicated region
  $region22: #{gat_forward.4} parent=0 // pred_check
    _
  $region23: #{gat_forward.4} parent=0 // pred_check_branch
    %829 = sbr.rel (0) target = $region25
  $region24: #{gat_forward.4} parent=0 // pred_region
    _
  $region25: #{gat_forward.4} parent=0 // pred_fallthru
    _
  // Predicated region
  $region26: #{gat_forward.4} parent=0 // pred_check
    _
  $region27: #{gat_forward.4} parent=0 // pred_check_branch
    %831 = sbr.rel (0) target = $region29
  $region28: #{gat_forward.4} parent=0 // pred_region
    _
  $region29: #{gat_forward.4} parent=0 // pred_fallthru
    _
  // Predicated region
  $region30: #{gat_forward.4} parent=0 // pred_check
    _
  $region31: #{gat_forward.4} parent=0 // pred_check_branch
    %833 = sbr.rel (0) target = $region33
  $region32: #{gat_forward.4} parent=0 // pred_region
    _
  $region33: #{gat_forward.4} parent=0 // pred_fallthru
    _

// kernel: gat_forward.6
$region0: #{gat_forward.6}
  #allocation0 [shape = 'u32[]', space=smem, size = 0x4, offset = 0x4, fixed_abs, tag = 'smem constant byte address 0x4 - core index']
  #allocation1 [shape = 'u32[144,128]{1,0:T(1,128)}', space=vmem, size = 0x12000, scoped, tag = 'internal scratch']
  %s0 = inlined_call_operand.vmem [shape: f32[256,64], index: 0, kind: input, shape index: {}]
  %s1 = inlined_call_operand.vmem [shape: f32[64,10], index: 1, kind: input, shape index: {}]
  %s2 = inlined_call_operand.vmem [shape: bf16[256,8], index: 2, kind: output, shape index: {0}]
  %s3 = inlined_call_operand.vmem [shape: f32[256,1], index: 3, kind: output, shape index: {1}]
  %s4 = inlined_call_operand.vmem [shape: f32[256,1], index: 4, kind: output, shape index: {2}]
  %5 = xla_tuple %s2, %s3, %s4
  %s6 = sld [smem:[#allocation0]]
  $region34: #{gat_forward.6} parent=0
    _
  %s8 = ssub.s32 1, %s6
  %s9 = scalar_select 0, %s8, %s6
  // Predicated region
  $region2: #{gat_forward.6} parent=0 // pred_check
    _
  $region3: #{gat_forward.6} parent=0 // pred_check_branch
    %11 = sbr.rel (0) target = $region5
  $region4: #{gat_forward.6} parent=0 // pred_region
    _
  $region5: #{gat_forward.6} parent=0 // pred_fallthru
    _
  // Predicated region
  $region6: #{gat_forward.6} parent=0 // pred_check
    _
  $region7: #{gat_forward.6} parent=0 // pred_check_branch
    %13 = sbr.rel (0) target = $region9
  $region8: #{gat_forward.6} parent=0 // pred_region
    _
  $region9: #{gat_forward.6} parent=0 // pred_fallthru
    _
  %v14 = vld [vmem:[%s0] sm:$0xff]
  %v15 = vld [vmem:[%s0 + $0x8] sm:$0xff]
  %v16 = vld [vmem:[%s0 + $0x10] sm:$0xff]
  %v17 = vld [vmem:[%s0 + $0x18] sm:$0xff]
  %v18 = vld [vmem:[%s0 + $0x20] sm:$0xff]
  %v19 = vld [vmem:[%s0 + $0x28] sm:$0xff]
  %v20 = vld [vmem:[%s0 + $0x30] sm:$0xff]
  %v21 = vld [vmem:[%s0 + $0x38] sm:$0xff]
  %v22 = vld [vmem:[%s0 + $0x40] sm:$0xff]
  %v23 = vld [vmem:[%s0 + $0x48] sm:$0xff]
  %v24 = vld [vmem:[%s0 + $0x50] sm:$0xff]
  %v25 = vld [vmem:[%s0 + $0x58] sm:$0xff]
  %v26 = vld [vmem:[%s0 + $0x60] sm:$0xff]
  %v27 = vld [vmem:[%s0 + $0x68] sm:$0xff]
  %v28 = vld [vmem:[%s0 + $0x70] sm:$0xff]
  %v29 = vld [vmem:[%s0 + $0x78] sm:$0xff]
  %v30 = vld [vmem:[%s0 + $0x80] sm:$0xff]
  %v31 = vld [vmem:[%s0 + $0x88] sm:$0xff]
  %v32 = vld [vmem:[%s0 + $0x90] sm:$0xff]
  %v33 = vld [vmem:[%s0 + $0x98] sm:$0xff]
  %v34 = vld [vmem:[%s0 + $0xa0] sm:$0xff]
  %v35 = vld [vmem:[%s0 + $0xa8] sm:$0xff]
  %v36 = vld [vmem:[%s0 + $0xb0] sm:$0xff]
  %v37 = vld [vmem:[%s0 + $0xb8] sm:$0xff]
  %v38 = vld [vmem:[%s0 + $0xc0] sm:$0xff]
  %v39 = vld [vmem:[%s0 + $0xc8] sm:$0xff]
  %v40 = vld [vmem:[%s0 + $0xd0] sm:$0xff]
  %v41 = vld [vmem:[%s0 + $0xd8] sm:$0xff]
  %v42 = vld [vmem:[%s0 + $0xe0] sm:$0xff]
  %v43 = vld [vmem:[%s0 + $0xe8] sm:$0xff]
  %v44 = vld [vmem:[%s0 + $0xf0] sm:$0xff]
  %v45 = vld [vmem:[%s0 + $0xf8] sm:$0xff]
  %v46 = vld [vmem:[%s1] sm:$0xff]
  %v47 = vld [vmem:[%s1 + $0x8] sm:$0xff]
  %v48 = vld [vmem:[%s1 + $0x10] sm:$0xff]
  %v49 = vld [vmem:[%s1 + $0x18] sm:$0xff]
  %v50 = vld [vmem:[%s1 + $0x20] sm:$0xff]
  %v51 = vld [vmem:[%s1 + $0x28] sm:$0xff]
  %v52 = vld [vmem:[%s1 + $0x30] sm:$0xff]
  %v53 = vld [vmem:[%s1 + $0x38] sm:$0xff]
  %vm54 = vcmask 523264
  %v56 = vsel %vm54, %v14, 0
  %v59 = vsel %vm54, %v15, 0
  %v62 = vsel %vm54, %v16, 0
  %v65 = vsel %vm54, %v17, 0
  %v68 = vsel %vm54, %v18, 0
  %v71 = vsel %vm54, %v19, 0
  %v74 = vsel %vm54, %v20, 0
  %v77 = vsel %vm54, %v21, 0
  %v80 = vsel %vm54, %v22, 0
  %v83 = vsel %vm54, %v23, 0
  %v86 = vsel %vm54, %v24, 0
  %v89 = vsel %vm54, %v25, 0
  %v92 = vsel %vm54, %v26, 0
  %v95 = vsel %vm54, %v27, 0
  %v98 = vsel %vm54, %v28, 0
  %v101 = vsel %vm54, %v29, 0
  %v104 = vsel %vm54, %v30, 0
  %v107 = vsel %vm54, %v31, 0
  %v110 = vsel %vm54, %v32, 0
  %v113 = vsel %vm54, %v33, 0
  %v116 = vsel %vm54, %v34, 0
  %v119 = vsel %vm54, %v35, 0
  %v122 = vsel %vm54, %v36, 0
  %v125 = vsel %vm54, %v37, 0
  %v128 = vsel %vm54, %v38, 0
  %v131 = vsel %vm54, %v39, 0
  %v134 = vsel %vm54, %v40, 0
  %v137 = vsel %vm54, %v41, 0
  %v140 = vsel %vm54, %v42, 0
  %v143 = vsel %vm54, %v43, 0
  %v146 = vsel %vm54, %v44, 0
  %v149 = vsel %vm54, %v45, 0
  %151 = vmatprep.subr.mxu0 0.0
  %152 = vmatpush1.msra.mxu0 %v46
  %153 = vmatprep.subr.mxu0 0.0
  %154 = vmatpush1.msra.mxu0 %v47
  %155 = vmatprep.subr.mxu0 0.0
  %156 = vmatpush1.msra.mxu0 %v48
  %157 = vmatprep.subr.mxu0 0.0
  %158 = vmatpush1.msra.mxu0 %v49
  %159 = vmatprep.subr.mxu0 0.0
  %160 = vmatpush1.msra.mxu0 %v50
  %161 = vmatprep.subr.mxu0 0.0
  %162 = vmatpush1.msra.mxu0 %v51
  %163 = vmatprep.subr.mxu0 0.0
  %164 = vmatpush1.msra.mxu0 %v52
  %165 = vmatprep.subr.mxu0 0.0
  %166 = vmatpush1.msra.mxu0 %v53
  %167 = vmatprep.subr.mxu0 0.0
  %168 = vmatpush1.msra.mxu0 0.0
  %169 = vmatprep.subr.mxu0 0.0
  %170 = vmatpush1.msra.mxu0 0.0
  %171 = vmatprep.subr.mxu0 0.0
  %172 = vmatpush1.msra.mxu0 0.0
  %173 = vmatprep.subr.mxu0 0.0
  %174 = vmatpush1.msra.mxu0 0.0
  %175 = vmatprep.subr.mxu0 0.0
  %176 = vmatpush1.msra.mxu0 0.0
  %177 = vmatprep.subr.mxu0 0.0
  %178 = vmatpush1.msra.mxu0 0.0
  %179 = vmatprep.subr.mxu0 0.0
  %180 = vmatpush1.msra.mxu0 0.0
  %181 = vmatprep.subr.mxu0 0.0
  %182 = vmatpush1.msra.mxu0 0.0
  %183 = vmatprep.subr.mxu0 0.0
  %184 = vmatpush1.msra.mxu0 0.0
  %185 = vmatprep.subr.mxu0 0.0
  %186 = vmatpush1.msra.mxu0 0.0
  %187 = vmatprep.subr.mxu0 0.0
  %188 = vmatpush1.msra.mxu0 0.0
  %189 = vmatprep.subr.mxu0 0.0
  %190 = vmatpush1.msra.mxu0 0.0
  %191 = vmatprep.subr.mxu0 0.0
  %192 = vmatpush1.msra.mxu0 0.0
  %193 = vmatprep.subr.mxu0 0.0
  %194 = vmatpush1.msra.mxu0 0.0
  %195 = vmatprep.subr.mxu0 0.0
  %196 = vmatpush1.msra.mxu0 0.0
  %197 = vmatprep.subr.mxu0 0.0
  %198 = vmatpush1.msra.mxu0 0.0
  %199 = vmatprep.subr.mxu0 0.0
  %200 = vmatpush1.msra.mxu0 0.0
  %201 = vmatprep.subr.mxu0 0.0
  %202 = vmatpush1.msra.mxu0 0.0
  %203 = vmatprep.subr.mxu0 0.0
  %204 = vmatpush1.msra.mxu0 0.0
  %205 = vmatprep.subr.mxu0 0.0
  %206 = vmatpush1.msra.mxu0 0.0
  %207 = vmatprep.subr.mxu0 0.0
  %208 = vmatpush1.msra.mxu0 0.0
  %209 = vmatprep.subr.mxu0 0.0
  %210 = vmatpush1.msra.mxu0 0.0
  %211 = vmatprep.subr.mxu0 0.0
  %212 = vmatpush1.msra.mxu0 0.0
  %213 = vmatprep.subr.mxu0 0.0
  %214 = vmatpush1.msra.mxu0 0.0
  %215 = vmatprep.mubr.f32.mxu0 0.0
  %216 = vmatmul.mubr.f32.gmra.mrb[0].mxu0 %v56
  %v217 = vpop.f32.mrb[0].mxu0
  %v218 = vadd.f32 0.0, %v217
  %v219 = vpop.f32.mrb[0].mxu0
  %220 = vmatprep.mubr.f32.mxu0 0.0
  %221 = vmatmul.mubr.f32.gmra.mrb[0].mxu0 %v59
  %v222 = vpop.f32.mrb[0].mxu0
  %v223 = vadd.f32 0.0, %v222
  %v224 = vpop.f32.mrb[0].mxu0
  %225 = vmatprep.mubr.f32.mxu0 0.0
  %226 = vmatmul.mubr.f32.gmra.mrb[0].mxu0 %v62
  %v227 = vpop.f32.mrb[0].mxu0
  %v228 = vadd.f32 0.0, %v227
  %v229 = vpop.f32.mrb[0].mxu0
  %230 = vmatprep.mubr.f32.mxu0 0.0
  %231 = vmatmul.mubr.f32.gmra.mrb[0].mxu0 %v65
  %v232 = vpop.f32.mrb[0].mxu0
  %v233 = vadd.f32 0.0, %v232
  %v234 = vpop.f32.mrb[0].mxu0
  %235 = vmatprep.mubr.f32.mxu0 0.0
  %236 = vmatmul.mubr.f32.gmra.mrb[0].mxu0 %v68
  %v237 = vpop.f32.mrb[0].mxu0
  %v238 = vadd.f32 0.0, %v237
  %v239 = vpop.f32.mrb[0].mxu0
  %240 = vmatprep.mubr.f32.mxu0 0.0
  %241 = vmatmul.mubr.f32.gmra.mrb[0].mxu0 %v71
  %v242 = vpop.f32.mrb[0].mxu0
  %v243 = vadd.f32 0.0, %v242
  %v244 = vpop.f32.mrb[0].mxu0
  %245 = vmatprep.mubr.f32.mxu0 0.0
  %246 = vmatmul.mubr.f32.gmra.mrb[0].mxu0 %v74
  %v247 = vpop.f32.mrb[0].mxu0
  %v248 = vadd.f32 0.0, %v247
  %v249 = vpop.f32.mrb[0].mxu0
  %250 = vmatprep.mubr.f32.mxu0 0.0
  %251 = vmatmul.mubr.f32.gmra.mrb[0].mxu0 %v77
  %v252 = vpop.f32.mrb[0].mxu0
  %v253 = vadd.f32 0.0, %v252
  %v254 = vpop.f32.mrb[0].mxu0
  %255 = vmatprep.mubr.f32.mxu0 0.0
  %256 = vmatmul.mubr.f32.gmra.mrb[0].mxu0 %v80
  %v257 = vpop.f32.mrb[0].mxu0
  %v258 = vadd.f32 0.0, %v257
  %v259 = vpop.f32.mrb[0].mxu0
  %260 = vmatprep.mubr.f32.mxu0 0.0
  %261 = vmatmul.mubr.f32.gmra.mrb[0].mxu0 %v83
  %v262 = vpop.f32.mrb[0].mxu0
  %v263 = vadd.f32 0.0, %v262
  %v264 = vpop.f32.mrb[0].mxu0
  %265 = vmatprep.mubr.f32.mxu0 0.0
  %266 = vmatmul.mubr.f32.gmra.mrb[0].mxu0 %v86
  %v267 = vpop.f32.mrb[0].mxu0
  %v268 = vadd.f32 0.0, %v267
  %v269 = vpop.f32.mrb[0].mxu0
  %270 = vmatprep.mubr.f32.mxu0 0.0
  %271 = vmatmul.mubr.f32.gmra.mrb[0].mxu0 %v89
  %v272 = vpop.f32.mrb[0].mxu0
  %v273 = vadd.f32 0.0, %v272
  %v274 = vpop.f32.mrb[0].mxu0
  %275 = vmatprep.mubr.f32.mxu0 0.0
  %276 = vmatmul.mubr.f32.gmra.mrb[0].mxu0 %v92
  %v277 = vpop.f32.mrb[0].mxu0
  %v278 = vadd.f32 0.0, %v277
  %v279 = vpop.f32.mrb[0].mxu0
  %280 = vmatprep.mubr.f32.mxu0 0.0
  %281 = vmatmul.mubr.f32.gmra.mrb[0].mxu0 %v95
  %v282 = vpop.f32.mrb[0].mxu0
  %v283 = vadd.f32 0.0, %v282
  %v284 = vpop.f32.mrb[0].mxu0
  %285 = vmatprep.mubr.f32.mxu0 0.0
  %286 = vmatmul.mubr.f32.gmra.mrb[0].mxu0 %v98
  %v287 = vpop.f32.mrb[0].mxu0
  %v288 = vadd.f32 0.0, %v287
  %v289 = vpop.f32.mrb[0].mxu0
  %290 = vmatprep.mubr.f32.mxu0 0.0
  %291 = vmatmul.mubr.f32.gmra.mrb[0].mxu0 %v101
  %v292 = vpop.f32.mrb[0].mxu0
  %v293 = vadd.f32 0.0, %v292
  %v294 = vpop.f32.mrb[0].mxu0
  %295 = vmatprep.mubr.f32.mxu0 0.0
  %296 = vmatmul.mubr.f32.gmra.mrb[0].mxu0 %v104
  %v297 = vpop.f32.mrb[0].mxu0
  %v298 = vadd.f32 0.0, %v297
  %v299 = vpop.f32.mrb[0].mxu0
  %300 = vmatprep.mubr.f32.mxu0 0.0
  %301 = vmatmul.mubr.f32.gmra.mrb[0].mxu0 %v107
  %v302 = vpop.f32.mrb[0].mxu0
  %v303 = vadd.f32 0.0, %v302
  %v304 = vpop.f32.mrb[0].mxu0
  %305 = vmatprep.mubr.f32.mxu0 0.0
  %306 = vmatmul.mubr.f32.gmra.mrb[0].mxu0 %v110
  %v307 = vpop.f32.mrb[0].mxu0
  %v308 = vadd.f32 0.0, %v307
  %v309 = vpop.f32.mrb[0].mxu0
  %310 = vmatprep.mubr.f32.mxu0 0.0
  %311 = vmatmul.mubr.f32.gmra.mrb[0].mxu0 %v113
  %v312 = vpop.f32.mrb[0].mxu0
  %v313 = vadd.f32 0.0, %v312
  %v314 = vpop.f32.mrb[0].mxu0
  %315 = vmatprep.mubr.f32.mxu0 0.0
  %316 = vmatmul.mubr.f32.gmra.mrb[0].mxu0 %v116
  %v317 = vpop.f32.mrb[0].mxu0
  %v318 = vadd.f32 0.0, %v317
  %v319 = vpop.f32.mrb[0].mxu0
  %320 = vmatprep.mubr.f32.mxu0 0.0
  %321 = vmatmul.mubr.f32.gmra.mrb[0].mxu0 %v119
  %v322 = vpop.f32.mrb[0].mxu0
  %v323 = vadd.f32 0.0, %v322
  %v324 = vpop.f32.mrb[0].mxu0
  %325 = vmatprep.mubr.f32.mxu0 0.0
  %326 = vmatmul.mubr.f32.gmra.mrb[0].mxu0 %v122
  %v327 = vpop.f32.mrb[0].mxu0
  %v328 = vadd.f32 0.0, %v327
  %v329 = vpop.f32.mrb[0].mxu0
  %330 = vmatprep.mubr.f32.mxu0 0.0
  %331 = vmatmul.mubr.f32.gmra.mrb[0].mxu0 %v125
  %v332 = vpop.f32.mrb[0].mxu0
  %v333 = vadd.f32 0.0, %v332
  %v334 = vpop.f32.mrb[0].mxu0
  %335 = vmatprep.mubr.f32.mxu0 0.0
  %336 = vmatmul.mubr.f32.gmra.mrb[0].mxu0 %v128
  %v337 = vpop.f32.mrb[0].mxu0
  %v338 = vadd.f32 0.0, %v337
  %v339 = vpop.f32.mrb[0].mxu0
  %340 = vmatprep.mubr.f32.mxu0 0.0
  %341 = vmatmul.mubr.f32.gmra.mrb[0].mxu0 %v131
  %v342 = vpop.f32.mrb[0].mxu0
  %v343 = vadd.f32 0.0, %v342
  %v344 = vpop.f32.mrb[0].mxu0
  %345 = vmatprep.mubr.f32.mxu0 0.0
  %346 = vmatmul.mubr.f32.gmra.mrb[0].mxu0 %v134
  %v347 = vpop.f32.mrb[0].mxu0
  %v348 = vadd.f32 0.0, %v347
  %v349 = vpop.f32.mrb[0].mxu0
  %350 = vmatprep.mubr.f32.mxu0 0.0
  %351 = vmatmul.mubr.f32.gmra.mrb[0].mxu0 %v137
  %v352 = vpop.f32.mrb[0].mxu0
  %v353 = vadd.f32 0.0, %v352
  %v354 = vpop.f32.mrb[0].mxu0
  %355 = vmatprep.mubr.f32.mxu0 0.0
  %356 = vmatmul.mubr.f32.gmra.mrb[0].mxu0 %v140
  %v357 = vpop.f32.mrb[0].mxu0
  %v358 = vadd.f32 0.0, %v357
  %v359 = vpop.f32.mrb[0].mxu0
  %360 = vmatprep.mubr.f32.mxu0 0.0
  %361 = vmatmul.mubr.f32.gmra.mrb[0].mxu0 %v143
  %v362 = vpop.f32.mrb[0].mxu0
  %v363 = vadd.f32 0.0, %v362
  %v364 = vpop.f32.mrb[0].mxu0
  %365 = vmatprep.mubr.f32.mxu0 0.0
  %366 = vmatmul.mubr.f32.gmra.mrb[0].mxu0 %v146
  %v367 = vpop.f32.mrb[0].mxu0
  %v368 = vadd.f32 0.0, %v367
  %v369 = vpop.f32.mrb[0].mxu0
  %370 = vmatprep.mubr.f32.mxu0 0.0
  %371 = vmatmul.mubr.f32.gmra.mrb[0].mxu0 %v149
  %v372 = vpop.f32.mrb[0].mxu0
  %v373 = vadd.f32 0.0, %v372
  %v374 = vpop.f32.mrb[0].mxu0
  %375 = vdwg.mxu0
  %v376 = vpack.c.bf16 %v223, %v218
  %v377 = vpack.c.bf16 %v233, %v228
  %v378 = vpack.c.bf16 %v243, %v238
  %v379 = vpack.c.bf16 %v253, %v248
  %v380 = vpack.c.bf16 %v263, %v258
  %v381 = vpack.c.bf16 %v273, %v268
  %v382 = vpack.c.bf16 %v283, %v278
  %v383 = vpack.c.bf16 %v293, %v288
  %v384 = vpack.c.bf16 %v303, %v298
  %v385 = vpack.c.bf16 %v313, %v308
  %v386 = vpack.c.bf16 %v323, %v318
  %v387 = vpack.c.bf16 %v333, %v328
  %v388 = vpack.c.bf16 %v343, %v338
  %v389 = vpack.c.bf16 %v353, %v348
  %v390 = vpack.c.bf16 %v363, %v358
  %v391 = vpack.c.bf16 %v373, %v368
  %v408 = vunpack.c.l.b16 %v376
  %v409 = vunpack.c.h.b16 %v376
  %v410 = vunpack.c.l.b16 %v377
  %v411 = vunpack.c.h.b16 %v377
  %v412 = vunpack.c.l.b16 %v378
  %v413 = vunpack.c.h.b16 %v378
  %v414 = vunpack.c.l.b16 %v379
  %v415 = vunpack.c.h.b16 %v379
  %v416 = vunpack.c.l.b16 %v380
  %v417 = vunpack.c.h.b16 %v380
  %v418 = vunpack.c.l.b16 %v381
  %v419 = vunpack.c.h.b16 %v381
  %v420 = vunpack.c.l.b16 %v382
  %v421 = vunpack.c.h.b16 %v382
  %v422 = vunpack.c.l.b16 %v383
  %v423 = vunpack.c.h.b16 %v383
  %v424 = vunpack.c.l.b16 %v384
  %v425 = vunpack.c.h.b16 %v384
  %v426 = vunpack.c.l.b16 %v385
  %v427 = vunpack.c.h.b16 %v385
  %v428 = vunpack.c.l.b16 %v386
  %v429 = vunpack.c.h.b16 %v386
  %v430 = vunpack.c.l.b16 %v387
  %v431 = vunpack.c.h.b16 %v387
  %v432 = vunpack.c.l.b16 %v388
  %v433 = vunpack.c.h.b16 %v388
  %v434 = vunpack.c.l.b16 %v389
  %v435 = vunpack.c.h.b16 %v389
  %v436 = vunpack.c.l.b16 %v390
  %v437 = vunpack.c.h.b16 %v390
  %v438 = vunpack.c.l.b16 %v391
  %v439 = vunpack.c.h.b16 %v391
  %v440 = vpack.c.b16 %v408, %v408
  %v441 = vpack.c.b16 %v409, %v409
  %v442 = vpack.c.b16 %v410, %v410
  %v443 = vpack.c.b16 %v411, %v411
  %v444 = vpack.c.b16 %v412, %v412
  %v445 = vpack.c.b16 %v413, %v413
  %v446 = vpack.c.b16 %v414, %v414
  %v447 = vpack.c.b16 %v415, %v415
  %v448 = vpack.c.b16 %v416, %v416
  %v449 = vpack.c.b16 %v417, %v417
  %v450 = vpack.c.b16 %v418, %v418
  %v451 = vpack.c.b16 %v419, %v419
  %v452 = vpack.c.b16 %v420, %v420
  %v453 = vpack.c.b16 %v421, %v421
  %v454 = vpack.c.b16 %v422, %v422
  %v455 = vpack.c.b16 %v423, %v423
  %v456 = vpack.c.b16 %v424, %v424
  %v457 = vpack.c.b16 %v425, %v425
  %v458 = vpack.c.b16 %v426, %v426
  %v459 = vpack.c.b16 %v427, %v427
  %v460 = vpack.c.b16 %v428, %v428
  %v461 = vpack.c.b16 %v429, %v429
  %v462 = vpack.c.b16 %v430, %v430
  %v463 = vpack.c.b16 %v431, %v431
  %v464 = vpack.c.b16 %v432, %v432
  %v465 = vpack.c.b16 %v433, %v433
  %v466 = vpack.c.b16 %v434, %v434
  %v467 = vpack.c.b16 %v435, %v435
  %v468 = vpack.c.b16 %v436, %v436
  %v469 = vpack.c.b16 %v437, %v437
  %v470 = vpack.c.b16 %v438, %v438
  %v471 = vpack.c.b16 %v439, %v439
  %vm504 = vcmask 60416
  %505 = vst.msk [vmem:[%s2] sm:$0xf] %vm504, %v440
  %506 = vst.msk [vmem:[%s2 + $0x4] sm:$0xf] %vm504, %v441
  %507 = vst.msk [vmem:[%s2 + $0x8] sm:$0xf] %vm504, %v442
  %508 = vst.msk [vmem:[%s2 + $0xc] sm:$0xf] %vm504, %v443
  %509 = vst.msk [vmem:[%s2 + $0x10] sm:$0xf] %vm504, %v444
  %510 = vst.msk [vmem:[%s2 + $0x14] sm:$0xf] %vm504, %v445
  %511 = vst.msk [vmem:[%s2 + $0x18] sm:$0xf] %vm504, %v446
  %512 = vst.msk [vmem:[%s2 + $0x1c] sm:$0xf] %vm504, %v447
  %513 = vst.msk [vmem:[%s2 + $0x20] sm:$0xf] %vm504, %v448
  %514 = vst.msk [vmem:[%s2 + $0x24] sm:$0xf] %vm504, %v449
  %515 = vst.msk [vmem:[%s2 + $0x28] sm:$0xf] %vm504, %v450
  %516 = vst.msk [vmem:[%s2 + $0x2c] sm:$0xf] %vm504, %v451
  %517 = vst.msk [vmem:[%s2 + $0x30] sm:$0xf] %vm504, %v452
  %518 = vst.msk [vmem:[%s2 + $0x34] sm:$0xf] %vm504, %v453
  %519 = vst.msk [vmem:[%s2 + $0x38] sm:$0xf] %vm504, %v454
  %520 = vst.msk [vmem:[%s2 + $0x3c] sm:$0xf] %vm504, %v455
  %521 = vst.msk [vmem:[%s2 + $0x40] sm:$0xf] %vm504, %v456
  %522 = vst.msk [vmem:[%s2 + $0x44] sm:$0xf] %vm504, %v457
  %523 = vst.msk [vmem:[%s2 + $0x48] sm:$0xf] %vm504, %v458
  %524 = vst.msk [vmem:[%s2 + $0x4c] sm:$0xf] %vm504, %v459
  %525 = vst.msk [vmem:[%s2 + $0x50] sm:$0xf] %vm504, %v460
  %526 = vst.msk [vmem:[%s2 + $0x54] sm:$0xf] %vm504, %v461
  %527 = vst.msk [vmem:[%s2 + $0x58] sm:$0xf] %vm504, %v462
  %528 = vst.msk [vmem:[%s2 + $0x5c] sm:$0xf] %vm504, %v463
  %529 = vst.msk [vmem:[%s2 + $0x60] sm:$0xf] %vm504, %v464
  %530 = vst.msk [vmem:[%s2 + $0x64] sm:$0xf] %vm504, %v465
  %531 = vst.msk [vmem:[%s2 + $0x68] sm:$0xf] %vm504, %v466
  %532 = vst.msk [vmem:[%s2 + $0x6c] sm:$0xf] %vm504, %v467
  %533 = vst.msk [vmem:[%s2 + $0x70] sm:$0xf] %vm504, %v468
  %534 = vst.msk [vmem:[%s2 + $0x74] sm:$0xf] %vm504, %v469
  %535 = vst.msk [vmem:[%s2 + $0x78] sm:$0xf] %vm504, %v470
  %536 = vst.msk [vmem:[%s2 + $0x7c] sm:$0xf] %vm504, %v471
  %569 = vrot.lane.b32.xlu0 %v218, 120
  %v570 = vpop.permute.xlu0 %569
  %571 = vrot.lane.b32.xlu0 %v223, 120
  %v572 = vpop.permute.xlu0 %571
  %573 = vrot.lane.b32.xlu0 %v228, 120
  %v574 = vpop.permute.xlu0 %573
  %575 = vrot.lane.b32.xlu0 %v233, 120
  %v576 = vpop.permute.xlu0 %575
  %577 = vrot.lane.b32.xlu0 %v238, 120
  %v578 = vpop.permute.xlu0 %577
  %579 = vrot.lane.b32.xlu0 %v243, 120
  %v580 = vpop.permute.xlu0 %579
  %581 = vrot.lane.b32.xlu0 %v248, 120
  %v582 = vpop.permute.xlu0 %581
  %583 = vrot.lane.b32.xlu0 %v253, 120
  %v584 = vpop.permute.xlu0 %583
  %585 = vrot.lane.b32.xlu0 %v258, 120
  %v586 = vpop.permute.xlu0 %585
  %587 = vrot.lane.b32.xlu0 %v263, 120
  %v588 = vpop.permute.xlu0 %587
  %589 = vrot.lane.b32.xlu0 %v268, 120
  %v590 = vpop.permute.xlu0 %589
  %591 = vrot.lane.b32.xlu0 %v273, 120
  %v592 = vpop.permute.xlu0 %591
  %593 = vrot.lane.b32.xlu0 %v278, 120
  %v594 = vpop.permute.xlu0 %593
  %595 = vrot.lane.b32.xlu0 %v283, 120
  %v596 = vpop.permute.xlu0 %595
  %597 = vrot.lane.b32.xlu0 %v288, 120
  %v598 = vpop.permute.xlu0 %597
  %599 = vrot.lane.b32.xlu0 %v293, 120
  %v600 = vpop.permute.xlu0 %599
  %601 = vrot.lane.b32.xlu0 %v298, 120
  %v602 = vpop.permute.xlu0 %601
  %603 = vrot.lane.b32.xlu0 %v303, 120
  %v604 = vpop.permute.xlu0 %603
  %605 = vrot.lane.b32.xlu0 %v308, 120
  %v606 = vpop.permute.xlu0 %605
  %607 = vrot.lane.b32.xlu0 %v313, 120
  %v608 = vpop.permute.xlu0 %607
  %609 = vrot.lane.b32.xlu0 %v318, 120
  %v610 = vpop.permute.xlu0 %609
  %611 = vrot.lane.b32.xlu0 %v323, 120
  %v612 = vpop.permute.xlu0 %611
  %613 = vrot.lane.b32.xlu0 %v328, 120
  %v614 = vpop.permute.xlu0 %613
  %615 = vrot.lane.b32.xlu0 %v333, 120
  %v616 = vpop.permute.xlu0 %615
  %617 = vrot.lane.b32.xlu0 %v338, 120
  %v618 = vpop.permute.xlu0 %617
  %619 = vrot.lane.b32.xlu0 %v343, 120
  %v620 = vpop.permute.xlu0 %619
  %621 = vrot.lane.b32.xlu0 %v348, 120
  %v622 = vpop.permute.xlu0 %621
  %623 = vrot.lane.b32.xlu0 %v353, 120
  %v624 = vpop.permute.xlu0 %623
  %625 = vrot.lane.b32.xlu0 %v358, 120
  %v626 = vpop.permute.xlu0 %625
  %627 = vrot.lane.b32.xlu0 %v363, 120
  %v628 = vpop.permute.xlu0 %627
  %629 = vrot.lane.b32.xlu0 %v368, 120
  %v630 = vpop.permute.xlu0 %629
  %631 = vrot.lane.b32.xlu0 %v373, 120
  %v632 = vpop.permute.xlu0 %631
  %vm665 = vcmask 7168
  %666 = vst.msk [vmem:[%s3] sm:$0xff] %vm665, %v570
  %667 = vst.msk [vmem:[%s3 + $0x8] sm:$0xff] %vm665, %v572
  %668 = vst.msk [vmem:[%s3 + $0x10] sm:$0xff] %vm665, %v574
  %669 = vst.msk [vmem:[%s3 + $0x18] sm:$0xff] %vm665, %v576
  %670 = vst.msk [vmem:[%s3 + $0x20] sm:$0xff] %vm665, %v578
  %671 = vst.msk [vmem:[%s3 + $0x28] sm:$0xff] %vm665, %v580
  %672 = vst.msk [vmem:[%s3 + $0x30] sm:$0xff] %vm665, %v582
  %673 = vst.msk [vmem:[%s3 + $0x38] sm:$0xff] %vm665, %v584
  %674 = vst.msk [vmem:[%s3 + $0x40] sm:$0xff] %vm665, %v586
  %675 = vst.msk [vmem:[%s3 + $0x48] sm:$0xff] %vm665, %v588
  %676 = vst.msk [vmem:[%s3 + $0x50] sm:$0xff] %vm665, %v590
  %677 = vst.msk [vmem:[%s3 + $0x58] sm:$0xff] %vm665, %v592
  %678 = vst.msk [vmem:[%s3 + $0x60] sm:$0xff] %vm665, %v594
  %679 = vst.msk [vmem:[%s3 + $0x68] sm:$0xff] %vm665, %v596
  %680 = vst.msk [vmem:[%s3 + $0x70] sm:$0xff] %vm665, %v598
  %681 = vst.msk [vmem:[%s3 + $0x78] sm:$0xff] %vm665, %v600
  %682 = vst.msk [vmem:[%s3 + $0x80] sm:$0xff] %vm665, %v602
  %683 = vst.msk [vmem:[%s3 + $0x88] sm:$0xff] %vm665, %v604
  %684 = vst.msk [vmem:[%s3 + $0x90] sm:$0xff] %vm665, %v606
  %685 = vst.msk [vmem:[%s3 + $0x98] sm:$0xff] %vm665, %v608
  %686 = vst.msk [vmem:[%s3 + $0xa0] sm:$0xff] %vm665, %v610
  %687 = vst.msk [vmem:[%s3 + $0xa8] sm:$0xff] %vm665, %v612
  %688 = vst.msk [vmem:[%s3 + $0xb0] sm:$0xff] %vm665, %v614
  %689 = vst.msk [vmem:[%s3 + $0xb8] sm:$0xff] %vm665, %v616
  %690 = vst.msk [vmem:[%s3 + $0xc0] sm:$0xff] %vm665, %v618
  %691 = vst.msk [vmem:[%s3 + $0xc8] sm:$0xff] %vm665, %v620
  %692 = vst.msk [vmem:[%s3 + $0xd0] sm:$0xff] %vm665, %v622
  %693 = vst.msk [vmem:[%s3 + $0xd8] sm:$0xff] %vm665, %v624
  %694 = vst.msk [vmem:[%s3 + $0xe0] sm:$0xff] %vm665, %v626
  %695 = vst.msk [vmem:[%s3 + $0xe8] sm:$0xff] %vm665, %v628
  %696 = vst.msk [vmem:[%s3 + $0xf0] sm:$0xff] %vm665, %v630
  %697 = vst.msk [vmem:[%s3 + $0xf8] sm:$0xff] %vm665, %v632
  %698 = vrot.lane.b32.xlu0 %v218, 119
  %v699 = vpop.permute.xlu0 %698
  %700 = vrot.lane.b32.xlu0 %v223, 119
  %v701 = vpop.permute.xlu0 %700
  %702 = vrot.lane.b32.xlu0 %v228, 119
  %v703 = vpop.permute.xlu0 %702
  %704 = vrot.lane.b32.xlu0 %v233, 119
  %v705 = vpop.permute.xlu0 %704
  %706 = vrot.lane.b32.xlu0 %v238, 119
  %v707 = vpop.permute.xlu0 %706
  %708 = vrot.lane.b32.xlu0 %v243, 119
  %v709 = vpop.permute.xlu0 %708
  %710 = vrot.lane.b32.xlu0 %v248, 119
  %v711 = vpop.permute.xlu0 %710
  %712 = vrot.lane.b32.xlu0 %v253, 119
  %v713 = vpop.permute.xlu0 %712
  %714 = vrot.lane.b32.xlu0 %v258, 119
  %v715 = vpop.permute.xlu0 %714
  %716 = vrot.lane.b32.xlu0 %v263, 119
  %v717 = vpop.permute.xlu0 %716
  %718 = vrot.lane.b32.xlu0 %v268, 119
  %v719 = vpop.permute.xlu0 %718
  %720 = vrot.lane.b32.xlu0 %v273, 119
  %v721 = vpop.permute.xlu0 %720
  %722 = vrot.lane.b32.xlu0 %v278, 119
  %v723 = vpop.permute.xlu0 %722
  %724 = vrot.lane.b32.xlu0 %v283, 119
  %v725 = vpop.permute.xlu0 %724
  %726 = vrot.lane.b32.xlu0 %v288, 119
  %v727 = vpop.permute.xlu0 %726
  %728 = vrot.lane.b32.xlu0 %v293, 119
  %v729 = vpop.permute.xlu0 %728
  %730 = vrot.lane.b32.xlu0 %v298, 119
  %v731 = vpop.permute.xlu0 %730
  %732 = vrot.lane.b32.xlu0 %v303, 119
  %v733 = vpop.permute.xlu0 %732
  %734 = vrot.lane.b32.xlu0 %v308, 119
  %v735 = vpop.permute.xlu0 %734
  %736 = vrot.lane.b32.xlu0 %v313, 119
  %v737 = vpop.permute.xlu0 %736
  %738 = vrot.lane.b32.xlu0 %v318, 119
  %v739 = vpop.permute.xlu0 %738
  %740 = vrot.lane.b32.xlu0 %v323, 119
  %v741 = vpop.permute.xlu0 %740
  %742 = vrot.lane.b32.xlu0 %v328, 119
  %v743 = vpop.permute.xlu0 %742
  %744 = vrot.lane.b32.xlu0 %v333, 119
  %v745 = vpop.permute.xlu0 %744
  %746 = vrot.lane.b32.xlu0 %v338, 119
  %v747 = vpop.permute.xlu0 %746
  %748 = vrot.lane.b32.xlu0 %v343, 119
  %v749 = vpop.permute.xlu0 %748
  %750 = vrot.lane.b32.xlu0 %v348, 119
  %v751 = vpop.permute.xlu0 %750
  %752 = vrot.lane.b32.xlu0 %v353, 119
  %v753 = vpop.permute.xlu0 %752
  %754 = vrot.lane.b32.xlu0 %v358, 119
  %v755 = vpop.permute.xlu0 %754
  %756 = vrot.lane.b32.xlu0 %v363, 119
  %v757 = vpop.permute.xlu0 %756
  %758 = vrot.lane.b32.xlu0 %v368, 119
  %v759 = vpop.permute.xlu0 %758
  %760 = vrot.lane.b32.xlu0 %v373, 119
  %v761 = vpop.permute.xlu0 %760
  %794 = vst.msk [vmem:[%s4] sm:$0xff] %vm665, %v699
  %795 = vst.msk [vmem:[%s4 + $0x8] sm:$0xff] %vm665, %v701
  %796 = vst.msk [vmem:[%s4 + $0x10] sm:$0xff] %vm665, %v703
  %797 = vst.msk [vmem:[%s4 + $0x18] sm:$0xff] %vm665, %v705
  %798 = vst.msk [vmem:[%s4 + $0x20] sm:$0xff] %vm665, %v707
  %799 = vst.msk [vmem:[%s4 + $0x28] sm:$0xff] %vm665, %v709
  %800 = vst.msk [vmem:[%s4 + $0x30] sm:$0xff] %vm665, %v711
  %801 = vst.msk [vmem:[%s4 + $0x38] sm:$0xff] %vm665, %v713
  %802 = vst.msk [vmem:[%s4 + $0x40] sm:$0xff] %vm665, %v715
  %803 = vst.msk [vmem:[%s4 + $0x48] sm:$0xff] %vm665, %v717
  %804 = vst.msk [vmem:[%s4 + $0x50] sm:$0xff] %vm665, %v719
  %805 = vst.msk [vmem:[%s4 + $0x58] sm:$0xff] %vm665, %v721
  %806 = vst.msk [vmem:[%s4 + $0x60] sm:$0xff] %vm665, %v723
  %807 = vst.msk [vmem:[%s4 + $0x68] sm:$0xff] %vm665, %v725
  %808 = vst.msk [vmem:[%s4 + $0x70] sm:$0xff] %vm665, %v727
  %809 = vst.msk [vmem:[%s4 + $0x78] sm:$0xff] %vm665, %v729
  %810 = vst.msk [vmem:[%s4 + $0x80] sm:$0xff] %vm665, %v731
  %811 = vst.msk [vmem:[%s4 + $0x88] sm:$0xff] %vm665, %v733
  %812 = vst.msk [vmem:[%s4 + $0x90] sm:$0xff] %vm665, %v735
  %813 = vst.msk [vmem:[%s4 + $0x98] sm:$0xff] %vm665, %v737
  %814 = vst.msk [vmem:[%s4 + $0xa0] sm:$0xff] %vm665, %v739
  %815 = vst.msk [vmem:[%s4 + $0xa8] sm:$0xff] %vm665, %v741
  %816 = vst.msk [vmem:[%s4 + $0xb0] sm:$0xff] %vm665, %v743
  %817 = vst.msk [vmem:[%s4 + $0xb8] sm:$0xff] %vm665, %v745
  %818 = vst.msk [vmem:[%s4 + $0xc0] sm:$0xff] %vm665, %v747
  %819 = vst.msk [vmem:[%s4 + $0xc8] sm:$0xff] %vm665, %v749
  %820 = vst.msk [vmem:[%s4 + $0xd0] sm:$0xff] %vm665, %v751
  %821 = vst.msk [vmem:[%s4 + $0xd8] sm:$0xff] %vm665, %v753
  %822 = vst.msk [vmem:[%s4 + $0xe0] sm:$0xff] %vm665, %v755
  %823 = vst.msk [vmem:[%s4 + $0xe8] sm:$0xff] %vm665, %v757
  %824 = vst.msk [vmem:[%s4 + $0xf0] sm:$0xff] %vm665, %v759
  %825 = vst.msk [vmem:[%s4 + $0xf8] sm:$0xff] %vm665, %v761
  // Predicated region
  $region10: #{gat_forward.6} parent=0 // pred_check
    _
  $region11: #{gat_forward.6} parent=0 // pred_check_branch
    %827 = sbr.rel (0) target = $region13
  $region12: #{gat_forward.6} parent=0 // pred_region
    _
  $region13: #{gat_forward.6} parent=0 // pred_fallthru
    _
  // Predicated region
  $region14: #{gat_forward.6} parent=0 // pred_check
    _
  $region15: #{gat_forward.6} parent=0 // pred_check_branch
    %829 = sbr.rel (0) target = $region17
  $region16: #{gat_forward.6} parent=0 // pred_region
    _
  $region17: #{gat_forward.6} parent=0 // pred_fallthru
    _
  // Predicated region
  $region18: #{gat_forward.6} parent=0 // pred_check
    _
  $region19: #{gat_forward.6} parent=0 // pred_check_branch
    %831 = sbr.rel (0) target = $region21
  $region20: #{gat_forward.6} parent=0 // pred_region
    _
  $region21: #{gat_forward.6} parent=0 // pred_fallthru
    _
  // Predicated region
  $region22: #{gat_forward.6} parent=0 // pred_check
    _
  $region23: #{gat_forward.6} parent=0 // pred_check_branch
    %833 = sbr.rel (0) target = $region25
  $region24: #{gat_forward.6} parent=0 // pred_region
    _
  $region25: #{gat_forward.6} parent=0 // pred_fallthru
    _
  // Predicated region
  $region26: #{gat_forward.6} parent=0 // pred_check
    _
  $region27: #{gat_forward.6} parent=0 // pred_check_branch
    %835 = sbr.rel (0) target = $region29
  $region28: #{gat_forward.6} parent=0 // pred_region
    _
  $region29: #{gat_forward.6} parent=0 // pred_fallthru
    _
  // Predicated region
  $region30: #{gat_forward.6} parent=0 // pred_check
    _
  $region31: #{gat_forward.6} parent=0 // pred_check_branch
    %837 = sbr.rel (0) target = $region33
  $region32: #{gat_forward.6} parent=0 // pred_region
    _
  $region33: #{gat_forward.6} parent=0 // pred_fallthru
    _

// kernel: gat_forward.7
$region0: #{gat_forward.7}
  #allocation0 [shape = 'u32[]', space=smem, size = 0x4, offset = 0x4, fixed_abs, tag = 'smem constant byte address 0x4 - core index']
  #allocation1 [shape = 'u32[144,128]{1,0:T(1,128)}', space=vmem, size = 0x12000, scoped, tag = 'internal scratch']
  #allocation2 [shape = 'f32[128,1]{1,0:T(8,128)}', space=vmem, size = 0x10000, scoped, tag = 'scratch operand']
  #allocation3 [shape = 'f32[128,1]{1,0:T(8,128)}', space=vmem, size = 0x10000, scoped, tag = 'scratch operand']
  #allocation4 [shape = 'f32[128,8]{1,0:T(8,128)}', space=vmem, size = 0x10000, scoped, tag = 'scratch operand']
  %s0 = inlined_call_operand.vmem [shape: bf16[256,8], index: 0, kind: input, shape index: {}]
  %s1 = inlined_call_operand.vmem [shape: f32[1,256], index: 1, kind: input, shape index: {}]
  %s2 = inlined_call_operand.vmem [shape: f32[256,1], index: 2, kind: input, shape index: {}]
  %s3 = inlined_call_operand.vmem [shape: f32[1,8], index: 3, kind: input, shape index: {}]
  %s4 = inlined_call_operand.vmem [shape: s8[256,256], index: 4, kind: input, shape index: {}]
  %s5 = inlined_call_operand.vmem [shape: f32[256,8], index: 5, kind: output, shape index: {}]
  %s6 = sld [smem:[#allocation0]]
  $region99: #{gat_forward.7} parent=0
    _
  %s8 = ssub.s32 1, %s6
  %s9 = scalar_select 0, %s8, %s6
  $region1: #{gat_forward.7} parent=0
    #allocation5 [shape = 'u8[32768]{0}', space=vmem, size = 0x8000, scoped, tag = 'input window, operand 4']
    loop: start=0, step=1, limit=6
    $region2: #{gat_forward.7} parent=1 // loop_pre_header
      _
    $region3: #{gat_forward.7} parent=1 // loop_header
      %s11 = sphi 0, %s15
      %p12 = scmp.ge.s32.totalorder %s11, 6
      %s18 = sphi 0, %s30
      %s19 = sphi 0, %s26
      %s20 = sphi 0, %s18
      %s21 = sphi 0, %s19
      %s22 = sphi 0, %s20
      %s23 = sphi 0, %s21
      %s33 = sphi 0, %s35
      %s36 = sphi 0, %s33
      %s37 = sphi 0, %s36
      %s53 = sphi 0, %s37
      %s59 = sphi 0, %s61
      %s62 = sphi 0, %s59
      %s63 = sphi 0, %s62
      %s79 = sphi 0, %s63
      %s85 = sphi 0, %s87
      %s88 = sphi 0, %s85
      %s89 = sphi 0, %s88
      %s105 = sphi 0, %s89
      %s109 = sphi 0, %s109
      %s111 = sphi 0, %s109
      %s112 = sphi 0, %s111
      %s126 = sphi 0, %s112
      %s134 = sphi 0, %s136
      %s137 = sphi 0, %s134
      %s138 = sphi 0, %s137
      %s154 = sphi 0, %s138
      %s160 = sphi 0, %s162
      %s163 = sphi 0, %s160
      %s164 = sphi 0, %s163
      %s180 = sphi 0, %s164
    $region4: #{gat_forward.7} parent=1 // loop_header_branch
      %14 = sbr.rel (%p12) target = $region8
    $region5: #{gat_forward.7} parent=1 // loop_body
      %s16 = ssub.s32 %s11, 1
      %s17 = ssub.s32 %s11, 2
      %s24 = sadd.s32 1, %s19
      %p25 = scmp.ge.s32.totalorder %s24, 2
      %s26 = scalar_select %p25, 0, %s24
      %s27 = sadd.s32 1, %s18
      %s28 = scalar_select %p25, %s27, %s18
      %p29 = scmp.ge.s32.totalorder %s28, 2
      %s30 = scalar_select %p29, 0, %s28
      %s31 = ssub.s32 %s19, %s26
      %p32 = scmp.eq.s32.totalorder %s31, 0
      %s34 = sadd.s32 %s33, 1
      %s35 = scalar_select %p32, %s33, %s34
      %p38 = pneg %p32
      %p39 = scmp.eq.s32.totalorder %s11, 3
      %p40 = por %p38, %p39
      %p41 = scmp.ne.s32.totalorder %s33, %s36
      %p42 = scmp.eq.s32.totalorder %s11, 0
      %p43 = por %p41, %p42
      %p44 = scmp.ne.s32.totalorder %s33, %s36
      %p45 = scmp.eq.s32.totalorder %s16, 3
      %p46 = por %p44, %p45
      %p47 = scmp.ne.s32.totalorder %s36, %s37
      %p48 = scmp.eq.s32.totalorder %s16, 0
      %p49 = por %p47, %p48
      %p50 = scmp.ne.s32.totalorder %s36, %s37
      %p51 = scmp.eq.s32.totalorder %s17, 3
      %p52 = por %p50, %p51
      %p54 = scmp.ne.s32.totalorder %s37, %s53
      %p55 = scmp.eq.s32.totalorder %s17, 0
      %p56 = por %p54, %p55
      %s57 = ssub.s32 %s19, %s26
      %p58 = scmp.eq.s32.totalorder %s57, 0
      %s60 = sadd.s32 %s59, 1
      %s61 = scalar_select %p58, %s59, %s60
      %p64 = pneg %p58
      %p65 = scmp.eq.s32.totalorder %s11, 3
      %p66 = por %p64, %p65
      %p67 = scmp.ne.s32.totalorder %s59, %s62
      %p68 = scmp.eq.s32.totalorder %s11, 0
      %p69 = por %p67, %p68
      %p70 = scmp.ne.s32.totalorder %s59, %s62
      %p71 = scmp.eq.s32.totalorder %s16, 3
      %p72 = por %p70, %p71
      %p73 = scmp.ne.s32.totalorder %s62, %s63
      %p74 = scmp.eq.s32.totalorder %s16, 0
      %p75 = por %p73, %p74
      %p76 = scmp.ne.s32.totalorder %s62, %s63
      %p77 = scmp.eq.s32.totalorder %s17, 3
      %p78 = por %p76, %p77
      %p80 = scmp.ne.s32.totalorder %s63, %s79
      %p81 = scmp.eq.s32.totalorder %s17, 0
      %p82 = por %p80, %p81
      %s83 = ssub.s32 %s18, %s30
      %p84 = scmp.eq.s32.totalorder %s83, 0
      %s86 = sadd.s32 %s85, 1
      %s87 = scalar_select %p84, %s85, %s86
      %p90 = pneg %p84
      %p91 = scmp.eq.s32.totalorder %s11, 3
      %p92 = por %p90, %p91
      %p93 = scmp.ne.s32.totalorder %s85, %s88
      %p94 = scmp.eq.s32.totalorder %s11, 0
      %p95 = por %p93, %p94
      %p96 = scmp.ne.s32.totalorder %s85, %s88
      %p97 = scmp.eq.s32.totalorder %s16, 3
      %p98 = por %p96, %p97
      %p99 = scmp.ne.s32.totalorder %s88, %s89
      %p100 = scmp.eq.s32.totalorder %s16, 0
      %p101 = por %p99, %p100
      %p102 = scmp.ne.s32.totalorder %s88, %s89
      %p103 = scmp.eq.s32.totalorder %s17, 3
      %p104 = por %p102, %p103
      %p106 = scmp.ne.s32.totalorder %s89, %s105
      %p107 = scmp.eq.s32.totalorder %s17, 0
      %p108 = por %p106, %p107
      %s110 = sadd.s32 %s109, 1
      %p113 = scmp.eq.s32.totalorder %s11, 3
      %p114 = scmp.ne.s32.totalorder %s109, %s111
      %p115 = scmp.eq.s32.totalorder %s11, 0
      %p116 = por %p114, %p115
      %p117 = scmp.ne.s32.totalorder %s109, %s111
      %p118 = scmp.eq.s32.totalorder %s16, 3
      %p119 = por %p117, %p118
      %p120 = scmp.ne.s32.totalorder %s111, %s112
      %p121 = scmp.eq.s32.totalorder %s16, 0
      %p122 = por %p120, %p121
      %p123 = scmp.ne.s32.totalorder %s111, %s112
      %p124 = scmp.eq.s32.totalorder %s17, 3
      %p125 = por %p123, %p124
      %p127 = scmp.ne.s32.totalorder %s112, %s126
      %p128 = scmp.eq.s32.totalorder %s17, 0
      %p129 = por %p127, %p128
      %s130 = ssub.s32 %s18, %s30
      %s131 = ssub.s32 %s19, %s26
      %s132 = sor.u32 %s130, %s131
      %p133 = scmp.eq.s32.totalorder %s132, 0
      %s135 = sadd.s32 %s134, 1
      %s136 = scalar_select %p133, %s134, %s135
      %p139 = pneg %p133
      %p140 = scmp.eq.s32.totalorder %s11, 3
      %p141 = por %p139, %p140
      %p142 = scmp.ne.s32.totalorder %s134, %s137
      %p143 = scmp.eq.s32.totalorder %s11, 0
      %p144 = por %p142, %p143
      %p145 = scmp.ne.s32.totalorder %s134, %s137
      %p146 = scmp.eq.s32.totalorder %s16, 3
      %p147 = por %p145, %p146
      %p148 = scmp.ne.s32.totalorder %s137, %s138
      %p149 = scmp.eq.s32.totalorder %s16, 0
      %p150 = por %p148, %p149
      %p151 = scmp.ne.s32.totalorder %s137, %s138
      %p152 = scmp.eq.s32.totalorder %s17, 3
      %p153 = por %p151, %p152
      %p155 = scmp.ne.s32.totalorder %s138, %s154
      %p156 = scmp.eq.s32.totalorder %s17, 0
      %p157 = por %p155, %p156
      %s158 = ssub.s32 %s18, %s30
      %p159 = scmp.eq.s32.totalorder %s158, 0
      %s161 = sadd.s32 %s160, 1
      %s162 = scalar_select %p159, %s160, %s161
      %p165 = pneg %p159
      %p166 = scmp.eq.s32.totalorder %s11, 3
      %p167 = por %p165, %p166
      %p168 = scmp.ne.s32.totalorder %s160, %s163
      %p169 = scmp.eq.s32.totalorder %s11, 0
      %p170 = por %p168, %p169
      %p171 = scmp.ne.s32.totalorder %s160, %s163
      %p172 = scmp.eq.s32.totalorder %s16, 3
      %p173 = por %p171, %p172
      %p174 = scmp.ne.s32.totalorder %s163, %s164
      %p175 = scmp.eq.s32.totalorder %s16, 0
      %p176 = por %p174, %p175
      %p177 = scmp.ne.s32.totalorder %s163, %s164
      %p178 = scmp.eq.s32.totalorder %s17, 3
      %p179 = por %p177, %p178
      %p181 = scmp.ne.s32.totalorder %s164, %s180
      %p182 = scmp.eq.s32.totalorder %s17, 0
      %p183 = por %p181, %p182
      %p184 = scmp.le.s32.totalorder 1, %s11
      %p185 = scmp.lt.s32.totalorder %s11, 5
      %p186 = pnand %p184, %p185
      %p187 = pneg %p186
      // Predicated region
      $region9: #{gat_forward.7} parent=5 // pred_check
        _
      $region10: #{gat_forward.7} parent=5 // pred_check_branch
        %189 = sbr.rel (%p186) target = $region12
      $region11: #{gat_forward.7} parent=5 // pred_region
        %s190 = ssub.s32 %s11, 1
        // Predicated region
        $region13: #{gat_forward.7} parent=11 // pred_check
          %p191 = pneg %p122
        $region14: #{gat_forward.7} parent=11 // pred_check_branch
          %193 = sbr.rel (%p191) target = $region16
        $region15: #{gat_forward.7} parent=11 // pred_region
          _
        $region16: #{gat_forward.7} parent=11 // pred_fallthru
          _
      $region12: #{gat_forward.7} parent=5 // pred_fallthru
        _
      %p194 = scmp.lt.s32.totalorder %s11, 4
      // Predicated region
      $region17: #{gat_forward.7} parent=5 // pred_check
        %p195 = pneg %p194
      $region18: #{gat_forward.7} parent=5 // pred_check_branch
        %197 = sbr.rel (%p195) target = $region20
      $region19: #{gat_forward.7} parent=5 // pred_region
        // Predicated region
        $region21: #{gat_forward.7} parent=19 // pred_check
          %p198 = pneg %p43
        $region22: #{gat_forward.7} parent=19 // pred_check_branch
          %200 = sbr.rel (%p198) target = $region24
        $region23: #{gat_forward.7} parent=19 // pred_region
          %s201 = smul.u32 16, %s19
          %p202 = scmp.lt.s32.totalorder %s201, 31
          %s203 = scalar_select %p202, %s201, 31
          %s204 = smul.addr %s203, 4
          %s205 = scalar_lea.vmem %s0, %s204
          %s206 = smul.u32 16, %s19
        $region24: #{gat_forward.7} parent=19 // pred_fallthru
          _
        // Predicated region
        $region25: #{gat_forward.7} parent=19 // pred_check
          %p207 = pneg %p69
        $region26: #{gat_forward.7} parent=19 // pred_check_branch
          %209 = sbr.rel (%p207) target = $region28
        $region27: #{gat_forward.7} parent=19 // pred_region
          %p210 = scmp.lt.s32.totalorder %s19, 1
          %s211 = scalar_select %p210, %s19, 1
          %s212 = scalar_lea.vmem %s1, %s211
        $region28: #{gat_forward.7} parent=19 // pred_fallthru
          _
        // Predicated region
        $region29: #{gat_forward.7} parent=19 // pred_check
          %p213 = pneg %p95
        $region30: #{gat_forward.7} parent=19 // pred_check_branch
          %215 = sbr.rel (%p213) target = $region32
        $region31: #{gat_forward.7} parent=19 // pred_region
          %s216 = smul.u32 16, %s18
          %p217 = scmp.lt.s32.totalorder %s216, 31
          %s218 = scalar_select %p217, %s216, 31
          %s219 = smul.addr %s218, 8
          %s220 = scalar_lea.vmem %s2, %s219
          %s221 = smul.u32 16, %s18
        $region32: #{gat_forward.7} parent=19 // pred_fallthru
          _
        // Predicated region
        $region33: #{gat_forward.7} parent=19 // pred_check
          %p222 = pneg %p144
        $region34: #{gat_forward.7} parent=19 // pred_check_branch
          %224 = sbr.rel (%p222) target = $region36
        $region35: #{gat_forward.7} parent=19 // pred_region
          %s225 = sand.u32 %s134, 1
          %s226 = sand.u32 %s134, 1
          %s227 = smul.addr %s226, 32
          %s228 = scalar_lea.vmem [#allocation5], %s227
          %s229 = smul.u32 4, %s18
          %s230 = smul.addr %s229, 2
          %s231 = sadd.s32 %s19, %s230
          %s232 = smul.addr %s231, 8
          %s233 = scalar_lea.vmem %s4, %s232
          // Predicated region
          $region37: #{gat_forward.7} parent=35 // pred_check
            _
          $region38: #{gat_forward.7} parent=35 // pred_check_branch
            %235 = sbr.rel (0) target = $region40
          $region39: #{gat_forward.7} parent=35 // pred_region
            // Predicated region
            $region41: #{gat_forward.7} parent=39 // pred_check
              _
            $region42: #{gat_forward.7} parent=39 // pred_check_branch
              %237 = sbr.rel (0) target = $region44
            $region43: #{gat_forward.7} parent=39 // pred_region
              // Predicated region
              $region56: #{gat_forward.7} parent=43 // pred_check
                _
              $region57: #{gat_forward.7} parent=43 // pred_check_branch
                %258 = sbr.rel (0) target = $region59
              $region58: #{gat_forward.7} parent=43 // pred_region
                loop: start=0, step=1, limit=1
                $region60: #{gat_forward.7} parent=58 // loop_pre_header
                  _
                $region61: #{gat_forward.7} parent=58 // loop_header
                  %s260 = sphi 0, %s264
                  %p261 = scmp.ge.s32.totalorder %s260, 1
                  %s265 = sphi %s233, %s233
                  %s266 = sphi %s228, %s228
                $region62: #{gat_forward.7} parent=58 // loop_header_branch
                  %263 = sbr.rel (%p261) target = $region66
                $region63: #{gat_forward.7} parent=58 // loop_body
                  %v267 = vld [vmem:[%s265] sm:$0xff]
                  %268 = vst [vmem:[%s266] sm:$0xff] %v267
                  %v269 = vld [vmem:[%s265 + $0x10] sm:$0xff]
                  %270 = vst [vmem:[%s266 + $0x8] sm:$0xff] %v269
                  %v271 = vld [vmem:[%s265 + $0x20] sm:$0xff]
                  %272 = vst [vmem:[%s266 + $0x10] sm:$0xff] %v271
                  %v273 = vld [vmem:[%s265 + $0x30] sm:$0xff]
                  %274 = vst [vmem:[%s266 + $0x18] sm:$0xff] %v273
                $region64: #{gat_forward.7} parent=58 // loop_footer
                  %s264 = sadd.s32 1, %s260
                $region65: #{gat_forward.7} parent=58 // loop_footer_branch
                  %259 = sbr.rel target = $region61
                $region66: #{gat_forward.7} parent=58 // loop_exit
                  _
              $region59: #{gat_forward.7} parent=43 // pred_fallthru
                _
              // Predicated region
              $region67: #{gat_forward.7} parent=43 // pred_check
                _
              $region68: #{gat_forward.7} parent=43 // pred_check_branch
                %276 = sbr.rel target = $region70
              $region69: #{gat_forward.7} parent=43 // pred_region
                _
              $region70: #{gat_forward.7} parent=43 // pred_fallthru
                _
            $region44: #{gat_forward.7} parent=39 // pred_fallthru
              _
            // Predicated region
            $region45: #{gat_forward.7} parent=39 // pred_check
              _
            $region46: #{gat_forward.7} parent=39 // pred_check_branch
              %239 = sbr.rel target = $region48
            $region47: #{gat_forward.7} parent=39 // pred_region
              loop: start=0, step=1, limit=1
              $region49: #{gat_forward.7} parent=47 // loop_pre_header
                _
              $region50: #{gat_forward.7} parent=47 // loop_header
                %s242 = sphi 0, %s246
                %p243 = scmp.ge.s32.totalorder %s242, 1
                %s247 = sphi %s233, %s233
                %s248 = sphi %s228, %s228
              $region51: #{gat_forward.7} parent=47 // loop_header_branch
                %245 = sbr.rel (%p243) target = $region55
              $region52: #{gat_forward.7} parent=47 // loop_body
                %v249 = vld [vmem:[%s247] sm:$0xff]
                %250 = vst [vmem:[%s248] sm:$0xff] %v249
                %v251 = vld [vmem:[%s247 + $0x10] sm:$0xff]
                %252 = vst [vmem:[%s248 + $0x8] sm:$0xff] %v251
                %v253 = vld [vmem:[%s247 + $0x20] sm:$0xff]
                %254 = vst [vmem:[%s248 + $0x10] sm:$0xff] %v253
                %v255 = vld [vmem:[%s247 + $0x30] sm:$0xff]
                %256 = vst [vmem:[%s248 + $0x18] sm:$0xff] %v255
              $region53: #{gat_forward.7} parent=47 // loop_footer
                %s246 = sadd.s32 1, %s242
              $region54: #{gat_forward.7} parent=47 // loop_footer_branch
                %241 = sbr.rel target = $region50
              $region55: #{gat_forward.7} parent=47 // loop_exit
                _
            $region48: #{gat_forward.7} parent=39 // pred_fallthru
              _
          $region40: #{gat_forward.7} parent=35 // pred_fallthru
            _
          %277 = vnop
        $region36: #{gat_forward.7} parent=19 // pred_fallthru
          _
      $region20: #{gat_forward.7} parent=5 // pred_fallthru
        _
      %p278 = scmp.le.s32.totalorder 1, %s11
      %p279 = scmp.lt.s32.totalorder %s11, 5
      %p280 = pnand %p278, %p279
      %p281 = pneg %p280
      // Predicated region
      $region71: #{gat_forward.7} parent=5 // pred_check
        _
      $region72: #{gat_forward.7} parent=5 // pred_check_branch
        %283 = sbr.rel (%p280) target = $region74
      $region73: #{gat_forward.7} parent=5 // pred_region
        %s284 = ssub.s32 %s11, 1
        %s285 = sand.u32 %s137, 1
        %s286 = sand.u32 %s137, 1
        %s287 = smul.addr %s286, 32
        %s288 = scalar_lea.vmem [#allocation5], %s287
        // Predicated region
        $region75: #{gat_forward.7} parent=73 // pred_check
          %p289 = pneg %p150
        $region76: #{gat_forward.7} parent=73 // pred_check_branch
          %291 = sbr.rel (%p289) target = $region78
        $region77: #{gat_forward.7} parent=73 // pred_region
          _
        $region78: #{gat_forward.7} parent=73 // pred_fallthru
          _
        %s292 = smul.u32 16, %s21
        %p293 = scmp.lt.s32.totalorder %s292, 31
        %s294 = scalar_select %p293, %s292, 31
        %s295 = smul.addr %s294, 4
        %s296 = scalar_lea.vmem %s0, %s295
        %p297 = pneg %p49
        %p298 = pneg %p46
        %p299 = scmp.lt.s32.totalorder %s21, 1
        %s300 = scalar_select %p299, %s21, 1
        %s301 = scalar_lea.vmem %s1, %s300
        %p302 = pneg %p75
        %p303 = pneg %p72
        %s304 = smul.u32 16, %s20
        %p305 = scmp.lt.s32.totalorder %s304, 31
        %s306 = scalar_select %p305, %s304, 31
        %s307 = smul.addr %s306, 8
        %s308 = scalar_lea.vmem %s2, %s307
        %p309 = pneg %p101
        %p310 = pneg %p98
        %p311 = pneg %p122
        %p312 = pneg %p119
        %s313 = sand.u32 %s137, 1
        %s314 = sand.u32 %s137, 1
        %s315 = smul.addr %s314, 32
        %s316 = scalar_lea.vmem [#allocation5], %s315
        %p317 = pneg %p150
        %p318 = pneg %p147
        %p319 = pneg %p176
        %p320 = pneg %p173
        %s321 = smul.u32 16, %s20
        %p322 = scmp.lt.s32.totalorder %s321, 31
        %s323 = scalar_select %p322, %s321, 31
        %s324 = smul.addr %s323, 8
        %s325 = scalar_lea.vmem %s5, %s324
        %s326 = smul.u32 16, %s21
        %p327 = scmp.lt.s32.totalorder %s326, 31
        %s328 = scalar_select %p327, %s326, 31
        %s329 = smul.addr %s328, 4
        %s330 = scalar_lea.vmem %s0, %s329
        %s331 = smul.u32 16, %s21
        %p332 = scmp.lt.s32.totalorder %s21, 1
        %s333 = scalar_select %p332, %s21, 1
        %s334 = scalar_lea.vmem %s1, %s333
        %s335 = smul.u32 16, %s20
        %p336 = scmp.lt.s32.totalorder %s335, 31
        %s337 = scalar_select %p336, %s335, 31
        %s338 = smul.addr %s337, 8
        %s339 = scalar_lea.vmem %s2, %s338
        %s340 = smul.u32 16, %s20
        %s341 = smul.u32 4, %s20
        %s342 = smul.u32 16, %s20
        %p343 = scmp.lt.s32.totalorder %s342, 31
        %s344 = scalar_select %p343, %s342, 31
        %s345 = smul.addr %s344, 8
        %s346 = scalar_lea.vmem %s5, %s345
        %s347 = smul.u32 16, %s20
        %p351 = scmp.eq.s32.totalorder %s21, 0
        // Predicated region
        $region79: #{gat_forward.7} parent=73 // pred_check
          %p352 = pneg %p351
        $region80: #{gat_forward.7} parent=73 // pred_check_branch
          %354 = sbr.rel (%p352) target = $region82
        $region81: #{gat_forward.7} parent=73 // pred_region
          %vm355 = vcmask 7168
          %356 = vst.msk [vmem:[#allocation2] sm:$0xff] %vm355, -1e+30
          %357 = vst.msk [vmem:[#allocation2 + $0x8] sm:$0xff] %vm355, -1e+30
          %358 = vst.msk [vmem:[#allocation2 + $0x10] sm:$0xff] %vm355, -1e+30
          %359 = vst.msk [vmem:[#allocation2 + $0x18] sm:$0xff] %vm355, -1e+30
          %360 = vst.msk [vmem:[#allocation2 + $0x20] sm:$0xff] %vm355, -1e+30
          %361 = vst.msk [vmem:[#allocation2 + $0x28] sm:$0xff] %vm355, -1e+30
          %362 = vst.msk [vmem:[#allocation2 + $0x30] sm:$0xff] %vm355, -1e+30
          %363 = vst.msk [vmem:[#allocation2 + $0x38] sm:$0xff] %vm355, -1e+30
          %364 = vst.msk [vmem:[#allocation2 + $0x40] sm:$0xff] %vm355, -1e+30
          %365 = vst.msk [vmem:[#allocation2 + $0x48] sm:$0xff] %vm355, -1e+30
          %366 = vst.msk [vmem:[#allocation2 + $0x50] sm:$0xff] %vm355, -1e+30
          %367 = vst.msk [vmem:[#allocation2 + $0x58] sm:$0xff] %vm355, -1e+30
          %368 = vst.msk [vmem:[#allocation2 + $0x60] sm:$0xff] %vm355, -1e+30
          %369 = vst.msk [vmem:[#allocation2 + $0x68] sm:$0xff] %vm355, -1e+30
          %370 = vst.msk [vmem:[#allocation2 + $0x70] sm:$0xff] %vm355, -1e+30
          %371 = vst.msk [vmem:[#allocation2 + $0x78] sm:$0xff] %vm355, -1e+30
          %372 = vst.msk [vmem:[#allocation3] sm:$0xff] %vm355, 0.0
          %373 = vst.msk [vmem:[#allocation3 + $0x8] sm:$0xff] %vm355, 0.0
          %374 = vst.msk [vmem:[#allocation3 + $0x10] sm:$0xff] %vm355, 0.0
          %375 = vst.msk [vmem:[#allocation3 + $0x18] sm:$0xff] %vm355, 0.0
          %376 = vst.msk [vmem:[#allocation3 + $0x20] sm:$0xff] %vm355, 0.0
          %377 = vst.msk [vmem:[#allocation3 + $0x28] sm:$0xff] %vm355, 0.0
          %378 = vst.msk [vmem:[#allocation3 + $0x30] sm:$0xff] %vm355, 0.0
          %379 = vst.msk [vmem:[#allocation3 + $0x38] sm:$0xff] %vm355, 0.0
          %380 = vst.msk [vmem:[#allocation3 + $0x40] sm:$0xff] %vm355, 0.0
          %381 = vst.msk [vmem:[#allocation3 + $0x48] sm:$0xff] %vm355, 0.0
          %382 = vst.msk [vmem:[#allocation3 + $0x50] sm:$0xff] %vm355, 0.0
          %383 = vst.msk [vmem:[#allocation3 + $0x58] sm:$0xff] %vm355, 0.0
          %384 = vst.msk [vmem:[#allocation3 + $0x60] sm:$0xff] %vm355, 0.0
          %385 = vst.msk [vmem:[#allocation3 + $0x68] sm:$0xff] %vm355, 0.0
          %386 = vst.msk [vmem:[#allocation3 + $0x70] sm:$0xff] %vm355, 0.0
          %387 = vst.msk [vmem:[#allocation3 + $0x78] sm:$0xff] %vm355, 0.0
          %vm388 = vcmask 64512
          %389 = vst.msk [vmem:[#allocation4] sm:$0xff] %vm388, 0.0
          %390 = vst.msk [vmem:[#allocation4 + $0x8] sm:$0xff] %vm388, 0.0
          %391 = vst.msk [vmem:[#allocation4 + $0x10] sm:$0xff] %vm388, 0.0
          %392 = vst.msk [vmem:[#allocation4 + $0x18] sm:$0xff] %vm388, 0.0
          %393 = vst.msk [vmem:[#allocation4 + $0x20] sm:$0xff] %vm388, 0.0
          %394 = vst.msk [vmem:[#allocation4 + $0x28] sm:$0xff] %vm388, 0.0
          %395 = vst.msk [vmem:[#allocation4 + $0x30] sm:$0xff] %vm388, 0.0
          %396 = vst.msk [vmem:[#allocation4 + $0x38] sm:$0xff] %vm388, 0.0
          %397 = vst.msk [vmem:[#allocation4 + $0x40] sm:$0xff] %vm388, 0.0
          %398 = vst.msk [vmem:[#allocation4 + $0x48] sm:$0xff] %vm388, 0.0
          %399 = vst.msk [vmem:[#allocation4 + $0x50] sm:$0xff] %vm388, 0.0
          %400 = vst.msk [vmem:[#allocation4 + $0x58] sm:$0xff] %vm388, 0.0
          %401 = vst.msk [vmem:[#allocation4 + $0x60] sm:$0xff] %vm388, 0.0
          %402 = vst.msk [vmem:[#allocation4 + $0x68] sm:$0xff] %vm388, 0.0
          %403 = vst.msk [vmem:[#allocation4 + $0x70] sm:$0xff] %vm388, 0.0
          %404 = vst.msk [vmem:[#allocation4 + $0x78] sm:$0xff] %vm388, 0.0
        $region82: #{gat_forward.7} parent=73 // pred_fallthru
          _
        %v405 = vld [vmem:[%s288] sm:$0xff]
        %v406 = vld [vmem:[%s288 + $0x8] sm:$0xff]
        %v407 = vld [vmem:[%s288 + $0x10] sm:$0xff]
        %v408 = vld [vmem:[%s288 + $0x18] sm:$0xff]
        %vm409 = vnez %v405
        %vm410 = vnez %v406
        %vm411 = vnez %v407
        %vm412 = vnez %v408
        %v413 = vld [vmem:[%s339] sm:$0xff]
        %v414 = vld [vmem:[%s339 + $0x8] sm:$0xff]
        %v415 = vld [vmem:[%s339 + $0x10] sm:$0xff]
        %v416 = vld [vmem:[%s339 + $0x18] sm:$0xff]
        %v417 = vld [vmem:[%s339 + $0x20] sm:$0xff]
        %v418 = vld [vmem:[%s339 + $0x28] sm:$0xff]
        %v419 = vld [vmem:[%s339 + $0x30] sm:$0xff]
        %v420 = vld [vmem:[%s339 + $0x38] sm:$0xff]
        %v421 = vld [vmem:[%s339 + $0x40] sm:$0xff]
        %v422 = vld [vmem:[%s339 + $0x48] sm:$0xff]
        %v423 = vld [vmem:[%s339 + $0x50] sm:$0xff]
        %v424 = vld [vmem:[%s339 + $0x58] sm:$0xff]
        %v425 = vld [vmem:[%s339 + $0x60] sm:$0xff]
        %v426 = vld [vmem:[%s339 + $0x68] sm:$0xff]
        %v427 = vld [vmem:[%s339 + $0x70] sm:$0xff]
        %v428 = vld [vmem:[%s339 + $0x78] sm:$0xff]
        %v429 = vld [vmem:[%s334] sm:$0x1]
        %431 = vset.pattern.permute.xlu0 0
        %432 = vperm.xlu0 %431, %v413
        %v433 = vpop.permute.xlu0 %432
        %436 = vset.pattern.permute.xlu0 0
        %437 = vperm.xlu0 %436, %v414
        %v438 = vpop.permute.xlu0 %437
        %441 = vset.pattern.permute.xlu0 0
        %442 = vperm.xlu0 %441, %v415
        %v443 = vpop.permute.xlu0 %442
        %446 = vset.pattern.permute.xlu0 0
        %447 = vperm.xlu0 %446, %v416
        %v448 = vpop.permute.xlu0 %447
        %451 = vset.pattern.permute.xlu0 0
        %452 = vperm.xlu0 %451, %v417
        %v453 = vpop.permute.xlu0 %452
        %456 = vset.pattern.permute.xlu0 0
        %457 = vperm.xlu0 %456, %v418
        %v458 = vpop.permute.xlu0 %457
        %461 = vset.pattern.permute.xlu0 0
        %462 = vperm.xlu0 %461, %v419
        %v463 = vpop.permute.xlu0 %462
        %466 = vset.pattern.permute.xlu0 0
        %467 = vperm.xlu0 %466, %v420
        %v468 = vpop.permute.xlu0 %467
        %471 = vset.pattern.permute.xlu0 0
        %472 = vperm.xlu0 %471, %v421
        %v473 = vpop.permute.xlu0 %472
        %476 = vset.pattern.permute.xlu0 0
        %477 = vperm.xlu0 %476, %v422
        %v478 = vpop.permute.xlu0 %477
        %481 = vset.pattern.permute.xlu0 0
        %482 = vperm.xlu0 %481, %v423
        %v483 = vpop.permute.xlu0 %482
        %486 = vset.pattern.permute.xlu0 0
        %487 = vperm.xlu0 %486, %v424
        %v488 = vpop.permute.xlu0 %487
        %491 = vset.pattern.permute.xlu0 0
        %492 = vperm.xlu0 %491, %v425
        %v493 = vpop.permute.xlu0 %492
        %496 = vset.pattern.permute.xlu0 0
        %497 = vperm.xlu0 %496, %v426
        %v498 = vpop.permute.xlu0 %497
        %501 = vset.pattern.permute.xlu0 0
        %502 = vperm.xlu0 %501, %v427
        %v503 = vpop.permute.xlu0 %502
        %506 = vset.pattern.permute.xlu0 0
        %507 = vperm.xlu0 %506, %v428
        %v508 = vpop.permute.xlu0 %507
        %v511 = vlaneseq
        %v512 = vshrl.u32 %v511, 7
        %v513 = vsub.s32 0, %v512
        %v514 = vrot.slane %v429, %v513
        %v516 = vadd.f32 %v433, %v514
        %v517 = vadd.f32 %v438, %v514
        %v518 = vadd.f32 %v443, %v514
        %v519 = vadd.f32 %v448, %v514
        %v520 = vadd.f32 %v453, %v514
        %v521 = vadd.f32 %v458, %v514
        %v522 = vadd.f32 %v463, %v514
        %v523 = vadd.f32 %v468, %v514
        %v524 = vadd.f32 %v473, %v514
        %v525 = vadd.f32 %v478, %v514
        %v526 = vadd.f32 %v483, %v514
        %v527 = vadd.f32 %v488, %v514
        %v528 = vadd.f32 %v493, %v514
        %v529 = vadd.f32 %v498, %v514
        %v530 = vadd.f32 %v503, %v514
        %v531 = vadd.f32 %v508, %v514
        %v532 = vmul.f32 %v516, 0.2
        %v533 = vmul.f32 %v517, 0.2
        %v534 = vmul.f32 %v518, 0.2
        %v535 = vmul.f32 %v519, 0.2
        %v536 = vmul.f32 %v520, 0.2
        %v537 = vmul.f32 %v521, 0.2
        %v538 = vmul.f32 %v522, 0.2
        %v539 = vmul.f32 %v523, 0.2
        %v540 = vmul.f32 %v524, 0.2
        %v541 = vmul.f32 %v525, 0.2
        %v542 = vmul.f32 %v526, 0.2
        %v543 = vmul.f32 %v527, 0.2
        %v544 = vmul.f32 %v528, 0.2
        %v545 = vmul.f32 %v529, 0.2
        %v546 = vmul.f32 %v530, 0.2
        %v547 = vmul.f32 %v531, 0.2
        %v548 = vmax.f32 %v516, %v532
        %v549 = vmax.f32 %v517, %v533
        %v550 = vmax.f32 %v518, %v534
        %v551 = vmax.f32 %v519, %v535
        %v552 = vmax.f32 %v520, %v536
        %v553 = vmax.f32 %v521, %v537
        %v554 = vmax.f32 %v522, %v538
        %v555 = vmax.f32 %v523, %v539
        %v556 = vmax.f32 %v524, %v540
        %v557 = vmax.f32 %v525, %v541
        %v558 = vmax.f32 %v526, %v542
        %v559 = vmax.f32 %v527, %v543
        %v560 = vmax.f32 %v528, %v544
        %v561 = vmax.f32 %v529, %v545
        %v562 = vmax.f32 %v530, %v546
        %v563 = vmax.f32 %v531, %v547
        %v564 = vsel %vm409, 16843009, 0
        %v565 = vsel %vm410, 16843009, 0
        %v566 = vsel %vm411, 16843009, 0
        %v567 = vsel %vm412, 16843009, 0
        %v568 = vunpack.c.0.s8 %v564
        %v569 = vunpack.c.1.s8 %v564
        %v570 = vunpack.c.2.s8 %v564
        %v571 = vunpack.c.3.s8 %v564
        %v572 = vunpack.c.0.s8 %v565
        %v573 = vunpack.c.1.s8 %v565
        %v574 = vunpack.c.2.s8 %v565
        %v575 = vunpack.c.3.s8 %v565
        %v576 = vunpack.c.0.s8 %v566
        %v577 = vunpack.c.1.s8 %v566
        %v578 = vunpack.c.2.s8 %v566
        %v579 = vunpack.c.3.s8 %v566
        %v580 = vunpack.c.0.s8 %v567
        %v581 = vunpack.c.1.s8 %v567
        %v582 = vunpack.c.2.s8 %v567
        %v583 = vunpack.c.3.s8 %v567
        %v584 = vpack.c.b16 %v568, %v568
        %v585 = vpack.c.b8 %v584, %v584
        %v586 = vpack.c.b16 %v569, %v569
        %v587 = vpack.c.b8 %v586, %v586
        %v588 = vpack.c.b16 %v570, %v570
        %v589 = vpack.c.b8 %v588, %v588
        %v590 = vpack.c.b16 %v571, %v571
        %v591 = vpack.c.b8 %v590, %v590
        %v592 = vpack.c.b16 %v572, %v572
        %v593 = vpack.c.b8 %v592, %v592
        %v594 = vpack.c.b16 %v573, %v573
        %v595 = vpack.c.b8 %v594, %v594
        %v596 = vpack.c.b16 %v574, %v574
        %v597 = vpack.c.b8 %v596, %v596
        %v598 = vpack.c.b16 %v575, %v575
        %v599 = vpack.c.b8 %v598, %v598
        %v600 = vpack.c.b16 %v576, %v576
        %v601 = vpack.c.b8 %v600, %v600
        %v602 = vpack.c.b16 %v577, %v577
        %v603 = vpack.c.b8 %v602, %v602
        %v604 = vpack.c.b16 %v578, %v578
        %v605 = vpack.c.b8 %v604, %v604
        %v606 = vpack.c.b16 %v579, %v579
        %v607 = vpack.c.b8 %v606, %v606
        %v608 = vpack.c.b16 %v580, %v580
        %v609 = vpack.c.b8 %v608, %v608
        %v610 = vpack.c.b16 %v581, %v581
        %v611 = vpack.c.b8 %v610, %v610
        %v612 = vpack.c.b16 %v582, %v582
        %v613 = vpack.c.b8 %v612, %v612
        %v614 = vpack.c.b16 %v583, %v583
        %v615 = vpack.c.b8 %v614, %v614
        %vm616 = vnez %v585
        %vm617 = vnez %v587
        %vm618 = vnez %v589
        %vm619 = vnez %v591
        %vm620 = vnez %v593
        %vm621 = vnez %v595
        %vm622 = vnez %v597
        %vm623 = vnez %v599
        %vm624 = vnez %v601
        %vm625 = vnez %v603
        %vm626 = vnez %v605
        %vm627 = vnez %v607
        %vm628 = vnez %v609
        %vm629 = vnez %v611
        %vm630 = vnez %v613
        %vm631 = vnez %v615
        %v632 = vsel %vm616, 16843009, 0
        %v633 = vsel %vm617, 16843009, 0
        %v634 = vsel %vm618, 16843009, 0
        %v635 = vsel %vm619, 16843009, 0
        %v636 = vsel %vm620, 16843009, 0
        %v637 = vsel %vm621, 16843009, 0
        %v638 = vsel %vm622, 16843009, 0
        %v639 = vsel %vm623, 16843009, 0
        %v640 = vsel %vm624, 16843009, 0
        %v641 = vsel %vm625, 16843009, 0
        %v642 = vsel %vm626, 16843009, 0
        %v643 = vsel %vm627, 16843009, 0
        %v644 = vsel %vm628, 16843009, 0
        %v645 = vsel %vm629, 16843009, 0
        %v646 = vsel %vm630, 16843009, 0
        %v647 = vsel %vm631, 16843009, 0
        %v648 = vunpack.c.0.s8 %v632
        %v649 = vunpack.c.0.s8 %v633
        %v650 = vunpack.c.0.s8 %v634
        %v651 = vunpack.c.0.s8 %v635
        %v652 = vunpack.c.0.s8 %v636
        %v653 = vunpack.c.0.s8 %v637
        %v654 = vunpack.c.0.s8 %v638
        %v655 = vunpack.c.0.s8 %v639
        %v656 = vunpack.c.0.s8 %v640
        %v657 = vunpack.c.0.s8 %v641
        %v658 = vunpack.c.0.s8 %v642
        %v659 = vunpack.c.0.s8 %v643
        %v660 = vunpack.c.0.s8 %v644
        %v661 = vunpack.c.0.s8 %v645
        %v662 = vunpack.c.0.s8 %v646
        %v663 = vunpack.c.0.s8 %v647
        %vm664 = vcmp.ne.s32.totalorder %v648, 0
        %vm665 = vcmp.ne.s32.totalorder %v649, 0
        %vm666 = vcmp.ne.s32.totalorder %v650, 0
        %vm667 = vcmp.ne.s32.totalorder %v651, 0
        %vm668 = vcmp.ne.s32.totalorder %v652, 0
        %vm669 = vcmp.ne.s32.totalorder %v653, 0
        %vm670 = vcmp.ne.s32.totalorder %v654, 0
        %vm671 = vcmp.ne.s32.totalorder %v655, 0
        %vm672 = vcmp.ne.s32.totalorder %v656, 0
        %vm673 = vcmp.ne.s32.totalorder %v657, 0
        %vm674 = vcmp.ne.s32.totalorder %v658, 0
        %vm675 = vcmp.ne.s32.totalorder %v659, 0
        %vm676 = vcmp.ne.s32.totalorder %v660, 0
        %vm677 = vcmp.ne.s32.totalorder %v661, 0
        %vm678 = vcmp.ne.s32.totalorder %v662, 0
        %vm679 = vcmp.ne.s32.totalorder %v663, 0
        %v680 = vsel %vm664, %v548, -1e+30
        %v681 = vsel %vm665, %v549, -1e+30
        %v682 = vsel %vm666, %v550, -1e+30
        %v683 = vsel %vm667, %v551, -1e+30
        %v684 = vsel %vm668, %v552, -1e+30
        %v685 = vsel %vm669, %v553, -1e+30
        %v686 = vsel %vm670, %v554, -1e+30
        %v687 = vsel %vm671, %v555, -1e+30
        %v688 = vsel %vm672, %v556, -1e+30
        %v689 = vsel %vm673, %v557, -1e+30
        %v690 = vsel %vm674, %v558, -1e+30
        %v691 = vsel %vm675, %v559, -1e+30
        %v692 = vsel %vm676, %v560, -1e+30
        %v693 = vsel %vm677, %v561, -1e+30
        %v694 = vsel %vm678, %v562, -1e+30
        %v695 = vsel %vm679, %v563, -1e+30
        %v696 = vld [vmem:[#allocation2] sm:$0xff]
        %v697 = vld [vmem:[#allocation2 + $0x8] sm:$0xff]
        %v698 = vld [vmem:[#allocation2 + $0x10] sm:$0xff]
        %v699 = vld [vmem:[#allocation2 + $0x18] sm:$0xff]
        %v700 = vld [vmem:[#allocation2 + $0x20] sm:$0xff]
        %v701 = vld [vmem:[#allocation2 + $0x28] sm:$0xff]
        %v702 = vld [vmem:[#allocation2 + $0x30] sm:$0xff]
        %v703 = vld [vmem:[#allocation2 + $0x38] sm:$0xff]
        %v704 = vld [vmem:[#allocation2 + $0x40] sm:$0xff]
        %v705 = vld [vmem:[#allocation2 + $0x48] sm:$0xff]
        %v706 = vld [vmem:[#allocation2 + $0x50] sm:$0xff]
        %v707 = vld [vmem:[#allocation2 + $0x58] sm:$0xff]
        %v708 = vld [vmem:[#allocation2 + $0x60] sm:$0xff]
        %v709 = vld [vmem:[#allocation2 + $0x68] sm:$0xff]
        %v710 = vld [vmem:[#allocation2 + $0x70] sm:$0xff]
        %v711 = vld [vmem:[#allocation2 + $0x78] sm:$0xff]
        %712 = vmax.xlane.f32.xlu0 %v680
        %v713 = vpop.xlane.xlu0 %712
        %714 = vmax.xlane.f32.xlu0 %v681
        %v715 = vpop.xlane.xlu0 %714
        %716 = vmax.xlane.f32.xlu0 %v682
        %v717 = vpop.xlane.xlu0 %716
        %718 = vmax.xlane.f32.xlu0 %v683
        %v719 = vpop.xlane.xlu0 %718
        %720 = vmax.xlane.f32.xlu0 %v684
        %v721 = vpop.xlane.xlu0 %720
        %722 = vmax.xlane.f32.xlu0 %v685
        %v723 = vpop.xlane.xlu0 %722
        %724 = vmax.xlane.f32.xlu0 %v686
        %v725 = vpop.xlane.xlu0 %724
        %726 = vmax.xlane.f32.xlu0 %v687
        %v727 = vpop.xlane.xlu0 %726
        %728 = vmax.xlane.f32.xlu0 %v688
        %v729 = vpop.xlane.xlu0 %728
        %730 = vmax.xlane.f32.xlu0 %v689
        %v731 = vpop.xlane.xlu0 %730
        %732 = vmax.xlane.f32.xlu0 %v690
        %v733 = vpop.xlane.xlu0 %732
        %734 = vmax.xlane.f32.xlu0 %v691
        %v735 = vpop.xlane.xlu0 %734
        %736 = vmax.xlane.f32.xlu0 %v692
        %v737 = vpop.xlane.xlu0 %736
        %738 = vmax.xlane.f32.xlu0 %v693
        %v739 = vpop.xlane.xlu0 %738
        %740 = vmax.xlane.f32.xlu0 %v694
        %v741 = vpop.xlane.xlu0 %740
        %742 = vmax.xlane.f32.xlu0 %v695
        %v743 = vpop.xlane.xlu0 %742
        %v744 = vmax.f32 %v696, %v713
        %v745 = vmax.f32 %v697, %v715
        %v746 = vmax.f32 %v698, %v717
        %v747 = vmax.f32 %v699, %v719
        %v748 = vmax.f32 %v700, %v721
        %v749 = vmax.f32 %v701, %v723
        %v750 = vmax.f32 %v702, %v725
        %v751 = vmax.f32 %v703, %v727
        %v752 = vmax.f32 %v704, %v729
        %v753 = vmax.f32 %v705, %v731
        %v754 = vmax.f32 %v706, %v733
        %v755 = vmax.f32 %v707, %v735
        %v756 = vmax.f32 %v708, %v737
        %v757 = vmax.f32 %v709, %v739
        %v758 = vmax.f32 %v710, %v741
        %v759 = vmax.f32 %v711, %v743
        %v760 = vsub.f32 %v696, %v744
        %v761 = vsub.f32 %v697, %v745
        %v762 = vsub.f32 %v698, %v746
        %v763 = vsub.f32 %v699, %v747
        %v764 = vsub.f32 %v700, %v748
        %v765 = vsub.f32 %v701, %v749
        %v766 = vsub.f32 %v702, %v750
        %v767 = vsub.f32 %v703, %v751
        %v768 = vsub.f32 %v704, %v752
        %v769 = vsub.f32 %v705, %v753
        %v770 = vsub.f32 %v706, %v754
        %v771 = vsub.f32 %v707, %v755
        %v772 = vsub.f32 %v708, %v756
        %v773 = vsub.f32 %v709, %v757
        %v774 = vsub.f32 %v710, %v758
        %v775 = vsub.f32 %v711, %v759
        %v776 = vmul.f32 %v760, 1.442695
        %v777 = vpow.pop %v776
        %v778 = vmul.f32 %v761, 1.442695
        %v779 = vpow.pop %v778
        %v780 = vmul.f32 %v762, 1.442695
        %v781 = vpow.pop %v780
        %v782 = vmul.f32 %v763, 1.442695
        %v783 = vpow.pop %v782
        %v784 = vmul.f32 %v764, 1.442695
        %v785 = vpow.pop %v784
        %v786 = vmul.f32 %v765, 1.442695
        %v787 = vpow.pop %v786
        %v788 = vmul.f32 %v766, 1.442695
        %v789 = vpow.pop %v788
        %v790 = vmul.f32 %v767, 1.442695
        %v791 = vpow.pop %v790
        %v792 = vmul.f32 %v768, 1.442695
        %v793 = vpow.pop %v792
        %v794 = vmul.f32 %v769, 1.442695
        %v795 = vpow.pop %v794
        %v796 = vmul.f32 %v770, 1.442695
        %v797 = vpow.pop %v796
        %v798 = vmul.f32 %v771, 1.442695
        %v799 = vpow.pop %v798
        %v800 = vmul.f32 %v772, 1.442695
        %v801 = vpow.pop %v800
        %v802 = vmul.f32 %v773, 1.442695
        %v803 = vpow.pop %v802
        %v804 = vmul.f32 %v774, 1.442695
        %v805 = vpow.pop %v804
        %v806 = vmul.f32 %v775, 1.442695
        %v807 = vpow.pop %v806
        %809 = vset.pattern.permute.xlu0 0
        %810 = vperm.xlu0 %809, %v744
        %v811 = vpop.permute.xlu0 %810
        %814 = vset.pattern.permute.xlu0 0
        %815 = vperm.xlu0 %814, %v745
        %v816 = vpop.permute.xlu0 %815
        %819 = vset.pattern.permute.xlu0 0
        %820 = vperm.xlu0 %819, %v746
        %v821 = vpop.permute.xlu0 %820
        %824 = vset.pattern.permute.xlu0 0
        %825 = vperm.xlu0 %824, %v747
        %v826 = vpop.permute.xlu0 %825
        %829 = vset.pattern.permute.xlu0 0
        %830 = vperm.xlu0 %829, %v748
        %v831 = vpop.permute.xlu0 %830
        %834 = vset.pattern.permute.xlu0 0
        %835 = vperm.xlu0 %834, %v749
        %v836 = vpop.permute.xlu0 %835
        %839 = vset.pattern.permute.xlu0 0
        %840 = vperm.xlu0 %839, %v750
        %v841 = vpop.permute.xlu0 %840
        %844 = vset.pattern.permute.xlu0 0
        %845 = vperm.xlu0 %844, %v751
        %v846 = vpop.permute.xlu0 %845
        %849 = vset.pattern.permute.xlu0 0
        %850 = vperm.xlu0 %849, %v752
        %v851 = vpop.permute.xlu0 %850
        %854 = vset.pattern.permute.xlu0 0
        %855 = vperm.xlu0 %854, %v753
        %v856 = vpop.permute.xlu0 %855
        %859 = vset.pattern.permute.xlu0 0
        %860 = vperm.xlu0 %859, %v754
        %v861 = vpop.permute.xlu0 %860
        %864 = vset.pattern.permute.xlu0 0
        %865 = vperm.xlu0 %864, %v755
        %v866 = vpop.permute.xlu0 %865
        %869 = vset.pattern.permute.xlu0 0
        %870 = vperm.xlu0 %869, %v756
        %v871 = vpop.permute.xlu0 %870
        %874 = vset.pattern.permute.xlu0 0
        %875 = vperm.xlu0 %874, %v757
        %v876 = vpop.permute.xlu0 %875
        %879 = vset.pattern.permute.xlu0 0
        %880 = vperm.xlu0 %879, %v758
        %v881 = vpop.permute.xlu0 %880
        %884 = vset.pattern.permute.xlu0 0
        %885 = vperm.xlu0 %884, %v759
        %v886 = vpop.permute.xlu0 %885
        %v888 = vsub.f32 %v680, %v811
        %v889 = vsub.f32 %v681, %v816
        %v890 = vsub.f32 %v682, %v821
        %v891 = vsub.f32 %v683, %v826
        %v892 = vsub.f32 %v684, %v831
        %v893 = vsub.f32 %v685, %v836
        %v894 = vsub.f32 %v686, %v841
        %v895 = vsub.f32 %v687, %v846
        %v896 = vsub.f32 %v688, %v851
        %v897 = vsub.f32 %v689, %v856
        %v898 = vsub.f32 %v690, %v861
        %v899 = vsub.f32 %v691, %v866
        %v900 = vsub.f32 %v692, %v871
        %v901 = vsub.f32 %v693, %v876
        %v902 = vsub.f32 %v694, %v881
        %v903 = vsub.f32 %v695, %v886
        %v904 = vmul.f32 %v888, 1.442695
        %v905 = vpow.pop %v904
        %v906 = vmul.f32 %v889, 1.442695
        %v907 = vpow.pop %v906
        %v908 = vmul.f32 %v890, 1.442695
        %v909 = vpow.pop %v908
        %v910 = vmul.f32 %v891, 1.442695
        %v911 = vpow.pop %v910
        %v912 = vmul.f32 %v892, 1.442695
        %v913 = vpow.pop %v912
        %v914 = vmul.f32 %v893, 1.442695
        %v915 = vpow.pop %v914
        %v916 = vmul.f32 %v894, 1.442695
        %v917 = vpow.pop %v916
        %v918 = vmul.f32 %v895, 1.442695
        %v919 = vpow.pop %v918
        %v920 = vmul.f32 %v896, 1.442695
        %v921 = vpow.pop %v920
        %v922 = vmul.f32 %v897, 1.442695
        %v923 = vpow.pop %v922
        %v924 = vmul.f32 %v898, 1.442695
        %v925 = vpow.pop %v924
        %v926 = vmul.f32 %v899, 1.442695
        %v927 = vpow.pop %v926
        %v928 = vmul.f32 %v900, 1.442695
        %v929 = vpow.pop %v928
        %v930 = vmul.f32 %v901, 1.442695
        %v931 = vpow.pop %v930
        %v932 = vmul.f32 %v902, 1.442695
        %v933 = vpow.pop %v932
        %v934 = vmul.f32 %v903, 1.442695
        %v935 = vpow.pop %v934
        %v936 = vld [vmem:[#allocation3] sm:$0xff]
        %v937 = vld [vmem:[#allocation3 + $0x8] sm:$0xff]
        %v938 = vld [vmem:[#allocation3 + $0x10] sm:$0xff]
        %v939 = vld [vmem:[#allocation3 + $0x18] sm:$0xff]
        %v940 = vld [vmem:[#allocation3 + $0x20] sm:$0xff]
        %v941 = vld [vmem:[#allocation3 + $0x28] sm:$0xff]
        %v942 = vld [vmem:[#allocation3 + $0x30] sm:$0xff]
        %v943 = vld [vmem:[#allocation3 + $0x38] sm:$0xff]
        %v944 = vld [vmem:[#allocation3 + $0x40] sm:$0xff]
        %v945 = vld [vmem:[#allocation3 + $0x48] sm:$0xff]
        %v946 = vld [vmem:[#allocation3 + $0x50] sm:$0xff]
        %v947 = vld [vmem:[#allocation3 + $0x58] sm:$0xff]
        %v948 = vld [vmem:[#allocation3 + $0x60] sm:$0xff]
        %v949 = vld [vmem:[#allocation3 + $0x68] sm:$0xff]
        %v950 = vld [vmem:[#allocation3 + $0x70] sm:$0xff]
        %v951 = vld [vmem:[#allocation3 + $0x78] sm:$0xff]
        %v952 = vmul.f32 %v777, %v936
        %v953 = vmul.f32 %v779, %v937
        %v954 = vmul.f32 %v781, %v938
        %v955 = vmul.f32 %v783, %v939
        %v956 = vmul.f32 %v785, %v940
        %v957 = vmul.f32 %v787, %v941
        %v958 = vmul.f32 %v789, %v942
        %v959 = vmul.f32 %v791, %v943
        %v960 = vmul.f32 %v793, %v944
        %v961 = vmul.f32 %v795, %v945
        %v962 = vmul.f32 %v797, %v946
        %v963 = vmul.f32 %v799, %v947
        %v964 = vmul.f32 %v801, %v948
        %v965 = vmul.f32 %v803, %v949
        %v966 = vmul.f32 %v805, %v950
        %v967 = vmul.f32 %v807, %v951
        %968 = vadd.xlane.f32.xlu0 %v905
        %v969 = vpop.xlane.xlu0 %968
        %970 = vadd.xlane.f32.xlu0 %v907
        %v971 = vpop.xlane.xlu0 %970
        %972 = vadd.xlane.f32.xlu0 %v909
        %v973 = vpop.xlane.xlu0 %972
        %974 = vadd.xlane.f32.xlu0 %v911
        %v975 = vpop.xlane.xlu0 %974
        %976 = vadd.xlane.f32.xlu0 %v913
        %v977 = vpop.xlane.xlu0 %976
        %978 = vadd.xlane.f32.xlu0 %v915
        %v979 = vpop.xlane.xlu0 %978
        %980 = vadd.xlane.f32.xlu0 %v917
        %v981 = vpop.xlane.xlu0 %980
        %982 = vadd.xlane.f32.xlu0 %v919
        %v983 = vpop.xlane.xlu0 %982
        %984 = vadd.xlane.f32.xlu0 %v921
        %v985 = vpop.xlane.xlu0 %984
        %986 = vadd.xlane.f32.xlu0 %v923
        %v987 = vpop.xlane.xlu0 %986
        %988 = vadd.xlane.f32.xlu0 %v925
        %v989 = vpop.xlane.xlu0 %988
        %990 = vadd.xlane.f32.xlu0 %v927
        %v991 = vpop.xlane.xlu0 %990
        %992 = vadd.xlane.f32.xlu0 %v929
        %v993 = vpop.xlane.xlu0 %992
        %994 = vadd.xlane.f32.xlu0 %v931
        %v995 = vpop.xlane.xlu0 %994
        %996 = vadd.xlane.f32.xlu0 %v933
        %v997 = vpop.xlane.xlu0 %996
        %998 = vadd.xlane.f32.xlu0 %v935
        %v999 = vpop.xlane.xlu0 %998
        %v1000 = vadd.f32 %v952, %v969
        %v1001 = vadd.f32 %v953, %v971
        %v1002 = vadd.f32 %v954, %v973
        %v1003 = vadd.f32 %v955, %v975
        %v1004 = vadd.f32 %v956, %v977
        %v1005 = vadd.f32 %v957, %v979
        %v1006 = vadd.f32 %v958, %v981
        %v1007 = vadd.f32 %v959, %v983
        %v1008 = vadd.f32 %v960, %v985
        %v1009 = vadd.f32 %v961, %v987
        %v1010 = vadd.f32 %v962, %v989
        %v1011 = vadd.f32 %v963, %v991
        %v1012 = vadd.f32 %v964, %v993
        %v1013 = vadd.f32 %v965, %v995
        %v1014 = vadd.f32 %v966, %v997
        %v1015 = vadd.f32 %v967, %v999
        %vm1016 = vcmask 7168
        %1017 = vst.msk [vmem:[#allocation3] sm:$0xff] %vm1016, %v1000
        %1018 = vst.msk [vmem:[#allocation3 + $0x8] sm:$0xff] %vm1016, %v1001
        %1019 = vst.msk [vmem:[#allocation3 + $0x10] sm:$0xff] %vm1016, %v1002
        %1020 = vst.msk [vmem:[#allocation3 + $0x18] sm:$0xff] %vm1016, %v1003
        %1021 = vst.msk [vmem:[#allocation3 + $0x20] sm:$0xff] %vm1016, %v1004
        %1022 = vst.msk [vmem:[#allocation3 + $0x28] sm:$0xff] %vm1016, %v1005
        %1023 = vst.msk [vmem:[#allocation3 + $0x30] sm:$0xff] %vm1016, %v1006
        %1024 = vst.msk [vmem:[#allocation3 + $0x38] sm:$0xff] %vm1016, %v1007
        %1025 = vst.msk [vmem:[#allocation3 + $0x40] sm:$0xff] %vm1016, %v1008
        %1026 = vst.msk [vmem:[#allocation3 + $0x48] sm:$0xff] %vm1016, %v1009
        %1027 = vst.msk [vmem:[#allocation3 + $0x50] sm:$0xff] %vm1016, %v1010
        %1028 = vst.msk [vmem:[#allocation3 + $0x58] sm:$0xff] %vm1016, %v1011
        %1029 = vst.msk [vmem:[#allocation3 + $0x60] sm:$0xff] %vm1016, %v1012
        %1030 = vst.msk [vmem:[#allocation3 + $0x68] sm:$0xff] %vm1016, %v1013
        %1031 = vst.msk [vmem:[#allocation3 + $0x70] sm:$0xff] %vm1016, %v1014
        %1032 = vst.msk [vmem:[#allocation3 + $0x78] sm:$0xff] %vm1016, %v1015
        %v1033 = vld [vmem:[%s330] sm:$0xf]
        %v1034 = vld [vmem:[%s330 + $0x4] sm:$0xf]
        %v1035 = vld [vmem:[%s330 + $0x8] sm:$0xf]
        %v1036 = vld [vmem:[%s330 + $0xc] sm:$0xf]
        %v1037 = vld [vmem:[%s330 + $0x10] sm:$0xf]
        %v1038 = vld [vmem:[%s330 + $0x14] sm:$0xf]
        %v1039 = vld [vmem:[%s330 + $0x18] sm:$0xf]
        %v1040 = vld [vmem:[%s330 + $0x1c] sm:$0xf]
        %v1041 = vld [vmem:[%s330 + $0x20] sm:$0xf]
        %v1042 = vld [vmem:[%s330 + $0x24] sm:$0xf]
        %v1043 = vld [vmem:[%s330 + $0x28] sm:$0xf]
        %v1044 = vld [vmem:[%s330 + $0x2c] sm:$0xf]
        %v1045 = vld [vmem:[%s330 + $0x30] sm:$0xf]
        %v1046 = vld [vmem:[%s330 + $0x34] sm:$0xf]
        %v1047 = vld [vmem:[%s330 + $0x38] sm:$0xf]
        %v1048 = vld [vmem:[%s330 + $0x3c] sm:$0xf]
        %v1049 = vpack.c.bf16 %v907, %v905
        %v1050 = vpack.c.bf16 %v911, %v909
        %v1051 = vpack.c.bf16 %v915, %v913
        %v1052 = vpack.c.bf16 %v919, %v917
        %v1053 = vpack.c.bf16 %v923, %v921
        %v1054 = vpack.c.bf16 %v927, %v925
        %v1055 = vpack.c.bf16 %v931, %v929
        %v1056 = vpack.c.bf16 %v935, %v933
        %v1073 = vunpack.c.l.b16 %v1033
        %v1074 = vunpack.c.l.b16 %v1034
        %v1075 = vunpack.c.l.b16 %v1035
        %v1076 = vunpack.c.l.b16 %v1036
        %v1077 = vunpack.c.l.b16 %v1037
        %v1078 = vunpack.c.l.b16 %v1038
        %v1079 = vunpack.c.l.b16 %v1039
        %v1080 = vunpack.c.l.b16 %v1040
        %v1081 = vunpack.c.l.b16 %v1041
        %v1082 = vunpack.c.l.b16 %v1042
        %v1083 = vunpack.c.l.b16 %v1043
        %v1084 = vunpack.c.l.b16 %v1044
        %v1085 = vunpack.c.l.b16 %v1045
        %v1086 = vunpack.c.l.b16 %v1046
        %v1087 = vunpack.c.l.b16 %v1047
        %v1088 = vunpack.c.l.b16 %v1048
        %v1089 = vpack.c.b16 %v1074, %v1073
        %v1090 = vpack.c.b16 %v1076, %v1075
        %v1091 = vpack.c.b16 %v1078, %v1077
        %v1092 = vpack.c.b16 %v1080, %v1079
        %v1093 = vpack.c.b16 %v1082, %v1081
        %v1094 = vpack.c.b16 %v1084, %v1083
        %v1095 = vpack.c.b16 %v1086, %v1085
        %v1096 = vpack.c.b16 %v1088, %v1087
        %1105 = vmatprep.subr.bf16.mxu0 0
        %1106 = vmatpush1.bf16.msra.mxu0 %v1089
        %1107 = vmatprep.subr.bf16.mxu0 0
        %1108 = vmatpush1.bf16.msra.mxu0 %v1090
        %1109 = vmatprep.subr.bf16.mxu0 0
        %1110 = vmatpush1.bf16.msra.mxu0 %v1091
        %1111 = vmatprep.subr.bf16.mxu0 0
        %1112 = vmatpush1.bf16.msra.mxu0 %v1092
        %1113 = vmatprep.subr.bf16.mxu0 0
        %1114 = vmatpush1.bf16.msra.mxu0 %v1093
        %1115 = vmatprep.subr.bf16.mxu0 0
        %1116 = vmatpush1.bf16.msra.mxu0 %v1094
        %1117 = vmatprep.subr.bf16.mxu0 0
        %1118 = vmatpush1.bf16.msra.mxu0 %v1095
        %1119 = vmatprep.subr.bf16.mxu0 0
        %1120 = vmatpush1.bf16.msra.mxu0 %v1096
        %1121 = vmatprep.subr.bf16.mxu0 0
        %1122 = vmatpush1.bf16.msra.mxu0 0
        %1123 = vmatprep.subr.bf16.mxu0 0
        %1124 = vmatpush1.bf16.msra.mxu0 0
        %1125 = vmatprep.subr.bf16.mxu0 0
        %1126 = vmatpush1.bf16.msra.mxu0 0
        %1127 = vmatprep.subr.bf16.mxu0 0
        %1128 = vmatpush1.bf16.msra.mxu0 0
        %1129 = vmatprep.subr.bf16.mxu0 0
        %1130 = vmatpush1.bf16.msra.mxu0 0
        %1131 = vmatprep.subr.bf16.mxu0 0
        %1132 = vmatpush1.bf16.msra.mxu0 0
        %1133 = vmatprep.subr.bf16.mxu0 0
        %1134 = vmatpush1.bf16.msra.mxu0 0
        %1135 = vmatprep.subr.bf16.mxu0 0
        %1136 = vmatpush1.bf16.msra.mxu0 0
        %1137 = vmatprep.mubr.bf16.mxu0 0
        %1138 = vmatmul.mubr.bf16.gmra.mrb[0].mxu0 %v1049
        %v1139 = vpop.f32.mrb[0].mxu0
        %v1140 = vadd.f32 0.0, %v1139
        %v1141 = vpop.f32.mrb[0].mxu0
        %v1142 = vpop.f32.mrb[0].mxu0
        %v1143 = vadd.f32 0.0, %v1142
        %v1144 = vpop.f32.mrb[0].mxu0
        %1145 = vmatprep.mubr.bf16.mxu0 0
        %1146 = vmatmul.mubr.bf16.gmra.mrb[0].mxu0 %v1050
        %v1147 = vpop.f32.mrb[0].mxu0
        %v1148 = vadd.f32 0.0, %v1147
        %v1149 = vpop.f32.mrb[0].mxu0
        %v1150 = vpop.f32.mrb[0].mxu0
        %v1151 = vadd.f32 0.0, %v1150
        %v1152 = vpop.f32.mrb[0].mxu0
        %1153 = vmatprep.mubr.bf16.mxu0 0
        %1154 = vmatmul.mubr.bf16.gmra.mrb[0].mxu0 %v1051
        %v1155 = vpop.f32.mrb[0].mxu0
        %v1156 = vadd.f32 0.0, %v1155
        %v1157 = vpop.f32.mrb[0].mxu0
        %v1158 = vpop.f32.mrb[0].mxu0
        %v1159 = vadd.f32 0.0, %v1158
        %v1160 = vpop.f32.mrb[0].mxu0
        %1161 = vmatprep.mubr.bf16.mxu0 0
        %1162 = vmatmul.mubr.bf16.gmra.mrb[0].mxu0 %v1052
        %v1163 = vpop.f32.mrb[0].mxu0
        %v1164 = vadd.f32 0.0, %v1163
        %v1165 = vpop.f32.mrb[0].mxu0
        %v1166 = vpop.f32.mrb[0].mxu0
        %v1167 = vadd.f32 0.0, %v1166
        %v1168 = vpop.f32.mrb[0].mxu0
        %1169 = vmatprep.mubr.bf16.mxu0 0
        %1170 = vmatmul.mubr.bf16.gmra.mrb[0].mxu0 %v1053
        %v1171 = vpop.f32.mrb[0].mxu0
        %v1172 = vadd.f32 0.0, %v1171
        %v1173 = vpop.f32.mrb[0].mxu0
        %v1174 = vpop.f32.mrb[0].mxu0
        %v1175 = vadd.f32 0.0, %v1174
        %v1176 = vpop.f32.mrb[0].mxu0
        %1177 = vmatprep.mubr.bf16.mxu0 0
        %1178 = vmatmul.mubr.bf16.gmra.mrb[0].mxu0 %v1054
        %v1179 = vpop.f32.mrb[0].mxu0
        %v1180 = vadd.f32 0.0, %v1179
        %v1181 = vpop.f32.mrb[0].mxu0
        %v1182 = vpop.f32.mrb[0].mxu0
        %v1183 = vadd.f32 0.0, %v1182
        %v1184 = vpop.f32.mrb[0].mxu0
        %1185 = vmatprep.mubr.bf16.mxu0 0
        %1186 = vmatmul.mubr.bf16.gmra.mrb[0].mxu0 %v1055
        %v1187 = vpop.f32.mrb[0].mxu0
        %v1188 = vadd.f32 0.0, %v1187
        %v1189 = vpop.f32.mrb[0].mxu0
        %v1190 = vpop.f32.mrb[0].mxu0
        %v1191 = vadd.f32 0.0, %v1190
        %v1192 = vpop.f32.mrb[0].mxu0
        %1193 = vmatprep.mubr.bf16.mxu0 0
        %1194 = vmatmul.mubr.bf16.gmra.mrb[0].mxu0 %v1056
        %v1195 = vpop.f32.mrb[0].mxu0
        %v1196 = vadd.f32 0.0, %v1195
        %v1197 = vpop.f32.mrb[0].mxu0
        %v1198 = vpop.f32.mrb[0].mxu0
        %v1199 = vadd.f32 0.0, %v1198
        %v1200 = vpop.f32.mrb[0].mxu0
        %1201 = vdwg.mxu0
        %v1202 = vld [vmem:[#allocation4] sm:$0xff]
        %v1203 = vld [vmem:[#allocation4 + $0x8] sm:$0xff]
        %v1204 = vld [vmem:[#allocation4 + $0x10] sm:$0xff]
        %v1205 = vld [vmem:[#allocation4 + $0x18] sm:$0xff]
        %v1206 = vld [vmem:[#allocation4 + $0x20] sm:$0xff]
        %v1207 = vld [vmem:[#allocation4 + $0x28] sm:$0xff]
        %v1208 = vld [vmem:[#allocation4 + $0x30] sm:$0xff]
        %v1209 = vld [vmem:[#allocation4 + $0x38] sm:$0xff]
        %v1210 = vld [vmem:[#allocation4 + $0x40] sm:$0xff]
        %v1211 = vld [vmem:[#allocation4 + $0x48] sm:$0xff]
        %v1212 = vld [vmem:[#allocation4 + $0x50] sm:$0xff]
        %v1213 = vld [vmem:[#allocation4 + $0x58] sm:$0xff]
        %v1214 = vld [vmem:[#allocation4 + $0x60] sm:$0xff]
        %v1215 = vld [vmem:[#allocation4 + $0x68] sm:$0xff]
        %v1216 = vld [vmem:[#allocation4 + $0x70] sm:$0xff]
        %v1217 = vld [vmem:[#allocation4 + $0x78] sm:$0xff]
        %1219 = vset.pattern.permute.xlu0 0
        %1220 = vperm.xlu0 %1219, %v777
        %v1221 = vpop.permute.xlu0 %1220
        %1224 = vset.pattern.permute.xlu0 0
        %1225 = vperm.xlu0 %1224, %v779
        %v1226 = vpop.permute.xlu0 %1225
        %1229 = vset.pattern.permute.xlu0 0
        %1230 = vperm.xlu0 %1229, %v781
        %v1231 = vpop.permute.xlu0 %1230
        %1234 = vset.pattern.permute.xlu0 0
        %1235 = vperm.xlu0 %1234, %v783
        %v1236 = vpop.permute.xlu0 %1235
        %1239 = vset.pattern.permute.xlu0 0
        %1240 = vperm.xlu0 %1239, %v785
        %v1241 = vpop.permute.xlu0 %1240
        %1244 = vset.pattern.permute.xlu0 0
        %1245 = vperm.xlu0 %1244, %v787
        %v1246 = vpop.permute.xlu0 %1245
        %1249 = vset.pattern.permute.xlu0 0
        %1250 = vperm.xlu0 %1249, %v789
        %v1251 = vpop.permute.xlu0 %1250
        %1254 = vset.pattern.permute.xlu0 0
        %1255 = vperm.xlu0 %1254, %v791
        %v1256 = vpop.permute.xlu0 %1255
        %1259 = vset.pattern.permute.xlu0 0
        %1260 = vperm.xlu0 %1259, %v793
        %v1261 = vpop.permute.xlu0 %1260
        %1264 = vset.pattern.permute.xlu0 0
        %1265 = vperm.xlu0 %1264, %v795
        %v1266 = vpop.permute.xlu0 %1265
        %1269 = vset.pattern.permute.xlu0 0
        %1270 = vperm.xlu0 %1269, %v797
        %v1271 = vpop.permute.xlu0 %1270
        %1274 = vset.pattern.permute.xlu0 0
        %1275 = vperm.xlu0 %1274, %v799
        %v1276 = vpop.permute.xlu0 %1275
        %1279 = vset.pattern.permute.xlu0 0
        %1280 = vperm.xlu0 %1279, %v801
        %v1281 = vpop.permute.xlu0 %1280
        %1284 = vset.pattern.permute.xlu0 0
        %1285 = vperm.xlu0 %1284, %v803
        %v1286 = vpop.permute.xlu0 %1285
        %1289 = vset.pattern.permute.xlu0 0
        %1290 = vperm.xlu0 %1289, %v805
        %v1291 = vpop.permute.xlu0 %1290
        %1294 = vset.pattern.permute.xlu0 0
        %1295 = vperm.xlu0 %1294, %v807
        %v1296 = vpop.permute.xlu0 %1295
        %v1298 = vmul.f32 %v1221, %v1202
        %v1299 = vmul.f32 %v1226, %v1203
        %v1300 = vmul.f32 %v1231, %v1204
        %v1301 = vmul.f32 %v1236, %v1205
        %v1302 = vmul.f32 %v1241, %v1206
        %v1303 = vmul.f32 %v1246, %v1207
        %v1304 = vmul.f32 %v1251, %v1208
        %v1305 = vmul.f32 %v1256, %v1209
        %v1306 = vmul.f32 %v1261, %v1210
        %v1307 = vmul.f32 %v1266, %v1211
        %v1308 = vmul.f32 %v1271, %v1212
        %v1309 = vmul.f32 %v1276, %v1213
        %v1310 = vmul.f32 %v1281, %v1214
        %v1311 = vmul.f32 %v1286, %v1215
        %v1312 = vmul.f32 %v1291, %v1216
        %v1313 = vmul.f32 %v1296, %v1217
        %v1314 = vadd.f32 %v1298, %v1140
        %v1315 = vadd.f32 %v1299, %v1143
        %v1316 = vadd.f32 %v1300, %v1148
        %v1317 = vadd.f32 %v1301, %v1151
        %v1318 = vadd.f32 %v1302, %v1156
        %v1319 = vadd.f32 %v1303, %v1159
        %v1320 = vadd.f32 %v1304, %v1164
        %v1321 = vadd.f32 %v1305, %v1167
        %v1322 = vadd.f32 %v1306, %v1172
        %v1323 = vadd.f32 %v1307, %v1175
        %v1324 = vadd.f32 %v1308, %v1180
        %v1325 = vadd.f32 %v1309, %v1183
        %v1326 = vadd.f32 %v1310, %v1188
        %v1327 = vadd.f32 %v1311, %v1191
        %v1328 = vadd.f32 %v1312, %v1196
        %v1329 = vadd.f32 %v1313, %v1199
        %vm1330 = vcmask 64512
        %1331 = vst.msk [vmem:[#allocation4] sm:$0xff] %vm1330, %v1314
        %1332 = vst.msk [vmem:[#allocation4 + $0x8] sm:$0xff] %vm1330, %v1315
        %1333 = vst.msk [vmem:[#allocation4 + $0x10] sm:$0xff] %vm1330, %v1316
        %1334 = vst.msk [vmem:[#allocation4 + $0x18] sm:$0xff] %vm1330, %v1317
        %1335 = vst.msk [vmem:[#allocation4 + $0x20] sm:$0xff] %vm1330, %v1318
        %1336 = vst.msk [vmem:[#allocation4 + $0x28] sm:$0xff] %vm1330, %v1319
        %1337 = vst.msk [vmem:[#allocation4 + $0x30] sm:$0xff] %vm1330, %v1320
        %1338 = vst.msk [vmem:[#allocation4 + $0x38] sm:$0xff] %vm1330, %v1321
        %1339 = vst.msk [vmem:[#allocation4 + $0x40] sm:$0xff] %vm1330, %v1322
        %1340 = vst.msk [vmem:[#allocation4 + $0x48] sm:$0xff] %vm1330, %v1323
        %1341 = vst.msk [vmem:[#allocation4 + $0x50] sm:$0xff] %vm1330, %v1324
        %1342 = vst.msk [vmem:[#allocation4 + $0x58] sm:$0xff] %vm1330, %v1325
        %1343 = vst.msk [vmem:[#allocation4 + $0x60] sm:$0xff] %vm1330, %v1326
        %1344 = vst.msk [vmem:[#allocation4 + $0x68] sm:$0xff] %vm1330, %v1327
        %1345 = vst.msk [vmem:[#allocation4 + $0x70] sm:$0xff] %vm1330, %v1328
        %1346 = vst.msk [vmem:[#allocation4 + $0x78] sm:$0xff] %vm1330, %v1329
        %1347 = vst.msk [vmem:[#allocation2] sm:$0xff] %vm1016, %v744
        %1348 = vst.msk [vmem:[#allocation2 + $0x8] sm:$0xff] %vm1016, %v745
        %1349 = vst.msk [vmem:[#allocation2 + $0x10] sm:$0xff] %vm1016, %v746
        %1350 = vst.msk [vmem:[#allocation2 + $0x18] sm:$0xff] %vm1016, %v747
        %1351 = vst.msk [vmem:[#allocation2 + $0x20] sm:$0xff] %vm1016, %v748
        %1352 = vst.msk [vmem:[#allocation2 + $0x28] sm:$0xff] %vm1016, %v749
        %1353 = vst.msk [vmem:[#allocation2 + $0x30] sm:$0xff] %vm1016, %v750
        %1354 = vst.msk [vmem:[#allocation2 + $0x38] sm:$0xff] %vm1016, %v751
        %1355 = vst.msk [vmem:[#allocation2 + $0x40] sm:$0xff] %vm1016, %v752
        %1356 = vst.msk [vmem:[#allocation2 + $0x48] sm:$0xff] %vm1016, %v753
        %1357 = vst.msk [vmem:[#allocation2 + $0x50] sm:$0xff] %vm1016, %v754
        %1358 = vst.msk [vmem:[#allocation2 + $0x58] sm:$0xff] %vm1016, %v755
        %1359 = vst.msk [vmem:[#allocation2 + $0x60] sm:$0xff] %vm1016, %v756
        %1360 = vst.msk [vmem:[#allocation2 + $0x68] sm:$0xff] %vm1016, %v757
        %1361 = vst.msk [vmem:[#allocation2 + $0x70] sm:$0xff] %vm1016, %v758
        %1362 = vst.msk [vmem:[#allocation2 + $0x78] sm:$0xff] %vm1016, %v759
        %p1363 = scmp.eq.s32.totalorder %s21, 1
        // Predicated region
        $region83: #{gat_forward.7} parent=73 // pred_check
          %p1364 = pneg %p1363
        $region84: #{gat_forward.7} parent=73 // pred_check_branch
          %1366 = sbr.rel (%p1364) target = $region86
        $region85: #{gat_forward.7} parent=73 // pred_region
          %v1367 = vld [vmem:[#allocation3] sm:$0xff]
          %v1368 = vld [vmem:[#allocation3 + $0x8] sm:$0xff]
          %v1369 = vld [vmem:[#allocation3 + $0x10] sm:$0xff]
          %v1370 = vld [vmem:[#allocation3 + $0x18] sm:$0xff]
          %v1371 = vld [vmem:[#allocation3 + $0x20] sm:$0xff]
          %v1372 = vld [vmem:[#allocation3 + $0x28] sm:$0xff]
          %v1373 = vld [vmem:[#allocation3 + $0x30] sm:$0xff]
          %v1374 = vld [vmem:[#allocation3 + $0x38] sm:$0xff]
          %v1375 = vld [vmem:[#allocation3 + $0x40] sm:$0xff]
          %v1376 = vld [vmem:[#allocation3 + $0x48] sm:$0xff]
          %v1377 = vld [vmem:[#allocation3 + $0x50] sm:$0xff]
          %v1378 = vld [vmem:[#allocation3 + $0x58] sm:$0xff]
          %v1379 = vld [vmem:[#allocation3 + $0x60] sm:$0xff]
          %v1380 = vld [vmem:[#allocation3 + $0x68] sm:$0xff]
          %v1381 = vld [vmem:[#allocation3 + $0x70] sm:$0xff]
          %v1382 = vld [vmem:[#allocation3 + $0x78] sm:$0xff]
          %v1383 = vrcp.pop %v1367
          %v1384 = vrcp.pop %v1368
          %v1385 = vrcp.pop %v1369
          %v1386 = vrcp.pop %v1370
          %v1387 = vrcp.pop %v1371
          %v1388 = vrcp.pop %v1372
          %v1389 = vrcp.pop %v1373
          %v1390 = vrcp.pop %v1374
          %v1391 = vrcp.pop %v1375
          %v1392 = vrcp.pop %v1376
          %v1393 = vrcp.pop %v1377
          %v1394 = vrcp.pop %v1378
          %v1395 = vrcp.pop %v1379
          %v1396 = vrcp.pop %v1380
          %v1397 = vrcp.pop %v1381
          %v1398 = vrcp.pop %v1382
          %v1399 = vld [vmem:[#allocation4] sm:$0xff]
          %v1400 = vld [vmem:[#allocation4 + $0x8] sm:$0xff]
          %v1401 = vld [vmem:[#allocation4 + $0x10] sm:$0xff]
          %v1402 = vld [vmem:[#allocation4 + $0x18] sm:$0xff]
          %v1403 = vld [vmem:[#allocation4 + $0x20] sm:$0xff]
          %v1404 = vld [vmem:[#allocation4 + $0x28] sm:$0xff]
          %v1405 = vld [vmem:[#allocation4 + $0x30] sm:$0xff]
          %v1406 = vld [vmem:[#allocation4 + $0x38] sm:$0xff]
          %v1407 = vld [vmem:[#allocation4 + $0x40] sm:$0xff]
          %v1408 = vld [vmem:[#allocation4 + $0x48] sm:$0xff]
          %v1409 = vld [vmem:[#allocation4 + $0x50] sm:$0xff]
          %v1410 = vld [vmem:[#allocation4 + $0x58] sm:$0xff]
          %v1411 = vld [vmem:[#allocation4 + $0x60] sm:$0xff]
          %v1412 = vld [vmem:[#allocation4 + $0x68] sm:$0xff]
          %v1413 = vld [vmem:[#allocation4 + $0x70] sm:$0xff]
          %v1414 = vld [vmem:[#allocation4 + $0x78] sm:$0xff]
          %1416 = vset.pattern.permute.xlu0 0
          %1417 = vperm.xlu0 %1416, %v1383
          %v1418 = vpop.permute.xlu0 %1417
          %1421 = vset.pattern.permute.xlu0 0
          %1422 = vperm.xlu0 %1421, %v1384
          %v1423 = vpop.permute.xlu0 %1422
          %1426 = vset.pattern.permute.xlu0 0
          %1427 = vperm.xlu0 %1426, %v1385
          %v1428 = vpop.permute.xlu0 %1427
          %1431 = vset.pattern.permute.xlu0 0
          %1432 = vperm.xlu0 %1431, %v1386
          %v1433 = vpop.permute.xlu0 %1432
          %1436 = vset.pattern.permute.xlu0 0
          %1437 = vperm.xlu0 %1436, %v1387
          %v1438 = vpop.permute.xlu0 %1437
          %1441 = vset.pattern.permute.xlu0 0
          %1442 = vperm.xlu0 %1441, %v1388
          %v1443 = vpop.permute.xlu0 %1442
          %1446 = vset.pattern.permute.xlu0 0
          %1447 = vperm.xlu0 %1446, %v1389
          %v1448 = vpop.permute.xlu0 %1447
          %1451 = vset.pattern.permute.xlu0 0
          %1452 = vperm.xlu0 %1451, %v1390
          %v1453 = vpop.permute.xlu0 %1452
          %1456 = vset.pattern.permute.xlu0 0
          %1457 = vperm.xlu0 %1456, %v1391
          %v1458 = vpop.permute.xlu0 %1457
          %1461 = vset.pattern.permute.xlu0 0
          %1462 = vperm.xlu0 %1461, %v1392
          %v1463 = vpop.permute.xlu0 %1462
          %1466 = vset.pattern.permute.xlu0 0
          %1467 = vperm.xlu0 %1466, %v1393
          %v1468 = vpop.permute.xlu0 %1467
          %1471 = vset.pattern.permute.xlu0 0
          %1472 = vperm.xlu0 %1471, %v1394
          %v1473 = vpop.permute.xlu0 %1472
          %1476 = vset.pattern.permute.xlu0 0
          %1477 = vperm.xlu0 %1476, %v1395
          %v1478 = vpop.permute.xlu0 %1477
          %1481 = vset.pattern.permute.xlu0 0
          %1482 = vperm.xlu0 %1481, %v1396
          %v1483 = vpop.permute.xlu0 %1482
          %1486 = vset.pattern.permute.xlu0 0
          %1487 = vperm.xlu0 %1486, %v1397
          %v1488 = vpop.permute.xlu0 %1487
          %1491 = vset.pattern.permute.xlu0 0
          %1492 = vperm.xlu0 %1491, %v1398
          %v1493 = vpop.permute.xlu0 %1492
          %v1495 = vmul.f32 %v1399, %v1418
          %v1496 = vmul.f32 %v1400, %v1423
          %v1497 = vmul.f32 %v1401, %v1428
          %v1498 = vmul.f32 %v1402, %v1433
          %v1499 = vmul.f32 %v1403, %v1438
          %v1500 = vmul.f32 %v1404, %v1443
          %v1501 = vmul.f32 %v1405, %v1448
          %v1502 = vmul.f32 %v1406, %v1453
          %v1503 = vmul.f32 %v1407, %v1458
          %v1504 = vmul.f32 %v1408, %v1463
          %v1505 = vmul.f32 %v1409, %v1468
          %v1506 = vmul.f32 %v1410, %v1473
          %v1507 = vmul.f32 %v1411, %v1478
          %v1508 = vmul.f32 %v1412, %v1483
          %v1509 = vmul.f32 %v1413, %v1488
          %v1510 = vmul.f32 %v1414, %v1493
          %1511 = vst.msk [vmem:[#allocation4] sm:$0xff] %vm1330, %v1495
          %1512 = vst.msk [vmem:[#allocation4 + $0x8] sm:$0xff] %vm1330, %v1496
          %1513 = vst.msk [vmem:[#allocation4 + $0x10] sm:$0xff] %vm1330, %v1497
          %1514 = vst.msk [vmem:[#allocation4 + $0x18] sm:$0xff] %vm1330, %v1498
          %1515 = vst.msk [vmem:[#allocation4 + $0x20] sm:$0xff] %vm1330, %v1499
          %1516 = vst.msk [vmem:[#allocation4 + $0x28] sm:$0xff] %vm1330, %v1500
          %1517 = vst.msk [vmem:[#allocation4 + $0x30] sm:$0xff] %vm1330, %v1501
          %1518 = vst.msk [vmem:[#allocation4 + $0x38] sm:$0xff] %vm1330, %v1502
          %1519 = vst.msk [vmem:[#allocation4 + $0x40] sm:$0xff] %vm1330, %v1503
          %1520 = vst.msk [vmem:[#allocation4 + $0x48] sm:$0xff] %vm1330, %v1504
          %1521 = vst.msk [vmem:[#allocation4 + $0x50] sm:$0xff] %vm1330, %v1505
          %1522 = vst.msk [vmem:[#allocation4 + $0x58] sm:$0xff] %vm1330, %v1506
          %1523 = vst.msk [vmem:[#allocation4 + $0x60] sm:$0xff] %vm1330, %v1507
          %1524 = vst.msk [vmem:[#allocation4 + $0x68] sm:$0xff] %vm1330, %v1508
          %1525 = vst.msk [vmem:[#allocation4 + $0x70] sm:$0xff] %vm1330, %v1509
          %1526 = vst.msk [vmem:[#allocation4 + $0x78] sm:$0xff] %vm1330, %v1510
          %v1527 = vld [vmem:[#allocation4] sm:$0xff]
          %v1528 = vld [vmem:[#allocation4 + $0x8] sm:$0xff]
          %v1529 = vld [vmem:[#allocation4 + $0x10] sm:$0xff]
          %v1530 = vld [vmem:[#allocation4 + $0x18] sm:$0xff]
          %v1531 = vld [vmem:[#allocation4 + $0x20] sm:$0xff]
          %v1532 = vld [vmem:[#allocation4 + $0x28] sm:$0xff]
          %v1533 = vld [vmem:[#allocation4 + $0x30] sm:$0xff]
          %v1534 = vld [vmem:[#allocation4 + $0x38] sm:$0xff]
          %v1535 = vld [vmem:[#allocation4 + $0x40] sm:$0xff]
          %v1536 = vld [vmem:[#allocation4 + $0x48] sm:$0xff]
          %v1537 = vld [vmem:[#allocation4 + $0x50] sm:$0xff]
          %v1538 = vld [vmem:[#allocation4 + $0x58] sm:$0xff]
          %v1539 = vld [vmem:[#allocation4 + $0x60] sm:$0xff]
          %v1540 = vld [vmem:[#allocation4 + $0x68] sm:$0xff]
          %v1541 = vld [vmem:[#allocation4 + $0x70] sm:$0xff]
          %v1542 = vld [vmem:[#allocation4 + $0x78] sm:$0xff]
          %v1543 = vld [vmem:[%s3] sm:$0x1]
          %v1545 = vlaneseq
          %v1546 = vshrl.u32 %v1545, 7
          %v1547 = vsub.s32 0, %v1546
          %v1548 = vrot.slane %v1543, %v1547
          %v1550 = vadd.f32 %v1527, %v1548
          %v1551 = vadd.f32 %v1528, %v1548
          %v1552 = vadd.f32 %v1529, %v1548
          %v1553 = vadd.f32 %v1530, %v1548
          %v1554 = vadd.f32 %v1531, %v1548
          %v1555 = vadd.f32 %v1532, %v1548
          %v1556 = vadd.f32 %v1533, %v1548
          %v1557 = vadd.f32 %v1534, %v1548
          %v1558 = vadd.f32 %v1535, %v1548
          %v1559 = vadd.f32 %v1536, %v1548
          %v1560 = vadd.f32 %v1537, %v1548
          %v1561 = vadd.f32 %v1538, %v1548
          %v1562 = vadd.f32 %v1539, %v1548
          %v1563 = vadd.f32 %v1540, %v1548
          %v1564 = vadd.f32 %v1541, %v1548
          %v1565 = vadd.f32 %v1542, %v1548
          %1566 = vst.msk [vmem:[%s346] sm:$0xff] %vm1330, %v1550
          %1567 = vst.msk [vmem:[%s346 + $0x8] sm:$0xff] %vm1330, %v1551
          %1568 = vst.msk [vmem:[%s346 + $0x10] sm:$0xff] %vm1330, %v1552
          %1569 = vst.msk [vmem:[%s346 + $0x18] sm:$0xff] %vm1330, %v1553
          %1570 = vst.msk [vmem:[%s346 + $0x20] sm:$0xff] %vm1330, %v1554
          %1571 = vst.msk [vmem:[%s346 + $0x28] sm:$0xff] %vm1330, %v1555
          %1572 = vst.msk [vmem:[%s346 + $0x30] sm:$0xff] %vm1330, %v1556
          %1573 = vst.msk [vmem:[%s346 + $0x38] sm:$0xff] %vm1330, %v1557
          %1574 = vst.msk [vmem:[%s346 + $0x40] sm:$0xff] %vm1330, %v1558
          %1575 = vst.msk [vmem:[%s346 + $0x48] sm:$0xff] %vm1330, %v1559
          %1576 = vst.msk [vmem:[%s346 + $0x50] sm:$0xff] %vm1330, %v1560
          %1577 = vst.msk [vmem:[%s346 + $0x58] sm:$0xff] %vm1330, %v1561
          %1578 = vst.msk [vmem:[%s346 + $0x60] sm:$0xff] %vm1330, %v1562
          %1579 = vst.msk [vmem:[%s346 + $0x68] sm:$0xff] %vm1330, %v1563
          %1580 = vst.msk [vmem:[%s346 + $0x70] sm:$0xff] %vm1330, %v1564
          %1581 = vst.msk [vmem:[%s346 + $0x78] sm:$0xff] %vm1330, %v1565
        $region86: #{gat_forward.7} parent=73 // pred_fallthru
          _
        %s1582 = smul.u32 16, %s20
        %p1583 = scmp.lt.s32.totalorder %s1582, 31
        %s1584 = scalar_select %p1583, %s1582, 31
        %s1585 = smul.addr %s1584, 8
        %s1586 = scalar_lea.vmem %s5, %s1585
        // Predicated region
        $region87: #{gat_forward.7} parent=73 // pred_check
          %p1587 = pneg %p173
        $region88: #{gat_forward.7} parent=73 // pred_check_branch
          %1589 = sbr.rel (%p1587) target = $region90
        $region89: #{gat_forward.7} parent=73 // pred_region
          %s1590 = smul.u32 16, %s20
        $region90: #{gat_forward.7} parent=73 // pred_fallthru
          _
      $region74: #{gat_forward.7} parent=5 // pred_fallthru
        _
      %p1591 = scmp.le.s32.totalorder 2, %s11
      // Predicated region
      $region91: #{gat_forward.7} parent=5 // pred_check
        %p1592 = pneg %p1591
      $region92: #{gat_forward.7} parent=5 // pred_check_branch
        %1594 = sbr.rel (%p1592) target = $region94
      $region93: #{gat_forward.7} parent=5 // pred_region
        %s1595 = ssub.s32 %s11, 2
        // Predicated region
        $region95: #{gat_forward.7} parent=93 // pred_check
          %p1596 = pneg %p179
        $region96: #{gat_forward.7} parent=93 // pred_check_branch
          %1598 = sbr.rel (%p1596) target = $region98
        $region97: #{gat_forward.7} parent=93 // pred_region
          %s1599 = smul.u32 16, %s22
          %p1600 = scmp.lt.s32.totalorder %s1599, 31
          %s1601 = scalar_select %p1600, %s1599, 31
          %s1602 = smul.addr %s1601, 8
          %s1603 = scalar_lea.vmem %s5, %s1602
        $region98: #{gat_forward.7} parent=93 // pred_fallthru
          _
      $region94: #{gat_forward.7} parent=5 // pred_fallthru
        _
    $region6: #{gat_forward.7} parent=1 // loop_footer
      %s15 = sadd.s32 1, %s11
    $region7: #{gat_forward.7} parent=1 // loop_footer_branch
      %10 = sbr.rel target = $region3
    $region8: #{gat_forward.7} parent=1 // loop_exit
      _

// kernel: gat_forward.5
$region0: #{gat_forward.5}
  #allocation0 [shape = 'u32[]', space=smem, size = 0x4, offset = 0x4, fixed_abs, tag = 'smem constant byte address 0x4 - core index']
  #allocation1 [shape = 'u32[144,128]{1,0:T(1,128)}', space=vmem, size = 0x12000, scoped, tag = 'internal scratch']
  #allocation2 [shape = 'f32[128,4]{1,0:T(8,128)}', space=vmem, size = 0x10000, scoped, tag = 'scratch operand']
  #allocation3 [shape = 'f32[128,4]{1,0:T(8,128)}', space=vmem, size = 0x10000, scoped, tag = 'scratch operand']
  #allocation4 [shape = 'f32[128,64]{1,0:T(8,128)}', space=vmem, size = 0x10000, scoped, tag = 'scratch operand']
  %s0 = inlined_call_operand.vmem [shape: bf16[256,64], index: 0, kind: input, shape index: {}]
  %s1 = inlined_call_operand.vmem [shape: f32[4,256], index: 1, kind: input, shape index: {}]
  %s2 = inlined_call_operand.vmem [shape: f32[256,4], index: 2, kind: input, shape index: {}]
  %s3 = inlined_call_operand.vmem [shape: f32[1,64], index: 3, kind: input, shape index: {}]
  %s4 = inlined_call_operand.vmem [shape: s8[256,256], index: 4, kind: input, shape index: {}]
  %s5 = inlined_call_operand.vmem [shape: f32[256,64], index: 5, kind: output, shape index: {}]
  %s6 = sld [smem:[#allocation0]]
  $region99: #{gat_forward.5} parent=0
    _
  %s8 = ssub.s32 1, %s6
  %s9 = scalar_select 0, %s8, %s6
  $region1: #{gat_forward.5} parent=0
    #allocation5 [shape = 'u8[32768]{0}', space=vmem, size = 0x8000, scoped, tag = 'input window, operand 4']
    loop: start=0, step=1, limit=6
    $region2: #{gat_forward.5} parent=1 // loop_pre_header
      _
    $region3: #{gat_forward.5} parent=1 // loop_header
      %s11 = sphi 0, %s15
      %p12 = scmp.ge.s32.totalorder %s11, 6
      %s18 = sphi 0, %s30
      %s19 = sphi 0, %s26
      %s20 = sphi 0, %s18
      %s21 = sphi 0, %s19
      %s22 = sphi 0, %s20
      %s23 = sphi 0, %s21
      %s33 = sphi 0, %s35
      %s36 = sphi 0, %s33
      %s37 = sphi 0, %s36
      %s53 = sphi 0, %s37
      %s59 = sphi 0, %s61
      %s62 = sphi 0, %s59
      %s63 = sphi 0, %s62
      %s79 = sphi 0, %s63
      %s85 = sphi 0, %s87
      %s88 = sphi 0, %s85
      %s89 = sphi 0, %s88
      %s105 = sphi 0, %s89
      %s109 = sphi 0, %s109
      %s111 = sphi 0, %s109
      %s112 = sphi 0, %s111
      %s126 = sphi 0, %s112
      %s134 = sphi 0, %s136
      %s137 = sphi 0, %s134
      %s138 = sphi 0, %s137
      %s154 = sphi 0, %s138
      %s160 = sphi 0, %s162
      %s163 = sphi 0, %s160
      %s164 = sphi 0, %s163
      %s180 = sphi 0, %s164
    $region4: #{gat_forward.5} parent=1 // loop_header_branch
      %14 = sbr.rel (%p12) target = $region8
    $region5: #{gat_forward.5} parent=1 // loop_body
      %s16 = ssub.s32 %s11, 1
      %s17 = ssub.s32 %s11, 2
      %s24 = sadd.s32 1, %s19
      %p25 = scmp.ge.s32.totalorder %s24, 2
      %s26 = scalar_select %p25, 0, %s24
      %s27 = sadd.s32 1, %s18
      %s28 = scalar_select %p25, %s27, %s18
      %p29 = scmp.ge.s32.totalorder %s28, 2
      %s30 = scalar_select %p29, 0, %s28
      %s31 = ssub.s32 %s19, %s26
      %p32 = scmp.eq.s32.totalorder %s31, 0
      %s34 = sadd.s32 %s33, 1
      %s35 = scalar_select %p32, %s33, %s34
      %p38 = pneg %p32
      %p39 = scmp.eq.s32.totalorder %s11, 3
      %p40 = por %p38, %p39
      %p41 = scmp.ne.s32.totalorder %s33, %s36
      %p42 = scmp.eq.s32.totalorder %s11, 0
      %p43 = por %p41, %p42
      %p44 = scmp.ne.s32.totalorder %s33, %s36
      %p45 = scmp.eq.s32.totalorder %s16, 3
      %p46 = por %p44, %p45
      %p47 = scmp.ne.s32.totalorder %s36, %s37
      %p48 = scmp.eq.s32.totalorder %s16, 0
      %p49 = por %p47, %p48
      %p50 = scmp.ne.s32.totalorder %s36, %s37
      %p51 = scmp.eq.s32.totalorder %s17, 3
      %p52 = por %p50, %p51
      %p54 = scmp.ne.s32.totalorder %s37, %s53
      %p55 = scmp.eq.s32.totalorder %s17, 0
      %p56 = por %p54, %p55
      %s57 = ssub.s32 %s19, %s26
      %p58 = scmp.eq.s32.totalorder %s57, 0
      %s60 = sadd.s32 %s59, 1
      %s61 = scalar_select %p58, %s59, %s60
      %p64 = pneg %p58
      %p65 = scmp.eq.s32.totalorder %s11, 3
      %p66 = por %p64, %p65
      %p67 = scmp.ne.s32.totalorder %s59, %s62
      %p68 = scmp.eq.s32.totalorder %s11, 0
      %p69 = por %p67, %p68
      %p70 = scmp.ne.s32.totalorder %s59, %s62
      %p71 = scmp.eq.s32.totalorder %s16, 3
      %p72 = por %p70, %p71
      %p73 = scmp.ne.s32.totalorder %s62, %s63
      %p74 = scmp.eq.s32.totalorder %s16, 0
      %p75 = por %p73, %p74
      %p76 = scmp.ne.s32.totalorder %s62, %s63
      %p77 = scmp.eq.s32.totalorder %s17, 3
      %p78 = por %p76, %p77
      %p80 = scmp.ne.s32.totalorder %s63, %s79
      %p81 = scmp.eq.s32.totalorder %s17, 0
      %p82 = por %p80, %p81
      %s83 = ssub.s32 %s18, %s30
      %p84 = scmp.eq.s32.totalorder %s83, 0
      %s86 = sadd.s32 %s85, 1
      %s87 = scalar_select %p84, %s85, %s86
      %p90 = pneg %p84
      %p91 = scmp.eq.s32.totalorder %s11, 3
      %p92 = por %p90, %p91
      %p93 = scmp.ne.s32.totalorder %s85, %s88
      %p94 = scmp.eq.s32.totalorder %s11, 0
      %p95 = por %p93, %p94
      %p96 = scmp.ne.s32.totalorder %s85, %s88
      %p97 = scmp.eq.s32.totalorder %s16, 3
      %p98 = por %p96, %p97
      %p99 = scmp.ne.s32.totalorder %s88, %s89
      %p100 = scmp.eq.s32.totalorder %s16, 0
      %p101 = por %p99, %p100
      %p102 = scmp.ne.s32.totalorder %s88, %s89
      %p103 = scmp.eq.s32.totalorder %s17, 3
      %p104 = por %p102, %p103
      %p106 = scmp.ne.s32.totalorder %s89, %s105
      %p107 = scmp.eq.s32.totalorder %s17, 0
      %p108 = por %p106, %p107
      %s110 = sadd.s32 %s109, 1
      %p113 = scmp.eq.s32.totalorder %s11, 3
      %p114 = scmp.ne.s32.totalorder %s109, %s111
      %p115 = scmp.eq.s32.totalorder %s11, 0
      %p116 = por %p114, %p115
      %p117 = scmp.ne.s32.totalorder %s109, %s111
      %p118 = scmp.eq.s32.totalorder %s16, 3
      %p119 = por %p117, %p118
      %p120 = scmp.ne.s32.totalorder %s111, %s112
      %p121 = scmp.eq.s32.totalorder %s16, 0
      %p122 = por %p120, %p121
      %p123 = scmp.ne.s32.totalorder %s111, %s112
      %p124 = scmp.eq.s32.totalorder %s17, 3
      %p125 = por %p123, %p124
      %p127 = scmp.ne.s32.totalorder %s112, %s126
      %p128 = scmp.eq.s32.totalorder %s17, 0
      %p129 = por %p127, %p128
      %s130 = ssub.s32 %s18, %s30
      %s131 = ssub.s32 %s19, %s26
      %s132 = sor.u32 %s130, %s131
      %p133 = scmp.eq.s32.totalorder %s132, 0
      %s135 = sadd.s32 %s134, 1
      %s136 = scalar_select %p133, %s134, %s135
      %p139 = pneg %p133
      %p140 = scmp.eq.s32.totalorder %s11, 3
      %p141 = por %p139, %p140
      %p142 = scmp.ne.s32.totalorder %s134, %s137
      %p143 = scmp.eq.s32.totalorder %s11, 0
      %p144 = por %p142, %p143
      %p145 = scmp.ne.s32.totalorder %s134, %s137
      %p146 = scmp.eq.s32.totalorder %s16, 3
      %p147 = por %p145, %p146
      %p148 = scmp.ne.s32.totalorder %s137, %s138
      %p149 = scmp.eq.s32.totalorder %s16, 0
      %p150 = por %p148, %p149
      %p151 = scmp.ne.s32.totalorder %s137, %s138
      %p152 = scmp.eq.s32.totalorder %s17, 3
      %p153 = por %p151, %p152
      %p155 = scmp.ne.s32.totalorder %s138, %s154
      %p156 = scmp.eq.s32.totalorder %s17, 0
      %p157 = por %p155, %p156
      %s158 = ssub.s32 %s18, %s30
      %p159 = scmp.eq.s32.totalorder %s158, 0
      %s161 = sadd.s32 %s160, 1
      %s162 = scalar_select %p159, %s160, %s161
      %p165 = pneg %p159
      %p166 = scmp.eq.s32.totalorder %s11, 3
      %p167 = por %p165, %p166
      %p168 = scmp.ne.s32.totalorder %s160, %s163
      %p169 = scmp.eq.s32.totalorder %s11, 0
      %p170 = por %p168, %p169
      %p171 = scmp.ne.s32.totalorder %s160, %s163
      %p172 = scmp.eq.s32.totalorder %s16, 3
      %p173 = por %p171, %p172
      %p174 = scmp.ne.s32.totalorder %s163, %s164
      %p175 = scmp.eq.s32.totalorder %s16, 0
      %p176 = por %p174, %p175
      %p177 = scmp.ne.s32.totalorder %s163, %s164
      %p178 = scmp.eq.s32.totalorder %s17, 3
      %p179 = por %p177, %p178
      %p181 = scmp.ne.s32.totalorder %s164, %s180
      %p182 = scmp.eq.s32.totalorder %s17, 0
      %p183 = por %p181, %p182
      %p184 = scmp.le.s32.totalorder 1, %s11
      %p185 = scmp.lt.s32.totalorder %s11, 5
      %p186 = pnand %p184, %p185
      %p187 = pneg %p186
      // Predicated region
      $region9: #{gat_forward.5} parent=5 // pred_check
        _
      $region10: #{gat_forward.5} parent=5 // pred_check_branch
        %189 = sbr.rel (%p186) target = $region12
      $region11: #{gat_forward.5} parent=5 // pred_region
        %s190 = ssub.s32 %s11, 1
        // Predicated region
        $region13: #{gat_forward.5} parent=11 // pred_check
          %p191 = pneg %p122
        $region14: #{gat_forward.5} parent=11 // pred_check_branch
          %193 = sbr.rel (%p191) target = $region16
        $region15: #{gat_forward.5} parent=11 // pred_region
          _
        $region16: #{gat_forward.5} parent=11 // pred_fallthru
          _
      $region12: #{gat_forward.5} parent=5 // pred_fallthru
        _
      %p194 = scmp.lt.s32.totalorder %s11, 4
      // Predicated region
      $region17: #{gat_forward.5} parent=5 // pred_check
        %p195 = pneg %p194
      $region18: #{gat_forward.5} parent=5 // pred_check_branch
        %197 = sbr.rel (%p195) target = $region20
      $region19: #{gat_forward.5} parent=5 // pred_region
        // Predicated region
        $region21: #{gat_forward.5} parent=19 // pred_check
          %p198 = pneg %p43
        $region22: #{gat_forward.5} parent=19 // pred_check_branch
          %200 = sbr.rel (%p198) target = $region24
        $region23: #{gat_forward.5} parent=19 // pred_region
          %s201 = smul.u32 16, %s19
          %p202 = scmp.lt.s32.totalorder %s201, 31
          %s203 = scalar_select %p202, %s201, 31
          %s204 = smul.addr %s203, 4
          %s205 = scalar_lea.vmem %s0, %s204
          %s206 = smul.u32 16, %s19
        $region24: #{gat_forward.5} parent=19 // pred_fallthru
          _
        // Predicated region
        $region25: #{gat_forward.5} parent=19 // pred_check
          %p207 = pneg %p69
        $region26: #{gat_forward.5} parent=19 // pred_check_branch
          %209 = sbr.rel (%p207) target = $region28
        $region27: #{gat_forward.5} parent=19 // pred_region
          %p210 = scmp.lt.s32.totalorder %s19, 1
          %s211 = scalar_select %p210, %s19, 1
          %s212 = smul.addr %s211, 4
          %s213 = scalar_lea.vmem %s1, %s212
        $region28: #{gat_forward.5} parent=19 // pred_fallthru
          _
        // Predicated region
        $region29: #{gat_forward.5} parent=19 // pred_check
          %p214 = pneg %p95
        $region30: #{gat_forward.5} parent=19 // pred_check_branch
          %216 = sbr.rel (%p214) target = $region32
        $region31: #{gat_forward.5} parent=19 // pred_region
          %s217 = smul.u32 16, %s18
          %p218 = scmp.lt.s32.totalorder %s217, 31
          %s219 = scalar_select %p218, %s217, 31
          %s220 = smul.addr %s219, 8
          %s221 = scalar_lea.vmem %s2, %s220
          %s222 = smul.u32 16, %s18
        $region32: #{gat_forward.5} parent=19 // pred_fallthru
          _
        // Predicated region
        $region33: #{gat_forward.5} parent=19 // pred_check
          %p223 = pneg %p144
        $region34: #{gat_forward.5} parent=19 // pred_check_branch
          %225 = sbr.rel (%p223) target = $region36
        $region35: #{gat_forward.5} parent=19 // pred_region
          %s226 = sand.u32 %s134, 1
          %s227 = sand.u32 %s134, 1
          %s228 = smul.addr %s227, 32
          %s229 = scalar_lea.vmem [#allocation5], %s228
          %s230 = smul.u32 4, %s18
          %s231 = smul.addr %s230, 2
          %s232 = sadd.s32 %s19, %s231
          %s233 = smul.addr %s232, 8
          %s234 = scalar_lea.vmem %s4, %s233
          // Predicated region
          $region37: #{gat_forward.5} parent=35 // pred_check
            _
          $region38: #{gat_forward.5} parent=35 // pred_check_branch
            %236 = sbr.rel (0) target = $region40
          $region39: #{gat_forward.5} parent=35 // pred_region
            // Predicated region
            $region41: #{gat_forward.5} parent=39 // pred_check
              _
            $region42: #{gat_forward.5} parent=39 // pred_check_branch
              %238 = sbr.rel (0) target = $region44
            $region43: #{gat_forward.5} parent=39 // pred_region
              // Predicated region
              $region56: #{gat_forward.5} parent=43 // pred_check
                _
              $region57: #{gat_forward.5} parent=43 // pred_check_branch
                %259 = sbr.rel (0) target = $region59
              $region58: #{gat_forward.5} parent=43 // pred_region
                loop: start=0, step=1, limit=1
                $region60: #{gat_forward.5} parent=58 // loop_pre_header
                  _
                $region61: #{gat_forward.5} parent=58 // loop_header
                  %s261 = sphi 0, %s265
                  %p262 = scmp.ge.s32.totalorder %s261, 1
                  %s266 = sphi %s234, %s234
                  %s267 = sphi %s229, %s229
                $region62: #{gat_forward.5} parent=58 // loop_header_branch
                  %264 = sbr.rel (%p262) target = $region66
                $region63: #{gat_forward.5} parent=58 // loop_body
                  %v268 = vld [vmem:[%s266] sm:$0xff]
                  %269 = vst [vmem:[%s267] sm:$0xff] %v268
                  %v270 = vld [vmem:[%s266 + $0x10] sm:$0xff]
                  %271 = vst [vmem:[%s267 + $0x8] sm:$0xff] %v270
                  %v272 = vld [vmem:[%s266 + $0x20] sm:$0xff]
                  %273 = vst [vmem:[%s267 + $0x10] sm:$0xff] %v272
                  %v274 = vld [vmem:[%s266 + $0x30] sm:$0xff]
                  %275 = vst [vmem:[%s267 + $0x18] sm:$0xff] %v274
                $region64: #{gat_forward.5} parent=58 // loop_footer
                  %s265 = sadd.s32 1, %s261
                $region65: #{gat_forward.5} parent=58 // loop_footer_branch
                  %260 = sbr.rel target = $region61
                $region66: #{gat_forward.5} parent=58 // loop_exit
                  _
              $region59: #{gat_forward.5} parent=43 // pred_fallthru
                _
              // Predicated region
              $region67: #{gat_forward.5} parent=43 // pred_check
                _
              $region68: #{gat_forward.5} parent=43 // pred_check_branch
                %277 = sbr.rel target = $region70
              $region69: #{gat_forward.5} parent=43 // pred_region
                _
              $region70: #{gat_forward.5} parent=43 // pred_fallthru
                _
            $region44: #{gat_forward.5} parent=39 // pred_fallthru
              _
            // Predicated region
            $region45: #{gat_forward.5} parent=39 // pred_check
              _
            $region46: #{gat_forward.5} parent=39 // pred_check_branch
              %240 = sbr.rel target = $region48
            $region47: #{gat_forward.5} parent=39 // pred_region
              loop: start=0, step=1, limit=1
              $region49: #{gat_forward.5} parent=47 // loop_pre_header
                _
              $region50: #{gat_forward.5} parent=47 // loop_header
                %s243 = sphi 0, %s247
                %p244 = scmp.ge.s32.totalorder %s243, 1
                %s248 = sphi %s234, %s234
                %s249 = sphi %s229, %s229
              $region51: #{gat_forward.5} parent=47 // loop_header_branch
                %246 = sbr.rel (%p244) target = $region55
              $region52: #{gat_forward.5} parent=47 // loop_body
                %v250 = vld [vmem:[%s248] sm:$0xff]
                %251 = vst [vmem:[%s249] sm:$0xff] %v250
                %v252 = vld [vmem:[%s248 + $0x10] sm:$0xff]
                %253 = vst [vmem:[%s249 + $0x8] sm:$0xff] %v252
                %v254 = vld [vmem:[%s248 + $0x20] sm:$0xff]
                %255 = vst [vmem:[%s249 + $0x10] sm:$0xff] %v254
                %v256 = vld [vmem:[%s248 + $0x30] sm:$0xff]
                %257 = vst [vmem:[%s249 + $0x18] sm:$0xff] %v256
              $region53: #{gat_forward.5} parent=47 // loop_footer
                %s247 = sadd.s32 1, %s243
              $region54: #{gat_forward.5} parent=47 // loop_footer_branch
                %242 = sbr.rel target = $region50
              $region55: #{gat_forward.5} parent=47 // loop_exit
                _
            $region48: #{gat_forward.5} parent=39 // pred_fallthru
              _
          $region40: #{gat_forward.5} parent=35 // pred_fallthru
            _
          %278 = vnop
        $region36: #{gat_forward.5} parent=19 // pred_fallthru
          _
      $region20: #{gat_forward.5} parent=5 // pred_fallthru
        _
      %p279 = scmp.le.s32.totalorder 1, %s11
      %p280 = scmp.lt.s32.totalorder %s11, 5
      %p281 = pnand %p279, %p280
      %p282 = pneg %p281
      // Predicated region
      $region71: #{gat_forward.5} parent=5 // pred_check
        _
      $region72: #{gat_forward.5} parent=5 // pred_check_branch
        %284 = sbr.rel (%p281) target = $region74
      $region73: #{gat_forward.5} parent=5 // pred_region
        %s285 = ssub.s32 %s11, 1
        %s286 = sand.u32 %s137, 1
        %s287 = sand.u32 %s137, 1
        %s288 = smul.addr %s287, 32
        %s289 = scalar_lea.vmem [#allocation5], %s288
        // Predicated region
        $region75: #{gat_forward.5} parent=73 // pred_check
          %p290 = pneg %p150
        $region76: #{gat_forward.5} parent=73 // pred_check_branch
          %292 = sbr.rel (%p290) target = $region78
        $region77: #{gat_forward.5} parent=73 // pred_region
          _
        $region78: #{gat_forward.5} parent=73 // pred_fallthru
          _
        %s293 = smul.u32 16, %s21
        %p294 = scmp.lt.s32.totalorder %s293, 31
        %s295 = scalar_select %p294, %s293, 31
        %s296 = smul.addr %s295, 4
        %s297 = scalar_lea.vmem %s0, %s296
        %p298 = pneg %p49
        %p299 = pneg %p46
        %p300 = scmp.lt.s32.totalorder %s21, 1
        %s301 = scalar_select %p300, %s21, 1
        %s302 = smul.addr %s301, 4
        %s303 = scalar_lea.vmem %s1, %s302
        %p304 = pneg %p75
        %p305 = pneg %p72
        %s306 = smul.u32 16, %s20
        %p307 = scmp.lt.s32.totalorder %s306, 31
        %s308 = scalar_select %p307, %s306, 31
        %s309 = smul.addr %s308, 8
        %s310 = scalar_lea.vmem %s2, %s309
        %p311 = pneg %p101
        %p312 = pneg %p98
        %p313 = pneg %p122
        %p314 = pneg %p119
        %s315 = sand.u32 %s137, 1
        %s316 = sand.u32 %s137, 1
        %s317 = smul.addr %s316, 32
        %s318 = scalar_lea.vmem [#allocation5], %s317
        %p319 = pneg %p150
        %p320 = pneg %p147
        %p321 = pneg %p176
        %p322 = pneg %p173
        %s323 = smul.u32 16, %s20
        %p324 = scmp.lt.s32.totalorder %s323, 31
        %s325 = scalar_select %p324, %s323, 31
        %s326 = smul.addr %s325, 8
        %s327 = scalar_lea.vmem %s5, %s326
        %s328 = smul.u32 16, %s21
        %p329 = scmp.lt.s32.totalorder %s328, 31
        %s330 = scalar_select %p329, %s328, 31
        %s331 = smul.addr %s330, 4
        %s332 = scalar_lea.vmem %s0, %s331
        %s333 = smul.u32 16, %s21
        %p334 = scmp.lt.s32.totalorder %s21, 1
        %s335 = scalar_select %p334, %s21, 1
        %s336 = smul.addr %s335, 4
        %s337 = scalar_lea.vmem %s1, %s336
        %s338 = smul.u32 16, %s20
        %p339 = scmp.lt.s32.totalorder %s338, 31
        %s340 = scalar_select %p339, %s338, 31
        %s341 = smul.addr %s340, 8
        %s342 = scalar_lea.vmem %s2, %s341
        %s343 = smul.u32 16, %s20
        %s344 = smul.u32 4, %s20
        %s345 = smul.u32 16, %s20
        %p346 = scmp.lt.s32.totalorder %s345, 31
        %s347 = scalar_select %p346, %s345, 31
        %s348 = smul.addr %s347, 8
        %s349 = scalar_lea.vmem %s5, %s348
        %s350 = smul.u32 16, %s20
        %p354 = scmp.eq.s32.totalorder %s21, 0
        // Predicated region
        $region79: #{gat_forward.5} parent=73 // pred_check
          %p355 = pneg %p354
        $region80: #{gat_forward.5} parent=73 // pred_check_branch
          %357 = sbr.rel (%p355) target = $region82
        $region81: #{gat_forward.5} parent=73 // pred_region
          %vm358 = vcmask 31744
          %359 = vst.msk [vmem:[#allocation2] sm:$0xff] %vm358, -1e+30
          %360 = vst.msk [vmem:[#allocation2 + $0x8] sm:$0xff] %vm358, -1e+30
          %361 = vst.msk [vmem:[#allocation2 + $0x10] sm:$0xff] %vm358, -1e+30
          %362 = vst.msk [vmem:[#allocation2 + $0x18] sm:$0xff] %vm358, -1e+30
          %363 = vst.msk [vmem:[#allocation2 + $0x20] sm:$0xff] %vm358, -1e+30
          %364 = vst.msk [vmem:[#allocation2 + $0x28] sm:$0xff] %vm358, -1e+30
          %365 = vst.msk [vmem:[#allocation2 + $0x30] sm:$0xff] %vm358, -1e+30
          %366 = vst.msk [vmem:[#allocation2 + $0x38] sm:$0xff] %vm358, -1e+30
          %367 = vst.msk [vmem:[#allocation2 + $0x40] sm:$0xff] %vm358, -1e+30
          %368 = vst.msk [vmem:[#allocation2 + $0x48] sm:$0xff] %vm358, -1e+30
          %369 = vst.msk [vmem:[#allocation2 + $0x50] sm:$0xff] %vm358, -1e+30
          %370 = vst.msk [vmem:[#allocation2 + $0x58] sm:$0xff] %vm358, -1e+30
          %371 = vst.msk [vmem:[#allocation2 + $0x60] sm:$0xff] %vm358, -1e+30
          %372 = vst.msk [vmem:[#allocation2 + $0x68] sm:$0xff] %vm358, -1e+30
          %373 = vst.msk [vmem:[#allocation2 + $0x70] sm:$0xff] %vm358, -1e+30
          %374 = vst.msk [vmem:[#allocation2 + $0x78] sm:$0xff] %vm358, -1e+30
          %375 = vst.msk [vmem:[#allocation3] sm:$0xff] %vm358, 0.0
          %376 = vst.msk [vmem:[#allocation3 + $0x8] sm:$0xff] %vm358, 0.0
          %377 = vst.msk [vmem:[#allocation3 + $0x10] sm:$0xff] %vm358, 0.0
          %378 = vst.msk [vmem:[#allocation3 + $0x18] sm:$0xff] %vm358, 0.0
          %379 = vst.msk [vmem:[#allocation3 + $0x20] sm:$0xff] %vm358, 0.0
          %380 = vst.msk [vmem:[#allocation3 + $0x28] sm:$0xff] %vm358, 0.0
          %381 = vst.msk [vmem:[#allocation3 + $0x30] sm:$0xff] %vm358, 0.0
          %382 = vst.msk [vmem:[#allocation3 + $0x38] sm:$0xff] %vm358, 0.0
          %383 = vst.msk [vmem:[#allocation3 + $0x40] sm:$0xff] %vm358, 0.0
          %384 = vst.msk [vmem:[#allocation3 + $0x48] sm:$0xff] %vm358, 0.0
          %385 = vst.msk [vmem:[#allocation3 + $0x50] sm:$0xff] %vm358, 0.0
          %386 = vst.msk [vmem:[#allocation3 + $0x58] sm:$0xff] %vm358, 0.0
          %387 = vst.msk [vmem:[#allocation3 + $0x60] sm:$0xff] %vm358, 0.0
          %388 = vst.msk [vmem:[#allocation3 + $0x68] sm:$0xff] %vm358, 0.0
          %389 = vst.msk [vmem:[#allocation3 + $0x70] sm:$0xff] %vm358, 0.0
          %390 = vst.msk [vmem:[#allocation3 + $0x78] sm:$0xff] %vm358, 0.0
          %vm391 = vcmask 523264
          %392 = vst.msk [vmem:[#allocation4] sm:$0xff] %vm391, 0.0
          %393 = vst.msk [vmem:[#allocation4 + $0x8] sm:$0xff] %vm391, 0.0
          %394 = vst.msk [vmem:[#allocation4 + $0x10] sm:$0xff] %vm391, 0.0
          %395 = vst.msk [vmem:[#allocation4 + $0x18] sm:$0xff] %vm391, 0.0
          %396 = vst.msk [vmem:[#allocation4 + $0x20] sm:$0xff] %vm391, 0.0
          %397 = vst.msk [vmem:[#allocation4 + $0x28] sm:$0xff] %vm391, 0.0
          %398 = vst.msk [vmem:[#allocation4 + $0x30] sm:$0xff] %vm391, 0.0
          %399 = vst.msk [vmem:[#allocation4 + $0x38] sm:$0xff] %vm391, 0.0
          %400 = vst.msk [vmem:[#allocation4 + $0x40] sm:$0xff] %vm391, 0.0
          %401 = vst.msk [vmem:[#allocation4 + $0x48] sm:$0xff] %vm391, 0.0
          %402 = vst.msk [vmem:[#allocation4 + $0x50] sm:$0xff] %vm391, 0.0
          %403 = vst.msk [vmem:[#allocation4 + $0x58] sm:$0xff] %vm391, 0.0
          %404 = vst.msk [vmem:[#allocation4 + $0x60] sm:$0xff] %vm391, 0.0
          %405 = vst.msk [vmem:[#allocation4 + $0x68] sm:$0xff] %vm391, 0.0
          %406 = vst.msk [vmem:[#allocation4 + $0x70] sm:$0xff] %vm391, 0.0
          %407 = vst.msk [vmem:[#allocation4 + $0x78] sm:$0xff] %vm391, 0.0
        $region82: #{gat_forward.5} parent=73 // pred_fallthru
          _
        %v408 = vld [vmem:[%s289] sm:$0xff]
        %v409 = vld [vmem:[%s289 + $0x8] sm:$0xff]
        %v410 = vld [vmem:[%s289 + $0x10] sm:$0xff]
        %v411 = vld [vmem:[%s289 + $0x18] sm:$0xff]
        %vm412 = vnez %v408
        %vm413 = vnez %v409
        %vm414 = vnez %v410
        %vm415 = vnez %v411
        %v416 = vld [vmem:[%s342] sm:$0xff]
        %v417 = vld [vmem:[%s342 + $0x8] sm:$0xff]
        %v418 = vld [vmem:[%s342 + $0x10] sm:$0xff]
        %v419 = vld [vmem:[%s342 + $0x18] sm:$0xff]
        %v420 = vld [vmem:[%s342 + $0x20] sm:$0xff]
        %v421 = vld [vmem:[%s342 + $0x28] sm:$0xff]
        %v422 = vld [vmem:[%s342 + $0x30] sm:$0xff]
        %v423 = vld [vmem:[%s342 + $0x38] sm:$0xff]
        %v424 = vld [vmem:[%s342 + $0x40] sm:$0xff]
        %v425 = vld [vmem:[%s342 + $0x48] sm:$0xff]
        %v426 = vld [vmem:[%s342 + $0x50] sm:$0xff]
        %v427 = vld [vmem:[%s342 + $0x58] sm:$0xff]
        %v428 = vld [vmem:[%s342 + $0x60] sm:$0xff]
        %v429 = vld [vmem:[%s342 + $0x68] sm:$0xff]
        %v430 = vld [vmem:[%s342 + $0x70] sm:$0xff]
        %v431 = vld [vmem:[%s342 + $0x78] sm:$0xff]
        %v432 = vld [vmem:[%s337] sm:$0x1]
        %434 = vset.pattern.permute.xlu0 0
        %435 = vperm.xlu0 %434, %v416
        %v436 = vpop.permute.xlu0 %435
        %439 = vset.pattern.permute.xlu0 0
        %440 = vperm.xlu0 %439, %v417
        %v441 = vpop.permute.xlu0 %440
        %444 = vset.pattern.permute.xlu0 0
        %445 = vperm.xlu0 %444, %v418
        %v446 = vpop.permute.xlu0 %445
        %449 = vset.pattern.permute.xlu0 0
        %450 = vperm.xlu0 %449, %v419
        %v451 = vpop.permute.xlu0 %450
        %454 = vset.pattern.permute.xlu0 0
        %455 = vperm.xlu0 %454, %v420
        %v456 = vpop.permute.xlu0 %455
        %459 = vset.pattern.permute.xlu0 0
        %460 = vperm.xlu0 %459, %v421
        %v461 = vpop.permute.xlu0 %460
        %464 = vset.pattern.permute.xlu0 0
        %465 = vperm.xlu0 %464, %v422
        %v466 = vpop.permute.xlu0 %465
        %469 = vset.pattern.permute.xlu0 0
        %470 = vperm.xlu0 %469, %v423
        %v471 = vpop.permute.xlu0 %470
        %474 = vset.pattern.permute.xlu0 0
        %475 = vperm.xlu0 %474, %v424
        %v476 = vpop.permute.xlu0 %475
        %479 = vset.pattern.permute.xlu0 0
        %480 = vperm.xlu0 %479, %v425
        %v481 = vpop.permute.xlu0 %480
        %484 = vset.pattern.permute.xlu0 0
        %485 = vperm.xlu0 %484, %v426
        %v486 = vpop.permute.xlu0 %485
        %489 = vset.pattern.permute.xlu0 0
        %490 = vperm.xlu0 %489, %v427
        %v491 = vpop.permute.xlu0 %490
        %494 = vset.pattern.permute.xlu0 0
        %495 = vperm.xlu0 %494, %v428
        %v496 = vpop.permute.xlu0 %495
        %499 = vset.pattern.permute.xlu0 0
        %500 = vperm.xlu0 %499, %v429
        %v501 = vpop.permute.xlu0 %500
        %504 = vset.pattern.permute.xlu0 0
        %505 = vperm.xlu0 %504, %v430
        %v506 = vpop.permute.xlu0 %505
        %509 = vset.pattern.permute.xlu0 0
        %510 = vperm.xlu0 %509, %v431
        %v511 = vpop.permute.xlu0 %510
        %v513 = vlaneseq
        %v514 = vshrl.u32 %v513, 7
        %v515 = vsub.s32 0, %v514
        %v516 = vrot.slane %v432, %v515
        %v517 = vadd.f32 %v436, %v516
        %v518 = vadd.f32 %v441, %v516
        %v519 = vadd.f32 %v446, %v516
        %v520 = vadd.f32 %v451, %v516
        %v521 = vadd.f32 %v456, %v516
        %v522 = vadd.f32 %v461, %v516
        %v523 = vadd.f32 %v466, %v516
        %v524 = vadd.f32 %v471, %v516
        %v525 = vadd.f32 %v476, %v516
        %v526 = vadd.f32 %v481, %v516
        %v527 = vadd.f32 %v486, %v516
        %v528 = vadd.f32 %v491, %v516
        %v529 = vadd.f32 %v496, %v516
        %v530 = vadd.f32 %v501, %v516
        %v531 = vadd.f32 %v506, %v516
        %v532 = vadd.f32 %v511, %v516
        %v533 = vmul.f32 %v517, 0.2
        %v534 = vmul.f32 %v518, 0.2
        %v535 = vmul.f32 %v519, 0.2
        %v536 = vmul.f32 %v520, 0.2
        %v537 = vmul.f32 %v521, 0.2
        %v538 = vmul.f32 %v522, 0.2
        %v539 = vmul.f32 %v523, 0.2
        %v540 = vmul.f32 %v524, 0.2
        %v541 = vmul.f32 %v525, 0.2
        %v542 = vmul.f32 %v526, 0.2
        %v543 = vmul.f32 %v527, 0.2
        %v544 = vmul.f32 %v528, 0.2
        %v545 = vmul.f32 %v529, 0.2
        %v546 = vmul.f32 %v530, 0.2
        %v547 = vmul.f32 %v531, 0.2
        %v548 = vmul.f32 %v532, 0.2
        %v549 = vmax.f32 %v517, %v533
        %v550 = vmax.f32 %v518, %v534
        %v551 = vmax.f32 %v519, %v535
        %v552 = vmax.f32 %v520, %v536
        %v553 = vmax.f32 %v521, %v537
        %v554 = vmax.f32 %v522, %v538
        %v555 = vmax.f32 %v523, %v539
        %v556 = vmax.f32 %v524, %v540
        %v557 = vmax.f32 %v525, %v541
        %v558 = vmax.f32 %v526, %v542
        %v559 = vmax.f32 %v527, %v543
        %v560 = vmax.f32 %v528, %v544
        %v561 = vmax.f32 %v529, %v545
        %v562 = vmax.f32 %v530, %v546
        %v563 = vmax.f32 %v531, %v547
        %v564 = vmax.f32 %v532, %v548
        %v565 = vsel %vm412, 16843009, 0
        %v566 = vsel %vm413, 16843009, 0
        %v567 = vsel %vm414, 16843009, 0
        %v568 = vsel %vm415, 16843009, 0
        %v569 = vunpack.c.0.s8 %v565
        %v570 = vunpack.c.1.s8 %v565
        %v571 = vunpack.c.2.s8 %v565
        %v572 = vunpack.c.3.s8 %v565
        %v573 = vunpack.c.0.s8 %v566
        %v574 = vunpack.c.1.s8 %v566
        %v575 = vunpack.c.2.s8 %v566
        %v576 = vunpack.c.3.s8 %v566
        %v577 = vunpack.c.0.s8 %v567
        %v578 = vunpack.c.1.s8 %v567
        %v579 = vunpack.c.2.s8 %v567
        %v580 = vunpack.c.3.s8 %v567
        %v581 = vunpack.c.0.s8 %v568
        %v582 = vunpack.c.1.s8 %v568
        %v583 = vunpack.c.2.s8 %v568
        %v584 = vunpack.c.3.s8 %v568
        %v585 = vpack.c.b16 %v569, %v569
        %v586 = vpack.c.b8 %v585, %v585
        %v587 = vpack.c.b16 %v570, %v570
        %v588 = vpack.c.b8 %v587, %v587
        %v589 = vpack.c.b16 %v571, %v571
        %v590 = vpack.c.b8 %v589, %v589
        %v591 = vpack.c.b16 %v572, %v572
        %v592 = vpack.c.b8 %v591, %v591
        %v593 = vpack.c.b16 %v573, %v573
        %v594 = vpack.c.b8 %v593, %v593
        %v595 = vpack.c.b16 %v574, %v574
        %v596 = vpack.c.b8 %v595, %v595
        %v597 = vpack.c.b16 %v575, %v575
        %v598 = vpack.c.b8 %v597, %v597
        %v599 = vpack.c.b16 %v576, %v576
        %v600 = vpack.c.b8 %v599, %v599
        %v601 = vpack.c.b16 %v577, %v577
        %v602 = vpack.c.b8 %v601, %v601
        %v603 = vpack.c.b16 %v578, %v578
        %v604 = vpack.c.b8 %v603, %v603
        %v605 = vpack.c.b16 %v579, %v579
        %v606 = vpack.c.b8 %v605, %v605
        %v607 = vpack.c.b16 %v580, %v580
        %v608 = vpack.c.b8 %v607, %v607
        %v609 = vpack.c.b16 %v581, %v581
        %v610 = vpack.c.b8 %v609, %v609
        %v611 = vpack.c.b16 %v582, %v582
        %v612 = vpack.c.b8 %v611, %v611
        %v613 = vpack.c.b16 %v583, %v583
        %v614 = vpack.c.b8 %v613, %v613
        %v615 = vpack.c.b16 %v584, %v584
        %v616 = vpack.c.b8 %v615, %v615
        %vm617 = vnez %v586
        %vm618 = vnez %v588
        %vm619 = vnez %v590
        %vm620 = vnez %v592
        %vm621 = vnez %v594
        %vm622 = vnez %v596
        %vm623 = vnez %v598
        %vm624 = vnez %v600
        %vm625 = vnez %v602
        %vm626 = vnez %v604
        %vm627 = vnez %v606
        %vm628 = vnez %v608
        %vm629 = vnez %v610
        %vm630 = vnez %v612
        %vm631 = vnez %v614
        %vm632 = vnez %v616
        %v633 = vsel %vm617, 16843009, 0
        %v634 = vsel %vm618, 16843009, 0
        %v635 = vsel %vm619, 16843009, 0
        %v636 = vsel %vm620, 16843009, 0
        %v637 = vsel %vm621, 16843009, 0
        %v638 = vsel %vm622, 16843009, 0
        %v639 = vsel %vm623, 16843009, 0
        %v640 = vsel %vm624, 16843009, 0
        %v641 = vsel %vm625, 16843009, 0
        %v642 = vsel %vm626, 16843009, 0
        %v643 = vsel %vm627, 16843009, 0
        %v644 = vsel %vm628, 16843009, 0
        %v645 = vsel %vm629, 16843009, 0
        %v646 = vsel %vm630, 16843009, 0
        %v647 = vsel %vm631, 16843009, 0
        %v648 = vsel %vm632, 16843009, 0
        %v649 = vunpack.c.0.s8 %v633
        %v650 = vunpack.c.0.s8 %v634
        %v651 = vunpack.c.0.s8 %v635
        %v652 = vunpack.c.0.s8 %v636
        %v653 = vunpack.c.0.s8 %v637
        %v654 = vunpack.c.0.s8 %v638
        %v655 = vunpack.c.0.s8 %v639
        %v656 = vunpack.c.0.s8 %v640
        %v657 = vunpack.c.0.s8 %v641
        %v658 = vunpack.c.0.s8 %v642
        %v659 = vunpack.c.0.s8 %v643
        %v660 = vunpack.c.0.s8 %v644
        %v661 = vunpack.c.0.s8 %v645
        %v662 = vunpack.c.0.s8 %v646
        %v663 = vunpack.c.0.s8 %v647
        %v664 = vunpack.c.0.s8 %v648
        %vm665 = vcmp.ne.s32.totalorder %v649, 0
        %vm666 = vcmp.ne.s32.totalorder %v650, 0
        %vm667 = vcmp.ne.s32.totalorder %v651, 0
        %vm668 = vcmp.ne.s32.totalorder %v652, 0
        %vm669 = vcmp.ne.s32.totalorder %v653, 0
        %vm670 = vcmp.ne.s32.totalorder %v654, 0
        %vm671 = vcmp.ne.s32.totalorder %v655, 0
        %vm672 = vcmp.ne.s32.totalorder %v656, 0
        %vm673 = vcmp.ne.s32.totalorder %v657, 0
        %vm674 = vcmp.ne.s32.totalorder %v658, 0
        %vm675 = vcmp.ne.s32.totalorder %v659, 0
        %vm676 = vcmp.ne.s32.totalorder %v660, 0
        %vm677 = vcmp.ne.s32.totalorder %v661, 0
        %vm678 = vcmp.ne.s32.totalorder %v662, 0
        %vm679 = vcmp.ne.s32.totalorder %v663, 0
        %vm680 = vcmp.ne.s32.totalorder %v664, 0
        %v681 = vsel %vm665, %v549, -1e+30
        %v682 = vsel %vm666, %v550, -1e+30
        %v683 = vsel %vm667, %v551, -1e+30
        %v684 = vsel %vm668, %v552, -1e+30
        %v685 = vsel %vm669, %v553, -1e+30
        %v686 = vsel %vm670, %v554, -1e+30
        %v687 = vsel %vm671, %v555, -1e+30
        %v688 = vsel %vm672, %v556, -1e+30
        %v689 = vsel %vm673, %v557, -1e+30
        %v690 = vsel %vm674, %v558, -1e+30
        %v691 = vsel %vm675, %v559, -1e+30
        %v692 = vsel %vm676, %v560, -1e+30
        %v693 = vsel %vm677, %v561, -1e+30
        %v694 = vsel %vm678, %v562, -1e+30
        %v695 = vsel %vm679, %v563, -1e+30
        %v696 = vsel %vm680, %v564, -1e+30
        %v697 = vld [vmem:[#allocation2] sm:$0xff]
        %v698 = vld [vmem:[#allocation2 + $0x8] sm:$0xff]
        %v699 = vld [vmem:[#allocation2 + $0x10] sm:$0xff]
        %v700 = vld [vmem:[#allocation2 + $0x18] sm:$0xff]
        %v701 = vld [vmem:[#allocation2 + $0x20] sm:$0xff]
        %v702 = vld [vmem:[#allocation2 + $0x28] sm:$0xff]
        %v703 = vld [vmem:[#allocation2 + $0x30] sm:$0xff]
        %v704 = vld [vmem:[#allocation2 + $0x38] sm:$0xff]
        %v705 = vld [vmem:[#allocation2 + $0x40] sm:$0xff]
        %v706 = vld [vmem:[#allocation2 + $0x48] sm:$0xff]
        %v707 = vld [vmem:[#allocation2 + $0x50] sm:$0xff]
        %v708 = vld [vmem:[#allocation2 + $0x58] sm:$0xff]
        %v709 = vld [vmem:[#allocation2 + $0x60] sm:$0xff]
        %v710 = vld [vmem:[#allocation2 + $0x68] sm:$0xff]
        %v711 = vld [vmem:[#allocation2 + $0x70] sm:$0xff]
        %v712 = vld [vmem:[#allocation2 + $0x78] sm:$0xff]
        %713 = vmax.xlane.f32.xlu0 %v681
        %v714 = vpop.xlane.xlu0 %713
        %715 = vmax.xlane.f32.xlu0 %v682
        %v716 = vpop.xlane.xlu0 %715
        %717 = vmax.xlane.f32.xlu0 %v683
        %v718 = vpop.xlane.xlu0 %717
        %719 = vmax.xlane.f32.xlu0 %v684
        %v720 = vpop.xlane.xlu0 %719
        %721 = vmax.xlane.f32.xlu0 %v685
        %v722 = vpop.xlane.xlu0 %721
        %723 = vmax.xlane.f32.xlu0 %v686
        %v724 = vpop.xlane.xlu0 %723
        %725 = vmax.xlane.f32.xlu0 %v687
        %v726 = vpop.xlane.xlu0 %725
        %727 = vmax.xlane.f32.xlu0 %v688
        %v728 = vpop.xlane.xlu0 %727
        %729 = vmax.xlane.f32.xlu0 %v689
        %v730 = vpop.xlane.xlu0 %729
        %731 = vmax.xlane.f32.xlu0 %v690
        %v732 = vpop.xlane.xlu0 %731
        %733 = vmax.xlane.f32.xlu0 %v691
        %v734 = vpop.xlane.xlu0 %733
        %735 = vmax.xlane.f32.xlu0 %v692
        %v736 = vpop.xlane.xlu0 %735
        %737 = vmax.xlane.f32.xlu0 %v693
        %v738 = vpop.xlane.xlu0 %737
        %739 = vmax.xlane.f32.xlu0 %v694
        %v740 = vpop.xlane.xlu0 %739
        %741 = vmax.xlane.f32.xlu0 %v695
        %v742 = vpop.xlane.xlu0 %741
        %743 = vmax.xlane.f32.xlu0 %v696
        %v744 = vpop.xlane.xlu0 %743
        %v745 = vmax.f32 %v697, %v714
        %v746 = vmax.f32 %v698, %v716
        %v747 = vmax.f32 %v699, %v718
        %v748 = vmax.f32 %v700, %v720
        %v749 = vmax.f32 %v701, %v722
        %v750 = vmax.f32 %v702, %v724
        %v751 = vmax.f32 %v703, %v726
        %v752 = vmax.f32 %v704, %v728
        %v753 = vmax.f32 %v705, %v730
        %v754 = vmax.f32 %v706, %v732
        %v755 = vmax.f32 %v707, %v734
        %v756 = vmax.f32 %v708, %v736
        %v757 = vmax.f32 %v709, %v738
        %v758 = vmax.f32 %v710, %v740
        %v759 = vmax.f32 %v711, %v742
        %v760 = vmax.f32 %v712, %v744
        %v761 = vsub.f32 %v697, %v745
        %v762 = vsub.f32 %v698, %v746
        %v763 = vsub.f32 %v699, %v747
        %v764 = vsub.f32 %v700, %v748
        %v765 = vsub.f32 %v701, %v749
        %v766 = vsub.f32 %v702, %v750
        %v767 = vsub.f32 %v703, %v751
        %v768 = vsub.f32 %v704, %v752
        %v769 = vsub.f32 %v705, %v753
        %v770 = vsub.f32 %v706, %v754
        %v771 = vsub.f32 %v707, %v755
        %v772 = vsub.f32 %v708, %v756
        %v773 = vsub.f32 %v709, %v757
        %v774 = vsub.f32 %v710, %v758
        %v775 = vsub.f32 %v711, %v759
        %v776 = vsub.f32 %v712, %v760
        %v777 = vmul.f32 %v761, 1.442695
        %v778 = vpow.pop %v777
        %v779 = vmul.f32 %v762, 1.442695
        %v780 = vpow.pop %v779
        %v781 = vmul.f32 %v763, 1.442695
        %v782 = vpow.pop %v781
        %v783 = vmul.f32 %v764, 1.442695
        %v784 = vpow.pop %v783
        %v785 = vmul.f32 %v765, 1.442695
        %v786 = vpow.pop %v785
        %v787 = vmul.f32 %v766, 1.442695
        %v788 = vpow.pop %v787
        %v789 = vmul.f32 %v767, 1.442695
        %v790 = vpow.pop %v789
        %v791 = vmul.f32 %v768, 1.442695
        %v792 = vpow.pop %v791
        %v793 = vmul.f32 %v769, 1.442695
        %v794 = vpow.pop %v793
        %v795 = vmul.f32 %v770, 1.442695
        %v796 = vpow.pop %v795
        %v797 = vmul.f32 %v771, 1.442695
        %v798 = vpow.pop %v797
        %v799 = vmul.f32 %v772, 1.442695
        %v800 = vpow.pop %v799
        %v801 = vmul.f32 %v773, 1.442695
        %v802 = vpow.pop %v801
        %v803 = vmul.f32 %v774, 1.442695
        %v804 = vpow.pop %v803
        %v805 = vmul.f32 %v775, 1.442695
        %v806 = vpow.pop %v805
        %v807 = vmul.f32 %v776, 1.442695
        %v808 = vpow.pop %v807
        %810 = vset.pattern.permute.xlu0 0
        %811 = vperm.xlu0 %810, %v745
        %v812 = vpop.permute.xlu0 %811
        %815 = vset.pattern.permute.xlu0 0
        %816 = vperm.xlu0 %815, %v746
        %v817 = vpop.permute.xlu0 %816
        %820 = vset.pattern.permute.xlu0 0
        %821 = vperm.xlu0 %820, %v747
        %v822 = vpop.permute.xlu0 %821
        %825 = vset.pattern.permute.xlu0 0
        %826 = vperm.xlu0 %825, %v748
        %v827 = vpop.permute.xlu0 %826
        %830 = vset.pattern.permute.xlu0 0
        %831 = vperm.xlu0 %830, %v749
        %v832 = vpop.permute.xlu0 %831
        %835 = vset.pattern.permute.xlu0 0
        %836 = vperm.xlu0 %835, %v750
        %v837 = vpop.permute.xlu0 %836
        %840 = vset.pattern.permute.xlu0 0
        %841 = vperm.xlu0 %840, %v751
        %v842 = vpop.permute.xlu0 %841
        %845 = vset.pattern.permute.xlu0 0
        %846 = vperm.xlu0 %845, %v752
        %v847 = vpop.permute.xlu0 %846
        %850 = vset.pattern.permute.xlu0 0
        %851 = vperm.xlu0 %850, %v753
        %v852 = vpop.permute.xlu0 %851
        %855 = vset.pattern.permute.xlu0 0
        %856 = vperm.xlu0 %855, %v754
        %v857 = vpop.permute.xlu0 %856
        %860 = vset.pattern.permute.xlu0 0
        %861 = vperm.xlu0 %860, %v755
        %v862 = vpop.permute.xlu0 %861
        %865 = vset.pattern.permute.xlu0 0
        %866 = vperm.xlu0 %865, %v756
        %v867 = vpop.permute.xlu0 %866
        %870 = vset.pattern.permute.xlu0 0
        %871 = vperm.xlu0 %870, %v757
        %v872 = vpop.permute.xlu0 %871
        %875 = vset.pattern.permute.xlu0 0
        %876 = vperm.xlu0 %875, %v758
        %v877 = vpop.permute.xlu0 %876
        %880 = vset.pattern.permute.xlu0 0
        %881 = vperm.xlu0 %880, %v759
        %v882 = vpop.permute.xlu0 %881
        %885 = vset.pattern.permute.xlu0 0
        %886 = vperm.xlu0 %885, %v760
        %v887 = vpop.permute.xlu0 %886
        %v889 = vsub.f32 %v681, %v812
        %v890 = vsub.f32 %v682, %v817
        %v891 = vsub.f32 %v683, %v822
        %v892 = vsub.f32 %v684, %v827
        %v893 = vsub.f32 %v685, %v832
        %v894 = vsub.f32 %v686, %v837
        %v895 = vsub.f32 %v687, %v842
        %v896 = vsub.f32 %v688, %v847
        %v897 = vsub.f32 %v689, %v852
        %v898 = vsub.f32 %v690, %v857
        %v899 = vsub.f32 %v691, %v862
        %v900 = vsub.f32 %v692, %v867
        %v901 = vsub.f32 %v693, %v872
        %v902 = vsub.f32 %v694, %v877
        %v903 = vsub.f32 %v695, %v882
        %v904 = vsub.f32 %v696, %v887
        %v905 = vmul.f32 %v889, 1.442695
        %v906 = vpow.pop %v905
        %v907 = vmul.f32 %v890, 1.442695
        %v908 = vpow.pop %v907
        %v909 = vmul.f32 %v891, 1.442695
        %v910 = vpow.pop %v909
        %v911 = vmul.f32 %v892, 1.442695
        %v912 = vpow.pop %v911
        %v913 = vmul.f32 %v893, 1.442695
        %v914 = vpow.pop %v913
        %v915 = vmul.f32 %v894, 1.442695
        %v916 = vpow.pop %v915
        %v917 = vmul.f32 %v895, 1.442695
        %v918 = vpow.pop %v917
        %v919 = vmul.f32 %v896, 1.442695
        %v920 = vpow.pop %v919
        %v921 = vmul.f32 %v897, 1.442695
        %v922 = vpow.pop %v921
        %v923 = vmul.f32 %v898, 1.442695
        %v924 = vpow.pop %v923
        %v925 = vmul.f32 %v899, 1.442695
        %v926 = vpow.pop %v925
        %v927 = vmul.f32 %v900, 1.442695
        %v928 = vpow.pop %v927
        %v929 = vmul.f32 %v901, 1.442695
        %v930 = vpow.pop %v929
        %v931 = vmul.f32 %v902, 1.442695
        %v932 = vpow.pop %v931
        %v933 = vmul.f32 %v903, 1.442695
        %v934 = vpow.pop %v933
        %v935 = vmul.f32 %v904, 1.442695
        %v936 = vpow.pop %v935
        %v937 = vld [vmem:[#allocation3] sm:$0xff]
        %v938 = vld [vmem:[#allocation3 + $0x8] sm:$0xff]
        %v939 = vld [vmem:[#allocation3 + $0x10] sm:$0xff]
        %v940 = vld [vmem:[#allocation3 + $0x18] sm:$0xff]
        %v941 = vld [vmem:[#allocation3 + $0x20] sm:$0xff]
        %v942 = vld [vmem:[#allocation3 + $0x28] sm:$0xff]
        %v943 = vld [vmem:[#allocation3 + $0x30] sm:$0xff]
        %v944 = vld [vmem:[#allocation3 + $0x38] sm:$0xff]
        %v945 = vld [vmem:[#allocation3 + $0x40] sm:$0xff]
        %v946 = vld [vmem:[#allocation3 + $0x48] sm:$0xff]
        %v947 = vld [vmem:[#allocation3 + $0x50] sm:$0xff]
        %v948 = vld [vmem:[#allocation3 + $0x58] sm:$0xff]
        %v949 = vld [vmem:[#allocation3 + $0x60] sm:$0xff]
        %v950 = vld [vmem:[#allocation3 + $0x68] sm:$0xff]
        %v951 = vld [vmem:[#allocation3 + $0x70] sm:$0xff]
        %v952 = vld [vmem:[#allocation3 + $0x78] sm:$0xff]
        %v953 = vmul.f32 %v778, %v937
        %v954 = vmul.f32 %v780, %v938
        %v955 = vmul.f32 %v782, %v939
        %v956 = vmul.f32 %v784, %v940
        %v957 = vmul.f32 %v786, %v941
        %v958 = vmul.f32 %v788, %v942
        %v959 = vmul.f32 %v790, %v943
        %v960 = vmul.f32 %v792, %v944
        %v961 = vmul.f32 %v794, %v945
        %v962 = vmul.f32 %v796, %v946
        %v963 = vmul.f32 %v798, %v947
        %v964 = vmul.f32 %v800, %v948
        %v965 = vmul.f32 %v802, %v949
        %v966 = vmul.f32 %v804, %v950
        %v967 = vmul.f32 %v806, %v951
        %v968 = vmul.f32 %v808, %v952
        %969 = vadd.xlane.f32.xlu0 %v906
        %v970 = vpop.xlane.xlu0 %969
        %971 = vadd.xlane.f32.xlu0 %v908
        %v972 = vpop.xlane.xlu0 %971
        %973 = vadd.xlane.f32.xlu0 %v910
        %v974 = vpop.xlane.xlu0 %973
        %975 = vadd.xlane.f32.xlu0 %v912
        %v976 = vpop.xlane.xlu0 %975
        %977 = vadd.xlane.f32.xlu0 %v914
        %v978 = vpop.xlane.xlu0 %977
        %979 = vadd.xlane.f32.xlu0 %v916
        %v980 = vpop.xlane.xlu0 %979
        %981 = vadd.xlane.f32.xlu0 %v918
        %v982 = vpop.xlane.xlu0 %981
        %983 = vadd.xlane.f32.xlu0 %v920
        %v984 = vpop.xlane.xlu0 %983
        %985 = vadd.xlane.f32.xlu0 %v922
        %v986 = vpop.xlane.xlu0 %985
        %987 = vadd.xlane.f32.xlu0 %v924
        %v988 = vpop.xlane.xlu0 %987
        %989 = vadd.xlane.f32.xlu0 %v926
        %v990 = vpop.xlane.xlu0 %989
        %991 = vadd.xlane.f32.xlu0 %v928
        %v992 = vpop.xlane.xlu0 %991
        %993 = vadd.xlane.f32.xlu0 %v930
        %v994 = vpop.xlane.xlu0 %993
        %995 = vadd.xlane.f32.xlu0 %v932
        %v996 = vpop.xlane.xlu0 %995
        %997 = vadd.xlane.f32.xlu0 %v934
        %v998 = vpop.xlane.xlu0 %997
        %999 = vadd.xlane.f32.xlu0 %v936
        %v1000 = vpop.xlane.xlu0 %999
        %v1001 = vadd.f32 %v953, %v970
        %v1002 = vadd.f32 %v954, %v972
        %v1003 = vadd.f32 %v955, %v974
        %v1004 = vadd.f32 %v956, %v976
        %v1005 = vadd.f32 %v957, %v978
        %v1006 = vadd.f32 %v958, %v980
        %v1007 = vadd.f32 %v959, %v982
        %v1008 = vadd.f32 %v960, %v984
        %v1009 = vadd.f32 %v961, %v986
        %v1010 = vadd.f32 %v962, %v988
        %v1011 = vadd.f32 %v963, %v990
        %v1012 = vadd.f32 %v964, %v992
        %v1013 = vadd.f32 %v965, %v994
        %v1014 = vadd.f32 %v966, %v996
        %v1015 = vadd.f32 %v967, %v998
        %v1016 = vadd.f32 %v968, %v1000
        %vm1017 = vcmask 7168
        %1018 = vst.msk [vmem:[#allocation3] sm:$0xff] %vm1017, %v1001
        %1019 = vst.msk [vmem:[#allocation3 + $0x8] sm:$0xff] %vm1017, %v1002
        %1020 = vst.msk [vmem:[#allocation3 + $0x10] sm:$0xff] %vm1017, %v1003
        %1021 = vst.msk [vmem:[#allocation3 + $0x18] sm:$0xff] %vm1017, %v1004
        %1022 = vst.msk [vmem:[#allocation3 + $0x20] sm:$0xff] %vm1017, %v1005
        %1023 = vst.msk [vmem:[#allocation3 + $0x28] sm:$0xff] %vm1017, %v1006
        %1024 = vst.msk [vmem:[#allocation3 + $0x30] sm:$0xff] %vm1017, %v1007
        %1025 = vst.msk [vmem:[#allocation3 + $0x38] sm:$0xff] %vm1017, %v1008
        %1026 = vst.msk [vmem:[#allocation3 + $0x40] sm:$0xff] %vm1017, %v1009
        %1027 = vst.msk [vmem:[#allocation3 + $0x48] sm:$0xff] %vm1017, %v1010
        %1028 = vst.msk [vmem:[#allocation3 + $0x50] sm:$0xff] %vm1017, %v1011
        %1029 = vst.msk [vmem:[#allocation3 + $0x58] sm:$0xff] %vm1017, %v1012
        %1030 = vst.msk [vmem:[#allocation3 + $0x60] sm:$0xff] %vm1017, %v1013
        %1031 = vst.msk [vmem:[#allocation3 + $0x68] sm:$0xff] %vm1017, %v1014
        %1032 = vst.msk [vmem:[#allocation3 + $0x70] sm:$0xff] %vm1017, %v1015
        %1033 = vst.msk [vmem:[#allocation3 + $0x78] sm:$0xff] %vm1017, %v1016
        %v1034 = vld [vmem:[%s332] sm:$0xf]
        %v1035 = vld [vmem:[%s332 + $0x4] sm:$0xf]
        %v1036 = vld [vmem:[%s332 + $0x8] sm:$0xf]
        %v1037 = vld [vmem:[%s332 + $0xc] sm:$0xf]
        %v1038 = vld [vmem:[%s332 + $0x10] sm:$0xf]
        %v1039 = vld [vmem:[%s332 + $0x14] sm:$0xf]
        %v1040 = vld [vmem:[%s332 + $0x18] sm:$0xf]
        %v1041 = vld [vmem:[%s332 + $0x1c] sm:$0xf]
        %v1042 = vld [vmem:[%s332 + $0x20] sm:$0xf]
        %v1043 = vld [vmem:[%s332 + $0x24] sm:$0xf]
        %v1044 = vld [vmem:[%s332 + $0x28] sm:$0xf]
        %v1045 = vld [vmem:[%s332 + $0x2c] sm:$0xf]
        %v1046 = vld [vmem:[%s332 + $0x30] sm:$0xf]
        %v1047 = vld [vmem:[%s332 + $0x34] sm:$0xf]
        %v1048 = vld [vmem:[%s332 + $0x38] sm:$0xf]
        %v1049 = vld [vmem:[%s332 + $0x3c] sm:$0xf]
        %v1050 = vpack.c.bf16 %v908, %v906
        %v1051 = vpack.c.bf16 %v912, %v910
        %v1052 = vpack.c.bf16 %v916, %v914
        %v1053 = vpack.c.bf16 %v920, %v918
        %v1054 = vpack.c.bf16 %v924, %v922
        %v1055 = vpack.c.bf16 %v928, %v926
        %v1056 = vpack.c.bf16 %v932, %v930
        %v1057 = vpack.c.bf16 %v936, %v934
        %v1074 = vunpack.c.l.b16 %v1034
        %v1075 = vunpack.c.l.b16 %v1035
        %v1076 = vunpack.c.l.b16 %v1036
        %v1077 = vunpack.c.l.b16 %v1037
        %v1078 = vunpack.c.l.b16 %v1038
        %v1079 = vunpack.c.l.b16 %v1039
        %v1080 = vunpack.c.l.b16 %v1040
        %v1081 = vunpack.c.l.b16 %v1041
        %v1082 = vunpack.c.l.b16 %v1042
        %v1083 = vunpack.c.l.b16 %v1043
        %v1084 = vunpack.c.l.b16 %v1044
        %v1085 = vunpack.c.l.b16 %v1045
        %v1086 = vunpack.c.l.b16 %v1046
        %v1087 = vunpack.c.l.b16 %v1047
        %v1088 = vunpack.c.l.b16 %v1048
        %v1089 = vunpack.c.l.b16 %v1049
        %v1090 = vpack.c.b16 %v1075, %v1074
        %v1091 = vpack.c.b16 %v1077, %v1076
        %v1092 = vpack.c.b16 %v1079, %v1078
        %v1093 = vpack.c.b16 %v1081, %v1080
        %v1094 = vpack.c.b16 %v1083, %v1082
        %v1095 = vpack.c.b16 %v1085, %v1084
        %v1096 = vpack.c.b16 %v1087, %v1086
        %v1097 = vpack.c.b16 %v1089, %v1088
        %1106 = vmatprep.subr.bf16.mxu0 0
        %1107 = vmatpush1.bf16.msra.mxu0 %v1090
        %1108 = vmatprep.subr.bf16.mxu0 0
        %1109 = vmatpush1.bf16.msra.mxu0 %v1091
        %1110 = vmatprep.subr.bf16.mxu0 0
        %1111 = vmatpush1.bf16.msra.mxu0 %v1092
        %1112 = vmatprep.subr.bf16.mxu0 0
        %1113 = vmatpush1.bf16.msra.mxu0 %v1093
        %1114 = vmatprep.subr.bf16.mxu0 0
        %1115 = vmatpush1.bf16.msra.mxu0 %v1094
        %1116 = vmatprep.subr.bf16.mxu0 0
        %1117 = vmatpush1.bf16.msra.mxu0 %v1095
        %1118 = vmatprep.subr.bf16.mxu0 0
        %1119 = vmatpush1.bf16.msra.mxu0 %v1096
        %1120 = vmatprep.subr.bf16.mxu0 0
        %1121 = vmatpush1.bf16.msra.mxu0 %v1097
        %1122 = vmatprep.subr.bf16.mxu0 0
        %1123 = vmatpush1.bf16.msra.mxu0 0
        %1124 = vmatprep.subr.bf16.mxu0 0
        %1125 = vmatpush1.bf16.msra.mxu0 0
        %1126 = vmatprep.subr.bf16.mxu0 0
        %1127 = vmatpush1.bf16.msra.mxu0 0
        %1128 = vmatprep.subr.bf16.mxu0 0
        %1129 = vmatpush1.bf16.msra.mxu0 0
        %1130 = vmatprep.subr.bf16.mxu0 0
        %1131 = vmatpush1.bf16.msra.mxu0 0
        %1132 = vmatprep.subr.bf16.mxu0 0
        %1133 = vmatpush1.bf16.msra.mxu0 0
        %1134 = vmatprep.subr.bf16.mxu0 0
        %1135 = vmatpush1.bf16.msra.mxu0 0
        %1136 = vmatprep.subr.bf16.mxu0 0
        %1137 = vmatpush1.bf16.msra.mxu0 0
        %1138 = vmatprep.mubr.bf16.mxu0 0
        %1139 = vmatmul.mubr.bf16.gmra.mrb[0].mxu0 %v1050
        %v1140 = vpop.f32.mrb[0].mxu0
        %v1141 = vadd.f32 0.0, %v1140
        %v1142 = vpop.f32.mrb[0].mxu0
        %v1143 = vpop.f32.mrb[0].mxu0
        %v1144 = vadd.f32 0.0, %v1143
        %v1145 = vpop.f32.mrb[0].mxu0
        %1146 = vmatprep.mubr.bf16.mxu0 0
        %1147 = vmatmul.mubr.bf16.gmra.mrb[0].mxu0 %v1051
        %v1148 = vpop.f32.mrb[0].mxu0
        %v1149 = vadd.f32 0.0, %v1148
        %v1150 = vpop.f32.mrb[0].mxu0
        %v1151 = vpop.f32.mrb[0].mxu0
        %v1152 = vadd.f32 0.0, %v1151
        %v1153 = vpop.f32.mrb[0].mxu0
        %1154 = vmatprep.mubr.bf16.mxu0 0
        %1155 = vmatmul.mubr.bf16.gmra.mrb[0].mxu0 %v1052
        %v1156 = vpop.f32.mrb[0].mxu0
        %v1157 = vadd.f32 0.0, %v1156
        %v1158 = vpop.f32.mrb[0].mxu0
        %v1159 = vpop.f32.mrb[0].mxu0
        %v1160 = vadd.f32 0.0, %v1159
        %v1161 = vpop.f32.mrb[0].mxu0
        %1162 = vmatprep.mubr.bf16.mxu0 0
        %1163 = vmatmul.mubr.bf16.gmra.mrb[0].mxu0 %v1053
        %v1164 = vpop.f32.mrb[0].mxu0
        %v1165 = vadd.f32 0.0, %v1164
        %v1166 = vpop.f32.mrb[0].mxu0
        %v1167 = vpop.f32.mrb[0].mxu0
        %v1168 = vadd.f32 0.0, %v1167
        %v1169 = vpop.f32.mrb[0].mxu0
        %1170 = vmatprep.mubr.bf16.mxu0 0
        %1171 = vmatmul.mubr.bf16.gmra.mrb[0].mxu0 %v1054
        %v1172 = vpop.f32.mrb[0].mxu0
        %v1173 = vadd.f32 0.0, %v1172
        %v1174 = vpop.f32.mrb[0].mxu0
        %v1175 = vpop.f32.mrb[0].mxu0
        %v1176 = vadd.f32 0.0, %v1175
        %v1177 = vpop.f32.mrb[0].mxu0
        %1178 = vmatprep.mubr.bf16.mxu0 0
        %1179 = vmatmul.mubr.bf16.gmra.mrb[0].mxu0 %v1055
        %v1180 = vpop.f32.mrb[0].mxu0
        %v1181 = vadd.f32 0.0, %v1180
        %v1182 = vpop.f32.mrb[0].mxu0
        %v1183 = vpop.f32.mrb[0].mxu0
        %v1184 = vadd.f32 0.0, %v1183
        %v1185 = vpop.f32.mrb[0].mxu0
        %1186 = vmatprep.mubr.bf16.mxu0 0
        %1187 = vmatmul.mubr.bf16.gmra.mrb[0].mxu0 %v1056
        %v1188 = vpop.f32.mrb[0].mxu0
        %v1189 = vadd.f32 0.0, %v1188
        %v1190 = vpop.f32.mrb[0].mxu0
        %v1191 = vpop.f32.mrb[0].mxu0
        %v1192 = vadd.f32 0.0, %v1191
        %v1193 = vpop.f32.mrb[0].mxu0
        %1194 = vmatprep.mubr.bf16.mxu0 0
        %1195 = vmatmul.mubr.bf16.gmra.mrb[0].mxu0 %v1057
        %v1196 = vpop.f32.mrb[0].mxu0
        %v1197 = vadd.f32 0.0, %v1196
        %v1198 = vpop.f32.mrb[0].mxu0
        %v1199 = vpop.f32.mrb[0].mxu0
        %v1200 = vadd.f32 0.0, %v1199
        %v1201 = vpop.f32.mrb[0].mxu0
        %1202 = vdwg.mxu0
        %v1203 = vld [vmem:[#allocation4] sm:$0xff]
        %v1204 = vld [vmem:[#allocation4 + $0x8] sm:$0xff]
        %v1205 = vld [vmem:[#allocation4 + $0x10] sm:$0xff]
        %v1206 = vld [vmem:[#allocation4 + $0x18] sm:$0xff]
        %v1207 = vld [vmem:[#allocation4 + $0x20] sm:$0xff]
        %v1208 = vld [vmem:[#allocation4 + $0x28] sm:$0xff]
        %v1209 = vld [vmem:[#allocation4 + $0x30] sm:$0xff]
        %v1210 = vld [vmem:[#allocation4 + $0x38] sm:$0xff]
        %v1211 = vld [vmem:[#allocation4 + $0x40] sm:$0xff]
        %v1212 = vld [vmem:[#allocation4 + $0x48] sm:$0xff]
        %v1213 = vld [vmem:[#allocation4 + $0x50] sm:$0xff]
        %v1214 = vld [vmem:[#allocation4 + $0x58] sm:$0xff]
        %v1215 = vld [vmem:[#allocation4 + $0x60] sm:$0xff]
        %v1216 = vld [vmem:[#allocation4 + $0x68] sm:$0xff]
        %v1217 = vld [vmem:[#allocation4 + $0x70] sm:$0xff]
        %v1218 = vld [vmem:[#allocation4 + $0x78] sm:$0xff]
        %1220 = vset.pattern.permute.xlu0 0
        %1221 = vperm.xlu0 %1220, %v778
        %v1222 = vpop.permute.xlu0 %1221
        %1225 = vset.pattern.permute.xlu0 0
        %1226 = vperm.xlu0 %1225, %v780
        %v1227 = vpop.permute.xlu0 %1226
        %1230 = vset.pattern.permute.xlu0 0
        %1231 = vperm.xlu0 %1230, %v782
        %v1232 = vpop.permute.xlu0 %1231
        %1235 = vset.pattern.permute.xlu0 0
        %1236 = vperm.xlu0 %1235, %v784
        %v1237 = vpop.permute.xlu0 %1236
        %1240 = vset.pattern.permute.xlu0 0
        %1241 = vperm.xlu0 %1240, %v786
        %v1242 = vpop.permute.xlu0 %1241
        %1245 = vset.pattern.permute.xlu0 0
        %1246 = vperm.xlu0 %1245, %v788
        %v1247 = vpop.permute.xlu0 %1246
        %1250 = vset.pattern.permute.xlu0 0
        %1251 = vperm.xlu0 %1250, %v790
        %v1252 = vpop.permute.xlu0 %1251
        %1255 = vset.pattern.permute.xlu0 0
        %1256 = vperm.xlu0 %1255, %v792
        %v1257 = vpop.permute.xlu0 %1256
        %1260 = vset.pattern.permute.xlu0 0
        %1261 = vperm.xlu0 %1260, %v794
        %v1262 = vpop.permute.xlu0 %1261
        %1265 = vset.pattern.permute.xlu0 0
        %1266 = vperm.xlu0 %1265, %v796
        %v1267 = vpop.permute.xlu0 %1266
        %1270 = vset.pattern.permute.xlu0 0
        %1271 = vperm.xlu0 %1270, %v798
        %v1272 = vpop.permute.xlu0 %1271
        %1275 = vset.pattern.permute.xlu0 0
        %1276 = vperm.xlu0 %1275, %v800
        %v1277 = vpop.permute.xlu0 %1276
        %1280 = vset.pattern.permute.xlu0 0
        %1281 = vperm.xlu0 %1280, %v802
        %v1282 = vpop.permute.xlu0 %1281
        %1285 = vset.pattern.permute.xlu0 0
        %1286 = vperm.xlu0 %1285, %v804
        %v1287 = vpop.permute.xlu0 %1286
        %1290 = vset.pattern.permute.xlu0 0
        %1291 = vperm.xlu0 %1290, %v806
        %v1292 = vpop.permute.xlu0 %1291
        %1295 = vset.pattern.permute.xlu0 0
        %1296 = vperm.xlu0 %1295, %v808
        %v1297 = vpop.permute.xlu0 %1296
        %v1299 = vmul.f32 %v1222, %v1203
        %v1300 = vmul.f32 %v1227, %v1204
        %v1301 = vmul.f32 %v1232, %v1205
        %v1302 = vmul.f32 %v1237, %v1206
        %v1303 = vmul.f32 %v1242, %v1207
        %v1304 = vmul.f32 %v1247, %v1208
        %v1305 = vmul.f32 %v1252, %v1209
        %v1306 = vmul.f32 %v1257, %v1210
        %v1307 = vmul.f32 %v1262, %v1211
        %v1308 = vmul.f32 %v1267, %v1212
        %v1309 = vmul.f32 %v1272, %v1213
        %v1310 = vmul.f32 %v1277, %v1214
        %v1311 = vmul.f32 %v1282, %v1215
        %v1312 = vmul.f32 %v1287, %v1216
        %v1313 = vmul.f32 %v1292, %v1217
        %v1314 = vmul.f32 %v1297, %v1218
        %v1315 = vadd.f32 %v1299, %v1141
        %v1316 = vadd.f32 %v1300, %v1144
        %v1317 = vadd.f32 %v1301, %v1149
        %v1318 = vadd.f32 %v1302, %v1152
        %v1319 = vadd.f32 %v1303, %v1157
        %v1320 = vadd.f32 %v1304, %v1160
        %v1321 = vadd.f32 %v1305, %v1165
        %v1322 = vadd.f32 %v1306, %v1168
        %v1323 = vadd.f32 %v1307, %v1173
        %v1324 = vadd.f32 %v1308, %v1176
        %v1325 = vadd.f32 %v1309, %v1181
        %v1326 = vadd.f32 %v1310, %v1184
        %v1327 = vadd.f32 %v1311, %v1189
        %v1328 = vadd.f32 %v1312, %v1192
        %v1329 = vadd.f32 %v1313, %v1197
        %v1330 = vadd.f32 %v1314, %v1200
        %vm1331 = vcmask 130048
        %1332 = vst.msk [vmem:[#allocation4] sm:$0xff] %vm1331, %v1315
        %1333 = vst.msk [vmem:[#allocation4 + $0x8] sm:$0xff] %vm1331, %v1316
        %1334 = vst.msk [vmem:[#allocation4 + $0x10] sm:$0xff] %vm1331, %v1317
        %1335 = vst.msk [vmem:[#allocation4 + $0x18] sm:$0xff] %vm1331, %v1318
        %1336 = vst.msk [vmem:[#allocation4 + $0x20] sm:$0xff] %vm1331, %v1319
        %1337 = vst.msk [vmem:[#allocation4 + $0x28] sm:$0xff] %vm1331, %v1320
        %1338 = vst.msk [vmem:[#allocation4 + $0x30] sm:$0xff] %vm1331, %v1321
        %1339 = vst.msk [vmem:[#allocation4 + $0x38] sm:$0xff] %vm1331, %v1322
        %1340 = vst.msk [vmem:[#allocation4 + $0x40] sm:$0xff] %vm1331, %v1323
        %1341 = vst.msk [vmem:[#allocation4 + $0x48] sm:$0xff] %vm1331, %v1324
        %1342 = vst.msk [vmem:[#allocation4 + $0x50] sm:$0xff] %vm1331, %v1325
        %1343 = vst.msk [vmem:[#allocation4 + $0x58] sm:$0xff] %vm1331, %v1326
        %1344 = vst.msk [vmem:[#allocation4 + $0x60] sm:$0xff] %vm1331, %v1327
        %1345 = vst.msk [vmem:[#allocation4 + $0x68] sm:$0xff] %vm1331, %v1328
        %1346 = vst.msk [vmem:[#allocation4 + $0x70] sm:$0xff] %vm1331, %v1329
        %1347 = vst.msk [vmem:[#allocation4 + $0x78] sm:$0xff] %vm1331, %v1330
        %1348 = vst.msk [vmem:[#allocation2] sm:$0xff] %vm1017, %v745
        %1349 = vst.msk [vmem:[#allocation2 + $0x8] sm:$0xff] %vm1017, %v746
        %1350 = vst.msk [vmem:[#allocation2 + $0x10] sm:$0xff] %vm1017, %v747
        %1351 = vst.msk [vmem:[#allocation2 + $0x18] sm:$0xff] %vm1017, %v748
        %1352 = vst.msk [vmem:[#allocation2 + $0x20] sm:$0xff] %vm1017, %v749
        %1353 = vst.msk [vmem:[#allocation2 + $0x28] sm:$0xff] %vm1017, %v750
        %1354 = vst.msk [vmem:[#allocation2 + $0x30] sm:$0xff] %vm1017, %v751
        %1355 = vst.msk [vmem:[#allocation2 + $0x38] sm:$0xff] %vm1017, %v752
        %1356 = vst.msk [vmem:[#allocation2 + $0x40] sm:$0xff] %vm1017, %v753
        %1357 = vst.msk [vmem:[#allocation2 + $0x48] sm:$0xff] %vm1017, %v754
        %1358 = vst.msk [vmem:[#allocation2 + $0x50] sm:$0xff] %vm1017, %v755
        %1359 = vst.msk [vmem:[#allocation2 + $0x58] sm:$0xff] %vm1017, %v756
        %1360 = vst.msk [vmem:[#allocation2 + $0x60] sm:$0xff] %vm1017, %v757
        %1361 = vst.msk [vmem:[#allocation2 + $0x68] sm:$0xff] %vm1017, %v758
        %1362 = vst.msk [vmem:[#allocation2 + $0x70] sm:$0xff] %vm1017, %v759
        %1363 = vst.msk [vmem:[#allocation2 + $0x78] sm:$0xff] %vm1017, %v760
        %v1364 = vld [vmem:[%s337 + $0x1] sm:$0x1]
        %1365 = vset.pattern.permute.xlu0 1
        %1366 = vperm.xlu0 %1365, %v416
        %v1367 = vpop.permute.xlu0 %1366
        %1369 = vset.pattern.permute.xlu0 1
        %1370 = vperm.xlu0 %1369, %v417
        %v1371 = vpop.permute.xlu0 %1370
        %1373 = vset.pattern.permute.xlu0 1
        %1374 = vperm.xlu0 %1373, %v418
        %v1375 = vpop.permute.xlu0 %1374
        %1377 = vset.pattern.permute.xlu0 1
        %1378 = vperm.xlu0 %1377, %v419
        %v1379 = vpop.permute.xlu0 %1378
        %1381 = vset.pattern.permute.xlu0 1
        %1382 = vperm.xlu0 %1381, %v420
        %v1383 = vpop.permute.xlu0 %1382
        %1385 = vset.pattern.permute.xlu0 1
        %1386 = vperm.xlu0 %1385, %v421
        %v1387 = vpop.permute.xlu0 %1386
        %1389 = vset.pattern.permute.xlu0 1
        %1390 = vperm.xlu0 %1389, %v422
        %v1391 = vpop.permute.xlu0 %1390
        %1393 = vset.pattern.permute.xlu0 1
        %1394 = vperm.xlu0 %1393, %v423
        %v1395 = vpop.permute.xlu0 %1394
        %1397 = vset.pattern.permute.xlu0 1
        %1398 = vperm.xlu0 %1397, %v424
        %v1399 = vpop.permute.xlu0 %1398
        %1401 = vset.pattern.permute.xlu0 1
        %1402 = vperm.xlu0 %1401, %v425
        %v1403 = vpop.permute.xlu0 %1402
        %1405 = vset.pattern.permute.xlu0 1
        %1406 = vperm.xlu0 %1405, %v426
        %v1407 = vpop.permute.xlu0 %1406
        %1409 = vset.pattern.permute.xlu0 1
        %1410 = vperm.xlu0 %1409, %v427
        %v1411 = vpop.permute.xlu0 %1410
        %1413 = vset.pattern.permute.xlu0 1
        %1414 = vperm.xlu0 %1413, %v428
        %v1415 = vpop.permute.xlu0 %1414
        %1417 = vset.pattern.permute.xlu0 1
        %1418 = vperm.xlu0 %1417, %v429
        %v1419 = vpop.permute.xlu0 %1418
        %1421 = vset.pattern.permute.xlu0 1
        %1422 = vperm.xlu0 %1421, %v430
        %v1423 = vpop.permute.xlu0 %1422
        %1425 = vset.pattern.permute.xlu0 1
        %1426 = vperm.xlu0 %1425, %v431
        %v1427 = vpop.permute.xlu0 %1426
        %v1429 = vlaneseq
        %v1430 = vshrl.u32 %v1429, 7
        %v1431 = vsub.s32 0, %v1430
        %v1432 = vrot.slane %v1364, %v1431
        %v1433 = vadd.f32 %v1367, %v1432
        %v1434 = vadd.f32 %v1371, %v1432
        %v1435 = vadd.f32 %v1375, %v1432
        %v1436 = vadd.f32 %v1379, %v1432
        %v1437 = vadd.f32 %v1383, %v1432
        %v1438 = vadd.f32 %v1387, %v1432
        %v1439 = vadd.f32 %v1391, %v1432
        %v1440 = vadd.f32 %v1395, %v1432
        %v1441 = vadd.f32 %v1399, %v1432
        %v1442 = vadd.f32 %v1403, %v1432
        %v1443 = vadd.f32 %v1407, %v1432
        %v1444 = vadd.f32 %v1411, %v1432
        %v1445 = vadd.f32 %v1415, %v1432
        %v1446 = vadd.f32 %v1419, %v1432
        %v1447 = vadd.f32 %v1423, %v1432
        %v1448 = vadd.f32 %v1427, %v1432
        %v1449 = vmul.f32 %v1433, 0.2
        %v1450 = vmul.f32 %v1434, 0.2
        %v1451 = vmul.f32 %v1435, 0.2
        %v1452 = vmul.f32 %v1436, 0.2
        %v1453 = vmul.f32 %v1437, 0.2
        %v1454 = vmul.f32 %v1438, 0.2
        %v1455 = vmul.f32 %v1439, 0.2
        %v1456 = vmul.f32 %v1440, 0.2
        %v1457 = vmul.f32 %v1441, 0.2
        %v1458 = vmul.f32 %v1442, 0.2
        %v1459 = vmul.f32 %v1443, 0.2
        %v1460 = vmul.f32 %v1444, 0.2
        %v1461 = vmul.f32 %v1445, 0.2
        %v1462 = vmul.f32 %v1446, 0.2
        %v1463 = vmul.f32 %v1447, 0.2
        %v1464 = vmul.f32 %v1448, 0.2
        %v1465 = vmax.f32 %v1433, %v1449
        %v1466 = vmax.f32 %v1434, %v1450
        %v1467 = vmax.f32 %v1435, %v1451
        %v1468 = vmax.f32 %v1436, %v1452
        %v1469 = vmax.f32 %v1437, %v1453
        %v1470 = vmax.f32 %v1438, %v1454
        %v1471 = vmax.f32 %v1439, %v1455
        %v1472 = vmax.f32 %v1440, %v1456
        %v1473 = vmax.f32 %v1441, %v1457
        %v1474 = vmax.f32 %v1442, %v1458
        %v1475 = vmax.f32 %v1443, %v1459
        %v1476 = vmax.f32 %v1444, %v1460
        %v1477 = vmax.f32 %v1445, %v1461
        %v1478 = vmax.f32 %v1446, %v1462
        %v1479 = vmax.f32 %v1447, %v1463
        %v1480 = vmax.f32 %v1448, %v1464
        %v1481 = vsel %vm665, %v1465, -1e+30
        %v1482 = vsel %vm666, %v1466, -1e+30
        %v1483 = vsel %vm667, %v1467, -1e+30
        %v1484 = vsel %vm668, %v1468, -1e+30
        %v1485 = vsel %vm669, %v1469, -1e+30
        %v1486 = vsel %vm670, %v1470, -1e+30
        %v1487 = vsel %vm671, %v1471, -1e+30
        %v1488 = vsel %vm672, %v1472, -1e+30
        %v1489 = vsel %vm673, %v1473, -1e+30
        %v1490 = vsel %vm674, %v1474, -1e+30
        %v1491 = vsel %vm675, %v1475, -1e+30
        %v1492 = vsel %vm676, %v1476, -1e+30
        %v1493 = vsel %vm677, %v1477, -1e+30
        %v1494 = vsel %vm678, %v1478, -1e+30
        %v1495 = vsel %vm679, %v1479, -1e+30
        %v1496 = vsel %vm680, %v1480, -1e+30
        %v1497 = vld [vmem:[#allocation2] sm:$0xff]
        %v1498 = vld [vmem:[#allocation2 + $0x8] sm:$0xff]
        %v1499 = vld [vmem:[#allocation2 + $0x10] sm:$0xff]
        %v1500 = vld [vmem:[#allocation2 + $0x18] sm:$0xff]
        %v1501 = vld [vmem:[#allocation2 + $0x20] sm:$0xff]
        %v1502 = vld [vmem:[#allocation2 + $0x28] sm:$0xff]
        %v1503 = vld [vmem:[#allocation2 + $0x30] sm:$0xff]
        %v1504 = vld [vmem:[#allocation2 + $0x38] sm:$0xff]
        %v1505 = vld [vmem:[#allocation2 + $0x40] sm:$0xff]
        %v1506 = vld [vmem:[#allocation2 + $0x48] sm:$0xff]
        %v1507 = vld [vmem:[#allocation2 + $0x50] sm:$0xff]
        %v1508 = vld [vmem:[#allocation2 + $0x58] sm:$0xff]
        %v1509 = vld [vmem:[#allocation2 + $0x60] sm:$0xff]
        %v1510 = vld [vmem:[#allocation2 + $0x68] sm:$0xff]
        %v1511 = vld [vmem:[#allocation2 + $0x70] sm:$0xff]
        %v1512 = vld [vmem:[#allocation2 + $0x78] sm:$0xff]
        %1513 = vmax.xlane.f32.xlu0 %v1481
        %v1514 = vpop.xlane.xlu0 %1513
        %1515 = vmax.xlane.f32.xlu0 %v1482
        %v1516 = vpop.xlane.xlu0 %1515
        %1517 = vmax.xlane.f32.xlu0 %v1483
        %v1518 = vpop.xlane.xlu0 %1517
        %1519 = vmax.xlane.f32.xlu0 %v1484
        %v1520 = vpop.xlane.xlu0 %1519
        %1521 = vmax.xlane.f32.xlu0 %v1485
        %v1522 = vpop.xlane.xlu0 %1521
        %1523 = vmax.xlane.f32.xlu0 %v1486
        %v1524 = vpop.xlane.xlu0 %1523
        %1525 = vmax.xlane.f32.xlu0 %v1487
        %v1526 = vpop.xlane.xlu0 %1525
        %1527 = vmax.xlane.f32.xlu0 %v1488
        %v1528 = vpop.xlane.xlu0 %1527
        %1529 = vmax.xlane.f32.xlu0 %v1489
        %v1530 = vpop.xlane.xlu0 %1529
        %1531 = vmax.xlane.f32.xlu0 %v1490
        %v1532 = vpop.xlane.xlu0 %1531
        %1533 = vmax.xlane.f32.xlu0 %v1491
        %v1534 = vpop.xlane.xlu0 %1533
        %1535 = vmax.xlane.f32.xlu0 %v1492
        %v1536 = vpop.xlane.xlu0 %1535
        %1537 = vmax.xlane.f32.xlu0 %v1493
        %v1538 = vpop.xlane.xlu0 %1537
        %1539 = vmax.xlane.f32.xlu0 %v1494
        %v1540 = vpop.xlane.xlu0 %1539
        %1541 = vmax.xlane.f32.xlu0 %v1495
        %v1542 = vpop.xlane.xlu0 %1541
        %1543 = vmax.xlane.f32.xlu0 %v1496
        %v1544 = vpop.xlane.xlu0 %1543
        %v1545 = vmax.f32 %v1497, %v1514
        %v1546 = vmax.f32 %v1498, %v1516
        %v1547 = vmax.f32 %v1499, %v1518
        %v1548 = vmax.f32 %v1500, %v1520
        %v1549 = vmax.f32 %v1501, %v1522
        %v1550 = vmax.f32 %v1502, %v1524
        %v1551 = vmax.f32 %v1503, %v1526
        %v1552 = vmax.f32 %v1504, %v1528
        %v1553 = vmax.f32 %v1505, %v1530
        %v1554 = vmax.f32 %v1506, %v1532
        %v1555 = vmax.f32 %v1507, %v1534
        %v1556 = vmax.f32 %v1508, %v1536
        %v1557 = vmax.f32 %v1509, %v1538
        %v1558 = vmax.f32 %v1510, %v1540
        %v1559 = vmax.f32 %v1511, %v1542
        %v1560 = vmax.f32 %v1512, %v1544
        %v1561 = vsub.f32 %v1497, %v1545
        %v1562 = vsub.f32 %v1498, %v1546
        %v1563 = vsub.f32 %v1499, %v1547
        %v1564 = vsub.f32 %v1500, %v1548
        %v1565 = vsub.f32 %v1501, %v1549
        %v1566 = vsub.f32 %v1502, %v1550
        %v1567 = vsub.f32 %v1503, %v1551
        %v1568 = vsub.f32 %v1504, %v1552
        %v1569 = vsub.f32 %v1505, %v1553
        %v1570 = vsub.f32 %v1506, %v1554
        %v1571 = vsub.f32 %v1507, %v1555
        %v1572 = vsub.f32 %v1508, %v1556
        %v1573 = vsub.f32 %v1509, %v1557
        %v1574 = vsub.f32 %v1510, %v1558
        %v1575 = vsub.f32 %v1511, %v1559
        %v1576 = vsub.f32 %v1512, %v1560
        %v1577 = vmul.f32 %v1561, 1.442695
        %v1578 = vpow.pop %v1577
        %v1579 = vmul.f32 %v1562, 1.442695
        %v1580 = vpow.pop %v1579
        %v1581 = vmul.f32 %v1563, 1.442695
        %v1582 = vpow.pop %v1581
        %v1583 = vmul.f32 %v1564, 1.442695
        %v1584 = vpow.pop %v1583
        %v1585 = vmul.f32 %v1565, 1.442695
        %v1586 = vpow.pop %v1585
        %v1587 = vmul.f32 %v1566, 1.442695
        %v1588 = vpow.pop %v1587
        %v1589 = vmul.f32 %v1567, 1.442695
        %v1590 = vpow.pop %v1589
        %v1591 = vmul.f32 %v1568, 1.442695
        %v1592 = vpow.pop %v1591
        %v1593 = vmul.f32 %v1569, 1.442695
        %v1594 = vpow.pop %v1593
        %v1595 = vmul.f32 %v1570, 1.442695
        %v1596 = vpow.pop %v1595
        %v1597 = vmul.f32 %v1571, 1.442695
        %v1598 = vpow.pop %v1597
        %v1599 = vmul.f32 %v1572, 1.442695
        %v1600 = vpow.pop %v1599
        %v1601 = vmul.f32 %v1573, 1.442695
        %v1602 = vpow.pop %v1601
        %v1603 = vmul.f32 %v1574, 1.442695
        %v1604 = vpow.pop %v1603
        %v1605 = vmul.f32 %v1575, 1.442695
        %v1606 = vpow.pop %v1605
        %v1607 = vmul.f32 %v1576, 1.442695
        %v1608 = vpow.pop %v1607
        %1610 = vset.pattern.permute.xlu0 1
        %1611 = vperm.xlu0 %1610, %v1545
        %v1612 = vpop.permute.xlu0 %1611
        %1615 = vset.pattern.permute.xlu0 1
        %1616 = vperm.xlu0 %1615, %v1546
        %v1617 = vpop.permute.xlu0 %1616
        %1620 = vset.pattern.permute.xlu0 1
        %1621 = vperm.xlu0 %1620, %v1547
        %v1622 = vpop.permute.xlu0 %1621
        %1625 = vset.pattern.permute.xlu0 1
        %1626 = vperm.xlu0 %1625, %v1548
        %v1627 = vpop.permute.xlu0 %1626
        %1630 = vset.pattern.permute.xlu0 1
        %1631 = vperm.xlu0 %1630, %v1549
        %v1632 = vpop.permute.xlu0 %1631
        %1635 = vset.pattern.permute.xlu0 1
        %1636 = vperm.xlu0 %1635, %v1550
        %v1637 = vpop.permute.xlu0 %1636
        %1640 = vset.pattern.permute.xlu0 1
        %1641 = vperm.xlu0 %1640, %v1551
        %v1642 = vpop.permute.xlu0 %1641
        %1645 = vset.pattern.permute.xlu0 1
        %1646 = vperm.xlu0 %1645, %v1552
        %v1647 = vpop.permute.xlu0 %1646
        %1650 = vset.pattern.permute.xlu0 1
        %1651 = vperm.xlu0 %1650, %v1553
        %v1652 = vpop.permute.xlu0 %1651
        %1655 = vset.pattern.permute.xlu0 1
        %1656 = vperm.xlu0 %1655, %v1554
        %v1657 = vpop.permute.xlu0 %1656
        %1660 = vset.pattern.permute.xlu0 1
        %1661 = vperm.xlu0 %1660, %v1555
        %v1662 = vpop.permute.xlu0 %1661
        %1665 = vset.pattern.permute.xlu0 1
        %1666 = vperm.xlu0 %1665, %v1556
        %v1667 = vpop.permute.xlu0 %1666
        %1670 = vset.pattern.permute.xlu0 1
        %1671 = vperm.xlu0 %1670, %v1557
        %v1672 = vpop.permute.xlu0 %1671
        %1675 = vset.pattern.permute.xlu0 1
        %1676 = vperm.xlu0 %1675, %v1558
        %v1677 = vpop.permute.xlu0 %1676
        %1680 = vset.pattern.permute.xlu0 1
        %1681 = vperm.xlu0 %1680, %v1559
        %v1682 = vpop.permute.xlu0 %1681
        %1685 = vset.pattern.permute.xlu0 1
        %1686 = vperm.xlu0 %1685, %v1560
        %v1687 = vpop.permute.xlu0 %1686
        %v1689 = vsub.f32 %v1481, %v1612
        %v1690 = vsub.f32 %v1482, %v1617
        %v1691 = vsub.f32 %v1483, %v1622
        %v1692 = vsub.f32 %v1484, %v1627
        %v1693 = vsub.f32 %v1485, %v1632
        %v1694 = vsub.f32 %v1486, %v1637
        %v1695 = vsub.f32 %v1487, %v1642
        %v1696 = vsub.f32 %v1488, %v1647
        %v1697 = vsub.f32 %v1489, %v1652
        %v1698 = vsub.f32 %v1490, %v1657
        %v1699 = vsub.f32 %v1491, %v1662
        %v1700 = vsub.f32 %v1492, %v1667
        %v1701 = vsub.f32 %v1493, %v1672
        %v1702 = vsub.f32 %v1494, %v1677
        %v1703 = vsub.f32 %v1495, %v1682
        %v1704 = vsub.f32 %v1496, %v1687
        %v1705 = vmul.f32 %v1689, 1.442695
        %v1706 = vpow.pop %v1705
        %v1707 = vmul.f32 %v1690, 1.442695
        %v1708 = vpow.pop %v1707
        %v1709 = vmul.f32 %v1691, 1.442695
        %v1710 = vpow.pop %v1709
        %v1711 = vmul.f32 %v1692, 1.442695
        %v1712 = vpow.pop %v1711
        %v1713 = vmul.f32 %v1693, 1.442695
        %v1714 = vpow.pop %v1713
        %v1715 = vmul.f32 %v1694, 1.442695
        %v1716 = vpow.pop %v1715
        %v1717 = vmul.f32 %v1695, 1.442695
        %v1718 = vpow.pop %v1717
        %v1719 = vmul.f32 %v1696, 1.442695
        %v1720 = vpow.pop %v1719
        %v1721 = vmul.f32 %v1697, 1.442695
        %v1722 = vpow.pop %v1721
        %v1723 = vmul.f32 %v1698, 1.442695
        %v1724 = vpow.pop %v1723
        %v1725 = vmul.f32 %v1699, 1.442695
        %v1726 = vpow.pop %v1725
        %v1727 = vmul.f32 %v1700, 1.442695
        %v1728 = vpow.pop %v1727
        %v1729 = vmul.f32 %v1701, 1.442695
        %v1730 = vpow.pop %v1729
        %v1731 = vmul.f32 %v1702, 1.442695
        %v1732 = vpow.pop %v1731
        %v1733 = vmul.f32 %v1703, 1.442695
        %v1734 = vpow.pop %v1733
        %v1735 = vmul.f32 %v1704, 1.442695
        %v1736 = vpow.pop %v1735
        %v1737 = vld [vmem:[#allocation3] sm:$0xff]
        %v1738 = vld [vmem:[#allocation3 + $0x8] sm:$0xff]
        %v1739 = vld [vmem:[#allocation3 + $0x10] sm:$0xff]
        %v1740 = vld [vmem:[#allocation3 + $0x18] sm:$0xff]
        %v1741 = vld [vmem:[#allocation3 + $0x20] sm:$0xff]
        %v1742 = vld [vmem:[#allocation3 + $0x28] sm:$0xff]
        %v1743 = vld [vmem:[#allocation3 + $0x30] sm:$0xff]
        %v1744 = vld [vmem:[#allocation3 + $0x38] sm:$0xff]
        %v1745 = vld [vmem:[#allocation3 + $0x40] sm:$0xff]
        %v1746 = vld [vmem:[#allocation3 + $0x48] sm:$0xff]
        %v1747 = vld [vmem:[#allocation3 + $0x50] sm:$0xff]
        %v1748 = vld [vmem:[#allocation3 + $0x58] sm:$0xff]
        %v1749 = vld [vmem:[#allocation3 + $0x60] sm:$0xff]
        %v1750 = vld [vmem:[#allocation3 + $0x68] sm:$0xff]
        %v1751 = vld [vmem:[#allocation3 + $0x70] sm:$0xff]
        %v1752 = vld [vmem:[#allocation3 + $0x78] sm:$0xff]
        %v1753 = vmul.f32 %v1578, %v1737
        %v1754 = vmul.f32 %v1580, %v1738
        %v1755 = vmul.f32 %v1582, %v1739
        %v1756 = vmul.f32 %v1584, %v1740
        %v1757 = vmul.f32 %v1586, %v1741
        %v1758 = vmul.f32 %v1588, %v1742
        %v1759 = vmul.f32 %v1590, %v1743
        %v1760 = vmul.f32 %v1592, %v1744
        %v1761 = vmul.f32 %v1594, %v1745
        %v1762 = vmul.f32 %v1596, %v1746
        %v1763 = vmul.f32 %v1598, %v1747
        %v1764 = vmul.f32 %v1600, %v1748
        %v1765 = vmul.f32 %v1602, %v1749
        %v1766 = vmul.f32 %v1604, %v1750
        %v1767 = vmul.f32 %v1606, %v1751
        %v1768 = vmul.f32 %v1608, %v1752
        %1769 = vadd.xlane.f32.xlu0 %v1706
        %v1770 = vpop.xlane.xlu0 %1769
        %1771 = vadd.xlane.f32.xlu0 %v1708
        %v1772 = vpop.xlane.xlu0 %1771
        %1773 = vadd.xlane.f32.xlu0 %v1710
        %v1774 = vpop.xlane.xlu0 %1773
        %1775 = vadd.xlane.f32.xlu0 %v1712
        %v1776 = vpop.xlane.xlu0 %1775
        %1777 = vadd.xlane.f32.xlu0 %v1714
        %v1778 = vpop.xlane.xlu0 %1777
        %1779 = vadd.xlane.f32.xlu0 %v1716
        %v1780 = vpop.xlane.xlu0 %1779
        %1781 = vadd.xlane.f32.xlu0 %v1718
        %v1782 = vpop.xlane.xlu0 %1781
        %1783 = vadd.xlane.f32.xlu0 %v1720
        %v1784 = vpop.xlane.xlu0 %1783
        %1785 = vadd.xlane.f32.xlu0 %v1722
        %v1786 = vpop.xlane.xlu0 %1785
        %1787 = vadd.xlane.f32.xlu0 %v1724
        %v1788 = vpop.xlane.xlu0 %1787
        %1789 = vadd.xlane.f32.xlu0 %v1726
        %v1790 = vpop.xlane.xlu0 %1789
        %1791 = vadd.xlane.f32.xlu0 %v1728
        %v1792 = vpop.xlane.xlu0 %1791
        %1793 = vadd.xlane.f32.xlu0 %v1730
        %v1794 = vpop.xlane.xlu0 %1793
        %1795 = vadd.xlane.f32.xlu0 %v1732
        %v1796 = vpop.xlane.xlu0 %1795
        %1797 = vadd.xlane.f32.xlu0 %v1734
        %v1798 = vpop.xlane.xlu0 %1797
        %1799 = vadd.xlane.f32.xlu0 %v1736
        %v1800 = vpop.xlane.xlu0 %1799
        %v1801 = vadd.f32 %v1753, %v1770
        %v1802 = vadd.f32 %v1754, %v1772
        %v1803 = vadd.f32 %v1755, %v1774
        %v1804 = vadd.f32 %v1756, %v1776
        %v1805 = vadd.f32 %v1757, %v1778
        %v1806 = vadd.f32 %v1758, %v1780
        %v1807 = vadd.f32 %v1759, %v1782
        %v1808 = vadd.f32 %v1760, %v1784
        %v1809 = vadd.f32 %v1761, %v1786
        %v1810 = vadd.f32 %v1762, %v1788
        %v1811 = vadd.f32 %v1763, %v1790
        %v1812 = vadd.f32 %v1764, %v1792
        %v1813 = vadd.f32 %v1765, %v1794
        %v1814 = vadd.f32 %v1766, %v1796
        %v1815 = vadd.f32 %v1767, %v1798
        %v1816 = vadd.f32 %v1768, %v1800
        %vm1817 = vcmask 15368
        %1818 = vst.msk [vmem:[#allocation3] sm:$0xff] %vm1817, %v1801
        %1819 = vst.msk [vmem:[#allocation3 + $0x8] sm:$0xff] %vm1817, %v1802
        %1820 = vst.msk [vmem:[#allocation3 + $0x10] sm:$0xff] %vm1817, %v1803
        %1821 = vst.msk [vmem:[#allocation3 + $0x18] sm:$0xff] %vm1817, %v1804
        %1822 = vst.msk [vmem:[#allocation3 + $0x20] sm:$0xff] %vm1817, %v1805
        %1823 = vst.msk [vmem:[#allocation3 + $0x28] sm:$0xff] %vm1817, %v1806
        %1824 = vst.msk [vmem:[#allocation3 + $0x30] sm:$0xff] %vm1817, %v1807
        %1825 = vst.msk [vmem:[#allocation3 + $0x38] sm:$0xff] %vm1817, %v1808
        %1826 = vst.msk [vmem:[#allocation3 + $0x40] sm:$0xff] %vm1817, %v1809
        %1827 = vst.msk [vmem:[#allocation3 + $0x48] sm:$0xff] %vm1817, %v1810
        %1828 = vst.msk [vmem:[#allocation3 + $0x50] sm:$0xff] %vm1817, %v1811
        %1829 = vst.msk [vmem:[#allocation3 + $0x58] sm:$0xff] %vm1817, %v1812
        %1830 = vst.msk [vmem:[#allocation3 + $0x60] sm:$0xff] %vm1817, %v1813
        %1831 = vst.msk [vmem:[#allocation3 + $0x68] sm:$0xff] %vm1817, %v1814
        %1832 = vst.msk [vmem:[#allocation3 + $0x70] sm:$0xff] %vm1817, %v1815
        %1833 = vst.msk [vmem:[#allocation3 + $0x78] sm:$0xff] %vm1817, %v1816
        %v1834 = vld [vmem:[%s332] sm:$0xf]
        %v1835 = vld [vmem:[%s332 + $0x4] sm:$0xf]
        %v1836 = vld [vmem:[%s332 + $0x8] sm:$0xf]
        %v1837 = vld [vmem:[%s332 + $0xc] sm:$0xf]
        %v1838 = vld [vmem:[%s332 + $0x10] sm:$0xf]
        %v1839 = vld [vmem:[%s332 + $0x14] sm:$0xf]
        %v1840 = vld [vmem:[%s332 + $0x18] sm:$0xf]
        %v1841 = vld [vmem:[%s332 + $0x1c] sm:$0xf]
        %v1842 = vld [vmem:[%s332 + $0x20] sm:$0xf]
        %v1843 = vld [vmem:[%s332 + $0x24] sm:$0xf]
        %v1844 = vld [vmem:[%s332 + $0x28] sm:$0xf]
        %v1845 = vld [vmem:[%s332 + $0x2c] sm:$0xf]
        %v1846 = vld [vmem:[%s332 + $0x30] sm:$0xf]
        %v1847 = vld [vmem:[%s332 + $0x34] sm:$0xf]
        %v1848 = vld [vmem:[%s332 + $0x38] sm:$0xf]
        %v1849 = vld [vmem:[%s332 + $0x3c] sm:$0xf]
        %v1850 = vpack.c.bf16 %v1708, %v1706
        %v1851 = vpack.c.bf16 %v1712, %v1710
        %v1852 = vpack.c.bf16 %v1716, %v1714
        %v1853 = vpack.c.bf16 %v1720, %v1718
        %v1854 = vpack.c.bf16 %v1724, %v1722
        %v1855 = vpack.c.bf16 %v1728, %v1726
        %v1856 = vpack.c.bf16 %v1732, %v1730
        %v1857 = vpack.c.bf16 %v1736, %v1734
        %v1874 = vunpack.c.l.b16 %v1834
        %v1875 = vunpack.c.l.b16 %v1835
        %v1876 = vunpack.c.l.b16 %v1836
        %v1877 = vunpack.c.l.b16 %v1837
        %v1878 = vunpack.c.l.b16 %v1838
        %v1879 = vunpack.c.l.b16 %v1839
        %v1880 = vunpack.c.l.b16 %v1840
        %v1881 = vunpack.c.l.b16 %v1841
        %v1882 = vunpack.c.l.b16 %v1842
        %v1883 = vunpack.c.l.b16 %v1843
        %v1884 = vunpack.c.l.b16 %v1844
        %v1885 = vunpack.c.l.b16 %v1845
        %v1886 = vunpack.c.l.b16 %v1846
        %v1887 = vunpack.c.l.b16 %v1847
        %v1888 = vunpack.c.l.b16 %v1848
        %v1889 = vunpack.c.l.b16 %v1849
        %v1890 = vpack.c.b16 %v1875, %v1874
        %v1891 = vpack.c.b16 %v1877, %v1876
        %v1892 = vpack.c.b16 %v1879, %v1878
        %v1893 = vpack.c.b16 %v1881, %v1880
        %v1894 = vpack.c.b16 %v1883, %v1882
        %v1895 = vpack.c.b16 %v1885, %v1884
        %v1896 = vpack.c.b16 %v1887, %v1886
        %v1897 = vpack.c.b16 %v1889, %v1888
        %1898 = vrot.lane.b32.xlu0 %v1890, 112
        %v1899 = vpop.permute.xlu0 %1898
        %1900 = vrot.lane.b32.xlu0 %v1891, 112
        %v1901 = vpop.permute.xlu0 %1900
        %1902 = vrot.lane.b32.xlu0 %v1892, 112
        %v1903 = vpop.permute.xlu0 %1902
        %1904 = vrot.lane.b32.xlu0 %v1893, 112
        %v1905 = vpop.permute.xlu0 %1904
        %1906 = vrot.lane.b32.xlu0 %v1894, 112
        %v1907 = vpop.permute.xlu0 %1906
        %1908 = vrot.lane.b32.xlu0 %v1895, 112
        %v1909 = vpop.permute.xlu0 %1908
        %1910 = vrot.lane.b32.xlu0 %v1896, 112
        %v1911 = vpop.permute.xlu0 %1910
        %1912 = vrot.lane.b32.xlu0 %v1897, 112
        %v1913 = vpop.permute.xlu0 %1912
        %1922 = vmatprep.subr.bf16.mxu0 0
        %1923 = vmatpush1.bf16.msra.mxu0 %v1899
        %1924 = vmatprep.subr.bf16.mxu0 0
        %1925 = vmatpush1.bf16.msra.mxu0 %v1901
        %1926 = vmatprep.subr.bf16.mxu0 0
        %1927 = vmatpush1.bf16.msra.mxu0 %v1903
        %1928 = vmatprep.subr.bf16.mxu0 0
        %1929 = vmatpush1.bf16.msra.mxu0 %v1905
        %1930 = vmatprep.subr.bf16.mxu0 0
        %1931 = vmatpush1.bf16.msra.mxu0 %v1907
        %1932 = vmatprep.subr.bf16.mxu0 0
        %1933 = vmatpush1.bf16.msra.mxu0 %v1909
        %1934 = vmatprep.subr.bf16.mxu0 0
        %1935 = vmatpush1.bf16.msra.mxu0 %v1911
        %1936 = vmatprep.subr.bf16.mxu0 0
        %1937 = vmatpush1.bf16.msra.mxu0 %v1913
        %1938 = vmatprep.subr.bf16.mxu0 0
        %1939 = vmatpush1.bf16.msra.mxu0 0
        %1940 = vmatprep.subr.bf16.mxu0 0
        %1941 = vmatpush1.bf16.msra.mxu0 0
        %1942 = vmatprep.subr.bf16.mxu0 0
        %1943 = vmatpush1.bf16.msra.mxu0 0
        %1944 = vmatprep.subr.bf16.mxu0 0
        %1945 = vmatpush1.bf16.msra.mxu0 0
        %1946 = vmatprep.subr.bf16.mxu0 0
        %1947 = vmatpush1.bf16.msra.mxu0 0
        %1948 = vmatprep.subr.bf16.mxu0 0
        %1949 = vmatpush1.bf16.msra.mxu0 0
        %1950 = vmatprep.subr.bf16.mxu0 0
        %1951 = vmatpush1.bf16.msra.mxu0 0
        %1952 = vmatprep.subr.bf16.mxu0 0
        %1953 = vmatpush1.bf16.msra.mxu0 0
        %1954 = vmatprep.mubr.bf16.mxu0 0
        %1955 = vmatmul.mubr.bf16.gmra.mrb[0].mxu0 %v1850
        %v1956 = vpop.f32.mrb[0].mxu0
        %v1957 = vadd.f32 0.0, %v1956
        %v1958 = vpop.f32.mrb[0].mxu0
        %v1959 = vpop.f32.mrb[0].mxu0
        %v1960 = vadd.f32 0.0, %v1959
        %v1961 = vpop.f32.mrb[0].mxu0
        %1962 = vmatprep.mubr.bf16.mxu0 0
        %1963 = vmatmul.mubr.bf16.gmra.mrb[0].mxu0 %v1851
        %v1964 = vpop.f32.mrb[0].mxu0
        %v1965 = vadd.f32 0.0, %v1964
        %v1966 = vpop.f32.mrb[0].mxu0
        %v1967 = vpop.f32.mrb[0].mxu0
        %v1968 = vadd.f32 0.0, %v1967
        %v1969 = vpop.f32.mrb[0].mxu0
        %1970 = vmatprep.mubr.bf16.mxu0 0
        %1971 = vmatmul.mubr.bf16.gmra.mrb[0].mxu0 %v1852
        %v1972 = vpop.f32.mrb[0].mxu0
        %v1973 = vadd.f32 0.0, %v1972
        %v1974 = vpop.f32.mrb[0].mxu0
        %v1975 = vpop.f32.mrb[0].mxu0
        %v1976 = vadd.f32 0.0, %v1975
        %v1977 = vpop.f32.mrb[0].mxu0
        %1978 = vmatprep.mubr.bf16.mxu0 0
        %1979 = vmatmul.mubr.bf16.gmra.mrb[0].mxu0 %v1853
        %v1980 = vpop.f32.mrb[0].mxu0
        %v1981 = vadd.f32 0.0, %v1980
        %v1982 = vpop.f32.mrb[0].mxu0
        %v1983 = vpop.f32.mrb[0].mxu0
        %v1984 = vadd.f32 0.0, %v1983
        %v1985 = vpop.f32.mrb[0].mxu0
        %1986 = vmatprep.mubr.bf16.mxu0 0
        %1987 = vmatmul.mubr.bf16.gmra.mrb[0].mxu0 %v1854
        %v1988 = vpop.f32.mrb[0].mxu0
        %v1989 = vadd.f32 0.0, %v1988
        %v1990 = vpop.f32.mrb[0].mxu0
        %v1991 = vpop.f32.mrb[0].mxu0
        %v1992 = vadd.f32 0.0, %v1991
        %v1993 = vpop.f32.mrb[0].mxu0
        %1994 = vmatprep.mubr.bf16.mxu0 0
        %1995 = vmatmul.mubr.bf16.gmra.mrb[0].mxu0 %v1855
        %v1996 = vpop.f32.mrb[0].mxu0
        %v1997 = vadd.f32 0.0, %v1996
        %v1998 = vpop.f32.mrb[0].mxu0
        %v1999 = vpop.f32.mrb[0].mxu0
        %v2000 = vadd.f32 0.0, %v1999
        %v2001 = vpop.f32.mrb[0].mxu0
        %2002 = vmatprep.mubr.bf16.mxu0 0
        %2003 = vmatmul.mubr.bf16.gmra.mrb[0].mxu0 %v1856
        %v2004 = vpop.f32.mrb[0].mxu0
        %v2005 = vadd.f32 0.0, %v2004
        %v2006 = vpop.f32.mrb[0].mxu0
        %v2007 = vpop.f32.mrb[0].mxu0
        %v2008 = vadd.f32 0.0, %v2007
        %v2009 = vpop.f32.mrb[0].mxu0
        %2010 = vmatprep.mubr.bf16.mxu0 0
        %2011 = vmatmul.mubr.bf16.gmra.mrb[0].mxu0 %v1857
        %v2012 = vpop.f32.mrb[0].mxu0
        %v2013 = vadd.f32 0.0, %v2012
        %v2014 = vpop.f32.mrb[0].mxu0
        %v2015 = vpop.f32.mrb[0].mxu0
        %v2016 = vadd.f32 0.0, %v2015
        %v2017 = vpop.f32.mrb[0].mxu0
        %2018 = vdwg.mxu0
        %v2019 = vld [vmem:[#allocation4] sm:$0xff]
        %v2020 = vld [vmem:[#allocation4 + $0x8] sm:$0xff]
        %v2021 = vld [vmem:[#allocation4 + $0x10] sm:$0xff]
        %v2022 = vld [vmem:[#allocation4 + $0x18] sm:$0xff]
        %v2023 = vld [vmem:[#allocation4 + $0x20] sm:$0xff]
        %v2024 = vld [vmem:[#allocation4 + $0x28] sm:$0xff]
        %v2025 = vld [vmem:[#allocation4 + $0x30] sm:$0xff]
        %v2026 = vld [vmem:[#allocation4 + $0x38] sm:$0xff]
        %v2027 = vld [vmem:[#allocation4 + $0x40] sm:$0xff]
        %v2028 = vld [vmem:[#allocation4 + $0x48] sm:$0xff]
        %v2029 = vld [vmem:[#allocation4 + $0x50] sm:$0xff]
        %v2030 = vld [vmem:[#allocation4 + $0x58] sm:$0xff]
        %v2031 = vld [vmem:[#allocation4 + $0x60] sm:$0xff]
        %v2032 = vld [vmem:[#allocation4 + $0x68] sm:$0xff]
        %v2033 = vld [vmem:[#allocation4 + $0x70] sm:$0xff]
        %v2034 = vld [vmem:[#allocation4 + $0x78] sm:$0xff]
        %2036 = vset.pattern.permute.xlu0 1
        %2037 = vperm.xlu0 %2036, %v1578
        %v2038 = vpop.permute.xlu0 %2037
        %2041 = vset.pattern.permute.xlu0 1
        %2042 = vperm.xlu0 %2041, %v1580
        %v2043 = vpop.permute.xlu0 %2042
        %2046 = vset.pattern.permute.xlu0 1
        %2047 = vperm.xlu0 %2046, %v1582
        %v2048 = vpop.permute.xlu0 %2047
        %2051 = vset.pattern.permute.xlu0 1
        %2052 = vperm.xlu0 %2051, %v1584
        %v2053 = vpop.permute.xlu0 %2052
        %2056 = vset.pattern.permute.xlu0 1
        %2057 = vperm.xlu0 %2056, %v1586
        %v2058 = vpop.permute.xlu0 %2057
        %2061 = vset.pattern.permute.xlu0 1
        %2062 = vperm.xlu0 %2061, %v1588
        %v2063 = vpop.permute.xlu0 %2062
        %2066 = vset.pattern.permute.xlu0 1
        %2067 = vperm.xlu0 %2066, %v1590
        %v2068 = vpop.permute.xlu0 %2067
        %2071 = vset.pattern.permute.xlu0 1
        %2072 = vperm.xlu0 %2071, %v1592
        %v2073 = vpop.permute.xlu0 %2072
        %2076 = vset.pattern.permute.xlu0 1
        %2077 = vperm.xlu0 %2076, %v1594
        %v2078 = vpop.permute.xlu0 %2077
        %2081 = vset.pattern.permute.xlu0 1
        %2082 = vperm.xlu0 %2081, %v1596
        %v2083 = vpop.permute.xlu0 %2082
        %2086 = vset.pattern.permute.xlu0 1
        %2087 = vperm.xlu0 %2086, %v1598
        %v2088 = vpop.permute.xlu0 %2087
        %2091 = vset.pattern.permute.xlu0 1
        %2092 = vperm.xlu0 %2091, %v1600
        %v2093 = vpop.permute.xlu0 %2092
        %2096 = vset.pattern.permute.xlu0 1
        %2097 = vperm.xlu0 %2096, %v1602
        %v2098 = vpop.permute.xlu0 %2097
        %2101 = vset.pattern.permute.xlu0 1
        %2102 = vperm.xlu0 %2101, %v1604
        %v2103 = vpop.permute.xlu0 %2102
        %2106 = vset.pattern.permute.xlu0 1
        %2107 = vperm.xlu0 %2106, %v1606
        %v2108 = vpop.permute.xlu0 %2107
        %2111 = vset.pattern.permute.xlu0 1
        %2112 = vperm.xlu0 %2111, %v1608
        %v2113 = vpop.permute.xlu0 %2112
        %v2115 = vmul.f32 %v2038, %v2019
        %v2116 = vmul.f32 %v2043, %v2020
        %v2117 = vmul.f32 %v2048, %v2021
        %v2118 = vmul.f32 %v2053, %v2022
        %v2119 = vmul.f32 %v2058, %v2023
        %v2120 = vmul.f32 %v2063, %v2024
        %v2121 = vmul.f32 %v2068, %v2025
        %v2122 = vmul.f32 %v2073, %v2026
        %v2123 = vmul.f32 %v2078, %v2027
        %v2124 = vmul.f32 %v2083, %v2028
        %v2125 = vmul.f32 %v2088, %v2029
        %v2126 = vmul.f32 %v2093, %v2030
        %v2127 = vmul.f32 %v2098, %v2031
        %v2128 = vmul.f32 %v2103, %v2032
        %v2129 = vmul.f32 %v2108, %v2033
        %v2130 = vmul.f32 %v2113, %v2034
        %2147 = vrot.lane.b32.xlu0 %v1957, 16
        %v2148 = vpop.permute.xlu0 %2147
        %2149 = vrot.lane.b32.xlu0 %v1960, 16
        %v2150 = vpop.permute.xlu0 %2149
        %2151 = vrot.lane.b32.xlu0 %v1965, 16
        %v2152 = vpop.permute.xlu0 %2151
        %2153 = vrot.lane.b32.xlu0 %v1968, 16
        %v2154 = vpop.permute.xlu0 %2153
        %2155 = vrot.lane.b32.xlu0 %v1973, 16
        %v2156 = vpop.permute.xlu0 %2155
        %2157 = vrot.lane.b32.xlu0 %v1976, 16
        %v2158 = vpop.permute.xlu0 %2157
        %2159 = vrot.lane.b32.xlu0 %v1981, 16
        %v2160 = vpop.permute.xlu0 %2159
        %2161 = vrot.lane.b32.xlu0 %v1984, 16
        %v2162 = vpop.permute.xlu0 %2161
        %2163 = vrot.lane.b32.xlu0 %v1989, 16
        %v2164 = vpop.permute.xlu0 %2163
        %2165 = vrot.lane.b32.xlu0 %v1992, 16
        %v2166 = vpop.permute.xlu0 %2165
        %2167 = vrot.lane.b32.xlu0 %v1997, 16
        %v2168 = vpop.permute.xlu0 %2167
        %2169 = vrot.lane.b32.xlu0 %v2000, 16
        %v2170 = vpop.permute.xlu0 %2169
        %2171 = vrot.lane.b32.xlu0 %v2005, 16
        %v2172 = vpop.permute.xlu0 %2171
        %2173 = vrot.lane.b32.xlu0 %v2008, 16
        %v2174 = vpop.permute.xlu0 %2173
        %2175 = vrot.lane.b32.xlu0 %v2013, 16
        %v2176 = vpop.permute.xlu0 %2175
        %2177 = vrot.lane.b32.xlu0 %v2016, 16
        %v2178 = vpop.permute.xlu0 %2177
        %v2195 = vadd.f32 %v2115, %v2148
        %v2196 = vadd.f32 %v2116, %v2150
        %v2197 = vadd.f32 %v2117, %v2152
        %v2198 = vadd.f32 %v2118, %v2154
        %v2199 = vadd.f32 %v2119, %v2156
        %v2200 = vadd.f32 %v2120, %v2158
        %v2201 = vadd.f32 %v2121, %v2160
        %v2202 = vadd.f32 %v2122, %v2162
        %v2203 = vadd.f32 %v2123, %v2164
        %v2204 = vadd.f32 %v2124, %v2166
        %v2205 = vadd.f32 %v2125, %v2168
        %v2206 = vadd.f32 %v2126, %v2170
        %v2207 = vadd.f32 %v2127, %v2172
        %v2208 = vadd.f32 %v2128, %v2174
        %v2209 = vadd.f32 %v2129, %v2176
        %v2210 = vadd.f32 %v2130, %v2178
        %vm2211 = vcmask 261248
        %2212 = vst.msk [vmem:[#allocation4] sm:$0xff] %vm2211, %v2195
        %2213 = vst.msk [vmem:[#allocation4 + $0x8] sm:$0xff] %vm2211, %v2196
        %2214 = vst.msk [vmem:[#allocation4 + $0x10] sm:$0xff] %vm2211, %v2197
        %2215 = vst.msk [vmem:[#allocation4 + $0x18] sm:$0xff] %vm2211, %v2198
        %2216 = vst.msk [vmem:[#allocation4 + $0x20] sm:$0xff] %vm2211, %v2199
        %2217 = vst.msk [vmem:[#allocation4 + $0x28] sm:$0xff] %vm2211, %v2200
        %2218 = vst.msk [vmem:[#allocation4 + $0x30] sm:$0xff] %vm2211, %v2201
        %2219 = vst.msk [vmem:[#allocation4 + $0x38] sm:$0xff] %vm2211, %v2202
        %2220 = vst.msk [vmem:[#allocation4 + $0x40] sm:$0xff] %vm2211, %v2203
        %2221 = vst.msk [vmem:[#allocation4 + $0x48] sm:$0xff] %vm2211, %v2204
        %2222 = vst.msk [vmem:[#allocation4 + $0x50] sm:$0xff] %vm2211, %v2205
        %2223 = vst.msk [vmem:[#allocation4 + $0x58] sm:$0xff] %vm2211, %v2206
        %2224 = vst.msk [vmem:[#allocation4 + $0x60] sm:$0xff] %vm2211, %v2207
        %2225 = vst.msk [vmem:[#allocation4 + $0x68] sm:$0xff] %vm2211, %v2208
        %2226 = vst.msk [vmem:[#allocation4 + $0x70] sm:$0xff] %vm2211, %v2209
        %2227 = vst.msk [vmem:[#allocation4 + $0x78] sm:$0xff] %vm2211, %v2210
        %2228 = vst.msk [vmem:[#allocation2] sm:$0xff] %vm1817, %v1545
        %2229 = vst.msk [vmem:[#allocation2 + $0x8] sm:$0xff] %vm1817, %v1546
        %2230 = vst.msk [vmem:[#allocation2 + $0x10] sm:$0xff] %vm1817, %v1547
        %2231 = vst.msk [vmem:[#allocation2 + $0x18] sm:$0xff] %vm1817, %v1548
        %2232 = vst.msk [vmem:[#allocation2 + $0x20] sm:$0xff] %vm1817, %v1549
        %2233 = vst.msk [vmem:[#allocation2 + $0x28] sm:$0xff] %vm1817, %v1550
        %2234 = vst.msk [vmem:[#allocation2 + $0x30] sm:$0xff] %vm1817, %v1551
        %2235 = vst.msk [vmem:[#allocation2 + $0x38] sm:$0xff] %vm1817, %v1552
        %2236 = vst.msk [vmem:[#allocation2 + $0x40] sm:$0xff] %vm1817, %v1553
        %2237 = vst.msk [vmem:[#allocation2 + $0x48] sm:$0xff] %vm1817, %v1554
        %2238 = vst.msk [vmem:[#allocation2 + $0x50] sm:$0xff] %vm1817, %v1555
        %2239 = vst.msk [vmem:[#allocation2 + $0x58] sm:$0xff] %vm1817, %v1556
        %2240 = vst.msk [vmem:[#allocation2 + $0x60] sm:$0xff] %vm1817, %v1557
        %2241 = vst.msk [vmem:[#allocation2 + $0x68] sm:$0xff] %vm1817, %v1558
        %2242 = vst.msk [vmem:[#allocation2 + $0x70] sm:$0xff] %vm1817, %v1559
        %2243 = vst.msk [vmem:[#allocation2 + $0x78] sm:$0xff] %vm1817, %v1560
        %v2244 = vld [vmem:[%s337 + $0x2] sm:$0x1]
        %2245 = vset.pattern.permute.xlu0 2
        %2246 = vperm.xlu0 %2245, %v416
        %v2247 = vpop.permute.xlu0 %2246
        %2249 = vset.pattern.permute.xlu0 2
        %2250 = vperm.xlu0 %2249, %v417
        %v2251 = vpop.permute.xlu0 %2250
        %2253 = vset.pattern.permute.xlu0 2
        %2254 = vperm.xlu0 %2253, %v418
        %v2255 = vpop.permute.xlu0 %2254
        %2257 = vset.pattern.permute.xlu0 2
        %2258 = vperm.xlu0 %2257, %v419
        %v2259 = vpop.permute.xlu0 %2258
        %2261 = vset.pattern.permute.xlu0 2
        %2262 = vperm.xlu0 %2261, %v420
        %v2263 = vpop.permute.xlu0 %2262
        %2265 = vset.pattern.permute.xlu0 2
        %2266 = vperm.xlu0 %2265, %v421
        %v2267 = vpop.permute.xlu0 %2266
        %2269 = vset.pattern.permute.xlu0 2
        %2270 = vperm.xlu0 %2269, %v422
        %v2271 = vpop.permute.xlu0 %2270
        %2273 = vset.pattern.permute.xlu0 2
        %2274 = vperm.xlu0 %2273, %v423
        %v2275 = vpop.permute.xlu0 %2274
        %2277 = vset.pattern.permute.xlu0 2
        %2278 = vperm.xlu0 %2277, %v424
        %v2279 = vpop.permute.xlu0 %2278
        %2281 = vset.pattern.permute.xlu0 2
        %2282 = vperm.xlu0 %2281, %v425
        %v2283 = vpop.permute.xlu0 %2282
        %2285 = vset.pattern.permute.xlu0 2
        %2286 = vperm.xlu0 %2285, %v426
        %v2287 = vpop.permute.xlu0 %2286
        %2289 = vset.pattern.permute.xlu0 2
        %2290 = vperm.xlu0 %2289, %v427
        %v2291 = vpop.permute.xlu0 %2290
        %2293 = vset.pattern.permute.xlu0 2
        %2294 = vperm.xlu0 %2293, %v428
        %v2295 = vpop.permute.xlu0 %2294
        %2297 = vset.pattern.permute.xlu0 2
        %2298 = vperm.xlu0 %2297, %v429
        %v2299 = vpop.permute.xlu0 %2298
        %2301 = vset.pattern.permute.xlu0 2
        %2302 = vperm.xlu0 %2301, %v430
        %v2303 = vpop.permute.xlu0 %2302
        %2305 = vset.pattern.permute.xlu0 2
        %2306 = vperm.xlu0 %2305, %v431
        %v2307 = vpop.permute.xlu0 %2306
        %v2309 = vlaneseq
        %v2310 = vshrl.u32 %v2309, 7
        %v2311 = vsub.s32 0, %v2310
        %v2312 = vrot.slane %v2244, %v2311
        %v2313 = vadd.f32 %v2247, %v2312
        %v2314 = vadd.f32 %v2251, %v2312
        %v2315 = vadd.f32 %v2255, %v2312
        %v2316 = vadd.f32 %v2259, %v2312
        %v2317 = vadd.f32 %v2263, %v2312
        %v2318 = vadd.f32 %v2267, %v2312
        %v2319 = vadd.f32 %v2271, %v2312
        %v2320 = vadd.f32 %v2275, %v2312
        %v2321 = vadd.f32 %v2279, %v2312
        %v2322 = vadd.f32 %v2283, %v2312
        %v2323 = vadd.f32 %v2287, %v2312
        %v2324 = vadd.f32 %v2291, %v2312
        %v2325 = vadd.f32 %v2295, %v2312
        %v2326 = vadd.f32 %v2299, %v2312
        %v2327 = vadd.f32 %v2303, %v2312
        %v2328 = vadd.f32 %v2307, %v2312
        %v2329 = vmul.f32 %v2313, 0.2
        %v2330 = vmul.f32 %v2314, 0.2
        %v2331 = vmul.f32 %v2315, 0.2
        %v2332 = vmul.f32 %v2316, 0.2
        %v2333 = vmul.f32 %v2317, 0.2
        %v2334 = vmul.f32 %v2318, 0.2
        %v2335 = vmul.f32 %v2319, 0.2
        %v2336 = vmul.f32 %v2320, 0.2
        %v2337 = vmul.f32 %v2321, 0.2
        %v2338 = vmul.f32 %v2322, 0.2
        %v2339 = vmul.f32 %v2323, 0.2
        %v2340 = vmul.f32 %v2324, 0.2
        %v2341 = vmul.f32 %v2325, 0.2
        %v2342 = vmul.f32 %v2326, 0.2
        %v2343 = vmul.f32 %v2327, 0.2
        %v2344 = vmul.f32 %v2328, 0.2
        %v2345 = vmax.f32 %v2313, %v2329
        %v2346 = vmax.f32 %v2314, %v2330
        %v2347 = vmax.f32 %v2315, %v2331
        %v2348 = vmax.f32 %v2316, %v2332
        %v2349 = vmax.f32 %v2317, %v2333
        %v2350 = vmax.f32 %v2318, %v2334
        %v2351 = vmax.f32 %v2319, %v2335
        %v2352 = vmax.f32 %v2320, %v2336
        %v2353 = vmax.f32 %v2321, %v2337
        %v2354 = vmax.f32 %v2322, %v2338
        %v2355 = vmax.f32 %v2323, %v2339
        %v2356 = vmax.f32 %v2324, %v2340
        %v2357 = vmax.f32 %v2325, %v2341
        %v2358 = vmax.f32 %v2326, %v2342
        %v2359 = vmax.f32 %v2327, %v2343
        %v2360 = vmax.f32 %v2328, %v2344
        %v2361 = vsel %vm665, %v2345, -1e+30
        %v2362 = vsel %vm666, %v2346, -1e+30
        %v2363 = vsel %vm667, %v2347, -1e+30
        %v2364 = vsel %vm668, %v2348, -1e+30
        %v2365 = vsel %vm669, %v2349, -1e+30
        %v2366 = vsel %vm670, %v2350, -1e+30
        %v2367 = vsel %vm671, %v2351, -1e+30
        %v2368 = vsel %vm672, %v2352, -1e+30
        %v2369 = vsel %vm673, %v2353, -1e+30
        %v2370 = vsel %vm674, %v2354, -1e+30
        %v2371 = vsel %vm675, %v2355, -1e+30
        %v2372 = vsel %vm676, %v2356, -1e+30
        %v2373 = vsel %vm677, %v2357, -1e+30
        %v2374 = vsel %vm678, %v2358, -1e+30
        %v2375 = vsel %vm679, %v2359, -1e+30
        %v2376 = vsel %vm680, %v2360, -1e+30
        %v2377 = vld [vmem:[#allocation2] sm:$0xff]
        %v2378 = vld [vmem:[#allocation2 + $0x8] sm:$0xff]
        %v2379 = vld [vmem:[#allocation2 + $0x10] sm:$0xff]
        %v2380 = vld [vmem:[#allocation2 + $0x18] sm:$0xff]
        %v2381 = vld [vmem:[#allocation2 + $0x20] sm:$0xff]
        %v2382 = vld [vmem:[#allocation2 + $0x28] sm:$0xff]
        %v2383 = vld [vmem:[#allocation2 + $0x30] sm:$0xff]
        %v2384 = vld [vmem:[#allocation2 + $0x38] sm:$0xff]
        %v2385 = vld [vmem:[#allocation2 + $0x40] sm:$0xff]
        %v2386 = vld [vmem:[#allocation2 + $0x48] sm:$0xff]
        %v2387 = vld [vmem:[#allocation2 + $0x50] sm:$0xff]
        %v2388 = vld [vmem:[#allocation2 + $0x58] sm:$0xff]
        %v2389 = vld [vmem:[#allocation2 + $0x60] sm:$0xff]
        %v2390 = vld [vmem:[#allocation2 + $0x68] sm:$0xff]
        %v2391 = vld [vmem:[#allocation2 + $0x70] sm:$0xff]
        %v2392 = vld [vmem:[#allocation2 + $0x78] sm:$0xff]
        %2393 = vmax.xlane.f32.xlu0 %v2361
        %v2394 = vpop.xlane.xlu0 %2393
        %2395 = vmax.xlane.f32.xlu0 %v2362
        %v2396 = vpop.xlane.xlu0 %2395
        %2397 = vmax.xlane.f32.xlu0 %v2363
        %v2398 = vpop.xlane.xlu0 %2397
        %2399 = vmax.xlane.f32.xlu0 %v2364
        %v2400 = vpop.xlane.xlu0 %2399
        %2401 = vmax.xlane.f32.xlu0 %v2365
        %v2402 = vpop.xlane.xlu0 %2401
        %2403 = vmax.xlane.f32.xlu0 %v2366
        %v2404 = vpop.xlane.xlu0 %2403
        %2405 = vmax.xlane.f32.xlu0 %v2367
        %v2406 = vpop.xlane.xlu0 %2405
        %2407 = vmax.xlane.f32.xlu0 %v2368
        %v2408 = vpop.xlane.xlu0 %2407
        %2409 = vmax.xlane.f32.xlu0 %v2369
        %v2410 = vpop.xlane.xlu0 %2409
        %2411 = vmax.xlane.f32.xlu0 %v2370
        %v2412 = vpop.xlane.xlu0 %2411
        %2413 = vmax.xlane.f32.xlu0 %v2371
        %v2414 = vpop.xlane.xlu0 %2413
        %2415 = vmax.xlane.f32.xlu0 %v2372
        %v2416 = vpop.xlane.xlu0 %2415
        %2417 = vmax.xlane.f32.xlu0 %v2373
        %v2418 = vpop.xlane.xlu0 %2417
        %2419 = vmax.xlane.f32.xlu0 %v2374
        %v2420 = vpop.xlane.xlu0 %2419
        %2421 = vmax.xlane.f32.xlu0 %v2375
        %v2422 = vpop.xlane.xlu0 %2421
        %2423 = vmax.xlane.f32.xlu0 %v2376
        %v2424 = vpop.xlane.xlu0 %2423
        %v2425 = vmax.f32 %v2377, %v2394
        %v2426 = vmax.f32 %v2378, %v2396
        %v2427 = vmax.f32 %v2379, %v2398
        %v2428 = vmax.f32 %v2380, %v2400
        %v2429 = vmax.f32 %v2381, %v2402
        %v2430 = vmax.f32 %v2382, %v2404
        %v2431 = vmax.f32 %v2383, %v2406
        %v2432 = vmax.f32 %v2384, %v2408
        %v2433 = vmax.f32 %v2385, %v2410
        %v2434 = vmax.f32 %v2386, %v2412
        %v2435 = vmax.f32 %v2387, %v2414
        %v2436 = vmax.f32 %v2388, %v2416
        %v2437 = vmax.f32 %v2389, %v2418
        %v2438 = vmax.f32 %v2390, %v2420
        %v2439 = vmax.f32 %v2391, %v2422
        %v2440 = vmax.f32 %v2392, %v2424
        %v2441 = vsub.f32 %v2377, %v2425
        %v2442 = vsub.f32 %v2378, %v2426
        %v2443 = vsub.f32 %v2379, %v2427
        %v2444 = vsub.f32 %v2380, %v2428
        %v2445 = vsub.f32 %v2381, %v2429
        %v2446 = vsub.f32 %v2382, %v2430
        %v2447 = vsub.f32 %v2383, %v2431
        %v2448 = vsub.f32 %v2384, %v2432
        %v2449 = vsub.f32 %v2385, %v2433
        %v2450 = vsub.f32 %v2386, %v2434
        %v2451 = vsub.f32 %v2387, %v2435
        %v2452 = vsub.f32 %v2388, %v2436
        %v2453 = vsub.f32 %v2389, %v2437
        %v2454 = vsub.f32 %v2390, %v2438
        %v2455 = vsub.f32 %v2391, %v2439
        %v2456 = vsub.f32 %v2392, %v2440
        %v2457 = vmul.f32 %v2441, 1.442695
        %v2458 = vpow.pop %v2457
        %v2459 = vmul.f32 %v2442, 1.442695
        %v2460 = vpow.pop %v2459
        %v2461 = vmul.f32 %v2443, 1.442695
        %v2462 = vpow.pop %v2461
        %v2463 = vmul.f32 %v2444, 1.442695
        %v2464 = vpow.pop %v2463
        %v2465 = vmul.f32 %v2445, 1.442695
        %v2466 = vpow.pop %v2465
        %v2467 = vmul.f32 %v2446, 1.442695
        %v2468 = vpow.pop %v2467
        %v2469 = vmul.f32 %v2447, 1.442695
        %v2470 = vpow.pop %v2469
        %v2471 = vmul.f32 %v2448, 1.442695
        %v2472 = vpow.pop %v2471
        %v2473 = vmul.f32 %v2449, 1.442695
        %v2474 = vpow.pop %v2473
        %v2475 = vmul.f32 %v2450, 1.442695
        %v2476 = vpow.pop %v2475
        %v2477 = vmul.f32 %v2451, 1.442695
        %v2478 = vpow.pop %v2477
        %v2479 = vmul.f32 %v2452, 1.442695
        %v2480 = vpow.pop %v2479
        %v2481 = vmul.f32 %v2453, 1.442695
        %v2482 = vpow.pop %v2481
        %v2483 = vmul.f32 %v2454, 1.442695
        %v2484 = vpow.pop %v2483
        %v2485 = vmul.f32 %v2455, 1.442695
        %v2486 = vpow.pop %v2485
        %v2487 = vmul.f32 %v2456, 1.442695
        %v2488 = vpow.pop %v2487
        %2490 = vset.pattern.permute.xlu0 2
        %2491 = vperm.xlu0 %2490, %v2425
        %v2492 = vpop.permute.xlu0 %2491
        %2495 = vset.pattern.permute.xlu0 2
        %2496 = vperm.xlu0 %2495, %v2426
        %v2497 = vpop.permute.xlu0 %2496
        %2500 = vset.pattern.permute.xlu0 2
        %2501 = vperm.xlu0 %2500, %v2427
        %v2502 = vpop.permute.xlu0 %2501
        %2505 = vset.pattern.permute.xlu0 2
        %2506 = vperm.xlu0 %2505, %v2428
        %v2507 = vpop.permute.xlu0 %2506
        %2510 = vset.pattern.permute.xlu0 2
        %2511 = vperm.xlu0 %2510, %v2429
        %v2512 = vpop.permute.xlu0 %2511
        %2515 = vset.pattern.permute.xlu0 2
        %2516 = vperm.xlu0 %2515, %v2430
        %v2517 = vpop.permute.xlu0 %2516
        %2520 = vset.pattern.permute.xlu0 2
        %2521 = vperm.xlu0 %2520, %v2431
        %v2522 = vpop.permute.xlu0 %2521
        %2525 = vset.pattern.permute.xlu0 2
        %2526 = vperm.xlu0 %2525, %v2432
        %v2527 = vpop.permute.xlu0 %2526
        %2530 = vset.pattern.permute.xlu0 2
        %2531 = vperm.xlu0 %2530, %v2433
        %v2532 = vpop.permute.xlu0 %2531
        %2535 = vset.pattern.permute.xlu0 2
        %2536 = vperm.xlu0 %2535, %v2434
        %v2537 = vpop.permute.xlu0 %2536
        %2540 = vset.pattern.permute.xlu0 2
        %2541 = vperm.xlu0 %2540, %v2435
        %v2542 = vpop.permute.xlu0 %2541
        %2545 = vset.pattern.permute.xlu0 2
        %2546 = vperm.xlu0 %2545, %v2436
        %v2547 = vpop.permute.xlu0 %2546
        %2550 = vset.pattern.permute.xlu0 2
        %2551 = vperm.xlu0 %2550, %v2437
        %v2552 = vpop.permute.xlu0 %2551
        %2555 = vset.pattern.permute.xlu0 2
        %2556 = vperm.xlu0 %2555, %v2438
        %v2557 = vpop.permute.xlu0 %2556
        %2560 = vset.pattern.permute.xlu0 2
        %2561 = vperm.xlu0 %2560, %v2439
        %v2562 = vpop.permute.xlu0 %2561
        %2565 = vset.pattern.permute.xlu0 2
        %2566 = vperm.xlu0 %2565, %v2440
        %v2567 = vpop.permute.xlu0 %2566
        %v2569 = vsub.f32 %v2361, %v2492
        %v2570 = vsub.f32 %v2362, %v2497
        %v2571 = vsub.f32 %v2363, %v2502
        %v2572 = vsub.f32 %v2364, %v2507
        %v2573 = vsub.f32 %v2365, %v2512
        %v2574 = vsub.f32 %v2366, %v2517
        %v2575 = vsub.f32 %v2367, %v2522
        %v2576 = vsub.f32 %v2368, %v2527
        %v2577 = vsub.f32 %v2369, %v2532
        %v2578 = vsub.f32 %v2370, %v2537
        %v2579 = vsub.f32 %v2371, %v2542
        %v2580 = vsub.f32 %v2372, %v2547
        %v2581 = vsub.f32 %v2373, %v2552
        %v2582 = vsub.f32 %v2374, %v2557
        %v2583 = vsub.f32 %v2375, %v2562
        %v2584 = vsub.f32 %v2376, %v2567
        %v2585 = vmul.f32 %v2569, 1.442695
        %v2586 = vpow.pop %v2585
        %v2587 = vmul.f32 %v2570, 1.442695
        %v2588 = vpow.pop %v2587
        %v2589 = vmul.f32 %v2571, 1.442695
        %v2590 = vpow.pop %v2589
        %v2591 = vmul.f32 %v2572, 1.442695
        %v2592 = vpow.pop %v2591
        %v2593 = vmul.f32 %v2573, 1.442695
        %v2594 = vpow.pop %v2593
        %v2595 = vmul.f32 %v2574, 1.442695
        %v2596 = vpow.pop %v2595
        %v2597 = vmul.f32 %v2575, 1.442695
        %v2598 = vpow.pop %v2597
        %v2599 = vmul.f32 %v2576, 1.442695
        %v2600 = vpow.pop %v2599
        %v2601 = vmul.f32 %v2577, 1.442695
        %v2602 = vpow.pop %v2601
        %v2603 = vmul.f32 %v2578, 1.442695
        %v2604 = vpow.pop %v2603
        %v2605 = vmul.f32 %v2579, 1.442695
        %v2606 = vpow.pop %v2605
        %v2607 = vmul.f32 %v2580, 1.442695
        %v2608 = vpow.pop %v2607
        %v2609 = vmul.f32 %v2581, 1.442695
        %v2610 = vpow.pop %v2609
        %v2611 = vmul.f32 %v2582, 1.442695
        %v2612 = vpow.pop %v2611
        %v2613 = vmul.f32 %v2583, 1.442695
        %v2614 = vpow.pop %v2613
        %v2615 = vmul.f32 %v2584, 1.442695
        %v2616 = vpow.pop %v2615
        %v2617 = vld [vmem:[#allocation3] sm:$0xff]
        %v2618 = vld [vmem:[#allocation3 + $0x8] sm:$0xff]
        %v2619 = vld [vmem:[#allocation3 + $0x10] sm:$0xff]
        %v2620 = vld [vmem:[#allocation3 + $0x18] sm:$0xff]
        %v2621 = vld [vmem:[#allocation3 + $0x20] sm:$0xff]
        %v2622 = vld [vmem:[#allocation3 + $0x28] sm:$0xff]
        %v2623 = vld [vmem:[#allocation3 + $0x30] sm:$0xff]
        %v2624 = vld [vmem:[#allocation3 + $0x38] sm:$0xff]
        %v2625 = vld [vmem:[#allocation3 + $0x40] sm:$0xff]
        %v2626 = vld [vmem:[#allocation3 + $0x48] sm:$0xff]
        %v2627 = vld [vmem:[#allocation3 + $0x50] sm:$0xff]
        %v2628 = vld [vmem:[#allocation3 + $0x58] sm:$0xff]
        %v2629 = vld [vmem:[#allocation3 + $0x60] sm:$0xff]
        %v2630 = vld [vmem:[#allocation3 + $0x68] sm:$0xff]
        %v2631 = vld [vmem:[#allocation3 + $0x70] sm:$0xff]
        %v2632 = vld [vmem:[#allocation3 + $0x78] sm:$0xff]
        %v2633 = vmul.f32 %v2458, %v2617
        %v2634 = vmul.f32 %v2460, %v2618
        %v2635 = vmul.f32 %v2462, %v2619
        %v2636 = vmul.f32 %v2464, %v2620
        %v2637 = vmul.f32 %v2466, %v2621
        %v2638 = vmul.f32 %v2468, %v2622
        %v2639 = vmul.f32 %v2470, %v2623
        %v2640 = vmul.f32 %v2472, %v2624
        %v2641 = vmul.f32 %v2474, %v2625
        %v2642 = vmul.f32 %v2476, %v2626
        %v2643 = vmul.f32 %v2478, %v2627
        %v2644 = vmul.f32 %v2480, %v2628
        %v2645 = vmul.f32 %v2482, %v2629
        %v2646 = vmul.f32 %v2484, %v2630
        %v2647 = vmul.f32 %v2486, %v2631
        %v2648 = vmul.f32 %v2488, %v2632
        %2649 = vadd.xlane.f32.xlu0 %v2586
        %v2650 = vpop.xlane.xlu0 %2649
        %2651 = vadd.xlane.f32.xlu0 %v2588
        %v2652 = vpop.xlane.xlu0 %2651
        %2653 = vadd.xlane.f32.xlu0 %v2590
        %v2654 = vpop.xlane.xlu0 %2653
        %2655 = vadd.xlane.f32.xlu0 %v2592
        %v2656 = vpop.xlane.xlu0 %2655
        %2657 = vadd.xlane.f32.xlu0 %v2594
        %v2658 = vpop.xlane.xlu0 %2657
        %2659 = vadd.xlane.f32.xlu0 %v2596
        %v2660 = vpop.xlane.xlu0 %2659
        %2661 = vadd.xlane.f32.xlu0 %v2598
        %v2662 = vpop.xlane.xlu0 %2661
        %2663 = vadd.xlane.f32.xlu0 %v2600
        %v2664 = vpop.xlane.xlu0 %2663
        %2665 = vadd.xlane.f32.xlu0 %v2602
        %v2666 = vpop.xlane.xlu0 %2665
        %2667 = vadd.xlane.f32.xlu0 %v2604
        %v2668 = vpop.xlane.xlu0 %2667
        %2669 = vadd.xlane.f32.xlu0 %v2606
        %v2670 = vpop.xlane.xlu0 %2669
        %2671 = vadd.xlane.f32.xlu0 %v2608
        %v2672 = vpop.xlane.xlu0 %2671
        %2673 = vadd.xlane.f32.xlu0 %v2610
        %v2674 = vpop.xlane.xlu0 %2673
        %2675 = vadd.xlane.f32.xlu0 %v2612
        %v2676 = vpop.xlane.xlu0 %2675
        %2677 = vadd.xlane.f32.xlu0 %v2614
        %v2678 = vpop.xlane.xlu0 %2677
        %2679 = vadd.xlane.f32.xlu0 %v2616
        %v2680 = vpop.xlane.xlu0 %2679
        %v2681 = vadd.f32 %v2633, %v2650
        %v2682 = vadd.f32 %v2634, %v2652
        %v2683 = vadd.f32 %v2635, %v2654
        %v2684 = vadd.f32 %v2636, %v2656
        %v2685 = vadd.f32 %v2637, %v2658
        %v2686 = vadd.f32 %v2638, %v2660
        %v2687 = vadd.f32 %v2639, %v2662
        %v2688 = vadd.f32 %v2640, %v2664
        %v2689 = vadd.f32 %v2641, %v2666
        %v2690 = vadd.f32 %v2642, %v2668
        %v2691 = vadd.f32 %v2643, %v2670
        %v2692 = vadd.f32 %v2644, %v2672
        %v2693 = vadd.f32 %v2645, %v2674
        %v2694 = vadd.f32 %v2646, %v2676
        %v2695 = vadd.f32 %v2647, %v2678
        %v2696 = vadd.f32 %v2648, %v2680
        %vm2697 = vcmask 23568
        %2698 = vst.msk [vmem:[#allocation3] sm:$0xff] %vm2697, %v2681
        %2699 = vst.msk [vmem:[#allocation3 + $0x8] sm:$0xff] %vm2697, %v2682
        %2700 = vst.msk [vmem:[#allocation3 + $0x10] sm:$0xff] %vm2697, %v2683
        %2701 = vst.msk [vmem:[#allocation3 + $0x18] sm:$0xff] %vm2697, %v2684
        %2702 = vst.msk [vmem:[#allocation3 + $0x20] sm:$0xff] %vm2697, %v2685
        %2703 = vst.msk [vmem:[#allocation3 + $0x28] sm:$0xff] %vm2697, %v2686
        %2704 = vst.msk [vmem:[#allocation3 + $0x30] sm:$0xff] %vm2697, %v2687
        %2705 = vst.msk [vmem:[#allocation3 + $0x38] sm:$0xff] %vm2697, %v2688
        %2706 = vst.msk [vmem:[#allocation3 + $0x40] sm:$0xff] %vm2697, %v2689
        %2707 = vst.msk [vmem:[#allocation3 + $0x48] sm:$0xff] %vm2697, %v2690
        %2708 = vst.msk [vmem:[#allocation3 + $0x50] sm:$0xff] %vm2697, %v2691
        %2709 = vst.msk [vmem:[#allocation3 + $0x58] sm:$0xff] %vm2697, %v2692
        %2710 = vst.msk [vmem:[#allocation3 + $0x60] sm:$0xff] %vm2697, %v2693
        %2711 = vst.msk [vmem:[#allocation3 + $0x68] sm:$0xff] %vm2697, %v2694
        %2712 = vst.msk [vmem:[#allocation3 + $0x70] sm:$0xff] %vm2697, %v2695
        %2713 = vst.msk [vmem:[#allocation3 + $0x78] sm:$0xff] %vm2697, %v2696
        %v2714 = vld [vmem:[%s332] sm:$0xf]
        %v2715 = vld [vmem:[%s332 + $0x4] sm:$0xf]
        %v2716 = vld [vmem:[%s332 + $0x8] sm:$0xf]
        %v2717 = vld [vmem:[%s332 + $0xc] sm:$0xf]
        %v2718 = vld [vmem:[%s332 + $0x10] sm:$0xf]
        %v2719 = vld [vmem:[%s332 + $0x14] sm:$0xf]
        %v2720 = vld [vmem:[%s332 + $0x18] sm:$0xf]
        %v2721 = vld [vmem:[%s332 + $0x1c] sm:$0xf]
        %v2722 = vld [vmem:[%s332 + $0x20] sm:$0xf]
        %v2723 = vld [vmem:[%s332 + $0x24] sm:$0xf]
        %v2724 = vld [vmem:[%s332 + $0x28] sm:$0xf]
        %v2725 = vld [vmem:[%s332 + $0x2c] sm:$0xf]
        %v2726 = vld [vmem:[%s332 + $0x30] sm:$0xf]
        %v2727 = vld [vmem:[%s332 + $0x34] sm:$0xf]
        %v2728 = vld [vmem:[%s332 + $0x38] sm:$0xf]
        %v2729 = vld [vmem:[%s332 + $0x3c] sm:$0xf]
        %v2730 = vpack.c.bf16 %v2588, %v2586
        %v2731 = vpack.c.bf16 %v2592, %v2590
        %v2732 = vpack.c.bf16 %v2596, %v2594
        %v2733 = vpack.c.bf16 %v2600, %v2598
        %v2734 = vpack.c.bf16 %v2604, %v2602
        %v2735 = vpack.c.bf16 %v2608, %v2606
        %v2736 = vpack.c.bf16 %v2612, %v2610
        %v2737 = vpack.c.bf16 %v2616, %v2614
        %v2754 = vunpack.c.l.b16 %v2714
        %v2755 = vunpack.c.l.b16 %v2715
        %v2756 = vunpack.c.l.b16 %v2716
        %v2757 = vunpack.c.l.b16 %v2717
        %v2758 = vunpack.c.l.b16 %v2718
        %v2759 = vunpack.c.l.b16 %v2719
        %v2760 = vunpack.c.l.b16 %v2720
        %v2761 = vunpack.c.l.b16 %v2721
        %v2762 = vunpack.c.l.b16 %v2722
        %v2763 = vunpack.c.l.b16 %v2723
        %v2764 = vunpack.c.l.b16 %v2724
        %v2765 = vunpack.c.l.b16 %v2725
        %v2766 = vunpack.c.l.b16 %v2726
        %v2767 = vunpack.c.l.b16 %v2727
        %v2768 = vunpack.c.l.b16 %v2728
        %v2769 = vunpack.c.l.b16 %v2729
        %v2770 = vpack.c.b16 %v2755, %v2754
        %v2771 = vpack.c.b16 %v2757, %v2756
        %v2772 = vpack.c.b16 %v2759, %v2758
        %v2773 = vpack.c.b16 %v2761, %v2760
        %v2774 = vpack.c.b16 %v2763, %v2762
        %v2775 = vpack.c.b16 %v2765, %v2764
        %v2776 = vpack.c.b16 %v2767, %v2766
        %v2777 = vpack.c.b16 %v2769, %v2768
        %2778 = vrot.lane.b32.xlu0 %v2770, 96
        %v2779 = vpop.permute.xlu0 %2778
        %2780 = vrot.lane.b32.xlu0 %v2771, 96
        %v2781 = vpop.permute.xlu0 %2780
        %2782 = vrot.lane.b32.xlu0 %v2772, 96
        %v2783 = vpop.permute.xlu0 %2782
        %2784 = vrot.lane.b32.xlu0 %v2773, 96
        %v2785 = vpop.permute.xlu0 %2784
        %2786 = vrot.lane.b32.xlu0 %v2774, 96
        %v2787 = vpop.permute.xlu0 %2786
        %2788 = vrot.lane.b32.xlu0 %v2775, 96
        %v2789 = vpop.permute.xlu0 %2788
        %2790 = vrot.lane.b32.xlu0 %v2776, 96
        %v2791 = vpop.permute.xlu0 %2790
        %2792 = vrot.lane.b32.xlu0 %v2777, 96
        %v2793 = vpop.permute.xlu0 %2792
        %2802 = vmatprep.subr.bf16.mxu0 0
        %2803 = vmatpush1.bf16.msra.mxu0 %v2779
        %2804 = vmatprep.subr.bf16.mxu0 0
        %2805 = vmatpush1.bf16.msra.mxu0 %v2781
        %2806 = vmatprep.subr.bf16.mxu0 0
        %2807 = vmatpush1.bf16.msra.mxu0 %v2783
        %2808 = vmatprep.subr.bf16.mxu0 0
        %2809 = vmatpush1.bf16.msra.mxu0 %v2785
        %2810 = vmatprep.subr.bf16.mxu0 0
        %2811 = vmatpush1.bf16.msra.mxu0 %v2787
        %2812 = vmatprep.subr.bf16.mxu0 0
        %2813 = vmatpush1.bf16.msra.mxu0 %v2789
        %2814 = vmatprep.subr.bf16.mxu0 0
        %2815 = vmatpush1.bf16.msra.mxu0 %v2791
        %2816 = vmatprep.subr.bf16.mxu0 0
        %2817 = vmatpush1.bf16.msra.mxu0 %v2793
        %2818 = vmatprep.subr.bf16.mxu0 0
        %2819 = vmatpush1.bf16.msra.mxu0 0
        %2820 = vmatprep.subr.bf16.mxu0 0
        %2821 = vmatpush1.bf16.msra.mxu0 0
        %2822 = vmatprep.subr.bf16.mxu0 0
        %2823 = vmatpush1.bf16.msra.mxu0 0
        %2824 = vmatprep.subr.bf16.mxu0 0
        %2825 = vmatpush1.bf16.msra.mxu0 0
        %2826 = vmatprep.subr.bf16.mxu0 0
        %2827 = vmatpush1.bf16.msra.mxu0 0
        %2828 = vmatprep.subr.bf16.mxu0 0
        %2829 = vmatpush1.bf16.msra.mxu0 0
        %2830 = vmatprep.subr.bf16.mxu0 0
        %2831 = vmatpush1.bf16.msra.mxu0 0
        %2832 = vmatprep.subr.bf16.mxu0 0
        %2833 = vmatpush1.bf16.msra.mxu0 0
        %2834 = vmatprep.mubr.bf16.mxu0 0
        %2835 = vmatmul.mubr.bf16.gmra.mrb[0].mxu0 %v2730
        %v2836 = vpop.f32.mrb[0].mxu0
        %v2837 = vadd.f32 0.0, %v2836
        %v2838 = vpop.f32.mrb[0].mxu0
        %v2839 = vpop.f32.mrb[0].mxu0
        %v2840 = vadd.f32 0.0, %v2839
        %v2841 = vpop.f32.mrb[0].mxu0
        %2842 = vmatprep.mubr.bf16.mxu0 0
        %2843 = vmatmul.mubr.bf16.gmra.mrb[0].mxu0 %v2731
        %v2844 = vpop.f32.mrb[0].mxu0
        %v2845 = vadd.f32 0.0, %v2844
        %v2846 = vpop.f32.mrb[0].mxu0
        %v2847 = vpop.f32.mrb[0].mxu0
        %v2848 = vadd.f32 0.0, %v2847
        %v2849 = vpop.f32.mrb[0].mxu0
        %2850 = vmatprep.mubr.bf16.mxu0 0
        %2851 = vmatmul.mubr.bf16.gmra.mrb[0].mxu0 %v2732
        %v2852 = vpop.f32.mrb[0].mxu0
        %v2853 = vadd.f32 0.0, %v2852
        %v2854 = vpop.f32.mrb[0].mxu0
        %v2855 = vpop.f32.mrb[0].mxu0
        %v2856 = vadd.f32 0.0, %v2855
        %v2857 = vpop.f32.mrb[0].mxu0
        %2858 = vmatprep.mubr.bf16.mxu0 0
        %2859 = vmatmul.mubr.bf16.gmra.mrb[0].mxu0 %v2733
        %v2860 = vpop.f32.mrb[0].mxu0
        %v2861 = vadd.f32 0.0, %v2860
        %v2862 = vpop.f32.mrb[0].mxu0
        %v2863 = vpop.f32.mrb[0].mxu0
        %v2864 = vadd.f32 0.0, %v2863
        %v2865 = vpop.f32.mrb[0].mxu0
        %2866 = vmatprep.mubr.bf16.mxu0 0
        %2867 = vmatmul.mubr.bf16.gmra.mrb[0].mxu0 %v2734
        %v2868 = vpop.f32.mrb[0].mxu0
        %v2869 = vadd.f32 0.0, %v2868
        %v2870 = vpop.f32.mrb[0].mxu0
        %v2871 = vpop.f32.mrb[0].mxu0
        %v2872 = vadd.f32 0.0, %v2871
        %v2873 = vpop.f32.mrb[0].mxu0
        %2874 = vmatprep.mubr.bf16.mxu0 0
        %2875 = vmatmul.mubr.bf16.gmra.mrb[0].mxu0 %v2735
        %v2876 = vpop.f32.mrb[0].mxu0
        %v2877 = vadd.f32 0.0, %v2876
        %v2878 = vpop.f32.mrb[0].mxu0
        %v2879 = vpop.f32.mrb[0].mxu0
        %v2880 = vadd.f32 0.0, %v2879
        %v2881 = vpop.f32.mrb[0].mxu0
        %2882 = vmatprep.mubr.bf16.mxu0 0
        %2883 = vmatmul.mubr.bf16.gmra.mrb[0].mxu0 %v2736
        %v2884 = vpop.f32.mrb[0].mxu0
        %v2885 = vadd.f32 0.0, %v2884
        %v2886 = vpop.f32.mrb[0].mxu0
        %v2887 = vpop.f32.mrb[0].mxu0
        %v2888 = vadd.f32 0.0, %v2887
        %v2889 = vpop.f32.mrb[0].mxu0
        %2890 = vmatprep.mubr.bf16.mxu0 0
        %2891 = vmatmul.mubr.bf16.gmra.mrb[0].mxu0 %v2737
        %v2892 = vpop.f32.mrb[0].mxu0
        %v2893 = vadd.f32 0.0, %v2892
        %v2894 = vpop.f32.mrb[0].mxu0
        %v2895 = vpop.f32.mrb[0].mxu0
        %v2896 = vadd.f32 0.0, %v2895
        %v2897 = vpop.f32.mrb[0].mxu0
        %2898 = vdwg.mxu0
        %v2899 = vld [vmem:[#allocation4] sm:$0xff]
        %v2900 = vld [vmem:[#allocation4 + $0x8] sm:$0xff]
        %v2901 = vld [vmem:[#allocation4 + $0x10] sm:$0xff]
        %v2902 = vld [vmem:[#allocation4 + $0x18] sm:$0xff]
        %v2903 = vld [vmem:[#allocation4 + $0x20] sm:$0xff]
        %v2904 = vld [vmem:[#allocation4 + $0x28] sm:$0xff]
        %v2905 = vld [vmem:[#allocation4 + $0x30] sm:$0xff]
        %v2906 = vld [vmem:[#allocation4 + $0x38] sm:$0xff]
        %v2907 = vld [vmem:[#allocation4 + $0x40] sm:$0xff]
        %v2908 = vld [vmem:[#allocation4 + $0x48] sm:$0xff]
        %v2909 = vld [vmem:[#allocation4 + $0x50] sm:$0xff]
        %v2910 = vld [vmem:[#allocation4 + $0x58] sm:$0xff]
        %v2911 = vld [vmem:[#allocation4 + $0x60] sm:$0xff]
        %v2912 = vld [vmem:[#allocation4 + $0x68] sm:$0xff]
        %v2913 = vld [vmem:[#allocation4 + $0x70] sm:$0xff]
        %v2914 = vld [vmem:[#allocation4 + $0x78] sm:$0xff]
        %2916 = vset.pattern.permute.xlu0 2
        %2917 = vperm.xlu0 %2916, %v2458
        %v2918 = vpop.permute.xlu0 %2917
        %2921 = vset.pattern.permute.xlu0 2
        %2922 = vperm.xlu0 %2921, %v2460
        %v2923 = vpop.permute.xlu0 %2922
        %2926 = vset.pattern.permute.xlu0 2
        %2927 = vperm.xlu0 %2926, %v2462
        %v2928 = vpop.permute.xlu0 %2927
        %2931 = vset.pattern.permute.xlu0 2
        %2932 = vperm.xlu0 %2931, %v2464
        %v2933 = vpop.permute.xlu0 %2932
        %2936 = vset.pattern.permute.xlu0 2
        %2937 = vperm.xlu0 %2936, %v2466
        %v2938 = vpop.permute.xlu0 %2937
        %2941 = vset.pattern.permute.xlu0 2
        %2942 = vperm.xlu0 %2941, %v2468
        %v2943 = vpop.permute.xlu0 %2942
        %2946 = vset.pattern.permute.xlu0 2
        %2947 = vperm.xlu0 %2946, %v2470
        %v2948 = vpop.permute.xlu0 %2947
        %2951 = vset.pattern.permute.xlu0 2
        %2952 = vperm.xlu0 %2951, %v2472
        %v2953 = vpop.permute.xlu0 %2952
        %2956 = vset.pattern.permute.xlu0 2
        %2957 = vperm.xlu0 %2956, %v2474
        %v2958 = vpop.permute.xlu0 %2957
        %2961 = vset.pattern.permute.xlu0 2
        %2962 = vperm.xlu0 %2961, %v2476
        %v2963 = vpop.permute.xlu0 %2962
        %2966 = vset.pattern.permute.xlu0 2
        %2967 = vperm.xlu0 %2966, %v2478
        %v2968 = vpop.permute.xlu0 %2967
        %2971 = vset.pattern.permute.xlu0 2
        %2972 = vperm.xlu0 %2971, %v2480
        %v2973 = vpop.permute.xlu0 %2972
        %2976 = vset.pattern.permute.xlu0 2
        %2977 = vperm.xlu0 %2976, %v2482
        %v2978 = vpop.permute.xlu0 %2977
        %2981 = vset.pattern.permute.xlu0 2
        %2982 = vperm.xlu0 %2981, %v2484
        %v2983 = vpop.permute.xlu0 %2982
        %2986 = vset.pattern.permute.xlu0 2
        %2987 = vperm.xlu0 %2986, %v2486
        %v2988 = vpop.permute.xlu0 %2987
        %2991 = vset.pattern.permute.xlu0 2
        %2992 = vperm.xlu0 %2991, %v2488
        %v2993 = vpop.permute.xlu0 %2992
        %v2995 = vmul.f32 %v2918, %v2899
        %v2996 = vmul.f32 %v2923, %v2900
        %v2997 = vmul.f32 %v2928, %v2901
        %v2998 = vmul.f32 %v2933, %v2902
        %v2999 = vmul.f32 %v2938, %v2903
        %v3000 = vmul.f32 %v2943, %v2904
        %v3001 = vmul.f32 %v2948, %v2905
        %v3002 = vmul.f32 %v2953, %v2906
        %v3003 = vmul.f32 %v2958, %v2907
        %v3004 = vmul.f32 %v2963, %v2908
        %v3005 = vmul.f32 %v2968, %v2909
        %v3006 = vmul.f32 %v2973, %v2910
        %v3007 = vmul.f32 %v2978, %v2911
        %v3008 = vmul.f32 %v2983, %v2912
        %v3009 = vmul.f32 %v2988, %v2913
        %v3010 = vmul.f32 %v2993, %v2914
        %3027 = vrot.lane.b32.xlu0 %v2837, 32
        %v3028 = vpop.permute.xlu0 %3027
        %3029 = vrot.lane.b32.xlu0 %v2840, 32
        %v3030 = vpop.permute.xlu0 %3029
        %3031 = vrot.lane.b32.xlu0 %v2845, 32
        %v3032 = vpop.permute.xlu0 %3031
        %3033 = vrot.lane.b32.xlu0 %v2848, 32
        %v3034 = vpop.permute.xlu0 %3033
        %3035 = vrot.lane.b32.xlu0 %v2853, 32
        %v3036 = vpop.permute.xlu0 %3035
        %3037 = vrot.lane.b32.xlu0 %v2856, 32
        %v3038 = vpop.permute.xlu0 %3037
        %3039 = vrot.lane.b32.xlu0 %v2861, 32
        %v3040 = vpop.permute.xlu0 %3039
        %3041 = vrot.lane.b32.xlu0 %v2864, 32
        %v3042 = vpop.permute.xlu0 %3041
        %3043 = vrot.lane.b32.xlu0 %v2869, 32
        %v3044 = vpop.permute.xlu0 %3043
        %3045 = vrot.lane.b32.xlu0 %v2872, 32
        %v3046 = vpop.permute.xlu0 %3045
        %3047 = vrot.lane.b32.xlu0 %v2877, 32
        %v3048 = vpop.permute.xlu0 %3047
        %3049 = vrot.lane.b32.xlu0 %v2880, 32
        %v3050 = vpop.permute.xlu0 %3049
        %3051 = vrot.lane.b32.xlu0 %v2885, 32
        %v3052 = vpop.permute.xlu0 %3051
        %3053 = vrot.lane.b32.xlu0 %v2888, 32
        %v3054 = vpop.permute.xlu0 %3053
        %3055 = vrot.lane.b32.xlu0 %v2893, 32
        %v3056 = vpop.permute.xlu0 %3055
        %3057 = vrot.lane.b32.xlu0 %v2896, 32
        %v3058 = vpop.permute.xlu0 %3057
        %v3075 = vadd.f32 %v2995, %v3028
        %v3076 = vadd.f32 %v2996, %v3030
        %v3077 = vadd.f32 %v2997, %v3032
        %v3078 = vadd.f32 %v2998, %v3034
        %v3079 = vadd.f32 %v2999, %v3036
        %v3080 = vadd.f32 %v3000, %v3038
        %v3081 = vadd.f32 %v3001, %v3040
        %v3082 = vadd.f32 %v3002, %v3042
        %v3083 = vadd.f32 %v3003, %v3044
        %v3084 = vadd.f32 %v3004, %v3046
        %v3085 = vadd.f32 %v3005, %v3048
        %v3086 = vadd.f32 %v3006, %v3050
        %v3087 = vadd.f32 %v3007, %v3052
        %v3088 = vadd.f32 %v3008, %v3054
        %v3089 = vadd.f32 %v3009, %v3056
        %v3090 = vadd.f32 %v3010, %v3058
        %vm3091 = vcmask 392448
        %3092 = vst.msk [vmem:[#allocation4] sm:$0xff] %vm3091, %v3075
        %3093 = vst.msk [vmem:[#allocation4 + $0x8] sm:$0xff] %vm3091, %v3076
        %3094 = vst.msk [vmem:[#allocation4 + $0x10] sm:$0xff] %vm3091, %v3077
        %3095 = vst.msk [vmem:[#allocation4 + $0x18] sm:$0xff] %vm3091, %v3078
        %3096 = vst.msk [vmem:[#allocation4 + $0x20] sm:$0xff] %vm3091, %v3079
        %3097 = vst.msk [vmem:[#allocation4 + $0x28] sm:$0xff] %vm3091, %v3080
        %3098 = vst.msk [vmem:[#allocation4 + $0x30] sm:$0xff] %vm3091, %v3081
        %3099 = vst.msk [vmem:[#allocation4 + $0x38] sm:$0xff] %vm3091, %v3082
        %3100 = vst.msk [vmem:[#allocation4 + $0x40] sm:$0xff] %vm3091, %v3083
        %3101 = vst.msk [vmem:[#allocation4 + $0x48] sm:$0xff] %vm3091, %v3084
        %3102 = vst.msk [vmem:[#allocation4 + $0x50] sm:$0xff] %vm3091, %v3085
        %3103 = vst.msk [vmem:[#allocation4 + $0x58] sm:$0xff] %vm3091, %v3086
        %3104 = vst.msk [vmem:[#allocation4 + $0x60] sm:$0xff] %vm3091, %v3087
        %3105 = vst.msk [vmem:[#allocation4 + $0x68] sm:$0xff] %vm3091, %v3088
        %3106 = vst.msk [vmem:[#allocation4 + $0x70] sm:$0xff] %vm3091, %v3089
        %3107 = vst.msk [vmem:[#allocation4 + $0x78] sm:$0xff] %vm3091, %v3090
        %3108 = vst.msk [vmem:[#allocation2] sm:$0xff] %vm2697, %v2425
        %3109 = vst.msk [vmem:[#allocation2 + $0x8] sm:$0xff] %vm2697, %v2426
        %3110 = vst.msk [vmem:[#allocation2 + $0x10] sm:$0xff] %vm2697, %v2427
        %3111 = vst.msk [vmem:[#allocation2 + $0x18] sm:$0xff] %vm2697, %v2428
        %3112 = vst.msk [vmem:[#allocation2 + $0x20] sm:$0xff] %vm2697, %v2429
        %3113 = vst.msk [vmem:[#allocation2 + $0x28] sm:$0xff] %vm2697, %v2430
        %3114 = vst.msk [vmem:[#allocation2 + $0x30] sm:$0xff] %vm2697, %v2431
        %3115 = vst.msk [vmem:[#allocation2 + $0x38] sm:$0xff] %vm2697, %v2432
        %3116 = vst.msk [vmem:[#allocation2 + $0x40] sm:$0xff] %vm2697, %v2433
        %3117 = vst.msk [vmem:[#allocation2 + $0x48] sm:$0xff] %vm2697, %v2434
        %3118 = vst.msk [vmem:[#allocation2 + $0x50] sm:$0xff] %vm2697, %v2435
        %3119 = vst.msk [vmem:[#allocation2 + $0x58] sm:$0xff] %vm2697, %v2436
        %3120 = vst.msk [vmem:[#allocation2 + $0x60] sm:$0xff] %vm2697, %v2437
        %3121 = vst.msk [vmem:[#allocation2 + $0x68] sm:$0xff] %vm2697, %v2438
        %3122 = vst.msk [vmem:[#allocation2 + $0x70] sm:$0xff] %vm2697, %v2439
        %3123 = vst.msk [vmem:[#allocation2 + $0x78] sm:$0xff] %vm2697, %v2440
        %v3124 = vld [vmem:[%s337 + $0x3] sm:$0x1]
        %3125 = vset.pattern.permute.xlu0 3
        %3126 = vperm.xlu0 %3125, %v416
        %v3127 = vpop.permute.xlu0 %3126
        %3129 = vset.pattern.permute.xlu0 3
        %3130 = vperm.xlu0 %3129, %v417
        %v3131 = vpop.permute.xlu0 %3130
        %3133 = vset.pattern.permute.xlu0 3
        %3134 = vperm.xlu0 %3133, %v418
        %v3135 = vpop.permute.xlu0 %3134
        %3137 = vset.pattern.permute.xlu0 3
        %3138 = vperm.xlu0 %3137, %v419
        %v3139 = vpop.permute.xlu0 %3138
        %3141 = vset.pattern.permute.xlu0 3
        %3142 = vperm.xlu0 %3141, %v420
        %v3143 = vpop.permute.xlu0 %3142
        %3145 = vset.pattern.permute.xlu0 3
        %3146 = vperm.xlu0 %3145, %v421
        %v3147 = vpop.permute.xlu0 %3146
        %3149 = vset.pattern.permute.xlu0 3
        %3150 = vperm.xlu0 %3149, %v422
        %v3151 = vpop.permute.xlu0 %3150
        %3153 = vset.pattern.permute.xlu0 3
        %3154 = vperm.xlu0 %3153, %v423
        %v3155 = vpop.permute.xlu0 %3154
        %3157 = vset.pattern.permute.xlu0 3
        %3158 = vperm.xlu0 %3157, %v424
        %v3159 = vpop.permute.xlu0 %3158
        %3161 = vset.pattern.permute.xlu0 3
        %3162 = vperm.xlu0 %3161, %v425
        %v3163 = vpop.permute.xlu0 %3162
        %3165 = vset.pattern.permute.xlu0 3
        %3166 = vperm.xlu0 %3165, %v426
        %v3167 = vpop.permute.xlu0 %3166
        %3169 = vset.pattern.permute.xlu0 3
        %3170 = vperm.xlu0 %3169, %v427
        %v3171 = vpop.permute.xlu0 %3170
        %3173 = vset.pattern.permute.xlu0 3
        %3174 = vperm.xlu0 %3173, %v428
        %v3175 = vpop.permute.xlu0 %3174
        %3177 = vset.pattern.permute.xlu0 3
        %3178 = vperm.xlu0 %3177, %v429
        %v3179 = vpop.permute.xlu0 %3178
        %3181 = vset.pattern.permute.xlu0 3
        %3182 = vperm.xlu0 %3181, %v430
        %v3183 = vpop.permute.xlu0 %3182
        %3185 = vset.pattern.permute.xlu0 3
        %3186 = vperm.xlu0 %3185, %v431
        %v3187 = vpop.permute.xlu0 %3186
        %v3189 = vlaneseq
        %v3190 = vshrl.u32 %v3189, 7
        %v3191 = vsub.s32 0, %v3190
        %v3192 = vrot.slane %v3124, %v3191
        %v3193 = vadd.f32 %v3127, %v3192
        %v3194 = vadd.f32 %v3131, %v3192
        %v3195 = vadd.f32 %v3135, %v3192
        %v3196 = vadd.f32 %v3139, %v3192
        %v3197 = vadd.f32 %v3143, %v3192
        %v3198 = vadd.f32 %v3147, %v3192
        %v3199 = vadd.f32 %v3151, %v3192
        %v3200 = vadd.f32 %v3155, %v3192
        %v3201 = vadd.f32 %v3159, %v3192
        %v3202 = vadd.f32 %v3163, %v3192
        %v3203 = vadd.f32 %v3167, %v3192
        %v3204 = vadd.f32 %v3171, %v3192
        %v3205 = vadd.f32 %v3175, %v3192
        %v3206 = vadd.f32 %v3179, %v3192
        %v3207 = vadd.f32 %v3183, %v3192
        %v3208 = vadd.f32 %v3187, %v3192
        %v3209 = vmul.f32 %v3193, 0.2
        %v3210 = vmul.f32 %v3194, 0.2
        %v3211 = vmul.f32 %v3195, 0.2
        %v3212 = vmul.f32 %v3196, 0.2
        %v3213 = vmul.f32 %v3197, 0.2
        %v3214 = vmul.f32 %v3198, 0.2
        %v3215 = vmul.f32 %v3199, 0.2
        %v3216 = vmul.f32 %v3200, 0.2
        %v3217 = vmul.f32 %v3201, 0.2
        %v3218 = vmul.f32 %v3202, 0.2
        %v3219 = vmul.f32 %v3203, 0.2
        %v3220 = vmul.f32 %v3204, 0.2
        %v3221 = vmul.f32 %v3205, 0.2
        %v3222 = vmul.f32 %v3206, 0.2
        %v3223 = vmul.f32 %v3207, 0.2
        %v3224 = vmul.f32 %v3208, 0.2
        %v3225 = vmax.f32 %v3193, %v3209
        %v3226 = vmax.f32 %v3194, %v3210
        %v3227 = vmax.f32 %v3195, %v3211
        %v3228 = vmax.f32 %v3196, %v3212
        %v3229 = vmax.f32 %v3197, %v3213
        %v3230 = vmax.f32 %v3198, %v3214
        %v3231 = vmax.f32 %v3199, %v3215
        %v3232 = vmax.f32 %v3200, %v3216
        %v3233 = vmax.f32 %v3201, %v3217
        %v3234 = vmax.f32 %v3202, %v3218
        %v3235 = vmax.f32 %v3203, %v3219
        %v3236 = vmax.f32 %v3204, %v3220
        %v3237 = vmax.f32 %v3205, %v3221
        %v3238 = vmax.f32 %v3206, %v3222
        %v3239 = vmax.f32 %v3207, %v3223
        %v3240 = vmax.f32 %v3208, %v3224
        %v3241 = vsel %vm665, %v3225, -1e+30
        %v3242 = vsel %vm666, %v3226, -1e+30
        %v3243 = vsel %vm667, %v3227, -1e+30
        %v3244 = vsel %vm668, %v3228, -1e+30
        %v3245 = vsel %vm669, %v3229, -1e+30
        %v3246 = vsel %vm670, %v3230, -1e+30
        %v3247 = vsel %vm671, %v3231, -1e+30
        %v3248 = vsel %vm672, %v3232, -1e+30
        %v3249 = vsel %vm673, %v3233, -1e+30
        %v3250 = vsel %vm674, %v3234, -1e+30
        %v3251 = vsel %vm675, %v3235, -1e+30
        %v3252 = vsel %vm676, %v3236, -1e+30
        %v3253 = vsel %vm677, %v3237, -1e+30
        %v3254 = vsel %vm678, %v3238, -1e+30
        %v3255 = vsel %vm679, %v3239, -1e+30
        %v3256 = vsel %vm680, %v3240, -1e+30
        %v3257 = vld [vmem:[#allocation2] sm:$0xff]
        %v3258 = vld [vmem:[#allocation2 + $0x8] sm:$0xff]
        %v3259 = vld [vmem:[#allocation2 + $0x10] sm:$0xff]
        %v3260 = vld [vmem:[#allocation2 + $0x18] sm:$0xff]
        %v3261 = vld [vmem:[#allocation2 + $0x20] sm:$0xff]
        %v3262 = vld [vmem:[#allocation2 + $0x28] sm:$0xff]
        %v3263 = vld [vmem:[#allocation2 + $0x30] sm:$0xff]
        %v3264 = vld [vmem:[#allocation2 + $0x38] sm:$0xff]
        %v3265 = vld [vmem:[#allocation2 + $0x40] sm:$0xff]
        %v3266 = vld [vmem:[#allocation2 + $0x48] sm:$0xff]
        %v3267 = vld [vmem:[#allocation2 + $0x50] sm:$0xff]
        %v3268 = vld [vmem:[#allocation2 + $0x58] sm:$0xff]
        %v3269 = vld [vmem:[#allocation2 + $0x60] sm:$0xff]
        %v3270 = vld [vmem:[#allocation2 + $0x68] sm:$0xff]
        %v3271 = vld [vmem:[#allocation2 + $0x70] sm:$0xff]
        %v3272 = vld [vmem:[#allocation2 + $0x78] sm:$0xff]
        %3273 = vmax.xlane.f32.xlu0 %v3241
        %v3274 = vpop.xlane.xlu0 %3273
        %3275 = vmax.xlane.f32.xlu0 %v3242
        %v3276 = vpop.xlane.xlu0 %3275
        %3277 = vmax.xlane.f32.xlu0 %v3243
        %v3278 = vpop.xlane.xlu0 %3277
        %3279 = vmax.xlane.f32.xlu0 %v3244
        %v3280 = vpop.xlane.xlu0 %3279
        %3281 = vmax.xlane.f32.xlu0 %v3245
        %v3282 = vpop.xlane.xlu0 %3281
        %3283 = vmax.xlane.f32.xlu0 %v3246
        %v3284 = vpop.xlane.xlu0 %3283
        %3285 = vmax.xlane.f32.xlu0 %v3247
        %v3286 = vpop.xlane.xlu0 %3285
        %3287 = vmax.xlane.f32.xlu0 %v3248
        %v3288 = vpop.xlane.xlu0 %3287
        %3289 = vmax.xlane.f32.xlu0 %v3249
        %v3290 = vpop.xlane.xlu0 %3289
        %3291 = vmax.xlane.f32.xlu0 %v3250
        %v3292 = vpop.xlane.xlu0 %3291
        %3293 = vmax.xlane.f32.xlu0 %v3251
        %v3294 = vpop.xlane.xlu0 %3293
        %3295 = vmax.xlane.f32.xlu0 %v3252
        %v3296 = vpop.xlane.xlu0 %3295
        %3297 = vmax.xlane.f32.xlu0 %v3253
        %v3298 = vpop.xlane.xlu0 %3297
        %3299 = vmax.xlane.f32.xlu0 %v3254
        %v3300 = vpop.xlane.xlu0 %3299
        %3301 = vmax.xlane.f32.xlu0 %v3255
        %v3302 = vpop.xlane.xlu0 %3301
        %3303 = vmax.xlane.f32.xlu0 %v3256
        %v3304 = vpop.xlane.xlu0 %3303
        %v3305 = vmax.f32 %v3257, %v3274
        %v3306 = vmax.f32 %v3258, %v3276
        %v3307 = vmax.f32 %v3259, %v3278
        %v3308 = vmax.f32 %v3260, %v3280
        %v3309 = vmax.f32 %v3261, %v3282
        %v3310 = vmax.f32 %v3262, %v3284
        %v3311 = vmax.f32 %v3263, %v3286
        %v3312 = vmax.f32 %v3264, %v3288
        %v3313 = vmax.f32 %v3265, %v3290
        %v3314 = vmax.f32 %v3266, %v3292
        %v3315 = vmax.f32 %v3267, %v3294
        %v3316 = vmax.f32 %v3268, %v3296
        %v3317 = vmax.f32 %v3269, %v3298
        %v3318 = vmax.f32 %v3270, %v3300
        %v3319 = vmax.f32 %v3271, %v3302
        %v3320 = vmax.f32 %v3272, %v3304
        %v3321 = vsub.f32 %v3257, %v3305
        %v3322 = vsub.f32 %v3258, %v3306
        %v3323 = vsub.f32 %v3259, %v3307
        %v3324 = vsub.f32 %v3260, %v3308
        %v3325 = vsub.f32 %v3261, %v3309
        %v3326 = vsub.f32 %v3262, %v3310
        %v3327 = vsub.f32 %v3263, %v3311
        %v3328 = vsub.f32 %v3264, %v3312
        %v3329 = vsub.f32 %v3265, %v3313
        %v3330 = vsub.f32 %v3266, %v3314
        %v3331 = vsub.f32 %v3267, %v3315
        %v3332 = vsub.f32 %v3268, %v3316
        %v3333 = vsub.f32 %v3269, %v3317
        %v3334 = vsub.f32 %v3270, %v3318
        %v3335 = vsub.f32 %v3271, %v3319
        %v3336 = vsub.f32 %v3272, %v3320
        %v3337 = vmul.f32 %v3321, 1.442695
        %v3338 = vpow.pop %v3337
        %v3339 = vmul.f32 %v3322, 1.442695
        %v3340 = vpow.pop %v3339
        %v3341 = vmul.f32 %v3323, 1.442695
        %v3342 = vpow.pop %v3341
        %v3343 = vmul.f32 %v3324, 1.442695
        %v3344 = vpow.pop %v3343
        %v3345 = vmul.f32 %v3325, 1.442695
        %v3346 = vpow.pop %v3345
        %v3347 = vmul.f32 %v3326, 1.442695
        %v3348 = vpow.pop %v3347
        %v3349 = vmul.f32 %v3327, 1.442695
        %v3350 = vpow.pop %v3349
        %v3351 = vmul.f32 %v3328, 1.442695
        %v3352 = vpow.pop %v3351
        %v3353 = vmul.f32 %v3329, 1.442695
        %v3354 = vpow.pop %v3353
        %v3355 = vmul.f32 %v3330, 1.442695
        %v3356 = vpow.pop %v3355
        %v3357 = vmul.f32 %v3331, 1.442695
        %v3358 = vpow.pop %v3357
        %v3359 = vmul.f32 %v3332, 1.442695
        %v3360 = vpow.pop %v3359
        %v3361 = vmul.f32 %v3333, 1.442695
        %v3362 = vpow.pop %v3361
        %v3363 = vmul.f32 %v3334, 1.442695
        %v3364 = vpow.pop %v3363
        %v3365 = vmul.f32 %v3335, 1.442695
        %v3366 = vpow.pop %v3365
        %v3367 = vmul.f32 %v3336, 1.442695
        %v3368 = vpow.pop %v3367
        %3370 = vset.pattern.permute.xlu0 3
        %3371 = vperm.xlu0 %3370, %v3305
        %v3372 = vpop.permute.xlu0 %3371
        %3375 = vset.pattern.permute.xlu0 3
        %3376 = vperm.xlu0 %3375, %v3306
        %v3377 = vpop.permute.xlu0 %3376
        %3380 = vset.pattern.permute.xlu0 3
        %3381 = vperm.xlu0 %3380, %v3307
        %v3382 = vpop.permute.xlu0 %3381
        %3385 = vset.pattern.permute.xlu0 3
        %3386 = vperm.xlu0 %3385, %v3308
        %v3387 = vpop.permute.xlu0 %3386
        %3390 = vset.pattern.permute.xlu0 3
        %3391 = vperm.xlu0 %3390, %v3309
        %v3392 = vpop.permute.xlu0 %3391
        %3395 = vset.pattern.permute.xlu0 3
        %3396 = vperm.xlu0 %3395, %v3310
        %v3397 = vpop.permute.xlu0 %3396
        %3400 = vset.pattern.permute.xlu0 3
        %3401 = vperm.xlu0 %3400, %v3311
        %v3402 = vpop.permute.xlu0 %3401
        %3405 = vset.pattern.permute.xlu0 3
        %3406 = vperm.xlu0 %3405, %v3312
        %v3407 = vpop.permute.xlu0 %3406
        %3410 = vset.pattern.permute.xlu0 3
        %3411 = vperm.xlu0 %3410, %v3313
        %v3412 = vpop.permute.xlu0 %3411
        %3415 = vset.pattern.permute.xlu0 3
        %3416 = vperm.xlu0 %3415, %v3314
        %v3417 = vpop.permute.xlu0 %3416
        %3420 = vset.pattern.permute.xlu0 3
        %3421 = vperm.xlu0 %3420, %v3315
        %v3422 = vpop.permute.xlu0 %3421
        %3425 = vset.pattern.permute.xlu0 3
        %3426 = vperm.xlu0 %3425, %v3316
        %v3427 = vpop.permute.xlu0 %3426
        %3430 = vset.pattern.permute.xlu0 3
        %3431 = vperm.xlu0 %3430, %v3317
        %v3432 = vpop.permute.xlu0 %3431
        %3435 = vset.pattern.permute.xlu0 3
        %3436 = vperm.xlu0 %3435, %v3318
        %v3437 = vpop.permute.xlu0 %3436
        %3440 = vset.pattern.permute.xlu0 3
        %3441 = vperm.xlu0 %3440, %v3319
        %v3442 = vpop.permute.xlu0 %3441
        %3445 = vset.pattern.permute.xlu0 3
        %3446 = vperm.xlu0 %3445, %v3320
        %v3447 = vpop.permute.xlu0 %3446
        %v3449 = vsub.f32 %v3241, %v3372
        %v3450 = vsub.f32 %v3242, %v3377
        %v3451 = vsub.f32 %v3243, %v3382
        %v3452 = vsub.f32 %v3244, %v3387
        %v3453 = vsub.f32 %v3245, %v3392
        %v3454 = vsub.f32 %v3246, %v3397
        %v3455 = vsub.f32 %v3247, %v3402
        %v3456 = vsub.f32 %v3248, %v3407
        %v3457 = vsub.f32 %v3249, %v3412
        %v3458 = vsub.f32 %v3250, %v3417
        %v3459 = vsub.f32 %v3251, %v3422
        %v3460 = vsub.f32 %v3252, %v3427
        %v3461 = vsub.f32 %v3253, %v3432
        %v3462 = vsub.f32 %v3254, %v3437
        %v3463 = vsub.f32 %v3255, %v3442
        %v3464 = vsub.f32 %v3256, %v3447
        %v3465 = vmul.f32 %v3449, 1.442695
        %v3466 = vpow.pop %v3465
        %v3467 = vmul.f32 %v3450, 1.442695
        %v3468 = vpow.pop %v3467
        %v3469 = vmul.f32 %v3451, 1.442695
        %v3470 = vpow.pop %v3469
        %v3471 = vmul.f32 %v3452, 1.442695
        %v3472 = vpow.pop %v3471
        %v3473 = vmul.f32 %v3453, 1.442695
        %v3474 = vpow.pop %v3473
        %v3475 = vmul.f32 %v3454, 1.442695
        %v3476 = vpow.pop %v3475
        %v3477 = vmul.f32 %v3455, 1.442695
        %v3478 = vpow.pop %v3477
        %v3479 = vmul.f32 %v3456, 1.442695
        %v3480 = vpow.pop %v3479
        %v3481 = vmul.f32 %v3457, 1.442695
        %v3482 = vpow.pop %v3481
        %v3483 = vmul.f32 %v3458, 1.442695
        %v3484 = vpow.pop %v3483
        %v3485 = vmul.f32 %v3459, 1.442695
        %v3486 = vpow.pop %v3485
        %v3487 = vmul.f32 %v3460, 1.442695
        %v3488 = vpow.pop %v3487
        %v3489 = vmul.f32 %v3461, 1.442695
        %v3490 = vpow.pop %v3489
        %v3491 = vmul.f32 %v3462, 1.442695
        %v3492 = vpow.pop %v3491
        %v3493 = vmul.f32 %v3463, 1.442695
        %v3494 = vpow.pop %v3493
        %v3495 = vmul.f32 %v3464, 1.442695
        %v3496 = vpow.pop %v3495
        %v3497 = vld [vmem:[#allocation3] sm:$0xff]
        %v3498 = vld [vmem:[#allocation3 + $0x8] sm:$0xff]
        %v3499 = vld [vmem:[#allocation3 + $0x10] sm:$0xff]
        %v3500 = vld [vmem:[#allocation3 + $0x18] sm:$0xff]
        %v3501 = vld [vmem:[#allocation3 + $0x20] sm:$0xff]
        %v3502 = vld [vmem:[#allocation3 + $0x28] sm:$0xff]
        %v3503 = vld [vmem:[#allocation3 + $0x30] sm:$0xff]
        %v3504 = vld [vmem:[#allocation3 + $0x38] sm:$0xff]
        %v3505 = vld [vmem:[#allocation3 + $0x40] sm:$0xff]
        %v3506 = vld [vmem:[#allocation3 + $0x48] sm:$0xff]
        %v3507 = vld [vmem:[#allocation3 + $0x50] sm:$0xff]
        %v3508 = vld [vmem:[#allocation3 + $0x58] sm:$0xff]
        %v3509 = vld [vmem:[#allocation3 + $0x60] sm:$0xff]
        %v3510 = vld [vmem:[#allocation3 + $0x68] sm:$0xff]
        %v3511 = vld [vmem:[#allocation3 + $0x70] sm:$0xff]
        %v3512 = vld [vmem:[#allocation3 + $0x78] sm:$0xff]
        %v3513 = vmul.f32 %v3338, %v3497
        %v3514 = vmul.f32 %v3340, %v3498
        %v3515 = vmul.f32 %v3342, %v3499
        %v3516 = vmul.f32 %v3344, %v3500
        %v3517 = vmul.f32 %v3346, %v3501
        %v3518 = vmul.f32 %v3348, %v3502
        %v3519 = vmul.f32 %v3350, %v3503
        %v3520 = vmul.f32 %v3352, %v3504
        %v3521 = vmul.f32 %v3354, %v3505
        %v3522 = vmul.f32 %v3356, %v3506
        %v3523 = vmul.f32 %v3358, %v3507
        %v3524 = vmul.f32 %v3360, %v3508
        %v3525 = vmul.f32 %v3362, %v3509
        %v3526 = vmul.f32 %v3364, %v3510
        %v3527 = vmul.f32 %v3366, %v3511
        %v3528 = vmul.f32 %v3368, %v3512
        %3529 = vadd.xlane.f32.xlu0 %v3466
        %v3530 = vpop.xlane.xlu0 %3529
        %3531 = vadd.xlane.f32.xlu0 %v3468
        %v3532 = vpop.xlane.xlu0 %3531
        %3533 = vadd.xlane.f32.xlu0 %v3470
        %v3534 = vpop.xlane.xlu0 %3533
        %3535 = vadd.xlane.f32.xlu0 %v3472
        %v3536 = vpop.xlane.xlu0 %3535
        %3537 = vadd.xlane.f32.xlu0 %v3474
        %v3538 = vpop.xlane.xlu0 %3537
        %3539 = vadd.xlane.f32.xlu0 %v3476
        %v3540 = vpop.xlane.xlu0 %3539
        %3541 = vadd.xlane.f32.xlu0 %v3478
        %v3542 = vpop.xlane.xlu0 %3541
        %3543 = vadd.xlane.f32.xlu0 %v3480
        %v3544 = vpop.xlane.xlu0 %3543
        %3545 = vadd.xlane.f32.xlu0 %v3482
        %v3546 = vpop.xlane.xlu0 %3545
        %3547 = vadd.xlane.f32.xlu0 %v3484
        %v3548 = vpop.xlane.xlu0 %3547
        %3549 = vadd.xlane.f32.xlu0 %v3486
        %v3550 = vpop.xlane.xlu0 %3549
        %3551 = vadd.xlane.f32.xlu0 %v3488
        %v3552 = vpop.xlane.xlu0 %3551
        %3553 = vadd.xlane.f32.xlu0 %v3490
        %v3554 = vpop.xlane.xlu0 %3553
        %3555 = vadd.xlane.f32.xlu0 %v3492
        %v3556 = vpop.xlane.xlu0 %3555
        %3557 = vadd.xlane.f32.xlu0 %v3494
        %v3558 = vpop.xlane.xlu0 %3557
        %3559 = vadd.xlane.f32.xlu0 %v3496
        %v3560 = vpop.xlane.xlu0 %3559
        %v3561 = vadd.f32 %v3513, %v3530
        %v3562 = vadd.f32 %v3514, %v3532
        %v3563 = vadd.f32 %v3515, %v3534
        %v3564 = vadd.f32 %v3516, %v3536
        %v3565 = vadd.f32 %v3517, %v3538
        %v3566 = vadd.f32 %v3518, %v3540
        %v3567 = vadd.f32 %v3519, %v3542
        %v3568 = vadd.f32 %v3520, %v3544
        %v3569 = vadd.f32 %v3521, %v3546
        %v3570 = vadd.f32 %v3522, %v3548
        %v3571 = vadd.f32 %v3523, %v3550
        %v3572 = vadd.f32 %v3524, %v3552
        %v3573 = vadd.f32 %v3525, %v3554
        %v3574 = vadd.f32 %v3526, %v3556
        %v3575 = vadd.f32 %v3527, %v3558
        %v3576 = vadd.f32 %v3528, %v3560
        %vm3577 = vcmask 31768
        %3578 = vst.msk [vmem:[#allocation3] sm:$0xff] %vm3577, %v3561
        %3579 = vst.msk [vmem:[#allocation3 + $0x8] sm:$0xff] %vm3577, %v3562
        %3580 = vst.msk [vmem:[#allocation3 + $0x10] sm:$0xff] %vm3577, %v3563
        %3581 = vst.msk [vmem:[#allocation3 + $0x18] sm:$0xff] %vm3577, %v3564
        %3582 = vst.msk [vmem:[#allocation3 + $0x20] sm:$0xff] %vm3577, %v3565
        %3583 = vst.msk [vmem:[#allocation3 + $0x28] sm:$0xff] %vm3577, %v3566
        %3584 = vst.msk [vmem:[#allocation3 + $0x30] sm:$0xff] %vm3577, %v3567
        %3585 = vst.msk [vmem:[#allocation3 + $0x38] sm:$0xff] %vm3577, %v3568
        %3586 = vst.msk [vmem:[#allocation3 + $0x40] sm:$0xff] %vm3577, %v3569
        %3587 = vst.msk [vmem:[#allocation3 + $0x48] sm:$0xff] %vm3577, %v3570
        %3588 = vst.msk [vmem:[#allocation3 + $0x50] sm:$0xff] %vm3577, %v3571
        %3589 = vst.msk [vmem:[#allocation3 + $0x58] sm:$0xff] %vm3577, %v3572
        %3590 = vst.msk [vmem:[#allocation3 + $0x60] sm:$0xff] %vm3577, %v3573
        %3591 = vst.msk [vmem:[#allocation3 + $0x68] sm:$0xff] %vm3577, %v3574
        %3592 = vst.msk [vmem:[#allocation3 + $0x70] sm:$0xff] %vm3577, %v3575
        %3593 = vst.msk [vmem:[#allocation3 + $0x78] sm:$0xff] %vm3577, %v3576
        %v3594 = vld [vmem:[%s332] sm:$0xf]
        %v3595 = vld [vmem:[%s332 + $0x4] sm:$0xf]
        %v3596 = vld [vmem:[%s332 + $0x8] sm:$0xf]
        %v3597 = vld [vmem:[%s332 + $0xc] sm:$0xf]
        %v3598 = vld [vmem:[%s332 + $0x10] sm:$0xf]
        %v3599 = vld [vmem:[%s332 + $0x14] sm:$0xf]
        %v3600 = vld [vmem:[%s332 + $0x18] sm:$0xf]
        %v3601 = vld [vmem:[%s332 + $0x1c] sm:$0xf]
        %v3602 = vld [vmem:[%s332 + $0x20] sm:$0xf]
        %v3603 = vld [vmem:[%s332 + $0x24] sm:$0xf]
        %v3604 = vld [vmem:[%s332 + $0x28] sm:$0xf]
        %v3605 = vld [vmem:[%s332 + $0x2c] sm:$0xf]
        %v3606 = vld [vmem:[%s332 + $0x30] sm:$0xf]
        %v3607 = vld [vmem:[%s332 + $0x34] sm:$0xf]
        %v3608 = vld [vmem:[%s332 + $0x38] sm:$0xf]
        %v3609 = vld [vmem:[%s332 + $0x3c] sm:$0xf]
        %v3610 = vpack.c.bf16 %v3468, %v3466
        %v3611 = vpack.c.bf16 %v3472, %v3470
        %v3612 = vpack.c.bf16 %v3476, %v3474
        %v3613 = vpack.c.bf16 %v3480, %v3478
        %v3614 = vpack.c.bf16 %v3484, %v3482
        %v3615 = vpack.c.bf16 %v3488, %v3486
        %v3616 = vpack.c.bf16 %v3492, %v3490
        %v3617 = vpack.c.bf16 %v3496, %v3494
        %v3634 = vunpack.c.l.b16 %v3594
        %v3635 = vunpack.c.l.b16 %v3595
        %v3636 = vunpack.c.l.b16 %v3596
        %v3637 = vunpack.c.l.b16 %v3597
        %v3638 = vunpack.c.l.b16 %v3598
        %v3639 = vunpack.c.l.b16 %v3599
        %v3640 = vunpack.c.l.b16 %v3600
        %v3641 = vunpack.c.l.b16 %v3601
        %v3642 = vunpack.c.l.b16 %v3602
        %v3643 = vunpack.c.l.b16 %v3603
        %v3644 = vunpack.c.l.b16 %v3604
        %v3645 = vunpack.c.l.b16 %v3605
        %v3646 = vunpack.c.l.b16 %v3606
        %v3647 = vunpack.c.l.b16 %v3607
        %v3648 = vunpack.c.l.b16 %v3608
        %v3649 = vunpack.c.l.b16 %v3609
        %v3650 = vpack.c.b16 %v3635, %v3634
        %v3651 = vpack.c.b16 %v3637, %v3636
        %v3652 = vpack.c.b16 %v3639, %v3638
        %v3653 = vpack.c.b16 %v3641, %v3640
        %v3654 = vpack.c.b16 %v3643, %v3642
        %v3655 = vpack.c.b16 %v3645, %v3644
        %v3656 = vpack.c.b16 %v3647, %v3646
        %v3657 = vpack.c.b16 %v3649, %v3648
        %3658 = vrot.lane.b32.xlu0 %v3650, 80
        %v3659 = vpop.permute.xlu0 %3658
        %3660 = vrot.lane.b32.xlu0 %v3651, 80
        %v3661 = vpop.permute.xlu0 %3660
        %3662 = vrot.lane.b32.xlu0 %v3652, 80
        %v3663 = vpop.permute.xlu0 %3662
        %3664 = vrot.lane.b32.xlu0 %v3653, 80
        %v3665 = vpop.permute.xlu0 %3664
        %3666 = vrot.lane.b32.xlu0 %v3654, 80
        %v3667 = vpop.permute.xlu0 %3666
        %3668 = vrot.lane.b32.xlu0 %v3655, 80
        %v3669 = vpop.permute.xlu0 %3668
        %3670 = vrot.lane.b32.xlu0 %v3656, 80
        %v3671 = vpop.permute.xlu0 %3670
        %3672 = vrot.lane.b32.xlu0 %v3657, 80
        %v3673 = vpop.permute.xlu0 %3672
        %3682 = vmatprep.subr.bf16.mxu0 0
        %3683 = vmatpush1.bf16.msra.mxu0 %v3659
        %3684 = vmatprep.subr.bf16.mxu0 0
        %3685 = vmatpush1.bf16.msra.mxu0 %v3661
        %3686 = vmatprep.subr.bf16.mxu0 0
        %3687 = vmatpush1.bf16.msra.mxu0 %v3663
        %3688 = vmatprep.subr.bf16.mxu0 0
        %3689 = vmatpush1.bf16.msra.mxu0 %v3665
        %3690 = vmatprep.subr.bf16.mxu0 0
        %3691 = vmatpush1.bf16.msra.mxu0 %v3667
        %3692 = vmatprep.subr.bf16.mxu0 0
        %3693 = vmatpush1.bf16.msra.mxu0 %v3669
        %3694 = vmatprep.subr.bf16.mxu0 0
        %3695 = vmatpush1.bf16.msra.mxu0 %v3671
        %3696 = vmatprep.subr.bf16.mxu0 0
        %3697 = vmatpush1.bf16.msra.mxu0 %v3673
        %3698 = vmatprep.subr.bf16.mxu0 0
        %3699 = vmatpush1.bf16.msra.mxu0 0
        %3700 = vmatprep.subr.bf16.mxu0 0
        %3701 = vmatpush1.bf16.msra.mxu0 0
        %3702 = vmatprep.subr.bf16.mxu0 0
        %3703 = vmatpush1.bf16.msra.mxu0 0
        %3704 = vmatprep.subr.bf16.mxu0 0
        %3705 = vmatpush1.bf16.msra.mxu0 0
        %3706 = vmatprep.subr.bf16.mxu0 0
        %3707 = vmatpush1.bf16.msra.mxu0 0
        %3708 = vmatprep.subr.bf16.mxu0 0
        %3709 = vmatpush1.bf16.msra.mxu0 0
        %3710 = vmatprep.subr.bf16.mxu0 0
        %3711 = vmatpush1.bf16.msra.mxu0 0
        %3712 = vmatprep.subr.bf16.mxu0 0
        %3713 = vmatpush1.bf16.msra.mxu0 0
        %3714 = vmatprep.mubr.bf16.mxu0 0
        %3715 = vmatmul.mubr.bf16.gmra.mrb[0].mxu0 %v3610
        %v3716 = vpop.f32.mrb[0].mxu0
        %v3717 = vadd.f32 0.0, %v3716
        %v3718 = vpop.f32.mrb[0].mxu0
        %v3719 = vpop.f32.mrb[0].mxu0
        %v3720 = vadd.f32 0.0, %v3719
        %v3721 = vpop.f32.mrb[0].mxu0
        %3722 = vmatprep.mubr.bf16.mxu0 0
        %3723 = vmatmul.mubr.bf16.gmra.mrb[0].mxu0 %v3611
        %v3724 = vpop.f32.mrb[0].mxu0
        %v3725 = vadd.f32 0.0, %v3724
        %v3726 = vpop.f32.mrb[0].mxu0
        %v3727 = vpop.f32.mrb[0].mxu0
        %v3728 = vadd.f32 0.0, %v3727
        %v3729 = vpop.f32.mrb[0].mxu0
        %3730 = vmatprep.mubr.bf16.mxu0 0
        %3731 = vmatmul.mubr.bf16.gmra.mrb[0].mxu0 %v3612
        %v3732 = vpop.f32.mrb[0].mxu0
        %v3733 = vadd.f32 0.0, %v3732
        %v3734 = vpop.f32.mrb[0].mxu0
        %v3735 = vpop.f32.mrb[0].mxu0
        %v3736 = vadd.f32 0.0, %v3735
        %v3737 = vpop.f32.mrb[0].mxu0
        %3738 = vmatprep.mubr.bf16.mxu0 0
        %3739 = vmatmul.mubr.bf16.gmra.mrb[0].mxu0 %v3613
        %v3740 = vpop.f32.mrb[0].mxu0
        %v3741 = vadd.f32 0.0, %v3740
        %v3742 = vpop.f32.mrb[0].mxu0
        %v3743 = vpop.f32.mrb[0].mxu0
        %v3744 = vadd.f32 0.0, %v3743
        %v3745 = vpop.f32.mrb[0].mxu0
        %3746 = vmatprep.mubr.bf16.mxu0 0
        %3747 = vmatmul.mubr.bf16.gmra.mrb[0].mxu0 %v3614
        %v3748 = vpop.f32.mrb[0].mxu0
        %v3749 = vadd.f32 0.0, %v3748
        %v3750 = vpop.f32.mrb[0].mxu0
        %v3751 = vpop.f32.mrb[0].mxu0
        %v3752 = vadd.f32 0.0, %v3751
        %v3753 = vpop.f32.mrb[0].mxu0
        %3754 = vmatprep.mubr.bf16.mxu0 0
        %3755 = vmatmul.mubr.bf16.gmra.mrb[0].mxu0 %v3615
        %v3756 = vpop.f32.mrb[0].mxu0
        %v3757 = vadd.f32 0.0, %v3756
        %v3758 = vpop.f32.mrb[0].mxu0
        %v3759 = vpop.f32.mrb[0].mxu0
        %v3760 = vadd.f32 0.0, %v3759
        %v3761 = vpop.f32.mrb[0].mxu0
        %3762 = vmatprep.mubr.bf16.mxu0 0
        %3763 = vmatmul.mubr.bf16.gmra.mrb[0].mxu0 %v3616
        %v3764 = vpop.f32.mrb[0].mxu0
        %v3765 = vadd.f32 0.0, %v3764
        %v3766 = vpop.f32.mrb[0].mxu0
        %v3767 = vpop.f32.mrb[0].mxu0
        %v3768 = vadd.f32 0.0, %v3767
        %v3769 = vpop.f32.mrb[0].mxu0
        %3770 = vmatprep.mubr.bf16.mxu0 0
        %3771 = vmatmul.mubr.bf16.gmra.mrb[0].mxu0 %v3617
        %v3772 = vpop.f32.mrb[0].mxu0
        %v3773 = vadd.f32 0.0, %v3772
        %v3774 = vpop.f32.mrb[0].mxu0
        %v3775 = vpop.f32.mrb[0].mxu0
        %v3776 = vadd.f32 0.0, %v3775
        %v3777 = vpop.f32.mrb[0].mxu0
        %3778 = vdwg.mxu0
        %v3779 = vld [vmem:[#allocation4] sm:$0xff]
        %v3780 = vld [vmem:[#allocation4 + $0x8] sm:$0xff]
        %v3781 = vld [vmem:[#allocation4 + $0x10] sm:$0xff]
        %v3782 = vld [vmem:[#allocation4 + $0x18] sm:$0xff]
        %v3783 = vld [vmem:[#allocation4 + $0x20] sm:$0xff]
        %v3784 = vld [vmem:[#allocation4 + $0x28] sm:$0xff]
        %v3785 = vld [vmem:[#allocation4 + $0x30] sm:$0xff]
        %v3786 = vld [vmem:[#allocation4 + $0x38] sm:$0xff]
        %v3787 = vld [vmem:[#allocation4 + $0x40] sm:$0xff]
        %v3788 = vld [vmem:[#allocation4 + $0x48] sm:$0xff]
        %v3789 = vld [vmem:[#allocation4 + $0x50] sm:$0xff]
        %v3790 = vld [vmem:[#allocation4 + $0x58] sm:$0xff]
        %v3791 = vld [vmem:[#allocation4 + $0x60] sm:$0xff]
        %v3792 = vld [vmem:[#allocation4 + $0x68] sm:$0xff]
        %v3793 = vld [vmem:[#allocation4 + $0x70] sm:$0xff]
        %v3794 = vld [vmem:[#allocation4 + $0x78] sm:$0xff]
        %3796 = vset.pattern.permute.xlu0 3
        %3797 = vperm.xlu0 %3796, %v3338
        %v3798 = vpop.permute.xlu0 %3797
        %3801 = vset.pattern.permute.xlu0 3
        %3802 = vperm.xlu0 %3801, %v3340
        %v3803 = vpop.permute.xlu0 %3802
        %3806 = vset.pattern.permute.xlu0 3
        %3807 = vperm.xlu0 %3806, %v3342
        %v3808 = vpop.permute.xlu0 %3807
        %3811 = vset.pattern.permute.xlu0 3
        %3812 = vperm.xlu0 %3811, %v3344
        %v3813 = vpop.permute.xlu0 %3812
        %3816 = vset.pattern.permute.xlu0 3
        %3817 = vperm.xlu0 %3816, %v3346
        %v3818 = vpop.permute.xlu0 %3817
        %3821 = vset.pattern.permute.xlu0 3
        %3822 = vperm.xlu0 %3821, %v3348
        %v3823 = vpop.permute.xlu0 %3822
        %3826 = vset.pattern.permute.xlu0 3
        %3827 = vperm.xlu0 %3826, %v3350
        %v3828 = vpop.permute.xlu0 %3827
        %3831 = vset.pattern.permute.xlu0 3
        %3832 = vperm.xlu0 %3831, %v3352
        %v3833 = vpop.permute.xlu0 %3832
        %3836 = vset.pattern.permute.xlu0 3
        %3837 = vperm.xlu0 %3836, %v3354
        %v3838 = vpop.permute.xlu0 %3837
        %3841 = vset.pattern.permute.xlu0 3
        %3842 = vperm.xlu0 %3841, %v3356
        %v3843 = vpop.permute.xlu0 %3842
        %3846 = vset.pattern.permute.xlu0 3
        %3847 = vperm.xlu0 %3846, %v3358
        %v3848 = vpop.permute.xlu0 %3847
        %3851 = vset.pattern.permute.xlu0 3
        %3852 = vperm.xlu0 %3851, %v3360
        %v3853 = vpop.permute.xlu0 %3852
        %3856 = vset.pattern.permute.xlu0 3
        %3857 = vperm.xlu0 %3856, %v3362
        %v3858 = vpop.permute.xlu0 %3857
        %3861 = vset.pattern.permute.xlu0 3
        %3862 = vperm.xlu0 %3861, %v3364
        %v3863 = vpop.permute.xlu0 %3862
        %3866 = vset.pattern.permute.xlu0 3
        %3867 = vperm.xlu0 %3866, %v3366
        %v3868 = vpop.permute.xlu0 %3867
        %3871 = vset.pattern.permute.xlu0 3
        %3872 = vperm.xlu0 %3871, %v3368
        %v3873 = vpop.permute.xlu0 %3872
        %v3875 = vmul.f32 %v3798, %v3779
        %v3876 = vmul.f32 %v3803, %v3780
        %v3877 = vmul.f32 %v3808, %v3781
        %v3878 = vmul.f32 %v3813, %v3782
        %v3879 = vmul.f32 %v3818, %v3783
        %v3880 = vmul.f32 %v3823, %v3784
        %v3881 = vmul.f32 %v3828, %v3785
        %v3882 = vmul.f32 %v3833, %v3786
        %v3883 = vmul.f32 %v3838, %v3787
        %v3884 = vmul.f32 %v3843, %v3788
        %v3885 = vmul.f32 %v3848, %v3789
        %v3886 = vmul.f32 %v3853, %v3790
        %v3887 = vmul.f32 %v3858, %v3791
        %v3888 = vmul.f32 %v3863, %v3792
        %v3889 = vmul.f32 %v3868, %v3793
        %v3890 = vmul.f32 %v3873, %v3794
        %3907 = vrot.lane.b32.xlu0 %v3717, 48
        %v3908 = vpop.permute.xlu0 %3907
        %3909 = vrot.lane.b32.xlu0 %v3720, 48
        %v3910 = vpop.permute.xlu0 %3909
        %3911 = vrot.lane.b32.xlu0 %v3725, 48
        %v3912 = vpop.permute.xlu0 %3911
        %3913 = vrot.lane.b32.xlu0 %v3728, 48
        %v3914 = vpop.permute.xlu0 %3913
        %3915 = vrot.lane.b32.xlu0 %v3733, 48
        %v3916 = vpop.permute.xlu0 %3915
        %3917 = vrot.lane.b32.xlu0 %v3736, 48
        %v3918 = vpop.permute.xlu0 %3917
        %3919 = vrot.lane.b32.xlu0 %v3741, 48
        %v3920 = vpop.permute.xlu0 %3919
        %3921 = vrot.lane.b32.xlu0 %v3744, 48
        %v3922 = vpop.permute.xlu0 %3921
        %3923 = vrot.lane.b32.xlu0 %v3749, 48
        %v3924 = vpop.permute.xlu0 %3923
        %3925 = vrot.lane.b32.xlu0 %v3752, 48
        %v3926 = vpop.permute.xlu0 %3925
        %3927 = vrot.lane.b32.xlu0 %v3757, 48
        %v3928 = vpop.permute.xlu0 %3927
        %3929 = vrot.lane.b32.xlu0 %v3760, 48
        %v3930 = vpop.permute.xlu0 %3929
        %3931 = vrot.lane.b32.xlu0 %v3765, 48
        %v3932 = vpop.permute.xlu0 %3931
        %3933 = vrot.lane.b32.xlu0 %v3768, 48
        %v3934 = vpop.permute.xlu0 %3933
        %3935 = vrot.lane.b32.xlu0 %v3773, 48
        %v3936 = vpop.permute.xlu0 %3935
        %3937 = vrot.lane.b32.xlu0 %v3776, 48
        %v3938 = vpop.permute.xlu0 %3937
        %v3955 = vadd.f32 %v3875, %v3908
        %v3956 = vadd.f32 %v3876, %v3910
        %v3957 = vadd.f32 %v3877, %v3912
        %v3958 = vadd.f32 %v3878, %v3914
        %v3959 = vadd.f32 %v3879, %v3916
        %v3960 = vadd.f32 %v3880, %v3918
        %v3961 = vadd.f32 %v3881, %v3920
        %v3962 = vadd.f32 %v3882, %v3922
        %v3963 = vadd.f32 %v3883, %v3924
        %v3964 = vadd.f32 %v3884, %v3926
        %v3965 = vadd.f32 %v3885, %v3928
        %v3966 = vadd.f32 %v3886, %v3930
        %v3967 = vadd.f32 %v3887, %v3932
        %v3968 = vadd.f32 %v3888, %v3934
        %v3969 = vadd.f32 %v3889, %v3936
        %v3970 = vadd.f32 %v3890, %v3938
        %vm3971 = vcmask 523648
        %3972 = vst.msk [vmem:[#allocation4] sm:$0xff] %vm3971, %v3955
        %3973 = vst.msk [vmem:[#allocation4 + $0x8] sm:$0xff] %vm3971, %v3956
        %3974 = vst.msk [vmem:[#allocation4 + $0x10] sm:$0xff] %vm3971, %v3957
        %3975 = vst.msk [vmem:[#allocation4 + $0x18] sm:$0xff] %vm3971, %v3958
        %3976 = vst.msk [vmem:[#allocation4 + $0x20] sm:$0xff] %vm3971, %v3959
        %3977 = vst.msk [vmem:[#allocation4 + $0x28] sm:$0xff] %vm3971, %v3960
        %3978 = vst.msk [vmem:[#allocation4 + $0x30] sm:$0xff] %vm3971, %v3961
        %3979 = vst.msk [vmem:[#allocation4 + $0x38] sm:$0xff] %vm3971, %v3962
        %3980 = vst.msk [vmem:[#allocation4 + $0x40] sm:$0xff] %vm3971, %v3963
        %3981 = vst.msk [vmem:[#allocation4 + $0x48] sm:$0xff] %vm3971, %v3964
        %3982 = vst.msk [vmem:[#allocation4 + $0x50] sm:$0xff] %vm3971, %v3965
        %3983 = vst.msk [vmem:[#allocation4 + $0x58] sm:$0xff] %vm3971, %v3966
        %3984 = vst.msk [vmem:[#allocation4 + $0x60] sm:$0xff] %vm3971, %v3967
        %3985 = vst.msk [vmem:[#allocation4 + $0x68] sm:$0xff] %vm3971, %v3968
        %3986 = vst.msk [vmem:[#allocation4 + $0x70] sm:$0xff] %vm3971, %v3969
        %3987 = vst.msk [vmem:[#allocation4 + $0x78] sm:$0xff] %vm3971, %v3970
        %3988 = vst.msk [vmem:[#allocation2] sm:$0xff] %vm3577, %v3305
        %3989 = vst.msk [vmem:[#allocation2 + $0x8] sm:$0xff] %vm3577, %v3306
        %3990 = vst.msk [vmem:[#allocation2 + $0x10] sm:$0xff] %vm3577, %v3307
        %3991 = vst.msk [vmem:[#allocation2 + $0x18] sm:$0xff] %vm3577, %v3308
        %3992 = vst.msk [vmem:[#allocation2 + $0x20] sm:$0xff] %vm3577, %v3309
        %3993 = vst.msk [vmem:[#allocation2 + $0x28] sm:$0xff] %vm3577, %v3310
        %3994 = vst.msk [vmem:[#allocation2 + $0x30] sm:$0xff] %vm3577, %v3311
        %3995 = vst.msk [vmem:[#allocation2 + $0x38] sm:$0xff] %vm3577, %v3312
        %3996 = vst.msk [vmem:[#allocation2 + $0x40] sm:$0xff] %vm3577, %v3313
        %3997 = vst.msk [vmem:[#allocation2 + $0x48] sm:$0xff] %vm3577, %v3314
        %3998 = vst.msk [vmem:[#allocation2 + $0x50] sm:$0xff] %vm3577, %v3315
        %3999 = vst.msk [vmem:[#allocation2 + $0x58] sm:$0xff] %vm3577, %v3316
        %4000 = vst.msk [vmem:[#allocation2 + $0x60] sm:$0xff] %vm3577, %v3317
        %4001 = vst.msk [vmem:[#allocation2 + $0x68] sm:$0xff] %vm3577, %v3318
        %4002 = vst.msk [vmem:[#allocation2 + $0x70] sm:$0xff] %vm3577, %v3319
        %4003 = vst.msk [vmem:[#allocation2 + $0x78] sm:$0xff] %vm3577, %v3320
        %p4004 = scmp.eq.s32.totalorder %s21, 1
        // Predicated region
        $region83: #{gat_forward.5} parent=73 // pred_check
          %p4005 = pneg %p4004
        $region84: #{gat_forward.5} parent=73 // pred_check_branch
          %4007 = sbr.rel (%p4005) target = $region86
        $region85: #{gat_forward.5} parent=73 // pred_region
          %v4008 = vld [vmem:[#allocation3] sm:$0xff]
          %v4009 = vld [vmem:[#allocation3 + $0x8] sm:$0xff]
          %v4010 = vld [vmem:[#allocation3 + $0x10] sm:$0xff]
          %v4011 = vld [vmem:[#allocation3 + $0x18] sm:$0xff]
          %v4012 = vld [vmem:[#allocation3 + $0x20] sm:$0xff]
          %v4013 = vld [vmem:[#allocation3 + $0x28] sm:$0xff]
          %v4014 = vld [vmem:[#allocation3 + $0x30] sm:$0xff]
          %v4015 = vld [vmem:[#allocation3 + $0x38] sm:$0xff]
          %v4016 = vld [vmem:[#allocation3 + $0x40] sm:$0xff]
          %v4017 = vld [vmem:[#allocation3 + $0x48] sm:$0xff]
          %v4018 = vld [vmem:[#allocation3 + $0x50] sm:$0xff]
          %v4019 = vld [vmem:[#allocation3 + $0x58] sm:$0xff]
          %v4020 = vld [vmem:[#allocation3 + $0x60] sm:$0xff]
          %v4021 = vld [vmem:[#allocation3 + $0x68] sm:$0xff]
          %v4022 = vld [vmem:[#allocation3 + $0x70] sm:$0xff]
          %v4023 = vld [vmem:[#allocation3 + $0x78] sm:$0xff]
          %v4024 = vrcp.pop %v4008
          %v4025 = vrcp.pop %v4009
          %v4026 = vrcp.pop %v4010
          %v4027 = vrcp.pop %v4011
          %v4028 = vrcp.pop %v4012
          %v4029 = vrcp.pop %v4013
          %v4030 = vrcp.pop %v4014
          %v4031 = vrcp.pop %v4015
          %v4032 = vrcp.pop %v4016
          %v4033 = vrcp.pop %v4017
          %v4034 = vrcp.pop %v4018
          %v4035 = vrcp.pop %v4019
          %v4036 = vrcp.pop %v4020
          %v4037 = vrcp.pop %v4021
          %v4038 = vrcp.pop %v4022
          %v4039 = vrcp.pop %v4023
          %v4040 = vld [vmem:[#allocation4] sm:$0xff]
          %v4041 = vld [vmem:[#allocation4 + $0x8] sm:$0xff]
          %v4042 = vld [vmem:[#allocation4 + $0x10] sm:$0xff]
          %v4043 = vld [vmem:[#allocation4 + $0x18] sm:$0xff]
          %v4044 = vld [vmem:[#allocation4 + $0x20] sm:$0xff]
          %v4045 = vld [vmem:[#allocation4 + $0x28] sm:$0xff]
          %v4046 = vld [vmem:[#allocation4 + $0x30] sm:$0xff]
          %v4047 = vld [vmem:[#allocation4 + $0x38] sm:$0xff]
          %v4048 = vld [vmem:[#allocation4 + $0x40] sm:$0xff]
          %v4049 = vld [vmem:[#allocation4 + $0x48] sm:$0xff]
          %v4050 = vld [vmem:[#allocation4 + $0x50] sm:$0xff]
          %v4051 = vld [vmem:[#allocation4 + $0x58] sm:$0xff]
          %v4052 = vld [vmem:[#allocation4 + $0x60] sm:$0xff]
          %v4053 = vld [vmem:[#allocation4 + $0x68] sm:$0xff]
          %v4054 = vld [vmem:[#allocation4 + $0x70] sm:$0xff]
          %v4055 = vld [vmem:[#allocation4 + $0x78] sm:$0xff]
          %4057 = vset.pattern.permute.xlu0 0
          %4058 = vperm.xlu0 %4057, %v4024
          %v4059 = vpop.permute.xlu0 %4058
          %4062 = vset.pattern.permute.xlu0 0
          %4063 = vperm.xlu0 %4062, %v4025
          %v4064 = vpop.permute.xlu0 %4063
          %4067 = vset.pattern.permute.xlu0 0
          %4068 = vperm.xlu0 %4067, %v4026
          %v4069 = vpop.permute.xlu0 %4068
          %4072 = vset.pattern.permute.xlu0 0
          %4073 = vperm.xlu0 %4072, %v4027
          %v4074 = vpop.permute.xlu0 %4073
          %4077 = vset.pattern.permute.xlu0 0
          %4078 = vperm.xlu0 %4077, %v4028
          %v4079 = vpop.permute.xlu0 %4078
          %4082 = vset.pattern.permute.xlu0 0
          %4083 = vperm.xlu0 %4082, %v4029
          %v4084 = vpop.permute.xlu0 %4083
          %4087 = vset.pattern.permute.xlu0 0
          %4088 = vperm.xlu0 %4087, %v4030
          %v4089 = vpop.permute.xlu0 %4088
          %4092 = vset.pattern.permute.xlu0 0
          %4093 = vperm.xlu0 %4092, %v4031
          %v4094 = vpop.permute.xlu0 %4093
          %4097 = vset.pattern.permute.xlu0 0
          %4098 = vperm.xlu0 %4097, %v4032
          %v4099 = vpop.permute.xlu0 %4098
          %4102 = vset.pattern.permute.xlu0 0
          %4103 = vperm.xlu0 %4102, %v4033
          %v4104 = vpop.permute.xlu0 %4103
          %4107 = vset.pattern.permute.xlu0 0
          %4108 = vperm.xlu0 %4107, %v4034
          %v4109 = vpop.permute.xlu0 %4108
          %4112 = vset.pattern.permute.xlu0 0
          %4113 = vperm.xlu0 %4112, %v4035
          %v4114 = vpop.permute.xlu0 %4113
          %4117 = vset.pattern.permute.xlu0 0
          %4118 = vperm.xlu0 %4117, %v4036
          %v4119 = vpop.permute.xlu0 %4118
          %4122 = vset.pattern.permute.xlu0 0
          %4123 = vperm.xlu0 %4122, %v4037
          %v4124 = vpop.permute.xlu0 %4123
          %4127 = vset.pattern.permute.xlu0 0
          %4128 = vperm.xlu0 %4127, %v4038
          %v4129 = vpop.permute.xlu0 %4128
          %4132 = vset.pattern.permute.xlu0 0
          %4133 = vperm.xlu0 %4132, %v4039
          %v4134 = vpop.permute.xlu0 %4133
          %v4136 = vmul.f32 %v4040, %v4059
          %v4137 = vmul.f32 %v4041, %v4064
          %v4138 = vmul.f32 %v4042, %v4069
          %v4139 = vmul.f32 %v4043, %v4074
          %v4140 = vmul.f32 %v4044, %v4079
          %v4141 = vmul.f32 %v4045, %v4084
          %v4142 = vmul.f32 %v4046, %v4089
          %v4143 = vmul.f32 %v4047, %v4094
          %v4144 = vmul.f32 %v4048, %v4099
          %v4145 = vmul.f32 %v4049, %v4104
          %v4146 = vmul.f32 %v4050, %v4109
          %v4147 = vmul.f32 %v4051, %v4114
          %v4148 = vmul.f32 %v4052, %v4119
          %v4149 = vmul.f32 %v4053, %v4124
          %v4150 = vmul.f32 %v4054, %v4129
          %v4151 = vmul.f32 %v4055, %v4134
          %4152 = vst.msk [vmem:[#allocation4] sm:$0xff] %vm1331, %v4136
          %4153 = vst.msk [vmem:[#allocation4 + $0x8] sm:$0xff] %vm1331, %v4137
          %4154 = vst.msk [vmem:[#allocation4 + $0x10] sm:$0xff] %vm1331, %v4138
          %4155 = vst.msk [vmem:[#allocation4 + $0x18] sm:$0xff] %vm1331, %v4139
          %4156 = vst.msk [vmem:[#allocation4 + $0x20] sm:$0xff] %vm1331, %v4140
          %4157 = vst.msk [vmem:[#allocation4 + $0x28] sm:$0xff] %vm1331, %v4141
          %4158 = vst.msk [vmem:[#allocation4 + $0x30] sm:$0xff] %vm1331, %v4142
          %4159 = vst.msk [vmem:[#allocation4 + $0x38] sm:$0xff] %vm1331, %v4143
          %4160 = vst.msk [vmem:[#allocation4 + $0x40] sm:$0xff] %vm1331, %v4144
          %4161 = vst.msk [vmem:[#allocation4 + $0x48] sm:$0xff] %vm1331, %v4145
          %4162 = vst.msk [vmem:[#allocation4 + $0x50] sm:$0xff] %vm1331, %v4146
          %4163 = vst.msk [vmem:[#allocation4 + $0x58] sm:$0xff] %vm1331, %v4147
          %4164 = vst.msk [vmem:[#allocation4 + $0x60] sm:$0xff] %vm1331, %v4148
          %4165 = vst.msk [vmem:[#allocation4 + $0x68] sm:$0xff] %vm1331, %v4149
          %4166 = vst.msk [vmem:[#allocation4 + $0x70] sm:$0xff] %vm1331, %v4150
          %4167 = vst.msk [vmem:[#allocation4 + $0x78] sm:$0xff] %vm1331, %v4151
          %v4168 = vld [vmem:[#allocation3] sm:$0xff]
          %v4169 = vld [vmem:[#allocation3 + $0x8] sm:$0xff]
          %v4170 = vld [vmem:[#allocation3 + $0x10] sm:$0xff]
          %v4171 = vld [vmem:[#allocation3 + $0x18] sm:$0xff]
          %v4172 = vld [vmem:[#allocation3 + $0x20] sm:$0xff]
          %v4173 = vld [vmem:[#allocation3 + $0x28] sm:$0xff]
          %v4174 = vld [vmem:[#allocation3 + $0x30] sm:$0xff]
          %v4175 = vld [vmem:[#allocation3 + $0x38] sm:$0xff]
          %v4176 = vld [vmem:[#allocation3 + $0x40] sm:$0xff]
          %v4177 = vld [vmem:[#allocation3 + $0x48] sm:$0xff]
          %v4178 = vld [vmem:[#allocation3 + $0x50] sm:$0xff]
          %v4179 = vld [vmem:[#allocation3 + $0x58] sm:$0xff]
          %v4180 = vld [vmem:[#allocation3 + $0x60] sm:$0xff]
          %v4181 = vld [vmem:[#allocation3 + $0x68] sm:$0xff]
          %v4182 = vld [vmem:[#allocation3 + $0x70] sm:$0xff]
          %v4183 = vld [vmem:[#allocation3 + $0x78] sm:$0xff]
          %v4184 = vrcp.pop %v4168
          %v4185 = vrcp.pop %v4169
          %v4186 = vrcp.pop %v4170
          %v4187 = vrcp.pop %v4171
          %v4188 = vrcp.pop %v4172
          %v4189 = vrcp.pop %v4173
          %v4190 = vrcp.pop %v4174
          %v4191 = vrcp.pop %v4175
          %v4192 = vrcp.pop %v4176
          %v4193 = vrcp.pop %v4177
          %v4194 = vrcp.pop %v4178
          %v4195 = vrcp.pop %v4179
          %v4196 = vrcp.pop %v4180
          %v4197 = vrcp.pop %v4181
          %v4198 = vrcp.pop %v4182
          %v4199 = vrcp.pop %v4183
          %v4200 = vld [vmem:[#allocation4] sm:$0xff]
          %v4201 = vld [vmem:[#allocation4 + $0x8] sm:$0xff]
          %v4202 = vld [vmem:[#allocation4 + $0x10] sm:$0xff]
          %v4203 = vld [vmem:[#allocation4 + $0x18] sm:$0xff]
          %v4204 = vld [vmem:[#allocation4 + $0x20] sm:$0xff]
          %v4205 = vld [vmem:[#allocation4 + $0x28] sm:$0xff]
          %v4206 = vld [vmem:[#allocation4 + $0x30] sm:$0xff]
          %v4207 = vld [vmem:[#allocation4 + $0x38] sm:$0xff]
          %v4208 = vld [vmem:[#allocation4 + $0x40] sm:$0xff]
          %v4209 = vld [vmem:[#allocation4 + $0x48] sm:$0xff]
          %v4210 = vld [vmem:[#allocation4 + $0x50] sm:$0xff]
          %v4211 = vld [vmem:[#allocation4 + $0x58] sm:$0xff]
          %v4212 = vld [vmem:[#allocation4 + $0x60] sm:$0xff]
          %v4213 = vld [vmem:[#allocation4 + $0x68] sm:$0xff]
          %v4214 = vld [vmem:[#allocation4 + $0x70] sm:$0xff]
          %v4215 = vld [vmem:[#allocation4 + $0x78] sm:$0xff]
          %4217 = vset.pattern.permute.xlu0 1
          %4218 = vperm.xlu0 %4217, %v4184
          %v4219 = vpop.permute.xlu0 %4218
          %4222 = vset.pattern.permute.xlu0 1
          %4223 = vperm.xlu0 %4222, %v4185
          %v4224 = vpop.permute.xlu0 %4223
          %4227 = vset.pattern.permute.xlu0 1
          %4228 = vperm.xlu0 %4227, %v4186
          %v4229 = vpop.permute.xlu0 %4228
          %4232 = vset.pattern.permute.xlu0 1
          %4233 = vperm.xlu0 %4232, %v4187
          %v4234 = vpop.permute.xlu0 %4233
          %4237 = vset.pattern.permute.xlu0 1
          %4238 = vperm.xlu0 %4237, %v4188
          %v4239 = vpop.permute.xlu0 %4238
          %4242 = vset.pattern.permute.xlu0 1
          %4243 = vperm.xlu0 %4242, %v4189
          %v4244 = vpop.permute.xlu0 %4243
          %4247 = vset.pattern.permute.xlu0 1
          %4248 = vperm.xlu0 %4247, %v4190
          %v4249 = vpop.permute.xlu0 %4248
          %4252 = vset.pattern.permute.xlu0 1
          %4253 = vperm.xlu0 %4252, %v4191
          %v4254 = vpop.permute.xlu0 %4253
          %4257 = vset.pattern.permute.xlu0 1
          %4258 = vperm.xlu0 %4257, %v4192
          %v4259 = vpop.permute.xlu0 %4258
          %4262 = vset.pattern.permute.xlu0 1
          %4263 = vperm.xlu0 %4262, %v4193
          %v4264 = vpop.permute.xlu0 %4263
          %4267 = vset.pattern.permute.xlu0 1
          %4268 = vperm.xlu0 %4267, %v4194
          %v4269 = vpop.permute.xlu0 %4268
          %4272 = vset.pattern.permute.xlu0 1
          %4273 = vperm.xlu0 %4272, %v4195
          %v4274 = vpop.permute.xlu0 %4273
          %4277 = vset.pattern.permute.xlu0 1
          %4278 = vperm.xlu0 %4277, %v4196
          %v4279 = vpop.permute.xlu0 %4278
          %4282 = vset.pattern.permute.xlu0 1
          %4283 = vperm.xlu0 %4282, %v4197
          %v4284 = vpop.permute.xlu0 %4283
          %4287 = vset.pattern.permute.xlu0 1
          %4288 = vperm.xlu0 %4287, %v4198
          %v4289 = vpop.permute.xlu0 %4288
          %4292 = vset.pattern.permute.xlu0 1
          %4293 = vperm.xlu0 %4292, %v4199
          %v4294 = vpop.permute.xlu0 %4293
          %v4296 = vmul.f32 %v4200, %v4219
          %v4297 = vmul.f32 %v4201, %v4224
          %v4298 = vmul.f32 %v4202, %v4229
          %v4299 = vmul.f32 %v4203, %v4234
          %v4300 = vmul.f32 %v4204, %v4239
          %v4301 = vmul.f32 %v4205, %v4244
          %v4302 = vmul.f32 %v4206, %v4249
          %v4303 = vmul.f32 %v4207, %v4254
          %v4304 = vmul.f32 %v4208, %v4259
          %v4305 = vmul.f32 %v4209, %v4264
          %v4306 = vmul.f32 %v4210, %v4269
          %v4307 = vmul.f32 %v4211, %v4274
          %v4308 = vmul.f32 %v4212, %v4279
          %v4309 = vmul.f32 %v4213, %v4284
          %v4310 = vmul.f32 %v4214, %v4289
          %v4311 = vmul.f32 %v4215, %v4294
          %4312 = vst.msk [vmem:[#allocation4] sm:$0xff] %vm2211, %v4296
          %4313 = vst.msk [vmem:[#allocation4 + $0x8] sm:$0xff] %vm2211, %v4297
          %4314 = vst.msk [vmem:[#allocation4 + $0x10] sm:$0xff] %vm2211, %v4298
          %4315 = vst.msk [vmem:[#allocation4 + $0x18] sm:$0xff] %vm2211, %v4299
          %4316 = vst.msk [vmem:[#allocation4 + $0x20] sm:$0xff] %vm2211, %v4300
          %4317 = vst.msk [vmem:[#allocation4 + $0x28] sm:$0xff] %vm2211, %v4301
          %4318 = vst.msk [vmem:[#allocation4 + $0x30] sm:$0xff] %vm2211, %v4302
          %4319 = vst.msk [vmem:[#allocation4 + $0x38] sm:$0xff] %vm2211, %v4303
          %4320 = vst.msk [vmem:[#allocation4 + $0x40] sm:$0xff] %vm2211, %v4304
          %4321 = vst.msk [vmem:[#allocation4 + $0x48] sm:$0xff] %vm2211, %v4305
          %4322 = vst.msk [vmem:[#allocation4 + $0x50] sm:$0xff] %vm2211, %v4306
          %4323 = vst.msk [vmem:[#allocation4 + $0x58] sm:$0xff] %vm2211, %v4307
          %4324 = vst.msk [vmem:[#allocation4 + $0x60] sm:$0xff] %vm2211, %v4308
          %4325 = vst.msk [vmem:[#allocation4 + $0x68] sm:$0xff] %vm2211, %v4309
          %4326 = vst.msk [vmem:[#allocation4 + $0x70] sm:$0xff] %vm2211, %v4310
          %4327 = vst.msk [vmem:[#allocation4 + $0x78] sm:$0xff] %vm2211, %v4311
          %v4328 = vld [vmem:[#allocation3] sm:$0xff]
          %v4329 = vld [vmem:[#allocation3 + $0x8] sm:$0xff]
          %v4330 = vld [vmem:[#allocation3 + $0x10] sm:$0xff]
          %v4331 = vld [vmem:[#allocation3 + $0x18] sm:$0xff]
          %v4332 = vld [vmem:[#allocation3 + $0x20] sm:$0xff]
          %v4333 = vld [vmem:[#allocation3 + $0x28] sm:$0xff]
          %v4334 = vld [vmem:[#allocation3 + $0x30] sm:$0xff]
          %v4335 = vld [vmem:[#allocation3 + $0x38] sm:$0xff]
          %v4336 = vld [vmem:[#allocation3 + $0x40] sm:$0xff]
          %v4337 = vld [vmem:[#allocation3 + $0x48] sm:$0xff]
          %v4338 = vld [vmem:[#allocation3 + $0x50] sm:$0xff]
          %v4339 = vld [vmem:[#allocation3 + $0x58] sm:$0xff]
          %v4340 = vld [vmem:[#allocation3 + $0x60] sm:$0xff]
          %v4341 = vld [vmem:[#allocation3 + $0x68] sm:$0xff]
          %v4342 = vld [vmem:[#allocation3 + $0x70] sm:$0xff]
          %v4343 = vld [vmem:[#allocation3 + $0x78] sm:$0xff]
          %v4344 = vrcp.pop %v4328
          %v4345 = vrcp.pop %v4329
          %v4346 = vrcp.pop %v4330
          %v4347 = vrcp.pop %v4331
          %v4348 = vrcp.pop %v4332
          %v4349 = vrcp.pop %v4333
          %v4350 = vrcp.pop %v4334
          %v4351 = vrcp.pop %v4335
          %v4352 = vrcp.pop %v4336
          %v4353 = vrcp.pop %v4337
          %v4354 = vrcp.pop %v4338
          %v4355 = vrcp.pop %v4339
          %v4356 = vrcp.pop %v4340
          %v4357 = vrcp.pop %v4341
          %v4358 = vrcp.pop %v4342
          %v4359 = vrcp.pop %v4343
          %v4360 = vld [vmem:[#allocation4] sm:$0xff]
          %v4361 = vld [vmem:[#allocation4 + $0x8] sm:$0xff]
          %v4362 = vld [vmem:[#allocation4 + $0x10] sm:$0xff]
          %v4363 = vld [vmem:[#allocation4 + $0x18] sm:$0xff]
          %v4364 = vld [vmem:[#allocation4 + $0x20] sm:$0xff]
          %v4365 = vld [vmem:[#allocation4 + $0x28] sm:$0xff]
          %v4366 = vld [vmem:[#allocation4 + $0x30] sm:$0xff]
          %v4367 = vld [vmem:[#allocation4 + $0x38] sm:$0xff]
          %v4368 = vld [vmem:[#allocation4 + $0x40] sm:$0xff]
          %v4369 = vld [vmem:[#allocation4 + $0x48] sm:$0xff]
          %v4370 = vld [vmem:[#allocation4 + $0x50] sm:$0xff]
          %v4371 = vld [vmem:[#allocation4 + $0x58] sm:$0xff]
          %v4372 = vld [vmem:[#allocation4 + $0x60] sm:$0xff]
          %v4373 = vld [vmem:[#allocation4 + $0x68] sm:$0xff]
          %v4374 = vld [vmem:[#allocation4 + $0x70] sm:$0xff]
          %v4375 = vld [vmem:[#allocation4 + $0x78] sm:$0xff]
          %4377 = vset.pattern.permute.xlu0 2
          %4378 = vperm.xlu0 %4377, %v4344
          %v4379 = vpop.permute.xlu0 %4378
          %4382 = vset.pattern.permute.xlu0 2
          %4383 = vperm.xlu0 %4382, %v4345
          %v4384 = vpop.permute.xlu0 %4383
          %4387 = vset.pattern.permute.xlu0 2
          %4388 = vperm.xlu0 %4387, %v4346
          %v4389 = vpop.permute.xlu0 %4388
          %4392 = vset.pattern.permute.xlu0 2
          %4393 = vperm.xlu0 %4392, %v4347
          %v4394 = vpop.permute.xlu0 %4393
          %4397 = vset.pattern.permute.xlu0 2
          %4398 = vperm.xlu0 %4397, %v4348
          %v4399 = vpop.permute.xlu0 %4398
          %4402 = vset.pattern.permute.xlu0 2
          %4403 = vperm.xlu0 %4402, %v4349
          %v4404 = vpop.permute.xlu0 %4403
          %4407 = vset.pattern.permute.xlu0 2
          %4408 = vperm.xlu0 %4407, %v4350
          %v4409 = vpop.permute.xlu0 %4408
          %4412 = vset.pattern.permute.xlu0 2
          %4413 = vperm.xlu0 %4412, %v4351
          %v4414 = vpop.permute.xlu0 %4413
          %4417 = vset.pattern.permute.xlu0 2
          %4418 = vperm.xlu0 %4417, %v4352
          %v4419 = vpop.permute.xlu0 %4418
          %4422 = vset.pattern.permute.xlu0 2
          %4423 = vperm.xlu0 %4422, %v4353
          %v4424 = vpop.permute.xlu0 %4423
          %4427 = vset.pattern.permute.xlu0 2
          %4428 = vperm.xlu0 %4427, %v4354
          %v4429 = vpop.permute.xlu0 %4428
          %4432 = vset.pattern.permute.xlu0 2
          %4433 = vperm.xlu0 %4432, %v4355
          %v4434 = vpop.permute.xlu0 %4433
          %4437 = vset.pattern.permute.xlu0 2
          %4438 = vperm.xlu0 %4437, %v4356
          %v4439 = vpop.permute.xlu0 %4438
          %4442 = vset.pattern.permute.xlu0 2
          %4443 = vperm.xlu0 %4442, %v4357
          %v4444 = vpop.permute.xlu0 %4443
          %4447 = vset.pattern.permute.xlu0 2
          %4448 = vperm.xlu0 %4447, %v4358
          %v4449 = vpop.permute.xlu0 %4448
          %4452 = vset.pattern.permute.xlu0 2
          %4453 = vperm.xlu0 %4452, %v4359
          %v4454 = vpop.permute.xlu0 %4453
          %v4456 = vmul.f32 %v4360, %v4379
          %v4457 = vmul.f32 %v4361, %v4384
          %v4458 = vmul.f32 %v4362, %v4389
          %v4459 = vmul.f32 %v4363, %v4394
          %v4460 = vmul.f32 %v4364, %v4399
          %v4461 = vmul.f32 %v4365, %v4404
          %v4462 = vmul.f32 %v4366, %v4409
          %v4463 = vmul.f32 %v4367, %v4414
          %v4464 = vmul.f32 %v4368, %v4419
          %v4465 = vmul.f32 %v4369, %v4424
          %v4466 = vmul.f32 %v4370, %v4429
          %v4467 = vmul.f32 %v4371, %v4434
          %v4468 = vmul.f32 %v4372, %v4439
          %v4469 = vmul.f32 %v4373, %v4444
          %v4470 = vmul.f32 %v4374, %v4449
          %v4471 = vmul.f32 %v4375, %v4454
          %4472 = vst.msk [vmem:[#allocation4] sm:$0xff] %vm3091, %v4456
          %4473 = vst.msk [vmem:[#allocation4 + $0x8] sm:$0xff] %vm3091, %v4457
          %4474 = vst.msk [vmem:[#allocation4 + $0x10] sm:$0xff] %vm3091, %v4458
          %4475 = vst.msk [vmem:[#allocation4 + $0x18] sm:$0xff] %vm3091, %v4459
          %4476 = vst.msk [vmem:[#allocation4 + $0x20] sm:$0xff] %vm3091, %v4460
          %4477 = vst.msk [vmem:[#allocation4 + $0x28] sm:$0xff] %vm3091, %v4461
          %4478 = vst.msk [vmem:[#allocation4 + $0x30] sm:$0xff] %vm3091, %v4462
          %4479 = vst.msk [vmem:[#allocation4 + $0x38] sm:$0xff] %vm3091, %v4463
          %4480 = vst.msk [vmem:[#allocation4 + $0x40] sm:$0xff] %vm3091, %v4464
          %4481 = vst.msk [vmem:[#allocation4 + $0x48] sm:$0xff] %vm3091, %v4465
          %4482 = vst.msk [vmem:[#allocation4 + $0x50] sm:$0xff] %vm3091, %v4466
          %4483 = vst.msk [vmem:[#allocation4 + $0x58] sm:$0xff] %vm3091, %v4467
          %4484 = vst.msk [vmem:[#allocation4 + $0x60] sm:$0xff] %vm3091, %v4468
          %4485 = vst.msk [vmem:[#allocation4 + $0x68] sm:$0xff] %vm3091, %v4469
          %4486 = vst.msk [vmem:[#allocation4 + $0x70] sm:$0xff] %vm3091, %v4470
          %4487 = vst.msk [vmem:[#allocation4 + $0x78] sm:$0xff] %vm3091, %v4471
          %v4488 = vld [vmem:[#allocation3] sm:$0xff]
          %v4489 = vld [vmem:[#allocation3 + $0x8] sm:$0xff]
          %v4490 = vld [vmem:[#allocation3 + $0x10] sm:$0xff]
          %v4491 = vld [vmem:[#allocation3 + $0x18] sm:$0xff]
          %v4492 = vld [vmem:[#allocation3 + $0x20] sm:$0xff]
          %v4493 = vld [vmem:[#allocation3 + $0x28] sm:$0xff]
          %v4494 = vld [vmem:[#allocation3 + $0x30] sm:$0xff]
          %v4495 = vld [vmem:[#allocation3 + $0x38] sm:$0xff]
          %v4496 = vld [vmem:[#allocation3 + $0x40] sm:$0xff]
          %v4497 = vld [vmem:[#allocation3 + $0x48] sm:$0xff]
          %v4498 = vld [vmem:[#allocation3 + $0x50] sm:$0xff]
          %v4499 = vld [vmem:[#allocation3 + $0x58] sm:$0xff]
          %v4500 = vld [vmem:[#allocation3 + $0x60] sm:$0xff]
          %v4501 = vld [vmem:[#allocation3 + $0x68] sm:$0xff]
          %v4502 = vld [vmem:[#allocation3 + $0x70] sm:$0xff]
          %v4503 = vld [vmem:[#allocation3 + $0x78] sm:$0xff]
          %v4504 = vrcp.pop %v4488
          %v4505 = vrcp.pop %v4489
          %v4506 = vrcp.pop %v4490
          %v4507 = vrcp.pop %v4491
          %v4508 = vrcp.pop %v4492
          %v4509 = vrcp.pop %v4493
          %v4510 = vrcp.pop %v4494
          %v4511 = vrcp.pop %v4495
          %v4512 = vrcp.pop %v4496
          %v4513 = vrcp.pop %v4497
          %v4514 = vrcp.pop %v4498
          %v4515 = vrcp.pop %v4499
          %v4516 = vrcp.pop %v4500
          %v4517 = vrcp.pop %v4501
          %v4518 = vrcp.pop %v4502
          %v4519 = vrcp.pop %v4503
          %v4520 = vld [vmem:[#allocation4] sm:$0xff]
          %v4521 = vld [vmem:[#allocation4 + $0x8] sm:$0xff]
          %v4522 = vld [vmem:[#allocation4 + $0x10] sm:$0xff]
          %v4523 = vld [vmem:[#allocation4 + $0x18] sm:$0xff]
          %v4524 = vld [vmem:[#allocation4 + $0x20] sm:$0xff]
          %v4525 = vld [vmem:[#allocation4 + $0x28] sm:$0xff]
          %v4526 = vld [vmem:[#allocation4 + $0x30] sm:$0xff]
          %v4527 = vld [vmem:[#allocation4 + $0x38] sm:$0xff]
          %v4528 = vld [vmem:[#allocation4 + $0x40] sm:$0xff]
          %v4529 = vld [vmem:[#allocation4 + $0x48] sm:$0xff]
          %v4530 = vld [vmem:[#allocation4 + $0x50] sm:$0xff]
          %v4531 = vld [vmem:[#allocation4 + $0x58] sm:$0xff]
          %v4532 = vld [vmem:[#allocation4 + $0x60] sm:$0xff]
          %v4533 = vld [vmem:[#allocation4 + $0x68] sm:$0xff]
          %v4534 = vld [vmem:[#allocation4 + $0x70] sm:$0xff]
          %v4535 = vld [vmem:[#allocation4 + $0x78] sm:$0xff]
          %4537 = vset.pattern.permute.xlu0 3
          %4538 = vperm.xlu0 %4537, %v4504
          %v4539 = vpop.permute.xlu0 %4538
          %4542 = vset.pattern.permute.xlu0 3
          %4543 = vperm.xlu0 %4542, %v4505
          %v4544 = vpop.permute.xlu0 %4543
          %4547 = vset.pattern.permute.xlu0 3
          %4548 = vperm.xlu0 %4547, %v4506
          %v4549 = vpop.permute.xlu0 %4548
          %4552 = vset.pattern.permute.xlu0 3
          %4553 = vperm.xlu0 %4552, %v4507
          %v4554 = vpop.permute.xlu0 %4553
          %4557 = vset.pattern.permute.xlu0 3
          %4558 = vperm.xlu0 %4557, %v4508
          %v4559 = vpop.permute.xlu0 %4558
          %4562 = vset.pattern.permute.xlu0 3
          %4563 = vperm.xlu0 %4562, %v4509
          %v4564 = vpop.permute.xlu0 %4563
          %4567 = vset.pattern.permute.xlu0 3
          %4568 = vperm.xlu0 %4567, %v4510
          %v4569 = vpop.permute.xlu0 %4568
          %4572 = vset.pattern.permute.xlu0 3
          %4573 = vperm.xlu0 %4572, %v4511
          %v4574 = vpop.permute.xlu0 %4573
          %4577 = vset.pattern.permute.xlu0 3
          %4578 = vperm.xlu0 %4577, %v4512
          %v4579 = vpop.permute.xlu0 %4578
          %4582 = vset.pattern.permute.xlu0 3
          %4583 = vperm.xlu0 %4582, %v4513
          %v4584 = vpop.permute.xlu0 %4583
          %4587 = vset.pattern.permute.xlu0 3
          %4588 = vperm.xlu0 %4587, %v4514
          %v4589 = vpop.permute.xlu0 %4588
          %4592 = vset.pattern.permute.xlu0 3
          %4593 = vperm.xlu0 %4592, %v4515
          %v4594 = vpop.permute.xlu0 %4593
          %4597 = vset.pattern.permute.xlu0 3
          %4598 = vperm.xlu0 %4597, %v4516
          %v4599 = vpop.permute.xlu0 %4598
          %4602 = vset.pattern.permute.xlu0 3
          %4603 = vperm.xlu0 %4602, %v4517
          %v4604 = vpop.permute.xlu0 %4603
          %4607 = vset.pattern.permute.xlu0 3
          %4608 = vperm.xlu0 %4607, %v4518
          %v4609 = vpop.permute.xlu0 %4608
          %4612 = vset.pattern.permute.xlu0 3
          %4613 = vperm.xlu0 %4612, %v4519
          %v4614 = vpop.permute.xlu0 %4613
          %v4616 = vmul.f32 %v4520, %v4539
          %v4617 = vmul.f32 %v4521, %v4544
          %v4618 = vmul.f32 %v4522, %v4549
          %v4619 = vmul.f32 %v4523, %v4554
          %v4620 = vmul.f32 %v4524, %v4559
          %v4621 = vmul.f32 %v4525, %v4564
          %v4622 = vmul.f32 %v4526, %v4569
          %v4623 = vmul.f32 %v4527, %v4574
          %v4624 = vmul.f32 %v4528, %v4579
          %v4625 = vmul.f32 %v4529, %v4584
          %v4626 = vmul.f32 %v4530, %v4589
          %v4627 = vmul.f32 %v4531, %v4594
          %v4628 = vmul.f32 %v4532, %v4599
          %v4629 = vmul.f32 %v4533, %v4604
          %v4630 = vmul.f32 %v4534, %v4609
          %v4631 = vmul.f32 %v4535, %v4614
          %4632 = vst.msk [vmem:[#allocation4] sm:$0xff] %vm3971, %v4616
          %4633 = vst.msk [vmem:[#allocation4 + $0x8] sm:$0xff] %vm3971, %v4617
          %4634 = vst.msk [vmem:[#allocation4 + $0x10] sm:$0xff] %vm3971, %v4618
          %4635 = vst.msk [vmem:[#allocation4 + $0x18] sm:$0xff] %vm3971, %v4619
          %4636 = vst.msk [vmem:[#allocation4 + $0x20] sm:$0xff] %vm3971, %v4620
          %4637 = vst.msk [vmem:[#allocation4 + $0x28] sm:$0xff] %vm3971, %v4621
          %4638 = vst.msk [vmem:[#allocation4 + $0x30] sm:$0xff] %vm3971, %v4622
          %4639 = vst.msk [vmem:[#allocation4 + $0x38] sm:$0xff] %vm3971, %v4623
          %4640 = vst.msk [vmem:[#allocation4 + $0x40] sm:$0xff] %vm3971, %v4624
          %4641 = vst.msk [vmem:[#allocation4 + $0x48] sm:$0xff] %vm3971, %v4625
          %4642 = vst.msk [vmem:[#allocation4 + $0x50] sm:$0xff] %vm3971, %v4626
          %4643 = vst.msk [vmem:[#allocation4 + $0x58] sm:$0xff] %vm3971, %v4627
          %4644 = vst.msk [vmem:[#allocation4 + $0x60] sm:$0xff] %vm3971, %v4628
          %4645 = vst.msk [vmem:[#allocation4 + $0x68] sm:$0xff] %vm3971, %v4629
          %4646 = vst.msk [vmem:[#allocation4 + $0x70] sm:$0xff] %vm3971, %v4630
          %4647 = vst.msk [vmem:[#allocation4 + $0x78] sm:$0xff] %vm3971, %v4631
          %v4648 = vld [vmem:[#allocation4] sm:$0xff]
          %v4649 = vld [vmem:[#allocation4 + $0x8] sm:$0xff]
          %v4650 = vld [vmem:[#allocation4 + $0x10] sm:$0xff]
          %v4651 = vld [vmem:[#allocation4 + $0x18] sm:$0xff]
          %v4652 = vld [vmem:[#allocation4 + $0x20] sm:$0xff]
          %v4653 = vld [vmem:[#allocation4 + $0x28] sm:$0xff]
          %v4654 = vld [vmem:[#allocation4 + $0x30] sm:$0xff]
          %v4655 = vld [vmem:[#allocation4 + $0x38] sm:$0xff]
          %v4656 = vld [vmem:[#allocation4 + $0x40] sm:$0xff]
          %v4657 = vld [vmem:[#allocation4 + $0x48] sm:$0xff]
          %v4658 = vld [vmem:[#allocation4 + $0x50] sm:$0xff]
          %v4659 = vld [vmem:[#allocation4 + $0x58] sm:$0xff]
          %v4660 = vld [vmem:[#allocation4 + $0x60] sm:$0xff]
          %v4661 = vld [vmem:[#allocation4 + $0x68] sm:$0xff]
          %v4662 = vld [vmem:[#allocation4 + $0x70] sm:$0xff]
          %v4663 = vld [vmem:[#allocation4 + $0x78] sm:$0xff]
          %v4664 = vld [vmem:[%s3] sm:$0x1]
          %v4666 = vlaneseq
          %v4667 = vshrl.u32 %v4666, 7
          %v4668 = vsub.s32 0, %v4667
          %v4669 = vrot.slane %v4664, %v4668
          %v4671 = vadd.f32 %v4648, %v4669
          %v4672 = vadd.f32 %v4649, %v4669
          %v4673 = vadd.f32 %v4650, %v4669
          %v4674 = vadd.f32 %v4651, %v4669
          %v4675 = vadd.f32 %v4652, %v4669
          %v4676 = vadd.f32 %v4653, %v4669
          %v4677 = vadd.f32 %v4654, %v4669
          %v4678 = vadd.f32 %v4655, %v4669
          %v4679 = vadd.f32 %v4656, %v4669
          %v4680 = vadd.f32 %v4657, %v4669
          %v4681 = vadd.f32 %v4658, %v4669
          %v4682 = vadd.f32 %v4659, %v4669
          %v4683 = vadd.f32 %v4660, %v4669
          %v4684 = vadd.f32 %v4661, %v4669
          %v4685 = vadd.f32 %v4662, %v4669
          %v4686 = vadd.f32 %v4663, %v4669
          %vm4687 = vcmp.gt.f32.partialorder %v4671, 0.0
          %vm4688 = vcmp.gt.f32.partialorder %v4672, 0.0
          %vm4689 = vcmp.gt.f32.partialorder %v4673, 0.0
          %vm4690 = vcmp.gt.f32.partialorder %v4674, 0.0
          %vm4691 = vcmp.gt.f32.partialorder %v4675, 0.0
          %vm4692 = vcmp.gt.f32.partialorder %v4676, 0.0
          %vm4693 = vcmp.gt.f32.partialorder %v4677, 0.0
          %vm4694 = vcmp.gt.f32.partialorder %v4678, 0.0
          %vm4695 = vcmp.gt.f32.partialorder %v4679, 0.0
          %vm4696 = vcmp.gt.f32.partialorder %v4680, 0.0
          %vm4697 = vcmp.gt.f32.partialorder %v4681, 0.0
          %vm4698 = vcmp.gt.f32.partialorder %v4682, 0.0
          %vm4699 = vcmp.gt.f32.partialorder %v4683, 0.0
          %vm4700 = vcmp.gt.f32.partialorder %v4684, 0.0
          %vm4701 = vcmp.gt.f32.partialorder %v4685, 0.0
          %vm4702 = vcmp.gt.f32.partialorder %v4686, 0.0
          %v4703 = vmin.f32 %v4671, 0.0
          %v4704 = vmin.f32 %v4672, 0.0
          %v4705 = vmin.f32 %v4673, 0.0
          %v4706 = vmin.f32 %v4674, 0.0
          %v4707 = vmin.f32 %v4675, 0.0
          %v4708 = vmin.f32 %v4676, 0.0
          %v4709 = vmin.f32 %v4677, 0.0
          %v4710 = vmin.f32 %v4678, 0.0
          %v4711 = vmin.f32 %v4679, 0.0
          %v4712 = vmin.f32 %v4680, 0.0
          %v4713 = vmin.f32 %v4681, 0.0
          %v4714 = vmin.f32 %v4682, 0.0
          %v4715 = vmin.f32 %v4683, 0.0
          %v4716 = vmin.f32 %v4684, 0.0
          %v4717 = vmin.f32 %v4685, 0.0
          %v4718 = vmin.f32 %v4686, 0.0
          %v4719 = vmul.f32 %v4703, 1.442695
          %v4720 = vpow.pop %v4719
          %v4721 = vmul.f32 %v4704, 1.442695
          %v4722 = vpow.pop %v4721
          %v4723 = vmul.f32 %v4705, 1.442695
          %v4724 = vpow.pop %v4723
          %v4725 = vmul.f32 %v4706, 1.442695
          %v4726 = vpow.pop %v4725
          %v4727 = vmul.f32 %v4707, 1.442695
          %v4728 = vpow.pop %v4727
          %v4729 = vmul.f32 %v4708, 1.442695
          %v4730 = vpow.pop %v4729
          %v4731 = vmul.f32 %v4709, 1.442695
          %v4732 = vpow.pop %v4731
          %v4733 = vmul.f32 %v4710, 1.442695
          %v4734 = vpow.pop %v4733
          %v4735 = vmul.f32 %v4711, 1.442695
          %v4736 = vpow.pop %v4735
          %v4737 = vmul.f32 %v4712, 1.442695
          %v4738 = vpow.pop %v4737
          %v4739 = vmul.f32 %v4713, 1.442695
          %v4740 = vpow.pop %v4739
          %v4741 = vmul.f32 %v4714, 1.442695
          %v4742 = vpow.pop %v4741
          %v4743 = vmul.f32 %v4715, 1.442695
          %v4744 = vpow.pop %v4743
          %v4745 = vmul.f32 %v4716, 1.442695
          %v4746 = vpow.pop %v4745
          %v4747 = vmul.f32 %v4717, 1.442695
          %v4748 = vpow.pop %v4747
          %v4749 = vmul.f32 %v4718, 1.442695
          %v4750 = vpow.pop %v4749
          %v4751 = vsub.f32 %v4720, 1.0
          %v4752 = vsub.f32 %v4722, 1.0
          %v4753 = vsub.f32 %v4724, 1.0
          %v4754 = vsub.f32 %v4726, 1.0
          %v4755 = vsub.f32 %v4728, 1.0
          %v4756 = vsub.f32 %v4730, 1.0
          %v4757 = vsub.f32 %v4732, 1.0
          %v4758 = vsub.f32 %v4734, 1.0
          %v4759 = vsub.f32 %v4736, 1.0
          %v4760 = vsub.f32 %v4738, 1.0
          %v4761 = vsub.f32 %v4740, 1.0
          %v4762 = vsub.f32 %v4742, 1.0
          %v4763 = vsub.f32 %v4744, 1.0
          %v4764 = vsub.f32 %v4746, 1.0
          %v4765 = vsub.f32 %v4748, 1.0
          %v4766 = vsub.f32 %v4750, 1.0
          %v4767 = vsel %vm4687, %v4671, %v4751
          %v4768 = vsel %vm4688, %v4672, %v4752
          %v4769 = vsel %vm4689, %v4673, %v4753
          %v4770 = vsel %vm4690, %v4674, %v4754
          %v4771 = vsel %vm4691, %v4675, %v4755
          %v4772 = vsel %vm4692, %v4676, %v4756
          %v4773 = vsel %vm4693, %v4677, %v4757
          %v4774 = vsel %vm4694, %v4678, %v4758
          %v4775 = vsel %vm4695, %v4679, %v4759
          %v4776 = vsel %vm4696, %v4680, %v4760
          %v4777 = vsel %vm4697, %v4681, %v4761
          %v4778 = vsel %vm4698, %v4682, %v4762
          %v4779 = vsel %vm4699, %v4683, %v4763
          %v4780 = vsel %vm4700, %v4684, %v4764
          %v4781 = vsel %vm4701, %v4685, %v4765
          %v4782 = vsel %vm4702, %v4686, %v4766
          %vm4783 = vcmask 523264
          %4784 = vst.msk [vmem:[%s349] sm:$0xff] %vm4783, %v4767
          %4785 = vst.msk [vmem:[%s349 + $0x8] sm:$0xff] %vm4783, %v4768
          %4786 = vst.msk [vmem:[%s349 + $0x10] sm:$0xff] %vm4783, %v4769
          %4787 = vst.msk [vmem:[%s349 + $0x18] sm:$0xff] %vm4783, %v4770
          %4788 = vst.msk [vmem:[%s349 + $0x20] sm:$0xff] %vm4783, %v4771
          %4789 = vst.msk [vmem:[%s349 + $0x28] sm:$0xff] %vm4783, %v4772
          %4790 = vst.msk [vmem:[%s349 + $0x30] sm:$0xff] %vm4783, %v4773
          %4791 = vst.msk [vmem:[%s349 + $0x38] sm:$0xff] %vm4783, %v4774
          %4792 = vst.msk [vmem:[%s349 + $0x40] sm:$0xff] %vm4783, %v4775
          %4793 = vst.msk [vmem:[%s349 + $0x48] sm:$0xff] %vm4783, %v4776
          %4794 = vst.msk [vmem:[%s349 + $0x50] sm:$0xff] %vm4783, %v4777
          %4795 = vst.msk [vmem:[%s349 + $0x58] sm:$0xff] %vm4783, %v4778
          %4796 = vst.msk [vmem:[%s349 + $0x60] sm:$0xff] %vm4783, %v4779
          %4797 = vst.msk [vmem:[%s349 + $0x68] sm:$0xff] %vm4783, %v4780
          %4798 = vst.msk [vmem:[%s349 + $0x70] sm:$0xff] %vm4783, %v4781
          %4799 = vst.msk [vmem:[%s349 + $0x78] sm:$0xff] %vm4783, %v4782
        $region86: #{gat_forward.5} parent=73 // pred_fallthru
          _
        %s4800 = smul.u32 16, %s20
        %p4801 = scmp.lt.s32.totalorder %s4800, 31
        %s4802 = scalar_select %p4801, %s4800, 31
        %s4803 = smul.addr %s4802, 8
        %s4804 = scalar_lea.vmem %s5, %s4803
        // Predicated region
        $region87: #{gat_forward.5} parent=73 // pred_check
          %p4805 = pneg %p173
        $region88: #{gat_forward.5} parent=73 // pred_check_branch
          %4807 = sbr.rel (%p4805) target = $region90
        $region89: #{gat_forward.5} parent=73 // pred_region
          %s4808 = smul.u32 16, %s20
        $region90: #{gat_forward.5} parent=73 // pred_fallthru
          _
      $region74: #{gat_forward.5} parent=5 // pred_fallthru
        _
      %p4809 = scmp.le.s32.totalorder 2, %s11
      // Predicated region
      $region91: #{gat_forward.5} parent=5 // pred_check
        %p4810 = pneg %p4809
      $region92: #{gat_forward.5} parent=5 // pred_check_branch
        %4812 = sbr.rel (%p4810) target = $region94
      $region93: #{gat_forward.5} parent=5 // pred_region
        %s4813 = ssub.s32 %s11, 2
        // Predicated region
        $region95: #{gat_forward.5} parent=93 // pred_check
          %p4814 = pneg %p179
        $region96: #{gat_forward.5} parent=93 // pred_check_branch
          %4816 = sbr.rel (%p4814) target = $region98
        $region97: #{gat_forward.5} parent=93 // pred_region
          %s4817 = smul.u32 16, %s22
          %p4818 = scmp.lt.s32.totalorder %s4817, 31
          %s4819 = scalar_select %p4818, %s4817, 31
          %s4820 = smul.addr %s4819, 8
          %s4821 = scalar_lea.vmem %s5, %s4820
        $region98: #{gat_forward.5} parent=93 // pred_fallthru
          _
      $region94: #{gat_forward.5} parent=5 // pred_fallthru
        _
    $region6: #{gat_forward.5} parent=1 // loop_footer
      %s15 = sadd.s32 1, %s11
    $region7: #{gat_forward.5} parent=1 // loop_footer_branch
      %10 = sbr.rel target = $region3
    $region8: #{gat_forward.5} parent=1 // loop_exit
      _

</llo_original>
